<compile_context>
chip_gen: v5e
topology: v5e:2x2
jax: 0.10.0
libtpu: 0.0.40
codegen_flags: <defaults>
</compile_context>

<pallas_src>
import functools
import math

import jax
import jax.numpy as jnp
from jax import lax
from jax.experimental import pallas as pl
from jax.experimental.pallas import tpu as pltpu

_VMEM_LIMIT_BYTES = 32 * 1024 * 1024  # fits v5e/v6e/v7x; our tiles stay << this


def _round_up(x, m):
    return (x + m - 1) // m * m


# ----------------------------------------------------------------------------
# Kernel 1: tiled matmul + bias (+ fused ReLU).  Used for the im2col conv0.
# ----------------------------------------------------------------------------
def _matmul_kernel(x_ref, w_ref, b_ref, o_ref, acc_ref, *, apply_relu):
    @pl.when(pl.program_id(2) == 0)
    def _init():
        acc_ref[...] = jnp.zeros_like(acc_ref)

    acc_ref[...] += jnp.dot(x_ref[...], w_ref[...],
                            preferred_element_type=jnp.float32)

    @pl.when(pl.program_id(2) == pl.num_programs(2) - 1)
    def _store():
        y = acc_ref[...] + b_ref[...]
        if apply_relu:
            y = jnp.maximum(y, 0.0)
        o_ref[...] = y.astype(o_ref.dtype)


def matmul_bias_act(x, w, b, *, apply_relu, tm=256, tk_max=512):
    """(M,K) @ (K,N) + b (+ReLU). bf16 MXU inputs, f32 accumulation."""
    M, K = x.shape
    K2, N = w.shape
    assert K == K2 and N <= 512
    Kp = _round_up(K, 128)
    tk = Kp if Kp <= tk_max else tk_max
    Kp = _round_up(Kp, tk)
    Mp = _round_up(M, tm)
    xp = jnp.pad(x.astype(jnp.bfloat16), ((0, Mp - M), (0, Kp - K)))
    wp = jnp.pad(w.astype(jnp.bfloat16), ((0, Kp - K), (0, 0)))
    bp = jnp.asarray(b, jnp.float32).reshape(1, N)
    grid = (Mp // tm, 1, Kp // tk)
    cost = pl.CostEstimate(
        flops=2 * Mp * Kp * N, transcendentals=0,
        bytes_accessed=Mp * Kp * 2 + Kp * N * 2 + Mp * N * 4)
    out = pl.pallas_call(
        functools.partial(_matmul_kernel, apply_relu=apply_relu),
        out_shape=jax.ShapeDtypeStruct((Mp, N), jnp.float32),
        grid=grid,
        in_specs=[
            pl.BlockSpec((tm, tk), lambda i, j, k: (i, k)),
            pl.BlockSpec((tk, N), lambda i, j, k: (k, j)),
            pl.BlockSpec((1, N), lambda i, j, k: (0, j)),
        ],
        out_specs=pl.BlockSpec((tm, N), lambda i, j, k: (i, j)),
        scratch_shapes=[pltpu.VMEM((tm, N), jnp.float32)],
        compiler_params=pltpu.CompilerParams(
            dimension_semantics=("parallel", "parallel", "arbitrary"),
            vmem_limit_bytes=_VMEM_LIMIT_BYTES),
        cost_estimate=cost,
    )(xp, wp, bp)
    return out[:M]


# ----------------------------------------------------------------------------
# Kernel 2: direct stride-1 "same" conv via flat-shift matmuls (no HBM im2col).
# ----------------------------------------------------------------------------
def _conv_flat_kernel(x_ref, w_ref, b_ref, o_ref, acc_ref, *, k, Wp, apply_relu):
    # x_ref: (1, Hp*Wp, Cin) bf16; w_ref: (k*k, Cin, Cout) bf16
    # o_ref: (1, OH*Wp, Cout) f32; acc_ref: (OH*Wp, Cout) f32 scratch
    M = o_ref.shape[1]
    acc_ref[...] = jnp.zeros_like(acc_ref)
    for t in range(k * k):
        di, dj = divmod(t, k)
        off = di * Wp + dj                       # static, contiguous slice
        xs = x_ref[0, off:off + M, :]
        acc_ref[...] += jnp.dot(xs, w_ref[t],
                                preferred_element_type=jnp.float32)
    y = acc_ref[...] + b_ref[...]
    if apply_relu:
        y = jnp.maximum(y, 0.0)
    o_ref[0] = y.astype(o_ref.dtype)


def conv2d_direct(x_nhwc, w_oihw, b, k, p, *, apply_relu):
    """stride-1 conv with pad=(k-1)//2, accumulated over k*k shifted matmuls."""
    B, H, W, Cin = x_nhwc.shape
    Cout = w_oihw.shape[0]
    assert 2 * p == k - 1
    Hp, Wp = H + 2 * p + 1, W + 2 * p            # +1 bottom row keeps slices in range
    OH, OW = H, W
    M = OH * Wp                                   # includes Wp-OW garbage cols / row
    S = Hp * Wp
    xf = jnp.pad(x_nhwc, ((0, 0), (p, p + 1), (p, p), (0, 0))) \
            .astype(jnp.bfloat16).reshape(B, S, Cin)
    wt = jnp.transpose(w_oihw, (2, 3, 1, 0)).reshape(k * k, Cin, Cout) \
            .astype(jnp.bfloat16)
    bp = jnp.asarray(b, jnp.float32).reshape(1, Cout)
    cost = pl.CostEstimate(
        flops=2 * B * M * Cin * Cout * k * k, transcendentals=0,
        bytes_accessed=B * (S * Cin * 2 + M * Cout * 4) + k * k * Cin * Cout * 2)
    y = pl.pallas_call(
        functools.partial(_conv_flat_kernel, k=k, Wp=Wp, apply_relu=apply_relu),
        out_shape=jax.ShapeDtypeStruct((B, M, Cout), jnp.float32),
        grid=(B,),
        in_specs=[
            pl.BlockSpec((1, S, Cin), lambda bb: (bb, 0, 0)),
            pl.BlockSpec((k * k, Cin, Cout), lambda bb: (0, 0, 0)),
            pl.BlockSpec((1, Cout), lambda bb: (0, 0)),
        ],
        out_specs=pl.BlockSpec((1, M, Cout), lambda bb: (bb, 0, 0)),
        scratch_shapes=[pltpu.VMEM((M, Cout), jnp.float32)],
        compiler_params=pltpu.CompilerParams(
            dimension_semantics=("parallel",),
            vmem_limit_bytes=_VMEM_LIMIT_BYTES),
        cost_estimate=cost,
    )(xf, wt, bp)
    return y.reshape(B, OH, Wp, Cout)[:, :, :OW, :]


# ----------------------------------------------------------------------------
# conv0 (stride 4): im2col glue + the tiled matmul kernel above.
# ----------------------------------------------------------------------------
def _window_slices(x_nhwc, kh, kw, stride):
    B, H, W, C = x_nhwc.shape
    OH = (H - kh) // stride + 1
    OW = (W - kw) // stride + 1
    views = []
    for di in range(kh):
        for dj in range(kw):
            v = lax.slice(
                x_nhwc,
                (0, di, dj, 0),
                (B, di + (OH - 1) * stride + 1, dj + (OW - 1) * stride + 1, C),
                (1, stride, stride, 1))
            views.append(v)
    return views, OH, OW


def conv2d_im2col(x_nhwc, w_oihw, b, k, stride, pad, *, apply_relu):
    B, H, W, Cin = x_nhwc.shape
    Cout = w_oihw.shape[0]
    xp = jnp.pad(x_nhwc, ((0, 0), (pad, pad), (pad, pad), (0, 0))).astype(jnp.bfloat16)
    views, OH, OW = _window_slices(xp, k, k, stride)
    patches = jnp.stack(views, axis=3).reshape(B * OH * OW, k * k * Cin)
    wm = jnp.transpose(w_oihw, (2, 3, 1, 0)).reshape(k * k * Cin, Cout)
    y = matmul_bias_act(patches, wm, b, apply_relu=apply_relu)
    return y.reshape(B, OH, OW, Cout)


# ----------------------------------------------------------------------------
# Kernel 3: 3x3 / stride-2 max pool (per-batch grid step, no HBM window stack).
# ----------------------------------------------------------------------------
def _maxpool32_kernel(x_ref, o_ref):
    # x_ref: (1, H, W, C); o_ref: (1, OH, W-2, C)
    # 3-tap max along W (stride 1 here); 3-tap/stride-2 max along H via a
    # pairwise-max + leading-dim reshape (no strided vector accesses).
    _, H, _, C = x_ref.shape
    _, OH, WO, _ = o_ref.shape
    a = x_ref[0, :, 0:WO, :]
    bm = x_ref[0, :, 1:WO + 1, :]
    c = x_ref[0, :, 2:WO + 2, :]
    r = jnp.maximum(jnp.maximum(a, bm), c)              # (H, WO, C)
    p = jnp.maximum(r[0:H - 1], r[1:H])                 # adjacent-row max
    q = p[0:2 * OH].reshape(OH, 2, WO, C)               # leading-dim split only
    o_ref[0] = jnp.maximum(q[:, 0], q[:, 1])


def maxpool2d(x_nhwc, k, s):
    assert (k, s) == (3, 2), "AlexNet features use 3x3 / stride-2 pools"
    B, H, W, C = x_nhwc.shape
    OH = (H - k) // s + 1
    OW = (W - k) // s + 1
    WO = W - (k - 1)
    m = pl.pallas_call(
        _maxpool32_kernel,
        out_shape=jax.ShapeDtypeStruct((B, OH, WO, C), jnp.float32),
        grid=(B,),
        in_specs=[pl.BlockSpec((1, H, W, C), lambda bb: (bb, 0, 0, 0))],
        out_specs=pl.BlockSpec((1, OH, WO, C), lambda bb: (bb, 0, 0, 0)),
        compiler_params=pltpu.CompilerParams(
            dimension_semantics=("parallel",),
            vmem_limit_bytes=_VMEM_LIMIT_BYTES),
    )(x_nhwc)
    # stride-2 subsample along W in glue (fuses with the next layer's pad/cast)
    return m[:, :, ::s, :][:, :, :OW, :]


# ----------------------------------------------------------------------------
# Fallback elementwise ReLU (normally fused into conv epilogues; kept for
# completeness, per-batch tiled) and global max pool.
# ----------------------------------------------------------------------------
def _relu_kernel(x_ref, o_ref):
    o_ref[...] = jnp.maximum(x_ref[...], 0.0)


def relu_nhwc(x):
    B = x.shape[0]
    blk = (1,) + x.shape[1:]
    return pl.pallas_call(
        _relu_kernel,
        out_shape=jax.ShapeDtypeStruct(x.shape, jnp.float32),
        grid=(B,),
        in_specs=[pl.BlockSpec(blk, lambda bb: (bb, 0, 0, 0))],
        out_specs=pl.BlockSpec(blk, lambda bb: (bb, 0, 0, 0)),
        compiler_params=pltpu.CompilerParams(
            dimension_semantics=("parallel",),
            vmem_limit_bytes=_VMEM_LIMIT_BYTES),
    )(x)


def _global_max_kernel(x_ref, o_ref):
    o_ref[...] = jnp.max(x_ref[...], axis=1)


def global_max_pool(x_bhwc):
    B, H, W, C = x_bhwc.shape
    x = x_bhwc.reshape(B, H * W, C)
    return pl.pallas_call(
        _global_max_kernel,
        out_shape=jax.ShapeDtypeStruct((B, C), jnp.float32),
        grid=(1,),
        in_specs=[pl.BlockSpec((B, H * W, C), lambda i: (0, 0, 0))],
        out_specs=pl.BlockSpec((B, C), lambda i: (0, 0)),
        compiler_params=pltpu.CompilerParams(
            dimension_semantics=("arbitrary",),
            vmem_limit_bytes=_VMEM_LIMIT_BYTES),
    )(x)


# ----------------------------------------------------------------------------
# AlexNet `features` stack + deterministic parameter init
# ----------------------------------------------------------------------------
ALEXNET_FEATURES = [
    ("conv", dict(cin=3, cout=64, k=11, s=4, p=2)),     # 0
    ("relu", {}),                                        # 1
    ("maxpool", dict(k=3, s=2)),                         # 2
    ("conv", dict(cin=64, cout=192, k=5, s=1, p=2)),     # 3
    ("relu", {}),                                        # 4
    ("maxpool", dict(k=3, s=2)),                         # 5
    ("conv", dict(cin=192, cout=384, k=3, s=1, p=1)),    # 6
    ("relu", {}),                                        # 7
    ("conv", dict(cin=384, cout=256, k=3, s=1, p=1)),    # 8
    ("relu", {}),                                        # 9
    ("conv", dict(cin=256, cout=256, k=3, s=1, p=1)),    # 10
    ("relu", {}),                                        # 11
    ("maxpool", dict(k=3, s=2)),                         # 12
]


def init_params(key):
    """Deterministic init mimicking PyTorch Conv2d default (kaiming uniform)."""
    params = {}
    for idx, (kind, cfg) in enumerate(ALEXNET_FEATURES):
        if kind != "conv":
            continue
        kw, kb = jax.random.split(jax.random.fold_in(key, idx))
        fan_in = cfg["cin"] * cfg["k"] * cfg["k"]
        bound = 1.0 / math.sqrt(fan_in)
        w = jax.random.uniform(
            kw, (cfg["cout"], cfg["cin"], cfg["k"], cfg["k"]),
            minval=-bound, maxval=bound, dtype=jnp.float32)
        b = jax.random.uniform(
            kb, (cfg["cout"],), minval=-bound, maxval=bound, dtype=jnp.float32)
        params[idx] = (w, b)
    return params


@functools.partial(jax.jit, static_argnames=("features_layer", "gpool"))
def untrained_model_forward(x_nchw, params, features_layer, gpool=False):
    """Equivalent of UntrainedModel(features_layer, gpool).forward(x)."""
    x = jnp.transpose(x_nchw.astype(jnp.float32), (0, 2, 3, 1))   # NCHW -> NHWC
    act = None
    fused_relu = set()
    for idx, (kind, cfg) in enumerate(ALEXNET_FEATURES):
        if idx > features_layer:
            break   # later layers never affect the hooked output
        if kind == "conv":
            fuse = (idx + 1 <= features_layer
                    and idx + 1 < len(ALEXNET_FEATURES)
                    and ALEXNET_FEATURES[idx + 1][0] == "relu")
            w, b = params[idx]
            if cfg["s"] == 1 and 2 * cfg["p"] == cfg["k"] - 1:
                x = conv2d_direct(x, w, b, cfg["k"], cfg["p"], apply_relu=fuse)
            else:
                x = conv2d_im2col(x, w, b, cfg["k"], cfg["s"], cfg["p"],
                                  apply_relu=fuse)
            if fuse:
                fused_relu.add(idx + 1)
        elif kind == "relu":
            if idx not in fused_relu:
                x = relu_nhwc(x)
        else:  # maxpool
            x = maxpool2d(x, cfg["k"], cfg["s"])
        if idx == features_layer:
            act = x   # hooked activation, NHWC
    B = act.shape[0]
    if gpool:
        return global_max_pool(act)                      # (B, C)
    act_nchw = jnp.transpose(act, (0, 3, 1, 2))          # PyTorch flatten order
    return act_nchw.reshape(B, -1)


# ----------------------------------------------------------------------------
# Pure-JAX reference (for a numerical sanity check only)
# ----------------------------------------------------------------------------
def _reference_forward(x_nchw, params, features_layer, gpool=False):
    x = jnp.transpose(x_nchw.astype(jnp.float32), (0, 2, 3, 1))
    act = None
    for idx, (kind, cfg) in enumerate(ALEXNET_FEATURES):
        if idx > features_layer:
            break
        if kind == "conv":
            w, b = params[idx]
            wh = jnp.transpose(w, (2, 3, 1, 0))           # OIHW -> HWIO
            x = lax.conv_general_dilated(
                x, wh, window_strides=(cfg["s"], cfg["s"]),
                padding=[(cfg["p"], cfg["p"]), (cfg["p"], cfg["p"])],
                dimension_numbers=("NHWC", "HWIO", "NHWC")) + b
        elif kind == "relu":
            x = jnp.maximum(x, 0.0)
        else:
            x = lax.reduce_window(x, -jnp.inf, lax.max,
                                  (1, cfg["k"], cfg["k"], 1),
                                  (1, cfg["s"], cfg["s"], 1), "VALID")
        if idx == features_layer:
            act = x
    B = act.shape[0]
    if gpool:
        return jnp.max(act, axis=(1, 2))
    return jnp.transpose(act, (0, 3, 1, 2)).reshape(B, -1)


if __name__ == "__main__":
    key = jax.random.PRNGKey(0)
    params = init_params(key)

    # Small AlexNet-compatible input: batch=2, 3 channels, 64x64.
    x = jax.random.normal(jax.random.fold_in(key, 999), (2, 3, 64, 64), jnp.float32)

    # Hook on features[3] (second conv, pre-ReLU), no global pool.
    out = untrained_model_forward(x, params, features_layer=3, gpool=False)
    out = jax.block_until_ready(out)
    assert out.shape == (2, 192 * 7 * 7), out.shape

    # Same hook with global max pooling.
    out_g = untrained_model_forward(x, params, features_layer=3, gpool=True)
    out_g = jax.block_until_ready(out_g)
    assert out_g.shape == (2, 192), out_g.shape

    # Numerical sanity check against a pure-JAX reference (bf16 MXU inputs,
    # f32 accumulation -> loose tolerance).
    ref = _reference_forward(x, params, 3, False)
    ref_g = _reference_forward(x, params, 3, True)
    assert bool(jnp.allclose(out, ref, rtol=5e-2, atol=5e-2))
    assert bool(jnp.allclose(out_g, ref_g, rtol=5e-2, atol=5e-2))

    print("KERNEL_OK")
</pallas_src>

<mosaic_0001>
module attributes {stable_mosaic.version = 11 : i64} {
  func.func @_matmul_kernel(%arg0: i32, %arg1: i32, %arg2: i32, %arg3: memref<256x384xbf16, #tpu.memory_space<vmem>>, %arg4: memref<384x64xbf16, #tpu.memory_space<vmem>>, %arg5: memref<1x64xf32, #tpu.memory_space<vmem>>, %arg6: memref<256x64xf32, #tpu.memory_space<vmem>>, %arg7: memref<256x64xf32, #tpu.memory_space<vmem>>) attributes {dimension_semantics = [#tpu.dimension_semantics<parallel>, #tpu.dimension_semantics<parallel>, #tpu.dimension_semantics<arbitrary>], iteration_bounds = array<i64: 2, 1, 1>, scalar_prefetch = 0 : i64, scratch_operands = 1 : i64, tpu.core_type = #tpu.core_type<tc>, window_params = [{transform_indices = @transform_0, window_bounds = array<i64: 256, 384>}, {transform_indices = @transform_1, window_bounds = array<i64: 384, 64>}, {transform_indices = @transform_2, window_bounds = array<i64: 1, 64>}, {transform_indices = @transform_3, window_bounds = array<i64: 256, 64>}]} {
    %c0_i32 = arith.constant 0 : i32
    %0 = arith.cmpi eq, %arg2, %c0_i32 : i32
    %1 = arith.extui %0 : i1 to i32
    %c0_i32_0 = arith.constant 0 : i32
    %2 = arith.cmpi ne, %1, %c0_i32_0 : i32
    scf.if %2 {
      %cst_10 = arith.constant 0.000000e+00 : f32
      %12 = vector.broadcast %cst_10 : f32 to vector<256x64xf32>
      %c0_11 = arith.constant 0 : index
      %c0_12 = arith.constant 0 : index
      %13 = vector.load %arg7[%c0_11, %c0_12] : memref<256x64xf32, #tpu.memory_space<vmem>>, vector<256x64xf32>
      tpu.vector_store %arg7[%c0_11, %c0_12], %12 {strides = array<i32>} : memref<256x64xf32, #tpu.memory_space<vmem>>, vector<256x64xf32>,
    } else {
    }
    %c0 = arith.constant 0 : index
    %c0_1 = arith.constant 0 : index
    %3 = vector.load %arg7[%c0, %c0_1] : memref<256x64xf32, #tpu.memory_space<vmem>>, vector<256x64xf32>
    %c0_2 = arith.constant 0 : index
    %c0_3 = arith.constant 0 : index
    %4 = vector.load %arg3[%c0_2, %c0_3] : memref<256x384xbf16, #tpu.memory_space<vmem>>, vector<256x384xbf16>
    %c0_4 = arith.constant 0 : index
    %c0_5 = arith.constant 0 : index
    %5 = vector.load %arg4[%c0_4, %c0_5] : memref<384x64xbf16, #tpu.memory_space<vmem>>, vector<384x64xbf16>
    %cst = arith.constant dense<0.000000e+00> : vector<256x64xf32>
    %6 = tpu.matmul %4, %5, %cst {dimension_numbers = #tpu.dot_dimension_numbers<[1], [0], [0], [1], [0, 0, 1, 1], [], []>} : vector<256x384xbf16>, vector<384x64xbf16>, vector<256x64xf32> -> vector<256x64xf32>
    %7 = arith.addf %3, %6 : vector<256x64xf32>
    %c0_6 = arith.constant 0 : index
    %c0_7 = arith.constant 0 : index
    %8 = vector.load %arg7[%c0_6, %c0_7] : memref<256x64xf32, #tpu.memory_space<vmem>>, vector<256x64xf32>
    tpu.vector_store %arg7[%c0_6, %c0_7], %7 {strides = array<i32>} : memref<256x64xf32, #tpu.memory_space<vmem>>, vector<256x64xf32>,
    %c0_i32_8 = arith.constant 0 : i32
    %9 = arith.cmpi eq, %arg2, %c0_i32_8 : i32
    %10 = arith.extui %9 : i1 to i32
    %c0_i32_9 = arith.constant 0 : i32
    %11 = arith.cmpi ne, %10, %c0_i32_9 : i32
    scf.if %11 {
      %c0_10 = arith.constant 0 : index
      %c0_11 = arith.constant 0 : index
      %12 = vector.load %arg7[%c0_10, %c0_11] : memref<256x64xf32, #tpu.memory_space<vmem>>, vector<256x64xf32>
      %c0_12 = arith.constant 0 : index
      %c0_13 = arith.constant 0 : index
      %13 = vector.load %arg5[%c0_12, %c0_13] : memref<1x64xf32, #tpu.memory_space<vmem>>, vector<1x64xf32>
      %14 = vector.broadcast %13 : vector<1x64xf32> to vector<256x64xf32>
      %15 = arith.addf %12, %14 : vector<256x64xf32>
      %cst_14 = arith.constant 0.000000e+00 : f32
      %16 = vector.broadcast %cst_14 : f32 to vector<256x64xf32>
      %17 = arith.maximumf %15, %16 : vector<256x64xf32>
      %c0_15 = arith.constant 0 : index
      %c0_16 = arith.constant 0 : index
      %18 = vector.load %arg6[%c0_15, %c0_16] : memref<256x64xf32, #tpu.memory_space<vmem>>, vector<256x64xf32>
      tpu.vector_store %arg6[%c0_15, %c0_16], %17 {strides = array<i32>} : memref<256x64xf32, #tpu.memory_space<vmem>>, vector<256x64xf32>,
    } else {
    }
    return
  }
  func.func @transform_0(%arg0: i32, %arg1: i32, %arg2: i32) -> (i32, i32) {
    %c0_i32 = arith.constant 0 : i32
    return %arg0, %arg2 : i32, i32
  }
  func.func @transform_1(%arg0: i32, %arg1: i32, %arg2: i32) -> (i32, i32) {
    %c0_i32 = arith.constant 0 : i32
    return %arg2, %arg1 : i32, i32
  }
  func.func @transform_2(%arg0: i32, %arg1: i32, %arg2: i32) -> (i32, i32) {
    %c0_i32 = arith.constant 0 : i32
    %c0_i32_0 = arith.constant 0 : i32
    return %c0_i32, %arg1 : i32, i32
  }
  func.func @transform_3(%arg0: i32, %arg1: i32, %arg2: i32) -> (i32, i32) {
    %c0_i32 = arith.constant 0 : i32
    return %arg0, %arg1 : i32, i32
  }
}

module attributes {stable_mosaic.version = 11 : i64} {
  func.func @_maxpool32_kernel(%arg0: i32, %arg1: memref<1x15x15x64xf32, #tpu.memory_space<vmem>>, %arg2: memref<1x7x13x64xf32, #tpu.memory_space<vmem>>) attributes {dimension_semantics = [#tpu.dimension_semantics<parallel>], iteration_bounds = array<i64: 2>, scalar_prefetch = 0 : i64, scratch_operands = 0 : i64, tpu.core_type = #tpu.core_type<tc>, window_params = [{transform_indices = @transform_0, window_bounds = array<i64: 1, 15, 15, 64>}, {transform_indices = @transform_1, window_bounds = array<i64: 1, 7, 13, 64>}]} {
    %c0 = arith.constant 0 : index
    %c0_0 = arith.constant 0 : index
    %c0_1 = arith.constant 0 : index
    %c0_2 = arith.constant 0 : index
    %0 = vector.load %arg1[%c0, %c0_0, %c0_1, %c0_2] : memref<1x15x15x64xf32, #tpu.memory_space<vmem>>, vector<1x15x13x64xf32>
    %1 = vector.shape_cast %0 : vector<1x15x13x64xf32> to vector<15x13x64xf32>
    %c0_3 = arith.constant 0 : index
    %c0_4 = arith.constant 0 : index
    %c1 = arith.constant 1 : index
    %c0_5 = arith.constant 0 : index
    %2 = vector.load %arg1[%c0_3, %c0_4, %c1, %c0_5] : memref<1x15x15x64xf32, #tpu.memory_space<vmem>>, vector<1x15x13x64xf32>
    %3 = vector.shape_cast %2 : vector<1x15x13x64xf32> to vector<15x13x64xf32>
    %c0_6 = arith.constant 0 : index
    %c0_7 = arith.constant 0 : index
    %c2 = arith.constant 2 : index
    %c0_8 = arith.constant 0 : index
    %4 = vector.load %arg1[%c0_6, %c0_7, %c2, %c0_8] : memref<1x15x15x64xf32, #tpu.memory_space<vmem>>, vector<1x15x13x64xf32>
    %5 = vector.shape_cast %4 : vector<1x15x13x64xf32> to vector<15x13x64xf32>
    %6 = arith.maximumf %1, %3 : vector<15x13x64xf32>
    %7 = arith.maximumf %6, %5 : vector<15x13x64xf32>
    %8 = vector.extract_strided_slice %7 {offsets = [0, 0, 0], sizes = [14, 13, 64], strides = [1, 1, 1]} : vector<15x13x64xf32> to vector<14x13x64xf32>
    %9 = vector.extract_strided_slice %7 {offsets = [1, 0, 0], sizes = [14, 13, 64], strides = [1, 1, 1]} : vector<15x13x64xf32> to vector<14x13x64xf32>
    %10 = arith.maximumf %8, %9 : vector<14x13x64xf32>
    %11 = vector.shape_cast %10 : vector<14x13x64xf32> to vector<7x2x13x64xf32>
    %12 = vector.extract_strided_slice %11 {offsets = [0, 0, 0, 0], sizes = [7, 1, 13, 64], strides = [1, 1, 1, 1]} : vector<7x2x13x64xf32> to vector<7x1x13x64xf32>
    %13 = vector.shape_cast %12 : vector<7x1x13x64xf32> to vector<7x13x64xf32>
    %14 = vector.extract_strided_slice %11 {offsets = [0, 1, 0, 0], sizes = [7, 1, 13, 64], strides = [1, 1, 1, 1]} : vector<7x2x13x64xf32> to vector<7x1x13x64xf32>
    %15 = vector.shape_cast %14 : vector<7x1x13x64xf32> to vector<7x13x64xf32>
    %16 = arith.maximumf %13, %15 : vector<7x13x64xf32>
    %c0_9 = arith.constant 0 : index
    %c0_10 = arith.constant 0 : index
    %c0_11 = arith.constant 0 : index
    %c0_12 = arith.constant 0 : index
    %17 = vector.load %arg2[%c0_9, %c0_10, %c0_11, %c0_12] : memref<1x7x13x64xf32, #tpu.memory_space<vmem>>, vector<1x7x13x64xf32>
    %18 = vector.shape_cast %17 : vector<1x7x13x64xf32> to vector<7x13x64xf32>
    %19 = vector.shape_cast %16 : vector<7x13x64xf32> to vector<1x7x13x64xf32>
    tpu.vector_store %arg2[%c0_9, %c0_10, %c0_11, %c0_12], %19 {strides = array<i32>} : memref<1x7x13x64xf32, #tpu.memory_space<vmem>>, vector<1x7x13x64xf32>,
    return
  }
  func.func @transform_0(%arg0: i32) -> (i32, i32, i32, i32) {
    %c0_i32 = arith.constant 0 : i32
    %c0_i32_0 = arith.constant 0 : i32
    %c0_i32_1 = arith.constant 0 : i32
    %c0_i32_2 = arith.constant 0 : i32
    return %arg0, %c0_i32, %c0_i32_0, %c0_i32_1 : i32, i32, i32, i32
  }
  func.func @transform_1(%arg0: i32) -> (i32, i32, i32, i32) {
    %c0_i32 = arith.constant 0 : i32
    %c0_i32_0 = arith.constant 0 : i32
    %c0_i32_1 = arith.constant 0 : i32
    %c0_i32_2 = arith.constant 0 : i32
    return %arg0, %c0_i32, %c0_i32_0, %c0_i32_1 : i32, i32, i32, i32
  }
}

module attributes {stable_mosaic.version = 11 : i64} {
  func.func @_conv_flat_kernel(%arg0: i32, %arg1: memref<1x132x64xbf16, #tpu.memory_space<vmem>>, %arg2: memref<25x64x192xbf16, #tpu.memory_space<vmem>>, %arg3: memref<1x192xf32, #tpu.memory_space<vmem>>, %arg4: memref<1x77x192xf32, #tpu.memory_space<vmem>>, %arg5: memref<77x192xf32, #tpu.memory_space<vmem>>) attributes {dimension_semantics = [#tpu.dimension_semantics<parallel>], iteration_bounds = array<i64: 2>, scalar_prefetch = 0 : i64, scratch_operands = 1 : i64, tpu.core_type = #tpu.core_type<tc>, window_params = [{transform_indices = @transform_0, window_bounds = array<i64: 1, 132, 64>}, {pipeline_mode = #tpu.pipeline_mode<synchronous>, transform_indices = @transform_1, window_bounds = array<i64: 25, 64, 192>}, {pipeline_mode = #tpu.pipeline_mode<synchronous>, transform_indices = @transform_2, window_bounds = array<i64: 1, 192>}, {transform_indices = @transform_3, window_bounds = array<i64: 1, 77, 192>}]} {
    %cst = arith.constant 0.000000e+00 : f32
    %0 = vector.broadcast %cst : f32 to vector<77x192xf32>
    %c0 = arith.constant 0 : index
    %c0_0 = arith.constant 0 : index
    %1 = vector.load %arg5[%c0, %c0_0] : memref<77x192xf32, #tpu.memory_space<vmem>>, vector<77x192xf32>
    tpu.vector_store %arg5[%c0, %c0_0], %0 {strides = array<i32>} : memref<77x192xf32, #tpu.memory_space<vmem>>, vector<77x192xf32>,
    %c0_1 = arith.constant 0 : index
    %c0_2 = arith.constant 0 : index
    %c0_3 = arith.constant 0 : index
    %2 = vector.load %arg1[%c0_1, %c0_2, %c0_3] : memref<1x132x64xbf16, #tpu.memory_space<vmem>>, vector<1x77x64xbf16>
    %3 = vector.shape_cast %2 : vector<1x77x64xbf16> to vector<77x64xbf16>
    %c0_4 = arith.constant 0 : index
    %c0_5 = arith.constant 0 : index
    %4 = vector.load %arg5[%c0_4, %c0_5] : memref<77x192xf32, #tpu.memory_space<vmem>>, vector<77x192xf32>
    %c0_6 = arith.constant 0 : index
    %c0_7 = arith.constant 0 : index
    %c0_8 = arith.constant 0 : index
    %5 = vector.load %arg2[%c0_6, %c0_7, %c0_8] : memref<25x64x192xbf16, #tpu.memory_space<vmem>>, vector<1x64x192xbf16>
    %6 = vector.shape_cast %5 : vector<1x64x192xbf16> to vector<64x192xbf16>
    %cst_9 = arith.constant dense<0.000000e+00> : vector<77x192xf32>
    %7 = tpu.matmul %3, %6, %cst_9 {dimension_numbers = #tpu.dot_dimension_numbers<[1], [0], [0], [1], [0, 0, 1, 1], [], []>} : vector<77x64xbf16>, vector<64x192xbf16>, vector<77x192xf32> -> vector<77x192xf32>
    %8 = arith.addf %4, %7 : vector<77x192xf32>
    %c0_10 = arith.constant 0 : index
    %c0_11 = arith.constant 0 : index
    %9 = vector.load %arg5[%c0_10, %c0_11] : memref<77x192xf32, #tpu.memory_space<vmem>>, vector<77x192xf32>
    tpu.vector_store %arg5[%c0_10, %c0_11], %8 {strides = array<i32>} : memref<77x192xf32, #tpu.memory_space<vmem>>, vector<77x192xf32>,
    %c0_12 = arith.constant 0 : index
    %c1 = arith.constant 1 : index
    %c0_13 = arith.constant 0 : index
    %10 = vector.load %arg1[%c0_12, %c1, %c0_13] : memref<1x132x64xbf16, #tpu.memory_space<vmem>>, vector<1x77x64xbf16>
    %11 = vector.shape_cast %10 : vector<1x77x64xbf16> to vector<77x64xbf16>
    %c0_14 = arith.constant 0 : index
    %c0_15 = arith.constant 0 : index
    %12 = vector.load %arg5[%c0_14, %c0_15] : memref<77x192xf32, #tpu.memory_space<vmem>>, vector<77x192xf32>
    %c1_16 = arith.constant 1 : index
    %c0_17 = arith.constant 0 : index
    %c0_18 = arith.constant 0 : index
    %13 = vector.load %arg2[%c1_16, %c0_17, %c0_18] : memref<25x64x192xbf16, #tpu.memory_space<vmem>>, vector<1x64x192xbf16>
    %14 = vector.shape_cast %13 : vector<1x64x192xbf16> to vector<64x192xbf16>
    %cst_19 = arith.constant dense<0.000000e+00> : vector<77x192xf32>
    %15 = tpu.matmul %11, %14, %cst_19 {dimension_numbers = #tpu.dot_dimension_numbers<[1], [0], [0], [1], [0, 0, 1, 1], [], []>} : vector<77x64xbf16>, vector<64x192xbf16>, vector<77x192xf32> -> vector<77x192xf32>
    %16 = arith.addf %12, %15 : vector<77x192xf32>
    %c0_20 = arith.constant 0 : index
    %c0_21 = arith.constant 0 : index
    %17 = vector.load %arg5[%c0_20, %c0_21] : memref<77x192xf32, #tpu.memory_space<vmem>>, vector<77x192xf32>
    tpu.vector_store %arg5[%c0_20, %c0_21], %16 {strides = array<i32>} : memref<77x192xf32, #tpu.memory_space<vmem>>, vector<77x192xf32>,
    %c0_22 = arith.constant 0 : index
    %c2 = arith.constant 2 : index
    %c0_23 = arith.constant 0 : index
    %18 = vector.load %arg1[%c0_22, %c2, %c0_23] : memref<1x132x64xbf16, #tpu.memory_space<vmem>>, vector<1x77x64xbf16>
    %19 = vector.shape_cast %18 : vector<1x77x64xbf16> to vector<77x64xbf16>
    %c0_24 = arith.constant 0 : index
    %c0_25 = arith.constant 0 : index
    %20 = vector.load %arg5[%c0_24, %c0_25] : memref<77x192xf32, #tpu.memory_space<vmem>>, vector<77x192xf32>
    %c2_26 = arith.constant 2 : index
    %c0_27 = arith.constant 0 : index
    %c0_28 = arith.constant 0 : index
    %21 = vector.load %arg2[%c2_26, %c0_27, %c0_28] : memref<25x64x192xbf16, #tpu.memory_space<vmem>>, vector<1x64x192xbf16>
    %22 = vector.shape_cast %21 : vector<1x64x192xbf16> to vector<64x192xbf16>
    %cst_29 = arith.constant dense<0.000000e+00> : vector<77x192xf32>
    %23 = tpu.matmul %19, %22, %cst_29 {dimension_numbers = #tpu.dot_dimension_numbers<[1], [0], [0], [1], [0, 0, 1, 1], [], []>} : vector<77x64xbf16>, vector<64x192xbf16>, vector<77x192xf32> -> vector<77x192xf32>
    %24 = arith.addf %20, %23 : vector<77x192xf32>
    %c0_30 = arith.constant 0 : index
    %c0_31 = arith.constant 0 : index
    %25 = vector.load %arg5[%c0_30, %c0_31] : memref<77x192xf32, #tpu.memory_space<vmem>>, vector<77x192xf32>
    tpu.vector_store %arg5[%c0_30, %c0_31], %24 {strides = array<i32>} : memref<77x192xf32, #tpu.memory_space<vmem>>, vector<77x192xf32>,
    %c0_32 = arith.constant 0 : index
    %c3 = arith.constant 3 : index
    %c0_33 = arith.constant 0 : index
    %26 = vector.load %arg1[%c0_32, %c3, %c0_33] : memref<1x132x64xbf16, #tpu.memory_space<vmem>>, vector<1x77x64xbf16>
    %27 = vector.shape_cast %26 : vector<1x77x64xbf16> to vector<77x64xbf16>
    %c0_34 = arith.constant 0 : index
    %c0_35 = arith.constant 0 : index
    %28 = vector.load %arg5[%c0_34, %c0_35] : memref<77x192xf32, #tpu.memory_space<vmem>>, vector<77x192xf32>
    %c3_36 = arith.constant 3 : index
    %c0_37 = arith.constant 0 : index
    %c0_38 = arith.constant 0 : index
    %29 = vector.load %arg2[%c3_36, %c0_37, %c0_38] : memref<25x64x192xbf16, #tpu.memory_space<vmem>>, vector<1x64x192xbf16>
    %30 = vector.shape_cast %29 : vector<1x64x192xbf16> to vector<64x192xbf16>
    %cst_39 = arith.constant dense<0.000000e+00> : vector<77x192xf32>
    %31 = tpu.matmul %27, %30, %cst_39 {dimension_numbers = #tpu.dot_dimension_numbers<[1], [0], [0], [1], [0, 0, 1, 1], [], []>} : vector<77x64xbf16>, vector<64x192xbf16>, vector<77x192xf32> -> vector<77x192xf32>
    %32 = arith.addf %28, %31 : vector<77x192xf32>
    %c0_40 = arith.constant 0 : index
    %c0_41 = arith.constant 0 : index
    %33 = vector.load %arg5[%c0_40, %c0_41] : memref<77x192xf32, #tpu.memory_space<vmem>>, vector<77x192xf32>
    tpu.vector_store %arg5[%c0_40, %c0_41], %32 {strides = array<i32>} : memref<77x192xf32, #tpu.memory_space<vmem>>, vector<77x192xf32>,
    %c0_42 = arith.constant 0 : index
    %c4 = arith.constant 4 : index
    %c0_43 = arith.constant 0 : index
    %34 = vector.load %arg1[%c0_42, %c4, %c0_43] : memref<1x132x64xbf16, #tpu.memory_space<vmem>>, vector<1x77x64xbf16>
    %35 = vector.shape_cast %34 : vector<1x77x64xbf16> to vector<77x64xbf16>
    %c0_44 = arith.constant 0 : index
    %c0_45 = arith.constant 0 : index
    %36 = vector.load %arg5[%c0_44, %c0_45] : memref<77x192xf32, #tpu.memory_space<vmem>>, vector<77x192xf32>
    %c4_46 = arith.constant 4 : index
    %c0_47 = arith.constant 0 : index
    %c0_48 = arith.constant 0 : index
    %37 = vector.load %arg2[%c4_46, %c0_47, %c0_48] : memref<25x64x192xbf16, #tpu.memory_space<vmem>>, vector<1x64x192xbf16>
    %38 = vector.shape_cast %37 : vector<1x64x192xbf16> to vector<64x192xbf16>
    %cst_49 = arith.constant dense<0.000000e+00> : vector<77x192xf32>
    %39 = tpu.matmul %35, %38, %cst_49 {dimension_numbers = #tpu.dot_dimension_numbers<[1], [0], [0], [1], [0, 0, 1, 1], [], []>} : vector<77x64xbf16>, vector<64x192xbf16>, vector<77x192xf32> -> vector<77x192xf32>
    %40 = arith.addf %36, %39 : vector<77x192xf32>
    %c0_50 = arith.constant 0 : index
    %c0_51 = arith.constant 0 : index
    %41 = vector.load %arg5[%c0_50, %c0_51] : memref<77x192xf32, #tpu.memory_space<vmem>>, vector<77x192xf32>
    tpu.vector_store %arg5[%c0_50, %c0_51], %40 {strides = array<i32>} : memref<77x192xf32, #tpu.memory_space<vmem>>, vector<77x192xf32>,
    %c0_52 = arith.constant 0 : index
    %c11 = arith.constant 11 : index
    %c0_53 = arith.constant 0 : index
    %42 = vector.load %arg1[%c0_52, %c11, %c0_53] : memref<1x132x64xbf16, #tpu.memory_space<vmem>>, vector<1x77x64xbf16>
    %43 = vector.shape_cast %42 : vector<1x77x64xbf16> to vector<77x64xbf16>
    %c0_54 = arith.constant 0 : index
    %c0_55 = arith.constant 0 : index
    %44 = vector.load %arg5[%c0_54, %c0_55] : memref<77x192xf32, #tpu.memory_space<vmem>>, vector<77x192xf32>
    %c5 = arith.constant 5 : index
    %c0_56 = arith.constant 0 : index
    %c0_57 = arith.constant 0 : index
    %45 = vector.load %arg2[%c5, %c0_56, %c0_57] : memref<25x64x192xbf16, #tpu.memory_space<vmem>>, vector<1x64x192xbf16>
    %46 = vector.shape_cast %45 : vector<1x64x192xbf16> to vector<64x192xbf16>
    %cst_58 = arith.constant dense<0.000000e+00> : vector<77x192xf32>
    %47 = tpu.matmul %43, %46, %cst_58 {dimension_numbers = #tpu.dot_dimension_numbers<[1], [0], [0], [1], [0, 0, 1, 1], [], []>} : vector<77x64xbf16>, vector<64x192xbf16>, vector<77x192xf32> -> vector<77x192xf32>
    %48 = arith.addf %44, %47 : vector<77x192xf32>
    %c0_59 = arith.constant 0 : index
    %c0_60 = arith.constant 0 : index
    %49 = vector.load %arg5[%c0_59, %c0_60] : memref<77x192xf32, #tpu.memory_space<vmem>>, vector<77x192xf32>
    tpu.vector_store %arg5[%c0_59, %c0_60], %48 {strides = array<i32>} : memref<77x192xf32, #tpu.memory_space<vmem>>, vector<77x192xf32>,
    %c0_61 = arith.constant 0 : index
    %c12 = arith.constant 12 : index
    %c0_62 = arith.constant 0 : index
    %50 = vector.load %arg1[%c0_61, %c12, %c0_62] : memref<1x132x64xbf16, #tpu.memory_space<vmem>>, vector<1x77x64xbf16>
    %51 = vector.shape_cast %50 : vector<1x77x64xbf16> to vector<77x64xbf16>
    %c0_63 = arith.constant 0 : index
    %c0_64 = arith.constant 0 : index
    %52 = vector.load %arg5[%c0_63, %c0_64] : memref<77x192xf32, #tpu.memory_space<vmem>>, vector<77x192xf32>
    %c6 = arith.constant 6 : index
    %c0_65 = arith.constant 0 : index
    %c0_66 = arith.constant 0 : index
    %53 = vector.load %arg2[%c6, %c0_65, %c0_66] : memref<25x64x192xbf16, #tpu.memory_space<vmem>>, vector<1x64x192xbf16>
    %54 = vector.shape_cast %53 : vector<1x64x192xbf16> to vector<64x192xbf16>
    %cst_67 = arith.constant dense<0.000000e+00> : vector<77x192xf32>
    %55 = tpu.matmul %51, %54, %cst_67 {dimension_numbers = #tpu.dot_dimension_numbers<[1], [0], [0], [1], [0, 0, 1, 1], [], []>} : vector<77x64xbf16>, vector<64x192xbf16>, vector<77x192xf32> -> vector<77x192xf32>
    %56 = arith.addf %52, %55 : vector<77x192xf32>
    %c0_68 = arith.constant 0 : index
    %c0_69 = arith.constant 0 : index
    %57 = vector.load %arg5[%c0_68, %c0_69] : memref<77x192xf32, #tpu.memory_space<vmem>>, vector<77x192xf32>
    tpu.vector_store %arg5[%c0_68, %c0_69], %56 {strides = array<i32>} : memref<77x192xf32, #tpu.memory_space<vmem>>, vector<77x192xf32>,
    %c0_70 = arith.constant 0 : index
    %c13 = arith.constant 13 : index
    %c0_71 = arith.constant 0 : index
    %58 = vector.load %arg1[%c0_70, %c13, %c0_71] : memref<1x132x64xbf16, #tpu.memory_space<vmem>>, vector<1x77x64xbf16>
    %59 = vector.shape_cast %58 : vector<1x77x64xbf16> to vector<77x64xbf16>
    %c0_72 = arith.constant 0 : index
    %c0_73 = arith.constant 0 : index
    %60 = vector.load %arg5[%c0_72, %c0_73] : memref<77x192xf32, #tpu.memory_space<vmem>>, vector<77x192xf32>
    %c7 = arith.constant 7 : index
    %c0_74 = arith.constant 0 : index
    %c0_75 = arith.constant 0 : index
    %61 = vector.load %arg2[%c7, %c0_74, %c0_75] : memref<25x64x192xbf16, #tpu.memory_space<vmem>>, vector<1x64x192xbf16>
    %62 = vector.shape_cast %61 : vector<1x64x192xbf16> to vector<64x192xbf16>
    %cst_76 = arith.constant dense<0.000000e+00> : vector<77x192xf32>
    %63 = tpu.matmul %59, %62, %cst_76 {dimension_numbers = #tpu.dot_dimension_numbers<[1], [0], [0], [1], [0, 0, 1, 1], [], []>} : vector<77x64xbf16>, vector<64x192xbf16>, vector<77x192xf32> -> vector<77x192xf32>
    %64 = arith.addf %60, %63 : vector<77x192xf32>
    %c0_77 = arith.constant 0 : index
    %c0_78 = arith.constant 0 : index
    %65 = vector.load %arg5[%c0_77, %c0_78] : memref<77x192xf32, #tpu.memory_space<vmem>>, vector<77x192xf32>
    tpu.vector_store %arg5[%c0_77, %c0_78], %64 {strides = array<i32>} : memref<77x192xf32, #tpu.memory_space<vmem>>, vector<77x192xf32>,
    %c0_79 = arith.constant 0 : index
    %c14 = arith.constant 14 : index
    %c0_80 = arith.constant 0 : index
    %66 = vector.load %arg1[%c0_79, %c14, %c0_80] : memref<1x132x64xbf16, #tpu.memory_space<vmem>>, vector<1x77x64xbf16>
    %67 = vector.shape_cast %66 : vector<1x77x64xbf16> to vector<77x64xbf16>
    %c0_81 = arith.constant 0 : index
    %c0_82 = arith.constant 0 : index
    %68 = vector.load %arg5[%c0_81, %c0_82] : memref<77x192xf32, #tpu.memory_space<vmem>>, vector<77x192xf32>
    %c8 = arith.constant 8 : index
    %c0_83 = arith.constant 0 : index
    %c0_84 = arith.constant 0 : index
    %69 = vector.load %arg2[%c8, %c0_83, %c0_84] : memref<25x64x192xbf16, #tpu.memory_space<vmem>>, vector<1x64x192xbf16>
    %70 = vector.shape_cast %69 : vector<1x64x192xbf16> to vector<64x192xbf16>
    %cst_85 = arith.constant dense<0.000000e+00> : vector<77x192xf32>
    %71 = tpu.matmul %67, %70, %cst_85 {dimension_numbers = #tpu.dot_dimension_numbers<[1], [0], [0], [1], [0, 0, 1, 1], [], []>} : vector<77x64xbf16>, vector<64x192xbf16>, vector<77x192xf32> -> vector<77x192xf32>
    %72 = arith.addf %68, %71 : vector<77x192xf32>
    %c0_86 = arith.constant 0 : index
    %c0_87 = arith.constant 0 : index
    %73 = vector.load %arg5[%c0_86, %c0_87] : memref<77x192xf32, #tpu.memory_space<vmem>>, vector<77x192xf32>
    tpu.vector_store %arg5[%c0_86, %c0_87], %72 {strides = array<i32>} : memref<77x192xf32, #tpu.memory_space<vmem>>, vector<77x192xf32>,
    %c0_88 = arith.constant 0 : index
    %c15 = arith.constant 15 : index
    %c0_89 = arith.constant 0 : index
    %74 = vector.load %arg1[%c0_88, %c15, %c0_89] : memref<1x132x64xbf16, #tpu.memory_space<vmem>>, vector<1x77x64xbf16>
    %75 = vector.shape_cast %74 : vector<1x77x64xbf16> to vector<77x64xbf16>
    %c0_90 = arith.constant 0 : index
    %c0_91 = arith.constant 0 : index
    %76 = vector.load %arg5[%c0_90, %c0_91] : memref<77x192xf32, #tpu.memory_space<vmem>>, vector<77x192xf32>
    %c9 = arith.constant 9 : index
    %c0_92 = arith.constant 0 : index
    %c0_93 = arith.constant 0 : index
    %77 = vector.load %arg2[%c9, %c0_92, %c0_93] : memref<25x64x192xbf16, #tpu.memory_space<vmem>>, vector<1x64x192xbf16>
    %78 = vector.shape_cast %77 : vector<1x64x192xbf16> to vector<64x192xbf16>
    %cst_94 = arith.constant dense<0.000000e+00> : vector<77x192xf32>
    %79 = tpu.matmul %75, %78, %cst_94 {dimension_numbers = #tpu.dot_dimension_numbers<[1], [0], [0], [1], [0, 0, 1, 1], [], []>} : vector<77x64xbf16>, vector<64x192xbf16>, vector<77x192xf32> -> vector<77x192xf32>
    %80 = arith.addf %76, %79 : vector<77x192xf32>
    %c0_95 = arith.constant 0 : index
    %c0_96 = arith.constant 0 : index
    %81 = vector.load %arg5[%c0_95, %c0_96] : memref<77x192xf32, #tpu.memory_space<vmem>>, vector<77x192xf32>
    tpu.vector_store %arg5[%c0_95, %c0_96], %80 {strides = array<i32>} : memref<77x192xf32, #tpu.memory_space<vmem>>, vector<77x192xf32>,
    %c0_97 = arith.constant 0 : index
    %c22 = arith.constant 22 : index
    %c0_98 = arith.constant 0 : index
    %82 = vector.load %arg1[%c0_97, %c22, %c0_98] : memref<1x132x64xbf16, #tpu.memory_space<vmem>>, vector<1x77x64xbf16>
    %83 = vector.shape_cast %82 : vector<1x77x64xbf16> to vector<77x64xbf16>
    %c0_99 = arith.constant 0 : index
    %c0_100 = arith.constant 0 : index
    %84 = vector.load %arg5[%c0_99, %c0_100] : memref<77x192xf32, #tpu.memory_space<vmem>>, vector<77x192xf32>
    %c10 = arith.constant 10 : index
    %c0_101 = arith.constant 0 : index
    %c0_102 = arith.constant 0 : index
    %85 = vector.load %arg2[%c10, %c0_101, %c0_102] : memref<25x64x192xbf16, #tpu.memory_space<vmem>>, vector<1x64x192xbf16>
    %86 = vector.shape_cast %85 : vector<1x64x192xbf16> to vector<64x192xbf16>
    %cst_103 = arith.constant dense<0.000000e+00> : vector<77x192xf32>
    %87 = tpu.matmul %83, %86, %cst_103 {dimension_numbers = #tpu.dot_dimension_numbers<[1], [0], [0], [1], [0, 0, 1, 1], [], []>} : vector<77x64xbf16>, vector<64x192xbf16>, vector<77x192xf32> -> vector<77x192xf32>
    %88 = arith.addf %84, %87 : vector<77x192xf32>
    %c0_104 = arith.constant 0 : index
    %c0_105 = arith.constant 0 : index
    %89 = vector.load %arg5[%c0_104, %c0_105] : memref<77x192xf32, #tpu.memory_space<vmem>>, vector<77x192xf32>
    tpu.vector_store %arg5[%c0_104, %c0_105], %88 {strides = array<i32>} : memref<77x192xf32, #tpu.memory_space<vmem>>, vector<77x192xf32>,
    %c0_106 = arith.constant 0 : index
    %c23 = arith.constant 23 : index
    %c0_107 = arith.constant 0 : index
    %90 = vector.load %arg1[%c0_106, %c23, %c0_107] : memref<1x132x64xbf16, #tpu.memory_space<vmem>>, vector<1x77x64xbf16>
    %91 = vector.shape_cast %90 : vector<1x77x64xbf16> to vector<77x64xbf16>
    %c0_108 = arith.constant 0 : index
    %c0_109 = arith.constant 0 : index
    %92 = vector.load %arg5[%c0_108, %c0_109] : memref<77x192xf32, #tpu.memory_space<vmem>>, vector<77x192xf32>
    %c11_110 = arith.constant 11 : index
    %c0_111 = arith.constant 0 : index
    %c0_112 = arith.constant 0 : index
    %93 = vector.load %arg2[%c11_110, %c0_111, %c0_112] : memref<25x64x192xbf16, #tpu.memory_space<vmem>>, vector<1x64x192xbf16>
    %94 = vector.shape_cast %93 : vector<1x64x192xbf16> to vector<64x192xbf16>
    %cst_113 = arith.constant dense<0.000000e+00> : vector<77x192xf32>
    %95 = tpu.matmul %91, %94, %cst_113 {dimension_numbers = #tpu.dot_dimension_numbers<[1], [0], [0], [1], [0, 0, 1, 1], [], []>} : vector<77x64xbf16>, vector<64x192xbf16>, vector<77x192xf32> -> vector<77x192xf32>
    %96 = arith.addf %92, %95 : vector<77x192xf32>
    %c0_114 = arith.constant 0 : index
    %c0_115 = arith.constant 0 : index
    %97 = vector.load %arg5[%c0_114, %c0_115] : memref<77x192xf32, #tpu.memory_space<vmem>>, vector<77x192xf32>
    tpu.vector_store %arg5[%c0_114, %c0_115], %96 {strides = array<i32>} : memref<77x192xf32, #tpu.memory_space<vmem>>, vector<77x192xf32>,
    %c0_116 = arith.constant 0 : index
    %c24 = arith.constant 24 : index
    %c0_117 = arith.constant 0 : index
    %98 = vector.load %arg1[%c0_116, %c24, %c0_117] : memref<1x132x64xbf16, #tpu.memory_space<vmem>>, vector<1x77x64xbf16>
    %99 = vector.shape_cast %98 : vector<1x77x64xbf16> to vector<77x64xbf16>
    %c0_118 = arith.constant 0 : index
    %c0_119 = arith.constant 0 : index
    %100 = vector.load %arg5[%c0_118, %c0_119] : memref<77x192xf32, #tpu.memory_space<vmem>>, vector<77x192xf32>
    %c12_120 = arith.constant 12 : index
    %c0_121 = arith.constant 0 : index
    %c0_122 = arith.constant 0 : index
    %101 = vector.load %arg2[%c12_120, %c0_121, %c0_122] : memref<25x64x192xbf16, #tpu.memory_space<vmem>>, vector<1x64x192xbf16>
    %102 = vector.shape_cast %101 : vector<1x64x192xbf16> to vector<64x192xbf16>
    %cst_123 = arith.constant dense<0.000000e+00> : vector<77x192xf32>
    %103 = tpu.matmul %99, %102, %cst_123 {dimension_numbers = #tpu.dot_dimension_numbers<[1], [0], [0], [1], [0, 0, 1, 1], [], []>} : vector<77x64xbf16>, vector<64x192xbf16>, vector<77x192xf32> -> vector<77x192xf32>
    %104 = arith.addf %100, %103 : vector<77x192xf32>
    %c0_124 = arith.constant 0 : index
    %c0_125 = arith.constant 0 : index
    %105 = vector.load %arg5[%c0_124, %c0_125] : memref<77x192xf32, #tpu.memory_space<vmem>>, vector<77x192xf32>
    tpu.vector_store %arg5[%c0_124, %c0_125], %104 {strides = array<i32>} : memref<77x192xf32, #tpu.memory_space<vmem>>, vector<77x192xf32>,
    %c0_126 = arith.constant 0 : index
    %c25 = arith.constant 25 : index
    %c0_127 = arith.constant 0 : index
    %106 = vector.load %arg1[%c0_126, %c25, %c0_127] : memref<1x132x64xbf16, #tpu.memory_space<vmem>>, vector<1x77x64xbf16>
    %107 = vector.shape_cast %106 : vector<1x77x64xbf16> to vector<77x64xbf16>
    %c0_128 = arith.constant 0 : index
    %c0_129 = arith.constant 0 : index
    %108 = vector.load %arg5[%c0_128, %c0_129] : memref<77x192xf32, #tpu.memory_space<vmem>>, vector<77x192xf32>
    %c13_130 = arith.constant 13 : index
    %c0_131 = arith.constant 0 : index
    %c0_132 = arith.constant 0 : index
    %109 = vector.load %arg2[%c13_130, %c0_131, %c0_132] : memref<25x64x192xbf16, #tpu.memory_space<vmem>>, vector<1x64x192xbf16>
    %110 = vector.shape_cast %109 : vector<1x64x192xbf16> to vector<64x192xbf16>
    %cst_133 = arith.constant dense<0.000000e+00> : vector<77x192xf32>
    %111 = tpu.matmul %107, %110, %cst_133 {dimension_numbers = #tpu.dot_dimension_numbers<[1], [0], [0], [1], [0, 0, 1, 1], [], []>} : vector<77x64xbf16>, vector<64x192xbf16>, vector<77x192xf32> -> vector<77x192xf32>
    %112 = arith.addf %108, %111 : vector<77x192xf32>
    %c0_134 = arith.constant 0 : index
    %c0_135 = arith.constant 0 : index
    %113 = vector.load %arg5[%c0_134, %c0_135] : memref<77x192xf32, #tpu.memory_space<vmem>>, vector<77x192xf32>
    tpu.vector_store %arg5[%c0_134, %c0_135], %112 {strides = array<i32>} : memref<77x192xf32, #tpu.memory_space<vmem>>, vector<77x192xf32>,
    %c0_136 = arith.constant 0 : index
    %c26 = arith.constant 26 : index
    %c0_137 = arith.constant 0 : index
    %114 = vector.load %arg1[%c0_136, %c26, %c0_137] : memref<1x132x64xbf16, #tpu.memory_space<vmem>>, vector<1x77x64xbf16>
    %115 = vector.shape_cast %114 : vector<1x77x64xbf16> to vector<77x64xbf16>
    %c0_138 = arith.constant 0 : index
    %c0_139 = arith.constant 0 : index
    %116 = vector.load %arg5[%c0_138, %c0_139] : memref<77x192xf32, #tpu.memory_space<vmem>>, vector<77x192xf32>
    %c14_140 = arith.constant 14 : index
    %c0_141 = arith.constant 0 : index
    %c0_142 = arith.constant 0 : index
    %117 = vector.load %arg2[%c14_140, %c0_141, %c0_142] : memref<25x64x192xbf16, #tpu.memory_space<vmem>>, vector<1x64x192xbf16>
    %118 = vector.shape_cast %117 : vector<1x64x192xbf16> to vector<64x192xbf16>
    %cst_143 = arith.constant dense<0.000000e+00> : vector<77x192xf32>
    %119 = tpu.matmul %115, %118, %cst_143 {dimension_numbers = #tpu.dot_dimension_numbers<[1], [0], [0], [1], [0, 0, 1, 1], [], []>} : vector<77x64xbf16>, vector<64x192xbf16>, vector<77x192xf32> -> vector<77x192xf32>
    %120 = arith.addf %116, %119 : vector<77x192xf32>
    %c0_144 = arith.constant 0 : index
    %c0_145 = arith.constant 0 : index
    %121 = vector.load %arg5[%c0_144, %c0_145] : memref<77x192xf32, #tpu.memory_space<vmem>>, vector<77x192xf32>
    tpu.vector_store %arg5[%c0_144, %c0_145], %120 {strides = array<i32>} : memref<77x192xf32, #tpu.memory_space<vmem>>, vector<77x192xf32>,
    %c0_146 = arith.constant 0 : index
    %c33 = arith.constant 33 : index
    %c0_147 = arith.constant 0 : index
    %122 = vector.load %arg1[%c0_146, %c33, %c0_147] : memref<1x132x64xbf16, #tpu.memory_space<vmem>>, vector<1x77x64xbf16>
    %123 = vector.shape_cast %122 : vector<1x77x64xbf16> to vector<77x64xbf16>
    %c0_148 = arith.constant 0 : index
    %c0_149 = arith.constant 0 : index
    %124 = vector.load %arg5[%c0_148, %c0_149] : memref<77x192xf32, #tpu.memory_space<vmem>>, vector<77x192xf32>
    %c15_150 = arith.constant 15 : index
    %c0_151 = arith.constant 0 : index
    %c0_152 = arith.constant 0 : index
    %125 = vector.load %arg2[%c15_150, %c0_151, %c0_152] : memref<25x64x192xbf16, #tpu.memory_space<vmem>>, vector<1x64x192xbf16>
    %126 = vector.shape_cast %125 : vector<1x64x192xbf16> to vector<64x192xbf16>
    %cst_153 = arith.constant dense<0.000000e+00> : vector<77x192xf32>
    %127 = tpu.matmul %123, %126, %cst_153 {dimension_numbers = #tpu.dot_dimension_numbers<[1], [0], [0], [1], [0, 0, 1, 1], [], []>} : vector<77x64xbf16>, vector<64x192xbf16>, vector<77x192xf32> -> vector<77x192xf32>
    %128 = arith.addf %124, %127 : vector<77x192xf32>
    %c0_154 = arith.constant 0 : index
    %c0_155 = arith.constant 0 : index
    %129 = vector.load %arg5[%c0_154, %c0_155] : memref<77x192xf32, #tpu.memory_space<vmem>>, vector<77x192xf32>
    tpu.vector_store %arg5[%c0_154, %c0_155], %128 {strides = array<i32>} : memref<77x192xf32, #tpu.memory_space<vmem>>, vector<77x192xf32>,
    %c0_156 = arith.constant 0 : index
    %c34 = arith.constant 34 : index
    %c0_157 = arith.constant 0 : index
    %130 = vector.load %arg1[%c0_156, %c34, %c0_157] : memref<1x132x64xbf16, #tpu.memory_space<vmem>>, vector<1x77x64xbf16>
    %131 = vector.shape_cast %130 : vector<1x77x64xbf16> to vector<77x64xbf16>
    %c0_158 = arith.constant 0 : index
    %c0_159 = arith.constant 0 : index
    %132 = vector.load %arg5[%c0_158, %c0_159] : memref<77x192xf32, #tpu.memory_space<vmem>>, vector<77x192xf32>
    %c16 = arith.constant 16 : index
    %c0_160 = arith.constant 0 : index
    %c0_161 = arith.constant 0 : index
    %133 = vector.load %arg2[%c16, %c0_160, %c0_161] : memref<25x64x192xbf16, #tpu.memory_space<vmem>>, vector<1x64x192xbf16>
    %134 = vector.shape_cast %133 : vector<1x64x192xbf16> to vector<64x192xbf16>
    %cst_162 = arith.constant dense<0.000000e+00> : vector<77x192xf32>
    %135 = tpu.matmul %131, %134, %cst_162 {dimension_numbers = #tpu.dot_dimension_numbers<[1], [0], [0], [1], [0, 0, 1, 1], [], []>} : vector<77x64xbf16>, vector<64x192xbf16>, vector<77x192xf32> -> vector<77x192xf32>
    %136 = arith.addf %132, %135 : vector<77x192xf32>
    %c0_163 = arith.constant 0 : index
    %c0_164 = arith.constant 0 : index
    %137 = vector.load %arg5[%c0_163, %c0_164] : memref<77x192xf32, #tpu.memory_space<vmem>>, vector<77x192xf32>
    tpu.vector_store %arg5[%c0_163, %c0_164], %136 {strides = array<i32>} : memref<77x192xf32, #tpu.memory_space<vmem>>, vector<77x192xf32>,
    %c0_165 = arith.constant 0 : index
    %c35 = arith.constant 35 : index
    %c0_166 = arith.constant 0 : index
    %138 = vector.load %arg1[%c0_165, %c35, %c0_166] : memref<1x132x64xbf16, #tpu.memory_space<vmem>>, vector<1x77x64xbf16>
    %139 = vector.shape_cast %138 : vector<1x77x64xbf16> to vector<77x64xbf16>
    %c0_167 = arith.constant 0 : index
    %c0_168 = arith.constant 0 : index
    %140 = vector.load %arg5[%c0_167, %c0_168] : memref<77x192xf32, #tpu.memory_space<vmem>>, vector<77x192xf32>
    %c17 = arith.constant 17 : index
    %c0_169 = arith.constant 0 : index
    %c0_170 = arith.constant 0 : index
    %141 = vector.load %arg2[%c17, %c0_169, %c0_170] : memref<25x64x192xbf16, #tpu.memory_space<vmem>>, vector<1x64x192xbf16>
    %142 = vector.shape_cast %141 : vector<1x64x192xbf16> to vector<64x192xbf16>
    %cst_171 = arith.constant dense<0.000000e+00> : vector<77x192xf32>
    %143 = tpu.matmul %139, %142, %cst_171 {dimension_numbers = #tpu.dot_dimension_numbers<[1], [0], [0], [1], [0, 0, 1, 1], [], []>} : vector<77x64xbf16>, vector<64x192xbf16>, vector<77x192xf32> -> vector<77x192xf32>
    %144 = arith.addf %140, %143 : vector<77x192xf32>
    %c0_172 = arith.constant 0 : index
    %c0_173 = arith.constant 0 : index
    %145 = vector.load %arg5[%c0_172, %c0_173] : memref<77x192xf32, #tpu.memory_space<vmem>>, vector<77x192xf32>
    tpu.vector_store %arg5[%c0_172, %c0_173], %144 {strides = array<i32>} : memref<77x192xf32, #tpu.memory_space<vmem>>, vector<77x192xf32>,
    %c0_174 = arith.constant 0 : index
    %c36 = arith.constant 36 : index
    %c0_175 = arith.constant 0 : index
    %146 = vector.load %arg1[%c0_174, %c36, %c0_175] : memref<1x132x64xbf16, #tpu.memory_space<vmem>>, vector<1x77x64xbf16>
    %147 = vector.shape_cast %146 : vector<1x77x64xbf16> to vector<77x64xbf16>
    %c0_176 = arith.constant 0 : index
    %c0_177 = arith.constant 0 : index
    %148 = vector.load %arg5[%c0_176, %c0_177] : memref<77x192xf32, #tpu.memory_space<vmem>>, vector<77x192xf32>
    %c18 = arith.constant 18 : index
    %c0_178 = arith.constant 0 : index
    %c0_179 = arith.constant 0 : index
    %149 = vector.load %arg2[%c18, %c0_178, %c0_179] : memref<25x64x192xbf16, #tpu.memory_space<vmem>>, vector<1x64x192xbf16>
    %150 = vector.shape_cast %149 : vector<1x64x192xbf16> to vector<64x192xbf16>
    %cst_180 = arith.constant dense<0.000000e+00> : vector<77x192xf32>
    %151 = tpu.matmul %147, %150, %cst_180 {dimension_numbers = #tpu.dot_dimension_numbers<[1], [0], [0], [1], [0, 0, 1, 1], [], []>} : vector<77x64xbf16>, vector<64x192xbf16>, vector<77x192xf32> -> vector<77x192xf32>
    %152 = arith.addf %148, %151 : vector<77x192xf32>
    %c0_181 = arith.constant 0 : index
    %c0_182 = arith.constant 0 : index
    %153 = vector.load %arg5[%c0_181, %c0_182] : memref<77x192xf32, #tpu.memory_space<vmem>>, vector<77x192xf32>
    tpu.vector_store %arg5[%c0_181, %c0_182], %152 {strides = array<i32>} : memref<77x192xf32, #tpu.memory_space<vmem>>, vector<77x192xf32>,
    %c0_183 = arith.constant 0 : index
    %c37 = arith.constant 37 : index
    %c0_184 = arith.constant 0 : index
    %154 = vector.load %arg1[%c0_183, %c37, %c0_184] : memref<1x132x64xbf16, #tpu.memory_space<vmem>>, vector<1x77x64xbf16>
    %155 = vector.shape_cast %154 : vector<1x77x64xbf16> to vector<77x64xbf16>
    %c0_185 = arith.constant 0 : index
    %c0_186 = arith.constant 0 : index
    %156 = vector.load %arg5[%c0_185, %c0_186] : memref<77x192xf32, #tpu.memory_space<vmem>>, vector<77x192xf32>
    %c19 = arith.constant 19 : index
    %c0_187 = arith.constant 0 : index
    %c0_188 = arith.constant 0 : index
    %157 = vector.load %arg2[%c19, %c0_187, %c0_188] : memref<25x64x192xbf16, #tpu.memory_space<vmem>>, vector<1x64x192xbf16>
    %158 = vector.shape_cast %157 : vector<1x64x192xbf16> to vector<64x192xbf16>
    %cst_189 = arith.constant dense<0.000000e+00> : vector<77x192xf32>
    %159 = tpu.matmul %155, %158, %cst_189 {dimension_numbers = #tpu.dot_dimension_numbers<[1], [0], [0], [1], [0, 0, 1, 1], [], []>} : vector<77x64xbf16>, vector<64x192xbf16>, vector<77x192xf32> -> vector<77x192xf32>
    %160 = arith.addf %156, %159 : vector<77x192xf32>
    %c0_190 = arith.constant 0 : index
    %c0_191 = arith.constant 0 : index
    %161 = vector.load %arg5[%c0_190, %c0_191] : memref<77x192xf32, #tpu.memory_space<vmem>>, vector<77x192xf32>
    tpu.vector_store %arg5[%c0_190, %c0_191], %160 {strides = array<i32>} : memref<77x192xf32, #tpu.memory_space<vmem>>, vector<77x192xf32>,
    %c0_192 = arith.constant 0 : index
    %c44 = arith.constant 44 : index
    %c0_193 = arith.constant 0 : index
    %162 = vector.load %arg1[%c0_192, %c44, %c0_193] : memref<1x132x64xbf16, #tpu.memory_space<vmem>>, vector<1x77x64xbf16>
    %163 = vector.shape_cast %162 : vector<1x77x64xbf16> to vector<77x64xbf16>
    %c0_194 = arith.constant 0 : index
    %c0_195 = arith.constant 0 : index
    %164 = vector.load %arg5[%c0_194, %c0_195] : memref<77x192xf32, #tpu.memory_space<vmem>>, vector<77x192xf32>
    %c20 = arith.constant 20 : index
    %c0_196 = arith.constant 0 : index
    %c0_197 = arith.constant 0 : index
    %165 = vector.load %arg2[%c20, %c0_196, %c0_197] : memref<25x64x192xbf16, #tpu.memory_space<vmem>>, vector<1x64x192xbf16>
    %166 = vector.shape_cast %165 : vector<1x64x192xbf16> to vector<64x192xbf16>
    %cst_198 = arith.constant dense<0.000000e+00> : vector<77x192xf32>
    %167 = tpu.matmul %163, %166, %cst_198 {dimension_numbers = #tpu.dot_dimension_numbers<[1], [0], [0], [1], [0, 0, 1, 1], [], []>} : vector<77x64xbf16>, vector<64x192xbf16>, vector<77x192xf32> -> vector<77x192xf32>
    %168 = arith.addf %164, %167 : vector<77x192xf32>
    %c0_199 = arith.constant 0 : index
    %c0_200 = arith.constant 0 : index
    %169 = vector.load %arg5[%c0_199, %c0_200] : memref<77x192xf32, #tpu.memory_space<vmem>>, vector<77x192xf32>
    tpu.vector_store %arg5[%c0_199, %c0_200], %168 {strides = array<i32>} : memref<77x192xf32, #tpu.memory_space<vmem>>, vector<77x192xf32>,
    %c0_201 = arith.constant 0 : index
    %c45 = arith.constant 45 : index
    %c0_202 = arith.constant 0 : index
    %170 = vector.load %arg1[%c0_201, %c45, %c0_202] : memref<1x132x64xbf16, #tpu.memory_space<vmem>>, vector<1x77x64xbf16>
    %171 = vector.shape_cast %170 : vector<1x77x64xbf16> to vector<77x64xbf16>
    %c0_203 = arith.constant 0 : index
    %c0_204 = arith.constant 0 : index
    %172 = vector.load %arg5[%c0_203, %c0_204] : memref<77x192xf32, #tpu.memory_space<vmem>>, vector<77x192xf32>
    %c21 = arith.constant 21 : index
    %c0_205 = arith.constant 0 : index
    %c0_206 = arith.constant 0 : index
    %173 = vector.load %arg2[%c21, %c0_205, %c0_206] : memref<25x64x192xbf16, #tpu.memory_space<vmem>>, vector<1x64x192xbf16>
    %174 = vector.shape_cast %173 : vector<1x64x192xbf16> to vector<64x192xbf16>
    %cst_207 = arith.constant dense<0.000000e+00> : vector<77x192xf32>
    %175 = tpu.matmul %171, %174, %cst_207 {dimension_numbers = #tpu.dot_dimension_numbers<[1], [0], [0], [1], [0, 0, 1, 1], [], []>} : vector<77x64xbf16>, vector<64x192xbf16>, vector<77x192xf32> -> vector<77x192xf32>
    %176 = arith.addf %172, %175 : vector<77x192xf32>
    %c0_208 = arith.constant 0 : index
    %c0_209 = arith.constant 0 : index
    %177 = vector.load %arg5[%c0_208, %c0_209] : memref<77x192xf32, #tpu.memory_space<vmem>>, vector<77x192xf32>
    tpu.vector_store %arg5[%c0_208, %c0_209], %176 {strides = array<i32>} : memref<77x192xf32, #tpu.memory_space<vmem>>, vector<77x192xf32>,
    %c0_210 = arith.constant 0 : index
    %c46 = arith.constant 46 : index
    %c0_211 = arith.constant 0 : index
    %178 = vector.load %arg1[%c0_210, %c46, %c0_211] : memref<1x132x64xbf16, #tpu.memory_space<vmem>>, vector<1x77x64xbf16>
    %179 = vector.shape_cast %178 : vector<1x77x64xbf16> to vector<77x64xbf16>
    %c0_212 = arith.constant 0 : index
    %c0_213 = arith.constant 0 : index
    %180 = vector.load %arg5[%c0_212, %c0_213] : memref<77x192xf32, #tpu.memory_space<vmem>>, vector<77x192xf32>
    %c22_214 = arith.constant 22 : index
    %c0_215 = arith.constant 0 : index
    %c0_216 = arith.constant 0 : index
    %181 = vector.load %arg2[%c22_214, %c0_215, %c0_216] : memref<25x64x192xbf16, #tpu.memory_space<vmem>>, vector<1x64x192xbf16>
    %182 = vector.shape_cast %181 : vector<1x64x192xbf16> to vector<64x192xbf16>
    %cst_217 = arith.constant dense<0.000000e+00> : vector<77x192xf32>
    %183 = tpu.matmul %179, %182, %cst_217 {dimension_numbers = #tpu.dot_dimension_numbers<[1], [0], [0], [1], [0, 0, 1, 1], [], []>} : vector<77x64xbf16>, vector<64x192xbf16>, vector<77x192xf32> -> vector<77x192xf32>
    %184 = arith.addf %180, %183 : vector<77x192xf32>
    %c0_218 = arith.constant 0 : index
    %c0_219 = arith.constant 0 : index
    %185 = vector.load %arg5[%c0_218, %c0_219] : memref<77x192xf32, #tpu.memory_space<vmem>>, vector<77x192xf32>
    tpu.vector_store %arg5[%c0_218, %c0_219], %184 {strides = array<i32>} : memref<77x192xf32, #tpu.memory_space<vmem>>, vector<77x192xf32>,
    %c0_220 = arith.constant 0 : index
    %c47 = arith.constant 47 : index
    %c0_221 = arith.constant 0 : index
    %186 = vector.load %arg1[%c0_220, %c47, %c0_221] : memref<1x132x64xbf16, #tpu.memory_space<vmem>>, vector<1x77x64xbf16>
    %187 = vector.shape_cast %186 : vector<1x77x64xbf16> to vector<77x64xbf16>
    %c0_222 = arith.constant 0 : index
    %c0_223 = arith.constant 0 : index
    %188 = vector.load %arg5[%c0_222, %c0_223] : memref<77x192xf32, #tpu.memory_space<vmem>>, vector<77x192xf32>
    %c23_224 = arith.constant 23 : index
    %c0_225 = arith.constant 0 : index
    %c0_226 = arith.constant 0 : index
    %189 = vector.load %arg2[%c23_224, %c0_225, %c0_226] : memref<25x64x192xbf16, #tpu.memory_space<vmem>>, vector<1x64x192xbf16>
    %190 = vector.shape_cast %189 : vector<1x64x192xbf16> to vector<64x192xbf16>
    %cst_227 = arith.constant dense<0.000000e+00> : vector<77x192xf32>
    %191 = tpu.matmul %187, %190, %cst_227 {dimension_numbers = #tpu.dot_dimension_numbers<[1], [0], [0], [1], [0, 0, 1, 1], [], []>} : vector<77x64xbf16>, vector<64x192xbf16>, vector<77x192xf32> -> vector<77x192xf32>
    %192 = arith.addf %188, %191 : vector<77x192xf32>
    %c0_228 = arith.constant 0 : index
    %c0_229 = arith.constant 0 : index
    %193 = vector.load %arg5[%c0_228, %c0_229] : memref<77x192xf32, #tpu.memory_space<vmem>>, vector<77x192xf32>
    tpu.vector_store %arg5[%c0_228, %c0_229], %192 {strides = array<i32>} : memref<77x192xf32, #tpu.memory_space<vmem>>, vector<77x192xf32>,
    %c0_230 = arith.constant 0 : index
    %c48 = arith.constant 48 : index
    %c0_231 = arith.constant 0 : index
    %194 = vector.load %arg1[%c0_230, %c48, %c0_231] : memref<1x132x64xbf16, #tpu.memory_space<vmem>>, vector<1x77x64xbf16>
    %195 = vector.shape_cast %194 : vector<1x77x64xbf16> to vector<77x64xbf16>
    %c0_232 = arith.constant 0 : index
    %c0_233 = arith.constant 0 : index
    %196 = vector.load %arg5[%c0_232, %c0_233] : memref<77x192xf32, #tpu.memory_space<vmem>>, vector<77x192xf32>
    %c24_234 = arith.constant 24 : index
    %c0_235 = arith.constant 0 : index
    %c0_236 = arith.constant 0 : index
    %197 = vector.load %arg2[%c24_234, %c0_235, %c0_236] : memref<25x64x192xbf16, #tpu.memory_space<vmem>>, vector<1x64x192xbf16>
    %198 = vector.shape_cast %197 : vector<1x64x192xbf16> to vector<64x192xbf16>
    %cst_237 = arith.constant dense<0.000000e+00> : vector<77x192xf32>
    %199 = tpu.matmul %195, %198, %cst_237 {dimension_numbers = #tpu.dot_dimension_numbers<[1], [0], [0], [1], [0, 0, 1, 1], [], []>} : vector<77x64xbf16>, vector<64x192xbf16>, vector<77x192xf32> -> vector<77x192xf32>
    %200 = arith.addf %196, %199 : vector<77x192xf32>
    %c0_238 = arith.constant 0 : index
    %c0_239 = arith.constant 0 : index
    %201 = vector.load %arg5[%c0_238, %c0_239] : memref<77x192xf32, #tpu.memory_space<vmem>>, vector<77x192xf32>
    tpu.vector_store %arg5[%c0_238, %c0_239], %200 {strides = array<i32>} : memref<77x192xf32, #tpu.memory_space<vmem>>, vector<77x192xf32>,
    %c0_240 = arith.constant 0 : index
    %c0_241 = arith.constant 0 : index
    %202 = vector.load %arg5[%c0_240, %c0_241] : memref<77x192xf32, #tpu.memory_space<vmem>>, vector<77x192xf32>
    %c0_242 = arith.constant 0 : index
    %c0_243 = arith.constant 0 : index
    %203 = vector.load %arg3[%c0_242, %c0_243] : memref<1x192xf32, #tpu.memory_space<vmem>>, vector<1x192xf32>
    %204 = vector.broadcast %203 : vector<1x192xf32> to vector<77x192xf32>
    %205 = arith.addf %202, %204 : vector<77x192xf32>
    %c0_244 = arith.constant 0 : index
    %c0_245 = arith.constant 0 : index
    %c0_246 = arith.constant 0 : index
    %206 = vector.load %arg4[%c0_244, %c0_245, %c0_246] : memref<1x77x192xf32, #tpu.memory_space<vmem>>, vector<1x77x192xf32>
    %207 = vector.shape_cast %206 : vector<1x77x192xf32> to vector<77x192xf32>
    %208 = vector.shape_cast %205 : vector<77x192xf32> to vector<1x77x192xf32>
    tpu.vector_store %arg4[%c0_244, %c0_245, %c0_246], %208 {strides = array<i32>} : memref<1x77x192xf32, #tpu.memory_space<vmem>>, vector<1x77x192xf32>,
    return
  }
  func.func @transform_0(%arg0: i32) -> (i32, i32, i32) {
    %c0_i32 = arith.constant 0 : i32
    %c0_i32_0 = arith.constant 0 : i32
    %c0_i32_1 = arith.constant 0 : i32
    return %arg0, %c0_i32, %c0_i32_0 : i32, i32, i32
  }
  func.func @transform_1(%arg0: i32) -> (i32, i32, i32) {
    %c0_i32 = arith.constant 0 : i32
    %c0_i32_0 = arith.constant 0 : i32
    %c0_i32_1 = arith.constant 0 : i32
    %c0_i32_2 = arith.constant 0 : i32
    return %c0_i32, %c0_i32_0, %c0_i32_1 : i32, i32, i32
  }
  func.func @transform_2(%arg0: i32) -> (i32, i32) {
    %c0_i32 = arith.constant 0 : i32
    %c0_i32_0 = arith.constant 0 : i32
    %c0_i32_1 = arith.constant 0 : i32
    return %c0_i32, %c0_i32_0 : i32, i32
  }
  func.func @transform_3(%arg0: i32) -> (i32, i32, i32) {
    %c0_i32 = arith.constant 0 : i32
    %c0_i32_0 = arith.constant 0 : i32
    %c0_i32_1 = arith.constant 0 : i32
    return %arg0, %c0_i32, %c0_i32_0 : i32, i32, i32
  }
}

</mosaic_0001>

<llo_original>
// kernel: untrained_model_forward.4
$region0: #{untrained_model_forward.4}
  #allocation0 [shape = 'u32[]', space=smem, size = 0x4, offset = 0x4, fixed_abs, tag = 'smem constant byte address 0x4 - core index']
  #allocation1 [shape = 'u32[72,128]{1,0:T(1,128)}', space=vmem, size = 0x9000, scoped, tag = 'internal scratch']
  %s0 = inlined_call_operand.vmem [shape: f32[2,15,15,64], index: 0, kind: input, shape index: {}]
  %s1 = inlined_call_operand.vmem [shape: f32[2,7,13,64], index: 1, kind: output, shape index: {}]
  %s2 = sld [smem:[#allocation0]]
  $region37: #{untrained_model_forward.4} parent=0
    _
  %s4 = ssub.s32 1, %s2
  %s5 = scalar_select 0, %s4, %s2
  loop: start=0, step=1, limit=4
  $region2: #{untrained_model_forward.4} parent=0 // loop_pre_header
    _
  $region3: #{untrained_model_forward.4} parent=0 // loop_header
    %s7 = sphi 0, %s11
    %p8 = scmp.ge.s32.totalorder %s7, 4
    %s17 = sphi 0, %s19
    %s20 = sphi 0, %s17
    %s21 = sphi 0, %s20
    %s37 = sphi 0, %s21
    %s43 = sphi 0, %s45
    %s46 = sphi 0, %s43
    %s47 = sphi 0, %s46
    %s63 = sphi 0, %s47
  $region4: #{untrained_model_forward.4} parent=0 // loop_header_branch
    %10 = sbr.rel (%p8) target = $region8
  $region5: #{untrained_model_forward.4} parent=0 // loop_body
    %s12 = ssub.s32 %s7, 1
    %s13 = ssub.s32 %s7, 2
    %s14 = sadd.s32 %s7, 1
    %s15 = ssub.s32 %s7, %s14
    %p16 = scmp.eq.s32.totalorder %s15, 0
    %s18 = sadd.s32 %s17, 1
    %s19 = scalar_select %p16, %s17, %s18
    %p22 = pneg %p16
    %p23 = scmp.eq.s32.totalorder %s7, 1
    %p24 = por %p22, %p23
    %p25 = scmp.ne.s32.totalorder %s17, %s20
    %p26 = scmp.eq.s32.totalorder %s7, 0
    %p27 = por %p25, %p26
    %p28 = scmp.ne.s32.totalorder %s17, %s20
    %p29 = scmp.eq.s32.totalorder %s12, 1
    %p30 = por %p28, %p29
    %p31 = scmp.ne.s32.totalorder %s20, %s21
    %p32 = scmp.eq.s32.totalorder %s12, 0
    %p33 = por %p31, %p32
    %p34 = scmp.ne.s32.totalorder %s20, %s21
    %p35 = scmp.eq.s32.totalorder %s13, 1
    %p36 = por %p34, %p35
    %p38 = scmp.ne.s32.totalorder %s21, %s37
    %p39 = scmp.eq.s32.totalorder %s13, 0
    %p40 = por %p38, %p39
    %s41 = ssub.s32 %s7, %s14
    %p42 = scmp.eq.s32.totalorder %s41, 0
    %s44 = sadd.s32 %s43, 1
    %s45 = scalar_select %p42, %s43, %s44
    %p48 = pneg %p42
    %p49 = scmp.eq.s32.totalorder %s7, 1
    %p50 = por %p48, %p49
    %p51 = scmp.ne.s32.totalorder %s43, %s46
    %p52 = scmp.eq.s32.totalorder %s7, 0
    %p53 = por %p51, %p52
    %p54 = scmp.ne.s32.totalorder %s43, %s46
    %p55 = scmp.eq.s32.totalorder %s12, 1
    %p56 = por %p54, %p55
    %p57 = scmp.ne.s32.totalorder %s46, %s47
    %p58 = scmp.eq.s32.totalorder %s12, 0
    %p59 = por %p57, %p58
    %p60 = scmp.ne.s32.totalorder %s46, %s47
    %p61 = scmp.eq.s32.totalorder %s13, 1
    %p62 = por %p60, %p61
    %p64 = scmp.ne.s32.totalorder %s47, %s63
    %p65 = scmp.eq.s32.totalorder %s13, 0
    %p66 = por %p64, %p65
    %p67 = scmp.le.s32.totalorder 1, %s7
    %p68 = scmp.lt.s32.totalorder %s7, 3
    %p69 = pnand %p67, %p68
    %p70 = pneg %p69
    // Predicated region
    $region9: #{untrained_model_forward.4} parent=5 // pred_check
      _
    $region10: #{untrained_model_forward.4} parent=5 // pred_check_branch
      %72 = sbr.rel (%p69) target = $region12
    $region11: #{untrained_model_forward.4} parent=5 // pred_region
      %s73 = ssub.s32 %s7, 1
    $region12: #{untrained_model_forward.4} parent=5 // pred_fallthru
      _
    %p74 = scmp.lt.s32.totalorder %s7, 2
    // Predicated region
    $region13: #{untrained_model_forward.4} parent=5 // pred_check
      %p75 = pneg %p74
    $region14: #{untrained_model_forward.4} parent=5 // pred_check_branch
      %77 = sbr.rel (%p75) target = $region16
    $region15: #{untrained_model_forward.4} parent=5 // pred_region
      // Predicated region
      $region17: #{untrained_model_forward.4} parent=15 // pred_check
        %p78 = pneg %p27
      $region18: #{untrained_model_forward.4} parent=15 // pred_check_branch
        %80 = sbr.rel (%p78) target = $region20
      $region19: #{untrained_model_forward.4} parent=15 // pred_region
        %p81 = scmp.lt.s32.totalorder %s7, 1
        %s82 = scalar_select %p81, %s7, 1
        %s83 = smul.addr %s82, 30
        %s84 = smul.addr %s83, 8
        %s85 = scalar_lea.vmem %s0, %s84
      $region20: #{untrained_model_forward.4} parent=15 // pred_fallthru
        _
    $region16: #{untrained_model_forward.4} parent=5 // pred_fallthru
      _
    %p86 = scmp.le.s32.totalorder 1, %s7
    %p87 = scmp.lt.s32.totalorder %s7, 3
    %p88 = pnand %p86, %p87
    %p89 = pneg %p88
    // Predicated region
    $region21: #{untrained_model_forward.4} parent=5 // pred_check
      _
    $region22: #{untrained_model_forward.4} parent=5 // pred_check_branch
      %91 = sbr.rel (%p88) target = $region24
    $region23: #{untrained_model_forward.4} parent=5 // pred_region
      %s92 = ssub.s32 %s7, 1
      %p93 = scmp.lt.s32.totalorder %s12, 1
      %s94 = scalar_select %p93, %s12, 1
      %s95 = smul.addr %s94, 30
      %s96 = smul.addr %s95, 8
      %s97 = scalar_lea.vmem %s0, %s96
      %p98 = pneg %p33
      %p99 = pneg %p30
      %p100 = pneg %p59
      %p101 = pneg %p56
      %p102 = scmp.lt.s32.totalorder %s12, 1
      %s103 = scalar_select %p102, %s12, 1
      %s104 = smul.addr %s103, 14
      %s105 = smul.addr %s104, 8
      %s106 = scalar_lea.vmem %s1, %s105
      %p107 = scmp.lt.s32.totalorder %s12, 1
      %s108 = scalar_select %p107, %s12, 1
      %s109 = smul.addr %s108, 30
      %s110 = smul.addr %s109, 8
      %s111 = scalar_lea.vmem %s0, %s110
      %p112 = scmp.lt.s32.totalorder %s12, 1
      %s113 = scalar_select %p112, %s12, 1
      %s114 = smul.addr %s113, 14
      %s115 = smul.addr %s114, 8
      %s116 = scalar_lea.vmem %s1, %s115
      %v117 = vld [vmem:[%s111] sm:$0xff]
      %v118 = vld [vmem:[%s111 + $0x8] sm:$0x1f]
      %v119 = vld [vmem:[%s111 + $0x10] sm:$0xff]
      %v120 = vld [vmem:[%s111 + $0x18] sm:$0x1f]
      %v121 = vld [vmem:[%s111 + $0x20] sm:$0xff]
      %v122 = vld [vmem:[%s111 + $0x28] sm:$0x1f]
      %v123 = vld [vmem:[%s111 + $0x30] sm:$0xff]
      %v124 = vld [vmem:[%s111 + $0x38] sm:$0x1f]
      %v125 = vld [vmem:[%s111 + $0x40] sm:$0xff]
      %v126 = vld [vmem:[%s111 + $0x48] sm:$0x1f]
      %v127 = vld [vmem:[%s111 + $0x50] sm:$0xff]
      %v128 = vld [vmem:[%s111 + $0x58] sm:$0x1f]
      %v129 = vld [vmem:[%s111 + $0x60] sm:$0xff]
      %v130 = vld [vmem:[%s111 + $0x68] sm:$0x1f]
      %v131 = vld [vmem:[%s111 + $0x70] sm:$0xff]
      %v132 = vld [vmem:[%s111 + $0x78] sm:$0x1f]
      %v133 = vld [vmem:[%s111 + $0x80] sm:$0xff]
      %v134 = vld [vmem:[%s111 + $0x88] sm:$0x1f]
      %v135 = vld [vmem:[%s111 + $0x90] sm:$0xff]
      %v136 = vld [vmem:[%s111 + $0x98] sm:$0x1f]
      %v137 = vld [vmem:[%s111 + $0xa0] sm:$0xff]
      %v138 = vld [vmem:[%s111 + $0xa8] sm:$0x1f]
      %v139 = vld [vmem:[%s111 + $0xb0] sm:$0xff]
      %v140 = vld [vmem:[%s111 + $0xb8] sm:$0x1f]
      %v141 = vld [vmem:[%s111 + $0xc0] sm:$0xff]
      %v142 = vld [vmem:[%s111 + $0xc8] sm:$0x1f]
      %v143 = vld [vmem:[%s111 + $0xd0] sm:$0xff]
      %v144 = vld [vmem:[%s111 + $0xd8] sm:$0x1f]
      %v145 = vld [vmem:[%s111 + $0xe0] sm:$0xff]
      %v146 = vld [vmem:[%s111 + $0xe8] sm:$0x1f]
      %v147 = vld [vmem:[%s111 + $0x1] sm:$0xff]
      %v148 = vld [vmem:[%s111 + $0x9] sm:$0x1f]
      %v149 = vld [vmem:[%s111 + $0x11] sm:$0xff]
      %v150 = vld [vmem:[%s111 + $0x19] sm:$0x1f]
      %v151 = vld [vmem:[%s111 + $0x21] sm:$0xff]
      %v152 = vld [vmem:[%s111 + $0x29] sm:$0x1f]
      %v153 = vld [vmem:[%s111 + $0x31] sm:$0xff]
      %v154 = vld [vmem:[%s111 + $0x39] sm:$0x1f]
      %v155 = vld [vmem:[%s111 + $0x41] sm:$0xff]
      %v156 = vld [vmem:[%s111 + $0x49] sm:$0x1f]
      %v157 = vld [vmem:[%s111 + $0x51] sm:$0xff]
      %v158 = vld [vmem:[%s111 + $0x59] sm:$0x1f]
      %v159 = vld [vmem:[%s111 + $0x61] sm:$0xff]
      %v160 = vld [vmem:[%s111 + $0x69] sm:$0x1f]
      %v161 = vld [vmem:[%s111 + $0x71] sm:$0xff]
      %v162 = vld [vmem:[%s111 + $0x79] sm:$0x1f]
      %v163 = vld [vmem:[%s111 + $0x81] sm:$0xff]
      %v164 = vld [vmem:[%s111 + $0x89] sm:$0x1f]
      %v165 = vld [vmem:[%s111 + $0x91] sm:$0xff]
      %v166 = vld [vmem:[%s111 + $0x99] sm:$0x1f]
      %v167 = vld [vmem:[%s111 + $0xa1] sm:$0xff]
      %v168 = vld [vmem:[%s111 + $0xa9] sm:$0x1f]
      %v169 = vld [vmem:[%s111 + $0xb1] sm:$0xff]
      %v170 = vld [vmem:[%s111 + $0xb9] sm:$0x1f]
      %v171 = vld [vmem:[%s111 + $0xc1] sm:$0xff]
      %v172 = vld [vmem:[%s111 + $0xc9] sm:$0x1f]
      %v173 = vld [vmem:[%s111 + $0xd1] sm:$0xff]
      %v174 = vld [vmem:[%s111 + $0xd9] sm:$0x1f]
      %v175 = vld [vmem:[%s111 + $0xe1] sm:$0xff]
      %v176 = vld [vmem:[%s111 + $0xe9] sm:$0x1f]
      %v177 = vld [vmem:[%s111 + $0x2] sm:$0xff]
      %v178 = vld [vmem:[%s111 + $0xa] sm:$0x1f]
      %v179 = vld [vmem:[%s111 + $0x12] sm:$0xff]
      %v180 = vld [vmem:[%s111 + $0x1a] sm:$0x1f]
      %v181 = vld [vmem:[%s111 + $0x22] sm:$0xff]
      %v182 = vld [vmem:[%s111 + $0x2a] sm:$0x1f]
      %v183 = vld [vmem:[%s111 + $0x32] sm:$0xff]
      %v184 = vld [vmem:[%s111 + $0x3a] sm:$0x1f]
      %v185 = vld [vmem:[%s111 + $0x42] sm:$0xff]
      %v186 = vld [vmem:[%s111 + $0x4a] sm:$0x1f]
      %v187 = vld [vmem:[%s111 + $0x52] sm:$0xff]
      %v188 = vld [vmem:[%s111 + $0x5a] sm:$0x1f]
      %v189 = vld [vmem:[%s111 + $0x62] sm:$0xff]
      %v190 = vld [vmem:[%s111 + $0x6a] sm:$0x1f]
      %v191 = vld [vmem:[%s111 + $0x72] sm:$0xff]
      %v192 = vld [vmem:[%s111 + $0x7a] sm:$0x1f]
      %v193 = vld [vmem:[%s111 + $0x82] sm:$0xff]
      %v194 = vld [vmem:[%s111 + $0x8a] sm:$0x1f]
      %v195 = vld [vmem:[%s111 + $0x92] sm:$0xff]
      %v196 = vld [vmem:[%s111 + $0x9a] sm:$0x1f]
      %v197 = vld [vmem:[%s111 + $0xa2] sm:$0xff]
      %v198 = vld [vmem:[%s111 + $0xaa] sm:$0x1f]
      %v199 = vld [vmem:[%s111 + $0xb2] sm:$0xff]
      %v200 = vld [vmem:[%s111 + $0xba] sm:$0x1f]
      %v201 = vld [vmem:[%s111 + $0xc2] sm:$0xff]
      %v202 = vld [vmem:[%s111 + $0xca] sm:$0x1f]
      %v203 = vld [vmem:[%s111 + $0xd2] sm:$0xff]
      %v204 = vld [vmem:[%s111 + $0xda] sm:$0x1f]
      %v205 = vld [vmem:[%s111 + $0xe2] sm:$0xff]
      %v206 = vld [vmem:[%s111 + $0xea] sm:$0x1f]
      %v207 = vmax.f32 %v117, %v147
      %v208 = vmax.f32 %v118, %v148
      %v209 = vmax.f32 %v119, %v149
      %v210 = vmax.f32 %v120, %v150
      %v211 = vmax.f32 %v121, %v151
      %v212 = vmax.f32 %v122, %v152
      %v213 = vmax.f32 %v123, %v153
      %v214 = vmax.f32 %v124, %v154
      %v215 = vmax.f32 %v125, %v155
      %v216 = vmax.f32 %v126, %v156
      %v217 = vmax.f32 %v127, %v157
      %v218 = vmax.f32 %v128, %v158
      %v219 = vmax.f32 %v129, %v159
      %v220 = vmax.f32 %v130, %v160
      %v221 = vmax.f32 %v131, %v161
      %v222 = vmax.f32 %v132, %v162
      %v223 = vmax.f32 %v133, %v163
      %v224 = vmax.f32 %v134, %v164
      %v225 = vmax.f32 %v135, %v165
      %v226 = vmax.f32 %v136, %v166
      %v227 = vmax.f32 %v137, %v167
      %v228 = vmax.f32 %v138, %v168
      %v229 = vmax.f32 %v139, %v169
      %v230 = vmax.f32 %v140, %v170
      %v231 = vmax.f32 %v141, %v171
      %v232 = vmax.f32 %v142, %v172
      %v233 = vmax.f32 %v143, %v173
      %v234 = vmax.f32 %v144, %v174
      %v235 = vmax.f32 %v145, %v175
      %v236 = vmax.f32 %v146, %v176
      %v237 = vmax.f32 %v207, %v177
      %v238 = vmax.f32 %v208, %v178
      %v239 = vmax.f32 %v209, %v179
      %v240 = vmax.f32 %v210, %v180
      %v241 = vmax.f32 %v211, %v181
      %v242 = vmax.f32 %v212, %v182
      %v243 = vmax.f32 %v213, %v183
      %v244 = vmax.f32 %v214, %v184
      %v245 = vmax.f32 %v215, %v185
      %v246 = vmax.f32 %v216, %v186
      %v247 = vmax.f32 %v217, %v187
      %v248 = vmax.f32 %v218, %v188
      %v249 = vmax.f32 %v219, %v189
      %v250 = vmax.f32 %v220, %v190
      %v251 = vmax.f32 %v221, %v191
      %v252 = vmax.f32 %v222, %v192
      %v253 = vmax.f32 %v223, %v193
      %v254 = vmax.f32 %v224, %v194
      %v255 = vmax.f32 %v225, %v195
      %v256 = vmax.f32 %v226, %v196
      %v257 = vmax.f32 %v227, %v197
      %v258 = vmax.f32 %v228, %v198
      %v259 = vmax.f32 %v229, %v199
      %v260 = vmax.f32 %v230, %v200
      %v261 = vmax.f32 %v231, %v201
      %v262 = vmax.f32 %v232, %v202
      %v263 = vmax.f32 %v233, %v203
      %v264 = vmax.f32 %v234, %v204
      %v265 = vmax.f32 %v235, %v205
      %v266 = vmax.f32 %v236, %v206
      %v267 = vmax.f32 %v237, %v239
      %v268 = vmax.f32 %v238, %v240
      %v269 = vmax.f32 %v239, %v241
      %v270 = vmax.f32 %v240, %v242
      %v271 = vmax.f32 %v241, %v243
      %v272 = vmax.f32 %v242, %v244
      %v273 = vmax.f32 %v243, %v245
      %v274 = vmax.f32 %v244, %v246
      %v275 = vmax.f32 %v245, %v247
      %v276 = vmax.f32 %v246, %v248
      %v277 = vmax.f32 %v247, %v249
      %v278 = vmax.f32 %v248, %v250
      %v279 = vmax.f32 %v249, %v251
      %v280 = vmax.f32 %v250, %v252
      %v281 = vmax.f32 %v251, %v253
      %v282 = vmax.f32 %v252, %v254
      %v283 = vmax.f32 %v253, %v255
      %v284 = vmax.f32 %v254, %v256
      %v285 = vmax.f32 %v255, %v257
      %v286 = vmax.f32 %v256, %v258
      %v287 = vmax.f32 %v257, %v259
      %v288 = vmax.f32 %v258, %v260
      %v289 = vmax.f32 %v259, %v261
      %v290 = vmax.f32 %v260, %v262
      %v291 = vmax.f32 %v261, %v263
      %v292 = vmax.f32 %v262, %v264
      %v293 = vmax.f32 %v263, %v265
      %v294 = vmax.f32 %v264, %v266
      %v295 = vmax.f32 %v267, %v269
      %v296 = vmax.f32 %v268, %v270
      %v297 = vmax.f32 %v271, %v273
      %v298 = vmax.f32 %v272, %v274
      %v299 = vmax.f32 %v275, %v277
      %v300 = vmax.f32 %v276, %v278
      %v301 = vmax.f32 %v279, %v281
      %v302 = vmax.f32 %v280, %v282
      %v303 = vmax.f32 %v283, %v285
      %v304 = vmax.f32 %v284, %v286
      %v305 = vmax.f32 %v287, %v289
      %v306 = vmax.f32 %v288, %v290
      %v307 = vmax.f32 %v291, %v293
      %v308 = vmax.f32 %v292, %v294
      %vm309 = vcmask 523264
      %310 = vst.msk [vmem:[%s116] sm:$0xff] %vm309, %v295
      %vm311 = vcmask 520192
      %312 = vst.msk [vmem:[%s116 + $0x8] sm:$0x1f] %vm311, %v296
      %313 = vst.msk [vmem:[%s116 + $0x10] sm:$0xff] %vm309, %v297
      %314 = vst.msk [vmem:[%s116 + $0x18] sm:$0x1f] %vm311, %v298
      %315 = vst.msk [vmem:[%s116 + $0x20] sm:$0xff] %vm309, %v299
      %316 = vst.msk [vmem:[%s116 + $0x28] sm:$0x1f] %vm311, %v300
      %317 = vst.msk [vmem:[%s116 + $0x30] sm:$0xff] %vm309, %v301
      %318 = vst.msk [vmem:[%s116 + $0x38] sm:$0x1f] %vm311, %v302
      %319 = vst.msk [vmem:[%s116 + $0x40] sm:$0xff] %vm309, %v303
      %320 = vst.msk [vmem:[%s116 + $0x48] sm:$0x1f] %vm311, %v304
      %321 = vst.msk [vmem:[%s116 + $0x50] sm:$0xff] %vm309, %v305
      %322 = vst.msk [vmem:[%s116 + $0x58] sm:$0x1f] %vm311, %v306
      %323 = vst.msk [vmem:[%s116 + $0x60] sm:$0xff] %vm309, %v307
      %324 = vst.msk [vmem:[%s116 + $0x68] sm:$0x1f] %vm311, %v308
      %p325 = scmp.lt.s32.totalorder %s12, 1
      %s326 = scalar_select %p325, %s12, 1
      %s327 = smul.addr %s326, 14
      %s328 = smul.addr %s327, 8
      %s329 = scalar_lea.vmem %s1, %s328
      // Predicated region
      $region25: #{untrained_model_forward.4} parent=23 // pred_check
        %p330 = pneg %p56
      $region26: #{untrained_model_forward.4} parent=23 // pred_check_branch
        %332 = sbr.rel (%p330) target = $region28
      $region27: #{untrained_model_forward.4} parent=23 // pred_region
        _
      $region28: #{untrained_model_forward.4} parent=23 // pred_fallthru
        _
    $region24: #{untrained_model_forward.4} parent=5 // pred_fallthru
      _
    %p333 = scmp.le.s32.totalorder 2, %s7
    // Predicated region
    $region29: #{untrained_model_forward.4} parent=5 // pred_check
      %p334 = pneg %p333
    $region30: #{untrained_model_forward.4} parent=5 // pred_check_branch
      %336 = sbr.rel (%p334) target = $region32
    $region31: #{untrained_model_forward.4} parent=5 // pred_region
      %s337 = ssub.s32 %s7, 2
      // Predicated region
      $region33: #{untrained_model_forward.4} parent=31 // pred_check
        %p338 = pneg %p62
      $region34: #{untrained_model_forward.4} parent=31 // pred_check_branch
        %340 = sbr.rel (%p338) target = $region36
      $region35: #{untrained_model_forward.4} parent=31 // pred_region
        %p341 = scmp.lt.s32.totalorder %s13, 1
        %s342 = scalar_select %p341, %s13, 1
        %s343 = smul.addr %s342, 14
        %s344 = smul.addr %s343, 8
        %s345 = scalar_lea.vmem %s1, %s344
      $region36: #{untrained_model_forward.4} parent=31 // pred_fallthru
        _
    $region32: #{untrained_model_forward.4} parent=5 // pred_fallthru
      _
  $region6: #{untrained_model_forward.4} parent=0 // loop_footer
    %s11 = sadd.s32 1, %s7
  $region7: #{untrained_model_forward.4} parent=0 // loop_footer_branch
    %6 = sbr.rel target = $region3
  $region8: #{untrained_model_forward.4} parent=0 // loop_exit
    _

// kernel: untrained_model_forward.3
$region0: #{untrained_model_forward.3}
  #allocation0 [shape = 'u32[]', space=smem, size = 0x4, offset = 0x4, fixed_abs, tag = 'smem constant byte address 0x4 - core index']
  #allocation1 [shape = 'u32[72,128]{1,0:T(1,128)}', space=vmem, size = 0x9000, scoped, tag = 'internal scratch']
  #allocation2 [shape = 'f32[256,64]{1,0:T(8,128)}', space=vmem, size = 0x20000, scoped, tag = 'scratch operand']
  %s0 = inlined_call_operand.vmem [shape: bf16[512,384], index: 0, kind: input, shape index: {}]
  %s1 = inlined_call_operand.vmem [shape: bf16[384,64], index: 1, kind: input, shape index: {}]
  %s2 = inlined_call_operand.vmem [shape: f32[1,64], index: 2, kind: input, shape index: {}]
  %s3 = inlined_call_operand.vmem [shape: f32[512,64], index: 3, kind: output, shape index: {}]
  %s4 = sld [smem:[#allocation0]]
  $region53: #{untrained_model_forward.3} parent=0
    _
  %s6 = ssub.s32 1, %s4
  %s7 = scalar_select 0, %s6, %s4
  loop: start=0, step=1, limit=4
  $region2: #{untrained_model_forward.3} parent=0 // loop_pre_header
    _
  $region3: #{untrained_model_forward.3} parent=0 // loop_header
    %s9 = sphi 0, %s13
    %p10 = scmp.ge.s32.totalorder %s9, 4
    %s16 = sphi 0, %s35
    %s17 = sphi 0, %s31
    %s18 = sphi 0, %s27
    %s19 = sphi 0, %s16
    %s20 = sphi 0, %s17
    %s21 = sphi 0, %s18
    %s22 = sphi 0, %s19
    %s23 = sphi 0, %s20
    %s24 = sphi 0, %s21
    %s40 = sphi 0, %s42
    %s43 = sphi 0, %s40
    %s44 = sphi 0, %s43
    %s60 = sphi 0, %s44
    %s68 = sphi 0, %s70
    %s71 = sphi 0, %s68
    %s72 = sphi 0, %s71
    %s88 = sphi 0, %s72
    %s94 = sphi 0, %s96
    %s97 = sphi 0, %s94
    %s98 = sphi 0, %s97
    %s114 = sphi 0, %s98
    %s122 = sphi 0, %s124
    %s125 = sphi 0, %s122
    %s126 = sphi 0, %s125
    %s142 = sphi 0, %s126
  $region4: #{untrained_model_forward.3} parent=0 // loop_header_branch
    %12 = sbr.rel (%p10) target = $region8
  $region5: #{untrained_model_forward.3} parent=0 // loop_body
    %s14 = ssub.s32 %s9, 1
    %s15 = ssub.s32 %s9, 2
    %s25 = sadd.s32 1, %s18
    %p26 = scmp.ge.s32.totalorder %s25, 1
    %s27 = scalar_select %p26, 0, %s25
    %s28 = sadd.s32 1, %s17
    %s29 = scalar_select %p26, %s28, %s17
    %p30 = scmp.ge.s32.totalorder %s29, 1
    %s31 = scalar_select %p30, 0, %s29
    %s32 = sadd.s32 1, %s16
    %s33 = scalar_select %p30, %s32, %s16
    %p34 = scmp.ge.s32.totalorder %s33, 2
    %s35 = scalar_select %p34, 0, %s33
    %s36 = ssub.s32 %s16, %s35
    %s37 = ssub.s32 %s18, %s27
    %s38 = sor.u32 %s36, %s37
    %p39 = scmp.eq.s32.totalorder %s38, 0
    %s41 = sadd.s32 %s40, 1
    %s42 = scalar_select %p39, %s40, %s41
    %p45 = pneg %p39
    %p46 = scmp.eq.s32.totalorder %s9, 1
    %p47 = por %p45, %p46
    %p48 = scmp.ne.s32.totalorder %s40, %s43
    %p49 = scmp.eq.s32.totalorder %s9, 0
    %p50 = por %p48, %p49
    %p51 = scmp.ne.s32.totalorder %s40, %s43
    %p52 = scmp.eq.s32.totalorder %s14, 1
    %p53 = por %p51, %p52
    %p54 = scmp.ne.s32.totalorder %s43, %s44
    %p55 = scmp.eq.s32.totalorder %s14, 0
    %p56 = por %p54, %p55
    %p57 = scmp.ne.s32.totalorder %s43, %s44
    %p58 = scmp.eq.s32.totalorder %s15, 1
    %p59 = por %p57, %p58
    %p61 = scmp.ne.s32.totalorder %s44, %s60
    %p62 = scmp.eq.s32.totalorder %s15, 0
    %p63 = por %p61, %p62
    %s64 = ssub.s32 %s18, %s27
    %s65 = ssub.s32 %s17, %s31
    %s66 = sor.u32 %s64, %s65
    %p67 = scmp.eq.s32.totalorder %s66, 0
    %s69 = sadd.s32 %s68, 1
    %s70 = scalar_select %p67, %s68, %s69
    %p73 = pneg %p67
    %p74 = scmp.eq.s32.totalorder %s9, 1
    %p75 = por %p73, %p74
    %p76 = scmp.ne.s32.totalorder %s68, %s71
    %p77 = scmp.eq.s32.totalorder %s9, 0
    %p78 = por %p76, %p77
    %p79 = scmp.ne.s32.totalorder %s68, %s71
    %p80 = scmp.eq.s32.totalorder %s14, 1
    %p81 = por %p79, %p80
    %p82 = scmp.ne.s32.totalorder %s71, %s72
    %p83 = scmp.eq.s32.totalorder %s14, 0
    %p84 = por %p82, %p83
    %p85 = scmp.ne.s32.totalorder %s71, %s72
    %p86 = scmp.eq.s32.totalorder %s15, 1
    %p87 = por %p85, %p86
    %p89 = scmp.ne.s32.totalorder %s72, %s88
    %p90 = scmp.eq.s32.totalorder %s15, 0
    %p91 = por %p89, %p90
    %s92 = ssub.s32 %s17, %s31
    %p93 = scmp.eq.s32.totalorder %s92, 0
    %s95 = sadd.s32 %s94, 1
    %s96 = scalar_select %p93, %s94, %s95
    %p99 = pneg %p93
    %p100 = scmp.eq.s32.totalorder %s9, 1
    %p101 = por %p99, %p100
    %p102 = scmp.ne.s32.totalorder %s94, %s97
    %p103 = scmp.eq.s32.totalorder %s9, 0
    %p104 = por %p102, %p103
    %p105 = scmp.ne.s32.totalorder %s94, %s97
    %p106 = scmp.eq.s32.totalorder %s14, 1
    %p107 = por %p105, %p106
    %p108 = scmp.ne.s32.totalorder %s97, %s98
    %p109 = scmp.eq.s32.totalorder %s14, 0
    %p110 = por %p108, %p109
    %p111 = scmp.ne.s32.totalorder %s97, %s98
    %p112 = scmp.eq.s32.totalorder %s15, 1
    %p113 = por %p111, %p112
    %p115 = scmp.ne.s32.totalorder %s98, %s114
    %p116 = scmp.eq.s32.totalorder %s15, 0
    %p117 = por %p115, %p116
    %s118 = ssub.s32 %s16, %s35
    %s119 = ssub.s32 %s17, %s31
    %s120 = sor.u32 %s118, %s119
    %p121 = scmp.eq.s32.totalorder %s120, 0
    %s123 = sadd.s32 %s122, 1
    %s124 = scalar_select %p121, %s122, %s123
    %p127 = pneg %p121
    %p128 = scmp.eq.s32.totalorder %s9, 1
    %p129 = por %p127, %p128
    %p130 = scmp.ne.s32.totalorder %s122, %s125
    %p131 = scmp.eq.s32.totalorder %s9, 0
    %p132 = por %p130, %p131
    %p133 = scmp.ne.s32.totalorder %s122, %s125
    %p134 = scmp.eq.s32.totalorder %s14, 1
    %p135 = por %p133, %p134
    %p136 = scmp.ne.s32.totalorder %s125, %s126
    %p137 = scmp.eq.s32.totalorder %s14, 0
    %p138 = por %p136, %p137
    %p139 = scmp.ne.s32.totalorder %s125, %s126
    %p140 = scmp.eq.s32.totalorder %s15, 1
    %p141 = por %p139, %p140
    %p143 = scmp.ne.s32.totalorder %s126, %s142
    %p144 = scmp.eq.s32.totalorder %s15, 0
    %p145 = por %p143, %p144
    %p146 = scmp.le.s32.totalorder 1, %s9
    %p147 = scmp.lt.s32.totalorder %s9, 3
    %p148 = pnand %p146, %p147
    %p149 = pneg %p148
    // Predicated region
    $region9: #{untrained_model_forward.3} parent=5 // pred_check
      _
    $region10: #{untrained_model_forward.3} parent=5 // pred_check_branch
      %151 = sbr.rel (%p148) target = $region12
    $region11: #{untrained_model_forward.3} parent=5 // pred_region
      %s152 = ssub.s32 %s9, 1
      // Predicated region
      $region13: #{untrained_model_forward.3} parent=11 // pred_check
        %p153 = pneg %p84
      $region14: #{untrained_model_forward.3} parent=11 // pred_check_branch
        %155 = sbr.rel (%p153) target = $region16
      $region15: #{untrained_model_forward.3} parent=11 // pred_region
        %s156 = smul.u32 48, %s21
        %p157 = scmp.lt.s32.totalorder %s156, 47
        %s158 = scalar_select %p157, %s156, 47
        %p159 = scmp.lt.s32.totalorder %s20, 0
        %s160 = scalar_select %p159, %s20, 0
        %s161 = sadd.s32 %s160, %s158
        %s162 = smul.addr %s161, 4
        %s163 = scalar_lea.vmem %s1, %s162
        %s164 = smul.u32 48, %s21
      $region16: #{untrained_model_forward.3} parent=11 // pred_fallthru
        _
      // Predicated region
      $region17: #{untrained_model_forward.3} parent=11 // pred_check
        %p165 = pneg %p110
      $region18: #{untrained_model_forward.3} parent=11 // pred_check_branch
        %167 = sbr.rel (%p165) target = $region20
      $region19: #{untrained_model_forward.3} parent=11 // pred_region
        %p168 = scmp.lt.s32.totalorder %s20, 0
        %s169 = scalar_select %p168, %s20, 0
        %s170 = scalar_lea.vmem %s2, %s169
      $region20: #{untrained_model_forward.3} parent=11 // pred_fallthru
        _
    $region12: #{untrained_model_forward.3} parent=5 // pred_fallthru
      _
    %p171 = scmp.lt.s32.totalorder %s9, 2
    // Predicated region
    $region21: #{untrained_model_forward.3} parent=5 // pred_check
      %p172 = pneg %p171
    $region22: #{untrained_model_forward.3} parent=5 // pred_check_branch
      %174 = sbr.rel (%p172) target = $region24
    $region23: #{untrained_model_forward.3} parent=5 // pred_region
      // Predicated region
      $region25: #{untrained_model_forward.3} parent=23 // pred_check
        %p175 = pneg %p50
      $region26: #{untrained_model_forward.3} parent=23 // pred_check_branch
        %177 = sbr.rel (%p175) target = $region28
      $region27: #{untrained_model_forward.3} parent=23 // pred_region
        %s178 = smul.u32 32, %s16
        %s179 = smul.u32 3, %s18
        %p180 = scmp.lt.s32.totalorder %s178, 63
        %s181 = scalar_select %p180, %s178, 63
        %p182 = scmp.lt.s32.totalorder %s179, 2
        %s183 = scalar_select %p182, %s179, 2
        %s184 = smul.addr %s181, 3
        %s185 = sadd.s32 %s183, %s184
        %s186 = smul.addr %s185, 4
        %s187 = scalar_lea.vmem %s0, %s186
        %s188 = smul.u32 32, %s16
        %s189 = smul.u32 3, %s18
      $region28: #{untrained_model_forward.3} parent=23 // pred_fallthru
        _
    $region24: #{untrained_model_forward.3} parent=5 // pred_fallthru
      _
    %p190 = scmp.le.s32.totalorder 1, %s9
    %p191 = scmp.lt.s32.totalorder %s9, 3
    %p192 = pnand %p190, %p191
    %p193 = pneg %p192
    // Predicated region
    $region29: #{untrained_model_forward.3} parent=5 // pred_check
      _
    $region30: #{untrained_model_forward.3} parent=5 // pred_check_branch
      %195 = sbr.rel (%p192) target = $region32
    $region31: #{untrained_model_forward.3} parent=5 // pred_region
      %s196 = ssub.s32 %s9, 1
      %s197 = smul.u32 32, %s19
      %s198 = smul.u32 3, %s21
      %p199 = scmp.lt.s32.totalorder %s197, 63
      %s200 = scalar_select %p199, %s197, 63
      %p201 = scmp.lt.s32.totalorder %s198, 2
      %s202 = scalar_select %p201, %s198, 2
      %s203 = smul.addr %s200, 3
      %s204 = sadd.s32 %s202, %s203
      %s205 = smul.addr %s204, 4
      %s206 = scalar_lea.vmem %s0, %s205
      %p207 = pneg %p56
      %p208 = pneg %p53
      %s209 = smul.u32 48, %s21
      %p210 = scmp.lt.s32.totalorder %s209, 47
      %s211 = scalar_select %p210, %s209, 47
      %p212 = scmp.lt.s32.totalorder %s20, 0
      %s213 = scalar_select %p212, %s20, 0
      %s214 = sadd.s32 %s213, %s211
      %s215 = smul.addr %s214, 4
      %s216 = scalar_lea.vmem %s1, %s215
      %p217 = pneg %p84
      %p218 = pneg %p81
      %p219 = scmp.lt.s32.totalorder %s20, 0
      %s220 = scalar_select %p219, %s20, 0
      %s221 = scalar_lea.vmem %s2, %s220
      %p222 = pneg %p110
      %p223 = pneg %p107
      %p224 = pneg %p138
      %p225 = pneg %p135
      %s226 = smul.u32 32, %s19
      %p227 = scmp.lt.s32.totalorder %s226, 63
      %s228 = scalar_select %p227, %s226, 63
      %p229 = scmp.lt.s32.totalorder %s20, 0
      %s230 = scalar_select %p229, %s20, 0
      %s231 = sadd.s32 %s230, %s228
      %s232 = smul.addr %s231, 8
      %s233 = scalar_lea.vmem %s3, %s232
      %s234 = smul.u32 32, %s19
      %s235 = smul.u32 3, %s21
      %p236 = scmp.lt.s32.totalorder %s234, 63
      %s237 = scalar_select %p236, %s234, 63
      %p238 = scmp.lt.s32.totalorder %s235, 2
      %s239 = scalar_select %p238, %s235, 2
      %s240 = smul.addr %s237, 3
      %s241 = sadd.s32 %s239, %s240
      %s242 = smul.addr %s241, 4
      %s243 = scalar_lea.vmem %s0, %s242
      %s244 = smul.u32 32, %s19
      %s245 = smul.u32 3, %s21
      %s246 = smul.u32 48, %s21
      %p247 = scmp.lt.s32.totalorder %s246, 47
      %s248 = scalar_select %p247, %s246, 47
      %p249 = scmp.lt.s32.totalorder %s20, 0
      %s250 = scalar_select %p249, %s20, 0
      %s251 = sadd.s32 %s250, %s248
      %s252 = smul.addr %s251, 4
      %s253 = scalar_lea.vmem %s1, %s252
      %s254 = smul.u32 48, %s21
      %p255 = scmp.lt.s32.totalorder %s20, 0
      %s256 = scalar_select %p255, %s20, 0
      %s257 = scalar_lea.vmem %s2, %s256
      %s258 = smul.u32 32, %s19
      %p259 = scmp.lt.s32.totalorder %s258, 63
      %s260 = scalar_select %p259, %s258, 63
      %p261 = scmp.lt.s32.totalorder %s20, 0
      %s262 = scalar_select %p261, %s20, 0
      %s263 = sadd.s32 %s262, %s260
      %s264 = smul.addr %s263, 8
      %s265 = scalar_lea.vmem %s3, %s264
      %s266 = smul.u32 32, %s19
      %p267 = scmp.eq.s32.totalorder %s21, 0
      // Predicated region
      $region33: #{untrained_model_forward.3} parent=31 // pred_check
        %p268 = pneg %p267
      $region34: #{untrained_model_forward.3} parent=31 // pred_check_branch
        %270 = sbr.rel (%p268) target = $region36
      $region35: #{untrained_model_forward.3} parent=31 // pred_region
        %vm271 = vcmask 523264
        %272 = vst.msk [vmem:[#allocation2] sm:$0xff] %vm271, 0.0
        %273 = vst.msk [vmem:[#allocation2 + $0x8] sm:$0xff] %vm271, 0.0
        %274 = vst.msk [vmem:[#allocation2 + $0x10] sm:$0xff] %vm271, 0.0
        %275 = vst.msk [vmem:[#allocation2 + $0x18] sm:$0xff] %vm271, 0.0
        %276 = vst.msk [vmem:[#allocation2 + $0x20] sm:$0xff] %vm271, 0.0
        %277 = vst.msk [vmem:[#allocation2 + $0x28] sm:$0xff] %vm271, 0.0
        %278 = vst.msk [vmem:[#allocation2 + $0x30] sm:$0xff] %vm271, 0.0
        %279 = vst.msk [vmem:[#allocation2 + $0x38] sm:$0xff] %vm271, 0.0
        %280 = vst.msk [vmem:[#allocation2 + $0x40] sm:$0xff] %vm271, 0.0
        %281 = vst.msk [vmem:[#allocation2 + $0x48] sm:$0xff] %vm271, 0.0
        %282 = vst.msk [vmem:[#allocation2 + $0x50] sm:$0xff] %vm271, 0.0
        %283 = vst.msk [vmem:[#allocation2 + $0x58] sm:$0xff] %vm271, 0.0
        %284 = vst.msk [vmem:[#allocation2 + $0x60] sm:$0xff] %vm271, 0.0
        %285 = vst.msk [vmem:[#allocation2 + $0x68] sm:$0xff] %vm271, 0.0
        %286 = vst.msk [vmem:[#allocation2 + $0x70] sm:$0xff] %vm271, 0.0
        %287 = vst.msk [vmem:[#allocation2 + $0x78] sm:$0xff] %vm271, 0.0
        %288 = vst.msk [vmem:[#allocation2 + $0x80] sm:$0xff] %vm271, 0.0
        %289 = vst.msk [vmem:[#allocation2 + $0x88] sm:$0xff] %vm271, 0.0
        %290 = vst.msk [vmem:[#allocation2 + $0x90] sm:$0xff] %vm271, 0.0
        %291 = vst.msk [vmem:[#allocation2 + $0x98] sm:$0xff] %vm271, 0.0
        %292 = vst.msk [vmem:[#allocation2 + $0xa0] sm:$0xff] %vm271, 0.0
        %293 = vst.msk [vmem:[#allocation2 + $0xa8] sm:$0xff] %vm271, 0.0
        %294 = vst.msk [vmem:[#allocation2 + $0xb0] sm:$0xff] %vm271, 0.0
        %295 = vst.msk [vmem:[#allocation2 + $0xb8] sm:$0xff] %vm271, 0.0
        %296 = vst.msk [vmem:[#allocation2 + $0xc0] sm:$0xff] %vm271, 0.0
        %297 = vst.msk [vmem:[#allocation2 + $0xc8] sm:$0xff] %vm271, 0.0
        %298 = vst.msk [vmem:[#allocation2 + $0xd0] sm:$0xff] %vm271, 0.0
        %299 = vst.msk [vmem:[#allocation2 + $0xd8] sm:$0xff] %vm271, 0.0
        %300 = vst.msk [vmem:[#allocation2 + $0xe0] sm:$0xff] %vm271, 0.0
        %301 = vst.msk [vmem:[#allocation2 + $0xe8] sm:$0xff] %vm271, 0.0
        %302 = vst.msk [vmem:[#allocation2 + $0xf0] sm:$0xff] %vm271, 0.0
        %303 = vst.msk [vmem:[#allocation2 + $0xf8] sm:$0xff] %vm271, 0.0
      $region36: #{untrained_model_forward.3} parent=31 // pred_fallthru
        _
      %v304 = vld [vmem:[#allocation2] sm:$0xff]
      %v305 = vld [vmem:[#allocation2 + $0x8] sm:$0xff]
      %v306 = vld [vmem:[#allocation2 + $0x10] sm:$0xff]
      %v307 = vld [vmem:[#allocation2 + $0x18] sm:$0xff]
      %v308 = vld [vmem:[#allocation2 + $0x20] sm:$0xff]
      %v309 = vld [vmem:[#allocation2 + $0x28] sm:$0xff]
      %v310 = vld [vmem:[#allocation2 + $0x30] sm:$0xff]
      %v311 = vld [vmem:[#allocation2 + $0x38] sm:$0xff]
      %v312 = vld [vmem:[#allocation2 + $0x40] sm:$0xff]
      %v313 = vld [vmem:[#allocation2 + $0x48] sm:$0xff]
      %v314 = vld [vmem:[#allocation2 + $0x50] sm:$0xff]
      %v315 = vld [vmem:[#allocation2 + $0x58] sm:$0xff]
      %v316 = vld [vmem:[#allocation2 + $0x60] sm:$0xff]
      %v317 = vld [vmem:[#allocation2 + $0x68] sm:$0xff]
      %v318 = vld [vmem:[#allocation2 + $0x70] sm:$0xff]
      %v319 = vld [vmem:[#allocation2 + $0x78] sm:$0xff]
      %v320 = vld [vmem:[#allocation2 + $0x80] sm:$0xff]
      %v321 = vld [vmem:[#allocation2 + $0x88] sm:$0xff]
      %v322 = vld [vmem:[#allocation2 + $0x90] sm:$0xff]
      %v323 = vld [vmem:[#allocation2 + $0x98] sm:$0xff]
      %v324 = vld [vmem:[#allocation2 + $0xa0] sm:$0xff]
      %v325 = vld [vmem:[#allocation2 + $0xa8] sm:$0xff]
      %v326 = vld [vmem:[#allocation2 + $0xb0] sm:$0xff]
      %v327 = vld [vmem:[#allocation2 + $0xb8] sm:$0xff]
      %v328 = vld [vmem:[#allocation2 + $0xc0] sm:$0xff]
      %v329 = vld [vmem:[#allocation2 + $0xc8] sm:$0xff]
      %v330 = vld [vmem:[#allocation2 + $0xd0] sm:$0xff]
      %v331 = vld [vmem:[#allocation2 + $0xd8] sm:$0xff]
      %v332 = vld [vmem:[#allocation2 + $0xe0] sm:$0xff]
      %v333 = vld [vmem:[#allocation2 + $0xe8] sm:$0xff]
      %v334 = vld [vmem:[#allocation2 + $0xf0] sm:$0xff]
      %v335 = vld [vmem:[#allocation2 + $0xf8] sm:$0xff]
      %v336 = vld [vmem:[%s243] sm:$0xff]
      %v337 = vld [vmem:[%s243 + $0x8] sm:$0xf]
      %v338 = vld [vmem:[%s243 + $0xc] sm:$0xff]
      %v339 = vld [vmem:[%s243 + $0x14] sm:$0xf]
      %v340 = vld [vmem:[%s243 + $0x18] sm:$0xff]
      %v341 = vld [vmem:[%s243 + $0x20] sm:$0xf]
      %v342 = vld [vmem:[%s243 + $0x24] sm:$0xff]
      %v343 = vld [vmem:[%s243 + $0x2c] sm:$0xf]
      %v344 = vld [vmem:[%s243 + $0x30] sm:$0xff]
      %v345 = vld [vmem:[%s243 + $0x38] sm:$0xf]
      %v346 = vld [vmem:[%s243 + $0x3c] sm:$0xff]
      %v347 = vld [vmem:[%s243 + $0x44] sm:$0xf]
      %v348 = vld [vmem:[%s243 + $0x48] sm:$0xff]
      %v349 = vld [vmem:[%s243 + $0x50] sm:$0xf]
      %v350 = vld [vmem:[%s243 + $0x54] sm:$0xff]
      %v351 = vld [vmem:[%s243 + $0x5c] sm:$0xf]
      %v352 = vld [vmem:[%s243 + $0x60] sm:$0xff]
      %v353 = vld [vmem:[%s243 + $0x68] sm:$0xf]
      %v354 = vld [vmem:[%s243 + $0x6c] sm:$0xff]
      %v355 = vld [vmem:[%s243 + $0x74] sm:$0xf]
      %v356 = vld [vmem:[%s243 + $0x78] sm:$0xff]
      %v357 = vld [vmem:[%s243 + $0x80] sm:$0xf]
      %v358 = vld [vmem:[%s243 + $0x84] sm:$0xff]
      %v359 = vld [vmem:[%s243 + $0x8c] sm:$0xf]
      %v360 = vld [vmem:[%s243 + $0x90] sm:$0xff]
      %v361 = vld [vmem:[%s243 + $0x98] sm:$0xf]
      %v362 = vld [vmem:[%s243 + $0x9c] sm:$0xff]
      %v363 = vld [vmem:[%s243 + $0xa4] sm:$0xf]
      %v364 = vld [vmem:[%s243 + $0xa8] sm:$0xff]
      %v365 = vld [vmem:[%s243 + $0xb0] sm:$0xf]
      %v366 = vld [vmem:[%s243 + $0xb4] sm:$0xff]
      %v367 = vld [vmem:[%s243 + $0xbc] sm:$0xf]
      %v368 = vld [vmem:[%s243 + $0xc0] sm:$0xff]
      %v369 = vld [vmem:[%s243 + $0xc8] sm:$0xf]
      %v370 = vld [vmem:[%s243 + $0xcc] sm:$0xff]
      %v371 = vld [vmem:[%s243 + $0xd4] sm:$0xf]
      %v372 = vld [vmem:[%s243 + $0xd8] sm:$0xff]
      %v373 = vld [vmem:[%s243 + $0xe0] sm:$0xf]
      %v374 = vld [vmem:[%s243 + $0xe4] sm:$0xff]
      %v375 = vld [vmem:[%s243 + $0xec] sm:$0xf]
      %v376 = vld [vmem:[%s243 + $0xf0] sm:$0xff]
      %v377 = vld [vmem:[%s243 + $0xf8] sm:$0xf]
      %v378 = vld [vmem:[%s243 + $0xfc] sm:$0xff]
      %v379 = vld [vmem:[%s243 + $0x104] sm:$0xf]
      %v380 = vld [vmem:[%s243 + $0x108] sm:$0xff]
      %v381 = vld [vmem:[%s243 + $0x110] sm:$0xf]
      %v382 = vld [vmem:[%s243 + $0x114] sm:$0xff]
      %v383 = vld [vmem:[%s243 + $0x11c] sm:$0xf]
      %v384 = vld [vmem:[%s243 + $0x120] sm:$0xff]
      %v385 = vld [vmem:[%s243 + $0x128] sm:$0xf]
      %v386 = vld [vmem:[%s243 + $0x12c] sm:$0xff]
      %v387 = vld [vmem:[%s243 + $0x134] sm:$0xf]
      %v388 = vld [vmem:[%s243 + $0x138] sm:$0xff]
      %v389 = vld [vmem:[%s243 + $0x140] sm:$0xf]
      %v390 = vld [vmem:[%s243 + $0x144] sm:$0xff]
      %v391 = vld [vmem:[%s243 + $0x14c] sm:$0xf]
      %v392 = vld [vmem:[%s243 + $0x150] sm:$0xff]
      %v393 = vld [vmem:[%s243 + $0x158] sm:$0xf]
      %v394 = vld [vmem:[%s243 + $0x15c] sm:$0xff]
      %v395 = vld [vmem:[%s243 + $0x164] sm:$0xf]
      %v396 = vld [vmem:[%s243 + $0x168] sm:$0xff]
      %v397 = vld [vmem:[%s243 + $0x170] sm:$0xf]
      %v398 = vld [vmem:[%s243 + $0x174] sm:$0xff]
      %v399 = vld [vmem:[%s243 + $0x17c] sm:$0xf]
      %v400 = vld [vmem:[%s253] sm:$0xf]
      %v401 = vld [vmem:[%s253 + $0x4] sm:$0xf]
      %v402 = vld [vmem:[%s253 + $0x8] sm:$0xf]
      %v403 = vld [vmem:[%s253 + $0xc] sm:$0xf]
      %v404 = vld [vmem:[%s253 + $0x10] sm:$0xf]
      %v405 = vld [vmem:[%s253 + $0x14] sm:$0xf]
      %v406 = vld [vmem:[%s253 + $0x18] sm:$0xf]
      %v407 = vld [vmem:[%s253 + $0x1c] sm:$0xf]
      %v408 = vld [vmem:[%s253 + $0x20] sm:$0xf]
      %v409 = vld [vmem:[%s253 + $0x24] sm:$0xf]
      %v410 = vld [vmem:[%s253 + $0x28] sm:$0xf]
      %v411 = vld [vmem:[%s253 + $0x2c] sm:$0xf]
      %v412 = vld [vmem:[%s253 + $0x30] sm:$0xf]
      %v413 = vld [vmem:[%s253 + $0x34] sm:$0xf]
      %v414 = vld [vmem:[%s253 + $0x38] sm:$0xf]
      %v415 = vld [vmem:[%s253 + $0x3c] sm:$0xf]
      %v416 = vld [vmem:[%s253 + $0x40] sm:$0xf]
      %v417 = vld [vmem:[%s253 + $0x44] sm:$0xf]
      %v418 = vld [vmem:[%s253 + $0x48] sm:$0xf]
      %v419 = vld [vmem:[%s253 + $0x4c] sm:$0xf]
      %v420 = vld [vmem:[%s253 + $0x50] sm:$0xf]
      %v421 = vld [vmem:[%s253 + $0x54] sm:$0xf]
      %v422 = vld [vmem:[%s253 + $0x58] sm:$0xf]
      %v423 = vld [vmem:[%s253 + $0x5c] sm:$0xf]
      %v424 = vld [vmem:[%s253 + $0x60] sm:$0xf]
      %v425 = vld [vmem:[%s253 + $0x64] sm:$0xf]
      %v426 = vld [vmem:[%s253 + $0x68] sm:$0xf]
      %v427 = vld [vmem:[%s253 + $0x6c] sm:$0xf]
      %v428 = vld [vmem:[%s253 + $0x70] sm:$0xf]
      %v429 = vld [vmem:[%s253 + $0x74] sm:$0xf]
      %v430 = vld [vmem:[%s253 + $0x78] sm:$0xf]
      %v431 = vld [vmem:[%s253 + $0x7c] sm:$0xf]
      %v432 = vld [vmem:[%s253 + $0x80] sm:$0xf]
      %v433 = vld [vmem:[%s253 + $0x84] sm:$0xf]
      %v434 = vld [vmem:[%s253 + $0x88] sm:$0xf]
      %v435 = vld [vmem:[%s253 + $0x8c] sm:$0xf]
      %v436 = vld [vmem:[%s253 + $0x90] sm:$0xf]
      %v437 = vld [vmem:[%s253 + $0x94] sm:$0xf]
      %v438 = vld [vmem:[%s253 + $0x98] sm:$0xf]
      %v439 = vld [vmem:[%s253 + $0x9c] sm:$0xf]
      %v440 = vld [vmem:[%s253 + $0xa0] sm:$0xf]
      %v441 = vld [vmem:[%s253 + $0xa4] sm:$0xf]
      %v442 = vld [vmem:[%s253 + $0xa8] sm:$0xf]
      %v443 = vld [vmem:[%s253 + $0xac] sm:$0xf]
      %v444 = vld [vmem:[%s253 + $0xb0] sm:$0xf]
      %v445 = vld [vmem:[%s253 + $0xb4] sm:$0xf]
      %v446 = vld [vmem:[%s253 + $0xb8] sm:$0xf]
      %v447 = vld [vmem:[%s253 + $0xbc] sm:$0xf]
      %v512 = vunpack.c.l.b16 %v336
      %v513 = vunpack.c.h.b16 %v336
      %v514 = vunpack.c.l.b16 %v337
      %v515 = vunpack.c.l.b16 %v338
      %v516 = vunpack.c.h.b16 %v338
      %v517 = vunpack.c.l.b16 %v339
      %v518 = vunpack.c.l.b16 %v340
      %v519 = vunpack.c.h.b16 %v340
      %v520 = vunpack.c.l.b16 %v341
      %v521 = vunpack.c.l.b16 %v342
      %v522 = vunpack.c.h.b16 %v342
      %v523 = vunpack.c.l.b16 %v343
      %v524 = vunpack.c.l.b16 %v344
      %v525 = vunpack.c.h.b16 %v344
      %v526 = vunpack.c.l.b16 %v345
      %v527 = vunpack.c.l.b16 %v346
      %v528 = vunpack.c.h.b16 %v346
      %v529 = vunpack.c.l.b16 %v347
      %v530 = vunpack.c.l.b16 %v348
      %v531 = vunpack.c.h.b16 %v348
      %v532 = vunpack.c.l.b16 %v349
      %v533 = vunpack.c.l.b16 %v350
      %v534 = vunpack.c.h.b16 %v350
      %v535 = vunpack.c.l.b16 %v351
      %v536 = vunpack.c.l.b16 %v352
      %v537 = vunpack.c.h.b16 %v352
      %v538 = vunpack.c.l.b16 %v353
      %v539 = vunpack.c.l.b16 %v354
      %v540 = vunpack.c.h.b16 %v354
      %v541 = vunpack.c.l.b16 %v355
      %v542 = vunpack.c.l.b16 %v356
      %v543 = vunpack.c.h.b16 %v356
      %v544 = vunpack.c.l.b16 %v357
      %v545 = vunpack.c.l.b16 %v358
      %v546 = vunpack.c.h.b16 %v358
      %v547 = vunpack.c.l.b16 %v359
      %v548 = vunpack.c.l.b16 %v360
      %v549 = vunpack.c.h.b16 %v360
      %v550 = vunpack.c.l.b16 %v361
      %v551 = vunpack.c.l.b16 %v362
      %v552 = vunpack.c.h.b16 %v362
      %v553 = vunpack.c.l.b16 %v363
      %v554 = vunpack.c.l.b16 %v364
      %v555 = vunpack.c.h.b16 %v364
      %v556 = vunpack.c.l.b16 %v365
      %v557 = vunpack.c.l.b16 %v366
      %v558 = vunpack.c.h.b16 %v366
      %v559 = vunpack.c.l.b16 %v367
      %v560 = vunpack.c.l.b16 %v368
      %v561 = vunpack.c.h.b16 %v368
      %v562 = vunpack.c.l.b16 %v369
      %v563 = vunpack.c.l.b16 %v370
      %v564 = vunpack.c.h.b16 %v370
      %v565 = vunpack.c.l.b16 %v371
      %v566 = vunpack.c.l.b16 %v372
      %v567 = vunpack.c.h.b16 %v372
      %v568 = vunpack.c.l.b16 %v373
      %v569 = vunpack.c.l.b16 %v374
      %v570 = vunpack.c.h.b16 %v374
      %v571 = vunpack.c.l.b16 %v375
      %v572 = vunpack.c.l.b16 %v376
      %v573 = vunpack.c.h.b16 %v376
      %v574 = vunpack.c.l.b16 %v377
      %v575 = vunpack.c.l.b16 %v378
      %v576 = vunpack.c.h.b16 %v378
      %v577 = vunpack.c.l.b16 %v379
      %v578 = vunpack.c.l.b16 %v380
      %v579 = vunpack.c.h.b16 %v380
      %v580 = vunpack.c.l.b16 %v381
      %v581 = vunpack.c.l.b16 %v382
      %v582 = vunpack.c.h.b16 %v382
      %v583 = vunpack.c.l.b16 %v383
      %v584 = vunpack.c.l.b16 %v384
      %v585 = vunpack.c.h.b16 %v384
      %v586 = vunpack.c.l.b16 %v385
      %v587 = vunpack.c.l.b16 %v386
      %v588 = vunpack.c.h.b16 %v386
      %v589 = vunpack.c.l.b16 %v387
      %v590 = vunpack.c.l.b16 %v388
      %v591 = vunpack.c.h.b16 %v388
      %v592 = vunpack.c.l.b16 %v389
      %v593 = vunpack.c.l.b16 %v390
      %v594 = vunpack.c.h.b16 %v390
      %v595 = vunpack.c.l.b16 %v391
      %v596 = vunpack.c.l.b16 %v392
      %v597 = vunpack.c.h.b16 %v392
      %v598 = vunpack.c.l.b16 %v393
      %v599 = vunpack.c.l.b16 %v394
      %v600 = vunpack.c.h.b16 %v394
      %v601 = vunpack.c.l.b16 %v395
      %v602 = vunpack.c.l.b16 %v396
      %v603 = vunpack.c.h.b16 %v396
      %v604 = vunpack.c.l.b16 %v397
      %v605 = vunpack.c.l.b16 %v398
      %v606 = vunpack.c.h.b16 %v398
      %v607 = vunpack.c.l.b16 %v399
      %v608 = vpack.c.b16 %v515, %v512
      %v609 = vpack.c.b16 %v516, %v513
      %v610 = vpack.c.b16 %v517, %v514
      %v611 = vpack.c.b16 %v521, %v518
      %v612 = vpack.c.b16 %v522, %v519
      %v613 = vpack.c.b16 %v523, %v520
      %v614 = vpack.c.b16 %v527, %v524
      %v615 = vpack.c.b16 %v528, %v525
      %v616 = vpack.c.b16 %v529, %v526
      %v617 = vpack.c.b16 %v533, %v530
      %v618 = vpack.c.b16 %v534, %v531
      %v619 = vpack.c.b16 %v535, %v532
      %v620 = vpack.c.b16 %v539, %v536
      %v621 = vpack.c.b16 %v540, %v537
      %v622 = vpack.c.b16 %v541, %v538
      %v623 = vpack.c.b16 %v545, %v542
      %v624 = vpack.c.b16 %v546, %v543
      %v625 = vpack.c.b16 %v547, %v544
      %v626 = vpack.c.b16 %v551, %v548
      %v627 = vpack.c.b16 %v552, %v549
      %v628 = vpack.c.b16 %v553, %v550
      %v629 = vpack.c.b16 %v557, %v554
      %v630 = vpack.c.b16 %v558, %v555
      %v631 = vpack.c.b16 %v559, %v556
      %v632 = vpack.c.b16 %v563, %v560
      %v633 = vpack.c.b16 %v564, %v561
      %v634 = vpack.c.b16 %v565, %v562
      %v635 = vpack.c.b16 %v569, %v566
      %v636 = vpack.c.b16 %v570, %v567
      %v637 = vpack.c.b16 %v571, %v568
      %v638 = vpack.c.b16 %v575, %v572
      %v639 = vpack.c.b16 %v576, %v573
      %v640 = vpack.c.b16 %v577, %v574
      %v641 = vpack.c.b16 %v581, %v578
      %v642 = vpack.c.b16 %v582, %v579
      %v643 = vpack.c.b16 %v583, %v580
      %v644 = vpack.c.b16 %v587, %v584
      %v645 = vpack.c.b16 %v588, %v585
      %v646 = vpack.c.b16 %v589, %v586
      %v647 = vpack.c.b16 %v593, %v590
      %v648 = vpack.c.b16 %v594, %v591
      %v649 = vpack.c.b16 %v595, %v592
      %v650 = vpack.c.b16 %v599, %v596
      %v651 = vpack.c.b16 %v600, %v597
      %v652 = vpack.c.b16 %v601, %v598
      %v653 = vpack.c.b16 %v605, %v602
      %v654 = vpack.c.b16 %v606, %v603
      %v655 = vpack.c.b16 %v607, %v604
      %v752 = vunpack.c.l.b16 %v400
      %v753 = vunpack.c.l.b16 %v401
      %v754 = vunpack.c.l.b16 %v402
      %v755 = vunpack.c.l.b16 %v403
      %v756 = vunpack.c.l.b16 %v404
      %v757 = vunpack.c.l.b16 %v405
      %v758 = vunpack.c.l.b16 %v406
      %v759 = vunpack.c.l.b16 %v407
      %v760 = vunpack.c.l.b16 %v408
      %v761 = vunpack.c.l.b16 %v409
      %v762 = vunpack.c.l.b16 %v410
      %v763 = vunpack.c.l.b16 %v411
      %v764 = vunpack.c.l.b16 %v412
      %v765 = vunpack.c.l.b16 %v413
      %v766 = vunpack.c.l.b16 %v414
      %v767 = vunpack.c.l.b16 %v415
      %v768 = vunpack.c.l.b16 %v416
      %v769 = vunpack.c.l.b16 %v417
      %v770 = vunpack.c.l.b16 %v418
      %v771 = vunpack.c.l.b16 %v419
      %v772 = vunpack.c.l.b16 %v420
      %v773 = vunpack.c.l.b16 %v421
      %v774 = vunpack.c.l.b16 %v422
      %v775 = vunpack.c.l.b16 %v423
      %v776 = vunpack.c.l.b16 %v424
      %v777 = vunpack.c.l.b16 %v425
      %v778 = vunpack.c.l.b16 %v426
      %v779 = vunpack.c.l.b16 %v427
      %v780 = vunpack.c.l.b16 %v428
      %v781 = vunpack.c.l.b16 %v429
      %v782 = vunpack.c.l.b16 %v430
      %v783 = vunpack.c.l.b16 %v431
      %v784 = vunpack.c.l.b16 %v432
      %v785 = vunpack.c.l.b16 %v433
      %v786 = vunpack.c.l.b16 %v434
      %v787 = vunpack.c.l.b16 %v435
      %v788 = vunpack.c.l.b16 %v436
      %v789 = vunpack.c.l.b16 %v437
      %v790 = vunpack.c.l.b16 %v438
      %v791 = vunpack.c.l.b16 %v439
      %v792 = vunpack.c.l.b16 %v440
      %v793 = vunpack.c.l.b16 %v441
      %v794 = vunpack.c.l.b16 %v442
      %v795 = vunpack.c.l.b16 %v443
      %v796 = vunpack.c.l.b16 %v444
      %v797 = vunpack.c.l.b16 %v445
      %v798 = vunpack.c.l.b16 %v446
      %v799 = vunpack.c.l.b16 %v447
      %v800 = vpack.c.b16 %v753, %v752
      %v801 = vpack.c.b16 %v755, %v754
      %v802 = vpack.c.b16 %v757, %v756
      %v803 = vpack.c.b16 %v759, %v758
      %v804 = vpack.c.b16 %v761, %v760
      %v805 = vpack.c.b16 %v763, %v762
      %v806 = vpack.c.b16 %v765, %v764
      %v807 = vpack.c.b16 %v767, %v766
      %v808 = vpack.c.b16 %v769, %v768
      %v809 = vpack.c.b16 %v771, %v770
      %v810 = vpack.c.b16 %v773, %v772
      %v811 = vpack.c.b16 %v775, %v774
      %v812 = vpack.c.b16 %v777, %v776
      %v813 = vpack.c.b16 %v779, %v778
      %v814 = vpack.c.b16 %v781, %v780
      %v815 = vpack.c.b16 %v783, %v782
      %v816 = vpack.c.b16 %v785, %v784
      %v817 = vpack.c.b16 %v787, %v786
      %v818 = vpack.c.b16 %v789, %v788
      %v819 = vpack.c.b16 %v791, %v790
      %v820 = vpack.c.b16 %v793, %v792
      %v821 = vpack.c.b16 %v795, %v794
      %v822 = vpack.c.b16 %v797, %v796
      %v823 = vpack.c.b16 %v799, %v798
      %848 = vmatpush.bf16.msra.mxu0 %v807
      %849 = vmatpush.bf16.msra.mxu0 %v806
      %850 = vmatpush.bf16.msra.mxu0 %v805
      %851 = vmatpush.bf16.msra.mxu0 %v804
      %852 = vmatpush.bf16.msra.mxu0 %v803
      %853 = vmatpush.bf16.msra.mxu0 %v802
      %854 = vmatpush.bf16.msra.mxu0 %v801
      %855 = vmatpush.bf16.msra.mxu0 %v800
      %856 = vmatmul.bf16.gmra.mxu0 %v608
      %v857 = vpop.f32.mrf.mxu0
      %v858 = vadd.f32 0.0, %v857
      %v859 = vpop.f32.mrf.mxu0
      %v860 = vadd.f32 0.0, %v859
      %861 = vmatmul.bf16.gmra.mxu0 %v611
      %v862 = vpop.f32.mrf.mxu0
      %v863 = vadd.f32 0.0, %v862
      %v864 = vpop.f32.mrf.mxu0
      %v865 = vadd.f32 0.0, %v864
      %866 = vmatmul.bf16.gmra.mxu0 %v614
      %v867 = vpop.f32.mrf.mxu0
      %v868 = vadd.f32 0.0, %v867
      %v869 = vpop.f32.mrf.mxu0
      %v870 = vadd.f32 0.0, %v869
      %871 = vmatmul.bf16.gmra.mxu0 %v617
      %v872 = vpop.f32.mrf.mxu0
      %v873 = vadd.f32 0.0, %v872
      %v874 = vpop.f32.mrf.mxu0
      %v875 = vadd.f32 0.0, %v874
      %876 = vmatmul.bf16.gmra.mxu0 %v620
      %v877 = vpop.f32.mrf.mxu0
      %v878 = vadd.f32 0.0, %v877
      %v879 = vpop.f32.mrf.mxu0
      %v880 = vadd.f32 0.0, %v879
      %881 = vmatmul.bf16.gmra.mxu0 %v623
      %v882 = vpop.f32.mrf.mxu0
      %v883 = vadd.f32 0.0, %v882
      %v884 = vpop.f32.mrf.mxu0
      %v885 = vadd.f32 0.0, %v884
      %886 = vmatmul.bf16.gmra.mxu0 %v626
      %v887 = vpop.f32.mrf.mxu0
      %v888 = vadd.f32 0.0, %v887
      %v889 = vpop.f32.mrf.mxu0
      %v890 = vadd.f32 0.0, %v889
      %891 = vmatmul.bf16.gmra.mxu0 %v629
      %v892 = vpop.f32.mrf.mxu0
      %v893 = vadd.f32 0.0, %v892
      %v894 = vpop.f32.mrf.mxu0
      %v895 = vadd.f32 0.0, %v894
      %896 = vmatmul.bf16.gmra.mxu0 %v632
      %v897 = vpop.f32.mrf.mxu0
      %v898 = vadd.f32 0.0, %v897
      %v899 = vpop.f32.mrf.mxu0
      %v900 = vadd.f32 0.0, %v899
      %901 = vmatmul.bf16.gmra.mxu0 %v635
      %v902 = vpop.f32.mrf.mxu0
      %v903 = vadd.f32 0.0, %v902
      %v904 = vpop.f32.mrf.mxu0
      %v905 = vadd.f32 0.0, %v904
      %906 = vmatmul.bf16.gmra.mxu0 %v638
      %v907 = vpop.f32.mrf.mxu0
      %v908 = vadd.f32 0.0, %v907
      %v909 = vpop.f32.mrf.mxu0
      %v910 = vadd.f32 0.0, %v909
      %911 = vmatmul.bf16.gmra.mxu0 %v641
      %v912 = vpop.f32.mrf.mxu0
      %v913 = vadd.f32 0.0, %v912
      %v914 = vpop.f32.mrf.mxu0
      %v915 = vadd.f32 0.0, %v914
      %916 = vmatmul.bf16.gmra.mxu0 %v644
      %v917 = vpop.f32.mrf.mxu0
      %v918 = vadd.f32 0.0, %v917
      %v919 = vpop.f32.mrf.mxu0
      %v920 = vadd.f32 0.0, %v919
      %921 = vmatmul.bf16.gmra.mxu0 %v647
      %v922 = vpop.f32.mrf.mxu0
      %v923 = vadd.f32 0.0, %v922
      %v924 = vpop.f32.mrf.mxu0
      %v925 = vadd.f32 0.0, %v924
      %926 = vmatmul.bf16.gmra.mxu0 %v650
      %v927 = vpop.f32.mrf.mxu0
      %v928 = vadd.f32 0.0, %v927
      %v929 = vpop.f32.mrf.mxu0
      %v930 = vadd.f32 0.0, %v929
      %931 = vmatmul.bf16.gmra.mxu0 %v653
      %v932 = vpop.f32.mrf.mxu0
      %v933 = vadd.f32 0.0, %v932
      %v934 = vpop.f32.mrf.mxu0
      %v935 = vadd.f32 0.0, %v934
      %936 = vdwg.mxu0
      %937 = vmatpush.bf16.msra.mxu0 %v815
      %938 = vmatpush.bf16.msra.mxu0 %v814
      %939 = vmatpush.bf16.msra.mxu0 %v813
      %940 = vmatpush.bf16.msra.mxu0 %v812
      %941 = vmatpush.bf16.msra.mxu0 %v811
      %942 = vmatpush.bf16.msra.mxu0 %v810
      %943 = vmatpush.bf16.msra.mxu0 %v809
      %944 = vmatpush.bf16.msra.mxu0 %v808
      %945 = vmatmul.bf16.gmra.mxu0 %v609
      %v946 = vpop.f32.mrf.mxu0
      %v947 = vadd.f32 %v858, %v946
      %v948 = vpop.f32.mrf.mxu0
      %v949 = vadd.f32 %v860, %v948
      %950 = vmatmul.bf16.gmra.mxu0 %v612
      %v951 = vpop.f32.mrf.mxu0
      %v952 = vadd.f32 %v863, %v951
      %v953 = vpop.f32.mrf.mxu0
      %v954 = vadd.f32 %v865, %v953
      %955 = vmatmul.bf16.gmra.mxu0 %v615
      %v956 = vpop.f32.mrf.mxu0
      %v957 = vadd.f32 %v868, %v956
      %v958 = vpop.f32.mrf.mxu0
      %v959 = vadd.f32 %v870, %v958
      %960 = vmatmul.bf16.gmra.mxu0 %v618
      %v961 = vpop.f32.mrf.mxu0
      %v962 = vadd.f32 %v873, %v961
      %v963 = vpop.f32.mrf.mxu0
      %v964 = vadd.f32 %v875, %v963
      %965 = vmatmul.bf16.gmra.mxu0 %v621
      %v966 = vpop.f32.mrf.mxu0
      %v967 = vadd.f32 %v878, %v966
      %v968 = vpop.f32.mrf.mxu0
      %v969 = vadd.f32 %v880, %v968
      %970 = vmatmul.bf16.gmra.mxu0 %v624
      %v971 = vpop.f32.mrf.mxu0
      %v972 = vadd.f32 %v883, %v971
      %v973 = vpop.f32.mrf.mxu0
      %v974 = vadd.f32 %v885, %v973
      %975 = vmatmul.bf16.gmra.mxu0 %v627
      %v976 = vpop.f32.mrf.mxu0
      %v977 = vadd.f32 %v888, %v976
      %v978 = vpop.f32.mrf.mxu0
      %v979 = vadd.f32 %v890, %v978
      %980 = vmatmul.bf16.gmra.mxu0 %v630
      %v981 = vpop.f32.mrf.mxu0
      %v982 = vadd.f32 %v893, %v981
      %v983 = vpop.f32.mrf.mxu0
      %v984 = vadd.f32 %v895, %v983
      %985 = vmatmul.bf16.gmra.mxu0 %v633
      %v986 = vpop.f32.mrf.mxu0
      %v987 = vadd.f32 %v898, %v986
      %v988 = vpop.f32.mrf.mxu0
      %v989 = vadd.f32 %v900, %v988
      %990 = vmatmul.bf16.gmra.mxu0 %v636
      %v991 = vpop.f32.mrf.mxu0
      %v992 = vadd.f32 %v903, %v991
      %v993 = vpop.f32.mrf.mxu0
      %v994 = vadd.f32 %v905, %v993
      %995 = vmatmul.bf16.gmra.mxu0 %v639
      %v996 = vpop.f32.mrf.mxu0
      %v997 = vadd.f32 %v908, %v996
      %v998 = vpop.f32.mrf.mxu0
      %v999 = vadd.f32 %v910, %v998
      %1000 = vmatmul.bf16.gmra.mxu0 %v642
      %v1001 = vpop.f32.mrf.mxu0
      %v1002 = vadd.f32 %v913, %v1001
      %v1003 = vpop.f32.mrf.mxu0
      %v1004 = vadd.f32 %v915, %v1003
      %1005 = vmatmul.bf16.gmra.mxu0 %v645
      %v1006 = vpop.f32.mrf.mxu0
      %v1007 = vadd.f32 %v918, %v1006
      %v1008 = vpop.f32.mrf.mxu0
      %v1009 = vadd.f32 %v920, %v1008
      %1010 = vmatmul.bf16.gmra.mxu0 %v648
      %v1011 = vpop.f32.mrf.mxu0
      %v1012 = vadd.f32 %v923, %v1011
      %v1013 = vpop.f32.mrf.mxu0
      %v1014 = vadd.f32 %v925, %v1013
      %1015 = vmatmul.bf16.gmra.mxu0 %v651
      %v1016 = vpop.f32.mrf.mxu0
      %v1017 = vadd.f32 %v928, %v1016
      %v1018 = vpop.f32.mrf.mxu0
      %v1019 = vadd.f32 %v930, %v1018
      %1020 = vmatmul.bf16.gmra.mxu0 %v654
      %v1021 = vpop.f32.mrf.mxu0
      %v1022 = vadd.f32 %v933, %v1021
      %v1023 = vpop.f32.mrf.mxu0
      %v1024 = vadd.f32 %v935, %v1023
      %1025 = vdwg.mxu0
      %1026 = vmatpush.bf16.msra.mxu0 %v823
      %1027 = vmatpush.bf16.msra.mxu0 %v822
      %1028 = vmatpush.bf16.msra.mxu0 %v821
      %1029 = vmatpush.bf16.msra.mxu0 %v820
      %1030 = vmatpush.bf16.msra.mxu0 %v819
      %1031 = vmatpush.bf16.msra.mxu0 %v818
      %1032 = vmatpush.bf16.msra.mxu0 %v817
      %1033 = vmatpush.bf16.msra.mxu0 %v816
      %1034 = vmatmul.bf16.gmra.mxu0 %v610
      %v1035 = vpop.f32.mrf.mxu0
      %v1036 = vadd.f32 %v947, %v1035
      %v1037 = vpop.f32.mrf.mxu0
      %v1038 = vadd.f32 %v949, %v1037
      %1039 = vmatmul.bf16.gmra.mxu0 %v613
      %v1040 = vpop.f32.mrf.mxu0
      %v1041 = vadd.f32 %v952, %v1040
      %v1042 = vpop.f32.mrf.mxu0
      %v1043 = vadd.f32 %v954, %v1042
      %1044 = vmatmul.bf16.gmra.mxu0 %v616
      %v1045 = vpop.f32.mrf.mxu0
      %v1046 = vadd.f32 %v957, %v1045
      %v1047 = vpop.f32.mrf.mxu0
      %v1048 = vadd.f32 %v959, %v1047
      %1049 = vmatmul.bf16.gmra.mxu0 %v619
      %v1050 = vpop.f32.mrf.mxu0
      %v1051 = vadd.f32 %v962, %v1050
      %v1052 = vpop.f32.mrf.mxu0
      %v1053 = vadd.f32 %v964, %v1052
      %1054 = vmatmul.bf16.gmra.mxu0 %v622
      %v1055 = vpop.f32.mrf.mxu0
      %v1056 = vadd.f32 %v967, %v1055
      %v1057 = vpop.f32.mrf.mxu0
      %v1058 = vadd.f32 %v969, %v1057
      %1059 = vmatmul.bf16.gmra.mxu0 %v625
      %v1060 = vpop.f32.mrf.mxu0
      %v1061 = vadd.f32 %v972, %v1060
      %v1062 = vpop.f32.mrf.mxu0
      %v1063 = vadd.f32 %v974, %v1062
      %1064 = vmatmul.bf16.gmra.mxu0 %v628
      %v1065 = vpop.f32.mrf.mxu0
      %v1066 = vadd.f32 %v977, %v1065
      %v1067 = vpop.f32.mrf.mxu0
      %v1068 = vadd.f32 %v979, %v1067
      %1069 = vmatmul.bf16.gmra.mxu0 %v631
      %v1070 = vpop.f32.mrf.mxu0
      %v1071 = vadd.f32 %v982, %v1070
      %v1072 = vpop.f32.mrf.mxu0
      %v1073 = vadd.f32 %v984, %v1072
      %1074 = vmatmul.bf16.gmra.mxu0 %v634
      %v1075 = vpop.f32.mrf.mxu0
      %v1076 = vadd.f32 %v987, %v1075
      %v1077 = vpop.f32.mrf.mxu0
      %v1078 = vadd.f32 %v989, %v1077
      %1079 = vmatmul.bf16.gmra.mxu0 %v637
      %v1080 = vpop.f32.mrf.mxu0
      %v1081 = vadd.f32 %v992, %v1080
      %v1082 = vpop.f32.mrf.mxu0
      %v1083 = vadd.f32 %v994, %v1082
      %1084 = vmatmul.bf16.gmra.mxu0 %v640
      %v1085 = vpop.f32.mrf.mxu0
      %v1086 = vadd.f32 %v997, %v1085
      %v1087 = vpop.f32.mrf.mxu0
      %v1088 = vadd.f32 %v999, %v1087
      %1089 = vmatmul.bf16.gmra.mxu0 %v643
      %v1090 = vpop.f32.mrf.mxu0
      %v1091 = vadd.f32 %v1002, %v1090
      %v1092 = vpop.f32.mrf.mxu0
      %v1093 = vadd.f32 %v1004, %v1092
      %1094 = vmatmul.bf16.gmra.mxu0 %v646
      %v1095 = vpop.f32.mrf.mxu0
      %v1096 = vadd.f32 %v1007, %v1095
      %v1097 = vpop.f32.mrf.mxu0
      %v1098 = vadd.f32 %v1009, %v1097
      %1099 = vmatmul.bf16.gmra.mxu0 %v649
      %v1100 = vpop.f32.mrf.mxu0
      %v1101 = vadd.f32 %v1012, %v1100
      %v1102 = vpop.f32.mrf.mxu0
      %v1103 = vadd.f32 %v1014, %v1102
      %1104 = vmatmul.bf16.gmra.mxu0 %v652
      %v1105 = vpop.f32.mrf.mxu0
      %v1106 = vadd.f32 %v1017, %v1105
      %v1107 = vpop.f32.mrf.mxu0
      %v1108 = vadd.f32 %v1019, %v1107
      %1109 = vmatmul.bf16.gmra.mxu0 %v655
      %v1110 = vpop.f32.mrf.mxu0
      %v1111 = vadd.f32 %v1022, %v1110
      %v1112 = vpop.f32.mrf.mxu0
      %v1113 = vadd.f32 %v1024, %v1112
      %1114 = vdwg.mxu0
      %v1115 = vadd.f32 %v304, %v1036
      %v1116 = vadd.f32 %v305, %v1038
      %v1117 = vadd.f32 %v306, %v1041
      %v1118 = vadd.f32 %v307, %v1043
      %v1119 = vadd.f32 %v308, %v1046
      %v1120 = vadd.f32 %v309, %v1048
      %v1121 = vadd.f32 %v310, %v1051
      %v1122 = vadd.f32 %v311, %v1053
      %v1123 = vadd.f32 %v312, %v1056
      %v1124 = vadd.f32 %v313, %v1058
      %v1125 = vadd.f32 %v314, %v1061
      %v1126 = vadd.f32 %v315, %v1063
      %v1127 = vadd.f32 %v316, %v1066
      %v1128 = vadd.f32 %v317, %v1068
      %v1129 = vadd.f32 %v318, %v1071
      %v1130 = vadd.f32 %v319, %v1073
      %v1131 = vadd.f32 %v320, %v1076
      %v1132 = vadd.f32 %v321, %v1078
      %v1133 = vadd.f32 %v322, %v1081
      %v1134 = vadd.f32 %v323, %v1083
      %v1135 = vadd.f32 %v324, %v1086
      %v1136 = vadd.f32 %v325, %v1088
      %v1137 = vadd.f32 %v326, %v1091
      %v1138 = vadd.f32 %v327, %v1093
      %v1139 = vadd.f32 %v328, %v1096
      %v1140 = vadd.f32 %v329, %v1098
      %v1141 = vadd.f32 %v330, %v1101
      %v1142 = vadd.f32 %v331, %v1103
      %v1143 = vadd.f32 %v332, %v1106
      %v1144 = vadd.f32 %v333, %v1108
      %v1145 = vadd.f32 %v334, %v1111
      %v1146 = vadd.f32 %v335, %v1113
      %vm1147 = vcmask 523264
      %1148 = vst.msk [vmem:[#allocation2] sm:$0xff] %vm1147, %v1115
      %1149 = vst.msk [vmem:[#allocation2 + $0x8] sm:$0xff] %vm1147, %v1116
      %1150 = vst.msk [vmem:[#allocation2 + $0x10] sm:$0xff] %vm1147, %v1117
      %1151 = vst.msk [vmem:[#allocation2 + $0x18] sm:$0xff] %vm1147, %v1118
      %1152 = vst.msk [vmem:[#allocation2 + $0x20] sm:$0xff] %vm1147, %v1119
      %1153 = vst.msk [vmem:[#allocation2 + $0x28] sm:$0xff] %vm1147, %v1120
      %1154 = vst.msk [vmem:[#allocation2 + $0x30] sm:$0xff] %vm1147, %v1121
      %1155 = vst.msk [vmem:[#allocation2 + $0x38] sm:$0xff] %vm1147, %v1122
      %1156 = vst.msk [vmem:[#allocation2 + $0x40] sm:$0xff] %vm1147, %v1123
      %1157 = vst.msk [vmem:[#allocation2 + $0x48] sm:$0xff] %vm1147, %v1124
      %1158 = vst.msk [vmem:[#allocation2 + $0x50] sm:$0xff] %vm1147, %v1125
      %1159 = vst.msk [vmem:[#allocation2 + $0x58] sm:$0xff] %vm1147, %v1126
      %1160 = vst.msk [vmem:[#allocation2 + $0x60] sm:$0xff] %vm1147, %v1127
      %1161 = vst.msk [vmem:[#allocation2 + $0x68] sm:$0xff] %vm1147, %v1128
      %1162 = vst.msk [vmem:[#allocation2 + $0x70] sm:$0xff] %vm1147, %v1129
      %1163 = vst.msk [vmem:[#allocation2 + $0x78] sm:$0xff] %vm1147, %v1130
      %1164 = vst.msk [vmem:[#allocation2 + $0x80] sm:$0xff] %vm1147, %v1131
      %1165 = vst.msk [vmem:[#allocation2 + $0x88] sm:$0xff] %vm1147, %v1132
      %1166 = vst.msk [vmem:[#allocation2 + $0x90] sm:$0xff] %vm1147, %v1133
      %1167 = vst.msk [vmem:[#allocation2 + $0x98] sm:$0xff] %vm1147, %v1134
      %1168 = vst.msk [vmem:[#allocation2 + $0xa0] sm:$0xff] %vm1147, %v1135
      %1169 = vst.msk [vmem:[#allocation2 + $0xa8] sm:$0xff] %vm1147, %v1136
      %1170 = vst.msk [vmem:[#allocation2 + $0xb0] sm:$0xff] %vm1147, %v1137
      %1171 = vst.msk [vmem:[#allocation2 + $0xb8] sm:$0xff] %vm1147, %v1138
      %1172 = vst.msk [vmem:[#allocation2 + $0xc0] sm:$0xff] %vm1147, %v1139
      %1173 = vst.msk [vmem:[#allocation2 + $0xc8] sm:$0xff] %vm1147, %v1140
      %1174 = vst.msk [vmem:[#allocation2 + $0xd0] sm:$0xff] %vm1147, %v1141
      %1175 = vst.msk [vmem:[#allocation2 + $0xd8] sm:$0xff] %vm1147, %v1142
      %1176 = vst.msk [vmem:[#allocation2 + $0xe0] sm:$0xff] %vm1147, %v1143
      %1177 = vst.msk [vmem:[#allocation2 + $0xe8] sm:$0xff] %vm1147, %v1144
      %1178 = vst.msk [vmem:[#allocation2 + $0xf0] sm:$0xff] %vm1147, %v1145
      %1179 = vst.msk [vmem:[#allocation2 + $0xf8] sm:$0xff] %vm1147, %v1146
      // Predicated region
      $region37: #{untrained_model_forward.3} parent=31 // pred_check
        %p1180 = pneg %p267
      $region38: #{untrained_model_forward.3} parent=31 // pred_check_branch
        %1182 = sbr.rel (%p1180) target = $region40
      $region39: #{untrained_model_forward.3} parent=31 // pred_region
        %v1183 = vld [vmem:[#allocation2] sm:$0xff]
        %v1184 = vld [vmem:[#allocation2 + $0x8] sm:$0xff]
        %v1185 = vld [vmem:[#allocation2 + $0x10] sm:$0xff]
        %v1186 = vld [vmem:[#allocation2 + $0x18] sm:$0xff]
        %v1187 = vld [vmem:[#allocation2 + $0x20] sm:$0xff]
        %v1188 = vld [vmem:[#allocation2 + $0x28] sm:$0xff]
        %v1189 = vld [vmem:[#allocation2 + $0x30] sm:$0xff]
        %v1190 = vld [vmem:[#allocation2 + $0x38] sm:$0xff]
        %v1191 = vld [vmem:[#allocation2 + $0x40] sm:$0xff]
        %v1192 = vld [vmem:[#allocation2 + $0x48] sm:$0xff]
        %v1193 = vld [vmem:[#allocation2 + $0x50] sm:$0xff]
        %v1194 = vld [vmem:[#allocation2 + $0x58] sm:$0xff]
        %v1195 = vld [vmem:[#allocation2 + $0x60] sm:$0xff]
        %v1196 = vld [vmem:[#allocation2 + $0x68] sm:$0xff]
        %v1197 = vld [vmem:[#allocation2 + $0x70] sm:$0xff]
        %v1198 = vld [vmem:[#allocation2 + $0x78] sm:$0xff]
        %v1199 = vld [vmem:[#allocation2 + $0x80] sm:$0xff]
        %v1200 = vld [vmem:[#allocation2 + $0x88] sm:$0xff]
        %v1201 = vld [vmem:[#allocation2 + $0x90] sm:$0xff]
        %v1202 = vld [vmem:[#allocation2 + $0x98] sm:$0xff]
        %v1203 = vld [vmem:[#allocation2 + $0xa0] sm:$0xff]
        %v1204 = vld [vmem:[#allocation2 + $0xa8] sm:$0xff]
        %v1205 = vld [vmem:[#allocation2 + $0xb0] sm:$0xff]
        %v1206 = vld [vmem:[#allocation2 + $0xb8] sm:$0xff]
        %v1207 = vld [vmem:[#allocation2 + $0xc0] sm:$0xff]
        %v1208 = vld [vmem:[#allocation2 + $0xc8] sm:$0xff]
        %v1209 = vld [vmem:[#allocation2 + $0xd0] sm:$0xff]
        %v1210 = vld [vmem:[#allocation2 + $0xd8] sm:$0xff]
        %v1211 = vld [vmem:[#allocation2 + $0xe0] sm:$0xff]
        %v1212 = vld [vmem:[#allocation2 + $0xe8] sm:$0xff]
        %v1213 = vld [vmem:[#allocation2 + $0xf0] sm:$0xff]
        %v1214 = vld [vmem:[#allocation2 + $0xf8] sm:$0xff]
        %v1215 = vld [vmem:[%s257] sm:$0x1]
        %v1217 = vperm.slane %v1215, 0
        %v1219 = vadd.f32 %v1183, %v1217
        %v1220 = vadd.f32 %v1184, %v1217
        %v1221 = vadd.f32 %v1185, %v1217
        %v1222 = vadd.f32 %v1186, %v1217
        %v1223 = vadd.f32 %v1187, %v1217
        %v1224 = vadd.f32 %v1188, %v1217
        %v1225 = vadd.f32 %v1189, %v1217
        %v1226 = vadd.f32 %v1190, %v1217
        %v1227 = vadd.f32 %v1191, %v1217
        %v1228 = vadd.f32 %v1192, %v1217
        %v1229 = vadd.f32 %v1193, %v1217
        %v1230 = vadd.f32 %v1194, %v1217
        %v1231 = vadd.f32 %v1195, %v1217
        %v1232 = vadd.f32 %v1196, %v1217
        %v1233 = vadd.f32 %v1197, %v1217
        %v1234 = vadd.f32 %v1198, %v1217
        %v1235 = vadd.f32 %v1199, %v1217
        %v1236 = vadd.f32 %v1200, %v1217
        %v1237 = vadd.f32 %v1201, %v1217
        %v1238 = vadd.f32 %v1202, %v1217
        %v1239 = vadd.f32 %v1203, %v1217
        %v1240 = vadd.f32 %v1204, %v1217
        %v1241 = vadd.f32 %v1205, %v1217
        %v1242 = vadd.f32 %v1206, %v1217
        %v1243 = vadd.f32 %v1207, %v1217
        %v1244 = vadd.f32 %v1208, %v1217
        %v1245 = vadd.f32 %v1209, %v1217
        %v1246 = vadd.f32 %v1210, %v1217
        %v1247 = vadd.f32 %v1211, %v1217
        %v1248 = vadd.f32 %v1212, %v1217
        %v1249 = vadd.f32 %v1213, %v1217
        %v1250 = vadd.f32 %v1214, %v1217
        %v1251 = vmax.f32 %v1219, 0.0
        %v1252 = vmax.f32 %v1220, 0.0
        %v1253 = vmax.f32 %v1221, 0.0
        %v1254 = vmax.f32 %v1222, 0.0
        %v1255 = vmax.f32 %v1223, 0.0
        %v1256 = vmax.f32 %v1224, 0.0
        %v1257 = vmax.f32 %v1225, 0.0
        %v1258 = vmax.f32 %v1226, 0.0
        %v1259 = vmax.f32 %v1227, 0.0
        %v1260 = vmax.f32 %v1228, 0.0
        %v1261 = vmax.f32 %v1229, 0.0
        %v1262 = vmax.f32 %v1230, 0.0
        %v1263 = vmax.f32 %v1231, 0.0
        %v1264 = vmax.f32 %v1232, 0.0
        %v1265 = vmax.f32 %v1233, 0.0
        %v1266 = vmax.f32 %v1234, 0.0
        %v1267 = vmax.f32 %v1235, 0.0
        %v1268 = vmax.f32 %v1236, 0.0
        %v1269 = vmax.f32 %v1237, 0.0
        %v1270 = vmax.f32 %v1238, 0.0
        %v1271 = vmax.f32 %v1239, 0.0
        %v1272 = vmax.f32 %v1240, 0.0
        %v1273 = vmax.f32 %v1241, 0.0
        %v1274 = vmax.f32 %v1242, 0.0
        %v1275 = vmax.f32 %v1243, 0.0
        %v1276 = vmax.f32 %v1244, 0.0
        %v1277 = vmax.f32 %v1245, 0.0
        %v1278 = vmax.f32 %v1246, 0.0
        %v1279 = vmax.f32 %v1247, 0.0
        %v1280 = vmax.f32 %v1248, 0.0
        %v1281 = vmax.f32 %v1249, 0.0
        %v1282 = vmax.f32 %v1250, 0.0
        %1283 = vst.msk [vmem:[%s265] sm:$0xff] %vm1147, %v1251
        %1284 = vst.msk [vmem:[%s265 + $0x8] sm:$0xff] %vm1147, %v1252
        %1285 = vst.msk [vmem:[%s265 + $0x10] sm:$0xff] %vm1147, %v1253
        %1286 = vst.msk [vmem:[%s265 + $0x18] sm:$0xff] %vm1147, %v1254
        %1287 = vst.msk [vmem:[%s265 + $0x20] sm:$0xff] %vm1147, %v1255
        %1288 = vst.msk [vmem:[%s265 + $0x28] sm:$0xff] %vm1147, %v1256
        %1289 = vst.msk [vmem:[%s265 + $0x30] sm:$0xff] %vm1147, %v1257
        %1290 = vst.msk [vmem:[%s265 + $0x38] sm:$0xff] %vm1147, %v1258
        %1291 = vst.msk [vmem:[%s265 + $0x40] sm:$0xff] %vm1147, %v1259
        %1292 = vst.msk [vmem:[%s265 + $0x48] sm:$0xff] %vm1147, %v1260
        %1293 = vst.msk [vmem:[%s265 + $0x50] sm:$0xff] %vm1147, %v1261
        %1294 = vst.msk [vmem:[%s265 + $0x58] sm:$0xff] %vm1147, %v1262
        %1295 = vst.msk [vmem:[%s265 + $0x60] sm:$0xff] %vm1147, %v1263
        %1296 = vst.msk [vmem:[%s265 + $0x68] sm:$0xff] %vm1147, %v1264
        %1297 = vst.msk [vmem:[%s265 + $0x70] sm:$0xff] %vm1147, %v1265
        %1298 = vst.msk [vmem:[%s265 + $0x78] sm:$0xff] %vm1147, %v1266
        %1299 = vst.msk [vmem:[%s265 + $0x80] sm:$0xff] %vm1147, %v1267
        %1300 = vst.msk [vmem:[%s265 + $0x88] sm:$0xff] %vm1147, %v1268
        %1301 = vst.msk [vmem:[%s265 + $0x90] sm:$0xff] %vm1147, %v1269
        %1302 = vst.msk [vmem:[%s265 + $0x98] sm:$0xff] %vm1147, %v1270
        %1303 = vst.msk [vmem:[%s265 + $0xa0] sm:$0xff] %vm1147, %v1271
        %1304 = vst.msk [vmem:[%s265 + $0xa8] sm:$0xff] %vm1147, %v1272
        %1305 = vst.msk [vmem:[%s265 + $0xb0] sm:$0xff] %vm1147, %v1273
        %1306 = vst.msk [vmem:[%s265 + $0xb8] sm:$0xff] %vm1147, %v1274
        %1307 = vst.msk [vmem:[%s265 + $0xc0] sm:$0xff] %vm1147, %v1275
        %1308 = vst.msk [vmem:[%s265 + $0xc8] sm:$0xff] %vm1147, %v1276
        %1309 = vst.msk [vmem:[%s265 + $0xd0] sm:$0xff] %vm1147, %v1277
        %1310 = vst.msk [vmem:[%s265 + $0xd8] sm:$0xff] %vm1147, %v1278
        %1311 = vst.msk [vmem:[%s265 + $0xe0] sm:$0xff] %vm1147, %v1279
        %1312 = vst.msk [vmem:[%s265 + $0xe8] sm:$0xff] %vm1147, %v1280
        %1313 = vst.msk [vmem:[%s265 + $0xf0] sm:$0xff] %vm1147, %v1281
        %1314 = vst.msk [vmem:[%s265 + $0xf8] sm:$0xff] %vm1147, %v1282
      $region40: #{untrained_model_forward.3} parent=31 // pred_fallthru
        _
      %s1315 = smul.u32 32, %s19
      %p1316 = scmp.lt.s32.totalorder %s1315, 63
      %s1317 = scalar_select %p1316, %s1315, 63
      %p1318 = scmp.lt.s32.totalorder %s20, 0
      %s1319 = scalar_select %p1318, %s20, 0
      %s1320 = sadd.s32 %s1319, %s1317
      %s1321 = smul.addr %s1320, 8
      %s1322 = scalar_lea.vmem %s3, %s1321
      // Predicated region
      $region41: #{untrained_model_forward.3} parent=31 // pred_check
        %p1323 = pneg %p135
      $region42: #{untrained_model_forward.3} parent=31 // pred_check_branch
        %1325 = sbr.rel (%p1323) target = $region44
      $region43: #{untrained_model_forward.3} parent=31 // pred_region
        %s1326 = smul.u32 32, %s19
      $region44: #{untrained_model_forward.3} parent=31 // pred_fallthru
        _
    $region32: #{untrained_model_forward.3} parent=5 // pred_fallthru
      _
    %p1327 = scmp.le.s32.totalorder 2, %s9
    // Predicated region
    $region45: #{untrained_model_forward.3} parent=5 // pred_check
      %p1328 = pneg %p1327
    $region46: #{untrained_model_forward.3} parent=5 // pred_check_branch
      %1330 = sbr.rel (%p1328) target = $region48
    $region47: #{untrained_model_forward.3} parent=5 // pred_region
      %s1331 = ssub.s32 %s9, 2
      // Predicated region
      $region49: #{untrained_model_forward.3} parent=47 // pred_check
        %p1332 = pneg %p141
      $region50: #{untrained_model_forward.3} parent=47 // pred_check_branch
        %1334 = sbr.rel (%p1332) target = $region52
      $region51: #{untrained_model_forward.3} parent=47 // pred_region
        %s1335 = smul.u32 32, %s22
        %p1336 = scmp.lt.s32.totalorder %s1335, 63
        %s1337 = scalar_select %p1336, %s1335, 63
        %p1338 = scmp.lt.s32.totalorder %s23, 0
        %s1339 = scalar_select %p1338, %s23, 0
        %s1340 = sadd.s32 %s1339, %s1337
        %s1341 = smul.addr %s1340, 8
        %s1342 = scalar_lea.vmem %s3, %s1341
      $region52: #{untrained_model_forward.3} parent=47 // pred_fallthru
        _
    $region48: #{untrained_model_forward.3} parent=5 // pred_fallthru
      _
  $region6: #{untrained_model_forward.3} parent=0 // loop_footer
    %s13 = sadd.s32 1, %s9
  $region7: #{untrained_model_forward.3} parent=0 // loop_footer_branch
    %8 = sbr.rel target = $region3
  $region8: #{untrained_model_forward.3} parent=0 // loop_exit
    _

// kernel: untrained_model_forward.5
$region0: #{untrained_model_forward.5}
  #allocation0 [shape = 'u32[]', space=smem, size = 0x4, offset = 0x4, fixed_abs, tag = 'smem constant byte address 0x4 - core index']
  #allocation1 [shape = 'u32[72,128]{1,0:T(1,128)}', space=vmem, size = 0x9000, scoped, tag = 'internal scratch']
  #allocation2 [shape = 'f32[77,192]{1,0:T(8,128)}', space=vmem, size = 0x14000, scoped, tag = 'scratch operand']
  %s0 = inlined_call_operand.vmem [shape: bf16[2,132,64], index: 0, kind: input, shape index: {}]
  %s1 = inlined_call_operand.vmem [shape: bf16[25,64,192], index: 1, kind: input, shape index: {}]
  %s2 = inlined_call_operand.vmem [shape: f32[1,192], index: 2, kind: input, shape index: {}]
  %s3 = inlined_call_operand.vmem [shape: f32[2,77,192], index: 3, kind: output, shape index: {}]
  %s4 = sld [smem:[#allocation0]]
  $region45: #{untrained_model_forward.5} parent=0
    _
  %s6 = ssub.s32 1, %s4
  %s7 = scalar_select 0, %s6, %s4
  loop: start=0, step=1, limit=4
  $region2: #{untrained_model_forward.5} parent=0 // loop_pre_header
    _
  $region3: #{untrained_model_forward.5} parent=0 // loop_header
    %s9 = sphi 0, %s13
    %p10 = scmp.ge.s32.totalorder %s9, 4
    %s19 = sphi 0, %s21
    %s22 = sphi 0, %s19
    %s23 = sphi 0, %s22
    %s39 = sphi 0, %s23
    %s43 = sphi 0, %s43
    %s45 = sphi 0, %s43
    %s46 = sphi 0, %s45
    %s60 = sphi 0, %s46
    %s64 = sphi 0, %s64
    %s66 = sphi 0, %s64
    %s67 = sphi 0, %s66
    %s81 = sphi 0, %s67
    %s87 = sphi 0, %s89
    %s90 = sphi 0, %s87
    %s91 = sphi 0, %s90
    %s107 = sphi 0, %s91
  $region4: #{untrained_model_forward.5} parent=0 // loop_header_branch
    %12 = sbr.rel (%p10) target = $region8
  $region5: #{untrained_model_forward.5} parent=0 // loop_body
    %s14 = ssub.s32 %s9, 1
    %s15 = ssub.s32 %s9, 2
    %s16 = sadd.s32 %s9, 1
    %s17 = ssub.s32 %s9, %s16
    %p18 = scmp.eq.s32.totalorder %s17, 0
    %s20 = sadd.s32 %s19, 1
    %s21 = scalar_select %p18, %s19, %s20
    %p24 = pneg %p18
    %p25 = scmp.eq.s32.totalorder %s9, 1
    %p26 = por %p24, %p25
    %p27 = scmp.ne.s32.totalorder %s19, %s22
    %p28 = scmp.eq.s32.totalorder %s9, 0
    %p29 = por %p27, %p28
    %p30 = scmp.ne.s32.totalorder %s19, %s22
    %p31 = scmp.eq.s32.totalorder %s14, 1
    %p32 = por %p30, %p31
    %p33 = scmp.ne.s32.totalorder %s22, %s23
    %p34 = scmp.eq.s32.totalorder %s14, 0
    %p35 = por %p33, %p34
    %p36 = scmp.ne.s32.totalorder %s22, %s23
    %p37 = scmp.eq.s32.totalorder %s15, 1
    %p38 = por %p36, %p37
    %p40 = scmp.ne.s32.totalorder %s23, %s39
    %p41 = scmp.eq.s32.totalorder %s15, 0
    %p42 = por %p40, %p41
    %s44 = sadd.s32 %s43, 1
    %p47 = scmp.eq.s32.totalorder %s9, 1
    %p48 = scmp.ne.s32.totalorder %s43, %s45
    %p49 = scmp.eq.s32.totalorder %s9, 0
    %p50 = por %p48, %p49
    %p51 = scmp.ne.s32.totalorder %s43, %s45
    %p52 = scmp.eq.s32.totalorder %s14, 1
    %p53 = por %p51, %p52
    %p54 = scmp.ne.s32.totalorder %s45, %s46
    %p55 = scmp.eq.s32.totalorder %s14, 0
    %p56 = por %p54, %p55
    %p57 = scmp.ne.s32.totalorder %s45, %s46
    %p58 = scmp.eq.s32.totalorder %s15, 1
    %p59 = por %p57, %p58
    %p61 = scmp.ne.s32.totalorder %s46, %s60
    %p62 = scmp.eq.s32.totalorder %s15, 0
    %p63 = por %p61, %p62
    %s65 = sadd.s32 %s64, 1
    %p68 = scmp.eq.s32.totalorder %s9, 1
    %p69 = scmp.ne.s32.totalorder %s64, %s66
    %p70 = scmp.eq.s32.totalorder %s9, 0
    %p71 = por %p69, %p70
    %p72 = scmp.ne.s32.totalorder %s64, %s66
    %p73 = scmp.eq.s32.totalorder %s14, 1
    %p74 = por %p72, %p73
    %p75 = scmp.ne.s32.totalorder %s66, %s67
    %p76 = scmp.eq.s32.totalorder %s14, 0
    %p77 = por %p75, %p76
    %p78 = scmp.ne.s32.totalorder %s66, %s67
    %p79 = scmp.eq.s32.totalorder %s15, 1
    %p80 = por %p78, %p79
    %p82 = scmp.ne.s32.totalorder %s67, %s81
    %p83 = scmp.eq.s32.totalorder %s15, 0
    %p84 = por %p82, %p83
    %s85 = ssub.s32 %s9, %s16
    %p86 = scmp.eq.s32.totalorder %s85, 0
    %s88 = sadd.s32 %s87, 1
    %s89 = scalar_select %p86, %s87, %s88
    %p92 = pneg %p86
    %p93 = scmp.eq.s32.totalorder %s9, 1
    %p94 = por %p92, %p93
    %p95 = scmp.ne.s32.totalorder %s87, %s90
    %p96 = scmp.eq.s32.totalorder %s9, 0
    %p97 = por %p95, %p96
    %p98 = scmp.ne.s32.totalorder %s87, %s90
    %p99 = scmp.eq.s32.totalorder %s14, 1
    %p100 = por %p98, %p99
    %p101 = scmp.ne.s32.totalorder %s90, %s91
    %p102 = scmp.eq.s32.totalorder %s14, 0
    %p103 = por %p101, %p102
    %p104 = scmp.ne.s32.totalorder %s90, %s91
    %p105 = scmp.eq.s32.totalorder %s15, 1
    %p106 = por %p104, %p105
    %p108 = scmp.ne.s32.totalorder %s91, %s107
    %p109 = scmp.eq.s32.totalorder %s15, 0
    %p110 = por %p108, %p109
    %p111 = scmp.le.s32.totalorder 1, %s9
    %p112 = scmp.lt.s32.totalorder %s9, 3
    %p113 = pnand %p111, %p112
    %p114 = pneg %p113
    // Predicated region
    $region9: #{untrained_model_forward.5} parent=5 // pred_check
      _
    $region10: #{untrained_model_forward.5} parent=5 // pred_check_branch
      %116 = sbr.rel (%p113) target = $region12
    $region11: #{untrained_model_forward.5} parent=5 // pred_region
      %s117 = ssub.s32 %s9, 1
      // Predicated region
      $region13: #{untrained_model_forward.5} parent=11 // pred_check
        %p118 = pneg %p56
      $region14: #{untrained_model_forward.5} parent=11 // pred_check_branch
        %120 = sbr.rel (%p118) target = $region16
      $region15: #{untrained_model_forward.5} parent=11 // pred_region
        _
      $region16: #{untrained_model_forward.5} parent=11 // pred_fallthru
        _
      // Predicated region
      $region17: #{untrained_model_forward.5} parent=11 // pred_check
        %p121 = pneg %p77
      $region18: #{untrained_model_forward.5} parent=11 // pred_check_branch
        %123 = sbr.rel (%p121) target = $region20
      $region19: #{untrained_model_forward.5} parent=11 // pred_region
        _
      $region20: #{untrained_model_forward.5} parent=11 // pred_fallthru
        _
    $region12: #{untrained_model_forward.5} parent=5 // pred_fallthru
      _
    %p124 = scmp.lt.s32.totalorder %s9, 2
    // Predicated region
    $region21: #{untrained_model_forward.5} parent=5 // pred_check
      %p125 = pneg %p124
    $region22: #{untrained_model_forward.5} parent=5 // pred_check_branch
      %127 = sbr.rel (%p125) target = $region24
    $region23: #{untrained_model_forward.5} parent=5 // pred_region
      // Predicated region
      $region25: #{untrained_model_forward.5} parent=23 // pred_check
        %p128 = pneg %p29
      $region26: #{untrained_model_forward.5} parent=23 // pred_check_branch
        %130 = sbr.rel (%p128) target = $region28
      $region27: #{untrained_model_forward.5} parent=23 // pred_region
        %p131 = scmp.lt.s32.totalorder %s9, 1
        %s132 = scalar_select %p131, %s9, 1
        %s133 = smul.addr %s132, 17
        %s134 = smul.addr %s133, 4
        %s135 = scalar_lea.vmem %s0, %s134
      $region28: #{untrained_model_forward.5} parent=23 // pred_fallthru
        _
    $region24: #{untrained_model_forward.5} parent=5 // pred_fallthru
      _
    %p136 = scmp.le.s32.totalorder 1, %s9
    %p137 = scmp.lt.s32.totalorder %s9, 3
    %p138 = pnand %p136, %p137
    %p139 = pneg %p138
    // Predicated region
    $region29: #{untrained_model_forward.5} parent=5 // pred_check
      _
    $region30: #{untrained_model_forward.5} parent=5 // pred_check_branch
      %141 = sbr.rel (%p138) target = $region32
    $region31: #{untrained_model_forward.5} parent=5 // pred_region
      %s142 = ssub.s32 %s9, 1
      %p143 = scmp.lt.s32.totalorder %s14, 1
      %s144 = scalar_select %p143, %s14, 1
      %s145 = smul.addr %s144, 17
      %s146 = smul.addr %s145, 4
      %s147 = scalar_lea.vmem %s0, %s146
      %p148 = pneg %p35
      %p149 = pneg %p32
      %p150 = pneg %p56
      %p151 = pneg %p53
      %p152 = pneg %p77
      %p153 = pneg %p74
      %p154 = pneg %p103
      %p155 = pneg %p100
      %p156 = scmp.lt.s32.totalorder %s14, 1
      %s157 = scalar_select %p156, %s14, 1
      %s158 = smul.addr %s157, 20
      %s159 = smul.addr %s158, 8
      %s160 = scalar_lea.vmem %s3, %s159
      %p161 = scmp.lt.s32.totalorder %s14, 1
      %s162 = scalar_select %p161, %s14, 1
      %s163 = smul.addr %s162, 17
      %s164 = smul.addr %s163, 4
      %s165 = scalar_lea.vmem %s0, %s164
      %p166 = scmp.lt.s32.totalorder %s14, 1
      %s167 = scalar_select %p166, %s14, 1
      %s168 = smul.addr %s167, 20
      %s169 = smul.addr %s168, 8
      %s170 = scalar_lea.vmem %s3, %s169
      %172 = vst [vmem:[#allocation2] sm:$0xff] 0.0
      %vm173 = vcmask 523264
      %174 = vst.msk [vmem:[#allocation2 + $0x8] sm:$0xff] %vm173, 0.0
      %175 = vst [vmem:[#allocation2 + $0x10] sm:$0xff] 0.0
      %176 = vst.msk [vmem:[#allocation2 + $0x18] sm:$0xff] %vm173, 0.0
      %177 = vst [vmem:[#allocation2 + $0x20] sm:$0xff] 0.0
      %178 = vst.msk [vmem:[#allocation2 + $0x28] sm:$0xff] %vm173, 0.0
      %179 = vst [vmem:[#allocation2 + $0x30] sm:$0xff] 0.0
      %180 = vst.msk [vmem:[#allocation2 + $0x38] sm:$0xff] %vm173, 0.0
      %181 = vst [vmem:[#allocation2 + $0x40] sm:$0xff] 0.0
      %182 = vst.msk [vmem:[#allocation2 + $0x48] sm:$0xff] %vm173, 0.0
      %183 = vst [vmem:[#allocation2 + $0x50] sm:$0xff] 0.0
      %184 = vst.msk [vmem:[#allocation2 + $0x58] sm:$0xff] %vm173, 0.0
      %185 = vst [vmem:[#allocation2 + $0x60] sm:$0xff] 0.0
      %186 = vst.msk [vmem:[#allocation2 + $0x68] sm:$0xff] %vm173, 0.0
      %187 = vst [vmem:[#allocation2 + $0x70] sm:$0xff] 0.0
      %188 = vst.msk [vmem:[#allocation2 + $0x78] sm:$0xff] %vm173, 0.0
      %189 = vst [vmem:[#allocation2 + $0x80] sm:$0xff] 0.0
      %190 = vst.msk [vmem:[#allocation2 + $0x88] sm:$0xff] %vm173, 0.0
      %191 = vst [vmem:[#allocation2 + $0x90] sm:$0x1f] 0.0
      %vm192 = vcmask 520192
      %193 = vst.msk [vmem:[#allocation2 + $0x98] sm:$0x1f] %vm192, 0.0
      %v194 = vld [vmem:[%s165] sm:$0xf]
      %v195 = vld [vmem:[%s165 + $0x4] sm:$0xf]
      %v196 = vld [vmem:[%s165 + $0x8] sm:$0xf]
      %v197 = vld [vmem:[%s165 + $0xc] sm:$0xf]
      %v198 = vld [vmem:[%s165 + $0x10] sm:$0xf]
      %v199 = vld [vmem:[%s165 + $0x14] sm:$0xf]
      %v200 = vld [vmem:[%s165 + $0x18] sm:$0xf]
      %v201 = vld [vmem:[%s165 + $0x1c] sm:$0xf]
      %v202 = vld [vmem:[%s165 + $0x20] sm:$0xf]
      %v203 = vld [vmem:[%s165 + $0x24] sm:$0x7]
      %v204 = vld [vmem:[#allocation2] sm:$0xff]
      %v205 = vld [vmem:[#allocation2 + $0x8] sm:$0xff]
      %v206 = vld [vmem:[#allocation2 + $0x10] sm:$0xff]
      %v207 = vld [vmem:[#allocation2 + $0x18] sm:$0xff]
      %v208 = vld [vmem:[#allocation2 + $0x20] sm:$0xff]
      %v209 = vld [vmem:[#allocation2 + $0x28] sm:$0xff]
      %v210 = vld [vmem:[#allocation2 + $0x30] sm:$0xff]
      %v211 = vld [vmem:[#allocation2 + $0x38] sm:$0xff]
      %v212 = vld [vmem:[#allocation2 + $0x40] sm:$0xff]
      %v213 = vld [vmem:[#allocation2 + $0x48] sm:$0xff]
      %v214 = vld [vmem:[#allocation2 + $0x50] sm:$0xff]
      %v215 = vld [vmem:[#allocation2 + $0x58] sm:$0xff]
      %v216 = vld [vmem:[#allocation2 + $0x60] sm:$0xff]
      %v217 = vld [vmem:[#allocation2 + $0x68] sm:$0xff]
      %v218 = vld [vmem:[#allocation2 + $0x70] sm:$0xff]
      %v219 = vld [vmem:[#allocation2 + $0x78] sm:$0xff]
      %v220 = vld [vmem:[#allocation2 + $0x80] sm:$0xff]
      %v221 = vld [vmem:[#allocation2 + $0x88] sm:$0xff]
      %v222 = vld [vmem:[#allocation2 + $0x90] sm:$0x1f]
      %v223 = vld [vmem:[#allocation2 + $0x98] sm:$0x1f]
      %v224 = vld [vmem:[%s1] sm:$0xff]
      %v225 = vld [vmem:[%s1 + $0x8] sm:$0xff]
      %v226 = vld [vmem:[%s1 + $0x10] sm:$0xff]
      %v227 = vld [vmem:[%s1 + $0x18] sm:$0xff]
      %v228 = vld [vmem:[%s1 + $0x20] sm:$0xff]
      %v229 = vld [vmem:[%s1 + $0x28] sm:$0xff]
      %v230 = vld [vmem:[%s1 + $0x30] sm:$0xff]
      %v231 = vld [vmem:[%s1 + $0x38] sm:$0xff]
      %v242 = vunpack.c.l.b16 %v194
      %v243 = vunpack.c.l.b16 %v195
      %v244 = vunpack.c.l.b16 %v196
      %v245 = vunpack.c.l.b16 %v197
      %v246 = vunpack.c.l.b16 %v198
      %v247 = vunpack.c.l.b16 %v199
      %v248 = vunpack.c.l.b16 %v200
      %v249 = vunpack.c.l.b16 %v201
      %v250 = vunpack.c.l.b16 %v202
      %v251 = vunpack.c.l.b16 %v203
      %v252 = vpack.c.b16 %v243, %v242
      %v253 = vpack.c.b16 %v245, %v244
      %v254 = vpack.c.b16 %v247, %v246
      %v255 = vpack.c.b16 %v249, %v248
      %v256 = vpack.c.b16 %v251, %v250
      %v265 = vunpack.c.l.b16 %v224
      %v266 = vunpack.c.h.b16 %v224
      %v267 = vunpack.c.l.b16 %v225
      %v268 = vunpack.c.h.b16 %v225
      %v269 = vunpack.c.l.b16 %v226
      %v270 = vunpack.c.h.b16 %v226
      %v271 = vunpack.c.l.b16 %v227
      %v272 = vunpack.c.h.b16 %v227
      %v273 = vunpack.c.l.b16 %v228
      %v274 = vunpack.c.h.b16 %v228
      %v275 = vunpack.c.l.b16 %v229
      %v276 = vunpack.c.h.b16 %v229
      %v277 = vunpack.c.l.b16 %v230
      %v278 = vunpack.c.h.b16 %v230
      %v279 = vunpack.c.l.b16 %v231
      %v280 = vunpack.c.h.b16 %v231
      %v281 = vpack.c.b16 %v267, %v265
      %v282 = vpack.c.b16 %v268, %v266
      %v283 = vpack.c.b16 %v271, %v269
      %v284 = vpack.c.b16 %v272, %v270
      %v285 = vpack.c.b16 %v275, %v273
      %v286 = vpack.c.b16 %v276, %v274
      %v287 = vpack.c.b16 %v279, %v277
      %v288 = vpack.c.b16 %v280, %v278
      %v298 = vsel %vm173, %v252, 0
      %v301 = vsel %vm173, %v253, 0
      %v304 = vsel %vm173, %v254, 0
      %v307 = vsel %vm173, %v255, 0
      %v310 = vsel %vm173, %v256, 0
      %312 = vmatpush.bf16.msra.mxu0 0
      %313 = vmatpush.bf16.msra.mxu0 0
      %314 = vmatpush.bf16.msra.mxu0 0
      %315 = vmatpush.bf16.msra.mxu0 0
      %316 = vmatpush.bf16.msra.mxu0 %v287
      %317 = vmatpush.bf16.msra.mxu0 %v285
      %318 = vmatpush.bf16.msra.mxu0 %v283
      %319 = vmatpush.bf16.msra.mxu0 %v281
      %320 = vmatmul.bf16.gmra.mxu0 %v298
      %v321 = vpop.f32.mrf.mxu0
      %v322 = vadd.f32 0.0, %v321
      %v323 = vpop.f32.mrf.mxu0
      %v324 = vadd.f32 0.0, %v323
      %325 = vmatmul.bf16.gmra.mxu0 %v301
      %v326 = vpop.f32.mrf.mxu0
      %v327 = vadd.f32 0.0, %v326
      %v328 = vpop.f32.mrf.mxu0
      %v329 = vadd.f32 0.0, %v328
      %330 = vmatmul.bf16.gmra.mxu0 %v304
      %v331 = vpop.f32.mrf.mxu0
      %v332 = vadd.f32 0.0, %v331
      %v333 = vpop.f32.mrf.mxu0
      %v334 = vadd.f32 0.0, %v333
      %335 = vmatmul.bf16.gmra.mxu0 %v307
      %v336 = vpop.f32.mrf.mxu0
      %v337 = vadd.f32 0.0, %v336
      %v338 = vpop.f32.mrf.mxu0
      %v339 = vadd.f32 0.0, %v338
      %340 = vmatmul.bf16.gmra.mxu0 %v310
      %v341 = vpop.f32.mrf.mxu0
      %v342 = vadd.f32 0.0, %v341
      %v343 = vpop.f32.mrf.mxu0
      %v344 = vadd.f32 0.0, %v343
      %345 = vdwg.mxu0
      %346 = vmatpush.bf16.msra.mxu0 0
      %347 = vmatpush.bf16.msra.mxu0 0
      %348 = vmatpush.bf16.msra.mxu0 0
      %349 = vmatpush.bf16.msra.mxu0 0
      %350 = vmatpush.bf16.msra.mxu0 %v288
      %351 = vmatpush.bf16.msra.mxu0 %v286
      %352 = vmatpush.bf16.msra.mxu0 %v284
      %353 = vmatpush.bf16.msra.mxu0 %v282
      %354 = vmatmul.bf16.gmra.mxu0 %v298
      %v355 = vpop.f32.mrf.mxu0
      %v356 = vadd.f32 0.0, %v355
      %v357 = vpop.f32.mrf.mxu0
      %v358 = vadd.f32 0.0, %v357
      %359 = vmatmul.bf16.gmra.mxu0 %v301
      %v360 = vpop.f32.mrf.mxu0
      %v361 = vadd.f32 0.0, %v360
      %v362 = vpop.f32.mrf.mxu0
      %v363 = vadd.f32 0.0, %v362
      %364 = vmatmul.bf16.gmra.mxu0 %v304
      %v365 = vpop.f32.mrf.mxu0
      %v366 = vadd.f32 0.0, %v365
      %v367 = vpop.f32.mrf.mxu0
      %v368 = vadd.f32 0.0, %v367
      %369 = vmatmul.bf16.gmra.mxu0 %v307
      %v370 = vpop.f32.mrf.mxu0
      %v371 = vadd.f32 0.0, %v370
      %v372 = vpop.f32.mrf.mxu0
      %v373 = vadd.f32 0.0, %v372
      %374 = vmatmul.bf16.gmra.mxu0 %v310
      %v375 = vpop.f32.mrf.mxu0
      %v376 = vadd.f32 0.0, %v375
      %v377 = vpop.f32.mrf.mxu0
      %v378 = vadd.f32 0.0, %v377
      %379 = vdwg.mxu0
      %v380 = vadd.f32 %v204, %v322
      %v381 = vadd.f32 %v205, %v356
      %v382 = vadd.f32 %v206, %v324
      %v383 = vadd.f32 %v207, %v358
      %v384 = vadd.f32 %v208, %v327
      %v385 = vadd.f32 %v209, %v361
      %v386 = vadd.f32 %v210, %v329
      %v387 = vadd.f32 %v211, %v363
      %v388 = vadd.f32 %v212, %v332
      %v389 = vadd.f32 %v213, %v366
      %v390 = vadd.f32 %v214, %v334
      %v391 = vadd.f32 %v215, %v368
      %v392 = vadd.f32 %v216, %v337
      %v393 = vadd.f32 %v217, %v371
      %v394 = vadd.f32 %v218, %v339
      %v395 = vadd.f32 %v219, %v373
      %v396 = vadd.f32 %v220, %v342
      %v397 = vadd.f32 %v221, %v376
      %v398 = vadd.f32 %v222, %v344
      %v399 = vadd.f32 %v223, %v378
      %400 = vst [vmem:[#allocation2] sm:$0xff] %v380
      %401 = vst.msk [vmem:[#allocation2 + $0x8] sm:$0xff] %vm173, %v381
      %402 = vst [vmem:[#allocation2 + $0x10] sm:$0xff] %v382
      %403 = vst.msk [vmem:[#allocation2 + $0x18] sm:$0xff] %vm173, %v383
      %404 = vst [vmem:[#allocation2 + $0x20] sm:$0xff] %v384
      %405 = vst.msk [vmem:[#allocation2 + $0x28] sm:$0xff] %vm173, %v385
      %406 = vst [vmem:[#allocation2 + $0x30] sm:$0xff] %v386
      %407 = vst.msk [vmem:[#allocation2 + $0x38] sm:$0xff] %vm173, %v387
      %408 = vst [vmem:[#allocation2 + $0x40] sm:$0xff] %v388
      %409 = vst.msk [vmem:[#allocation2 + $0x48] sm:$0xff] %vm173, %v389
      %410 = vst [vmem:[#allocation2 + $0x50] sm:$0xff] %v390
      %411 = vst.msk [vmem:[#allocation2 + $0x58] sm:$0xff] %vm173, %v391
      %412 = vst [vmem:[#allocation2 + $0x60] sm:$0xff] %v392
      %413 = vst.msk [vmem:[#allocation2 + $0x68] sm:$0xff] %vm173, %v393
      %414 = vst [vmem:[#allocation2 + $0x70] sm:$0xff] %v394
      %415 = vst.msk [vmem:[#allocation2 + $0x78] sm:$0xff] %vm173, %v395
      %416 = vst [vmem:[#allocation2 + $0x80] sm:$0xff] %v396
      %417 = vst.msk [vmem:[#allocation2 + $0x88] sm:$0xff] %vm173, %v397
      %418 = vst [vmem:[#allocation2 + $0x90] sm:$0x1f] %v398
      %419 = vst.msk [vmem:[#allocation2 + $0x98] sm:$0x1f] %vm192, %v399
      %v420 = vld [vmem:[%s165] sm:$0xf]
      %v421 = vld [vmem:[%s165 + $0x4] sm:$0xf]
      %v422 = vld [vmem:[%s165 + $0x8] sm:$0xf]
      %v423 = vld [vmem:[%s165 + $0xc] sm:$0xf]
      %v424 = vld [vmem:[%s165 + $0x10] sm:$0xf]
      %v425 = vld [vmem:[%s165 + $0x14] sm:$0xf]
      %v426 = vld [vmem:[%s165 + $0x18] sm:$0xf]
      %v427 = vld [vmem:[%s165 + $0x1c] sm:$0xf]
      %v428 = vld [vmem:[%s165 + $0x20] sm:$0xf]
      %v429 = vld [vmem:[%s165 + $0x24] sm:$0x7]
      %v430 = vld [vmem:[#allocation2] sm:$0xff]
      %v431 = vld [vmem:[#allocation2 + $0x8] sm:$0xff]
      %v432 = vld [vmem:[#allocation2 + $0x10] sm:$0xff]
      %v433 = vld [vmem:[#allocation2 + $0x18] sm:$0xff]
      %v434 = vld [vmem:[#allocation2 + $0x20] sm:$0xff]
      %v435 = vld [vmem:[#allocation2 + $0x28] sm:$0xff]
      %v436 = vld [vmem:[#allocation2 + $0x30] sm:$0xff]
      %v437 = vld [vmem:[#allocation2 + $0x38] sm:$0xff]
      %v438 = vld [vmem:[#allocation2 + $0x40] sm:$0xff]
      %v439 = vld [vmem:[#allocation2 + $0x48] sm:$0xff]
      %v440 = vld [vmem:[#allocation2 + $0x50] sm:$0xff]
      %v441 = vld [vmem:[#allocation2 + $0x58] sm:$0xff]
      %v442 = vld [vmem:[#allocation2 + $0x60] sm:$0xff]
      %v443 = vld [vmem:[#allocation2 + $0x68] sm:$0xff]
      %v444 = vld [vmem:[#allocation2 + $0x70] sm:$0xff]
      %v445 = vld [vmem:[#allocation2 + $0x78] sm:$0xff]
      %v446 = vld [vmem:[#allocation2 + $0x80] sm:$0xff]
      %v447 = vld [vmem:[#allocation2 + $0x88] sm:$0xff]
      %v448 = vld [vmem:[#allocation2 + $0x90] sm:$0x1f]
      %v449 = vld [vmem:[#allocation2 + $0x98] sm:$0x1f]
      %s450 = scalar_lea.vmem %s1, 64
      %v451 = vld [vmem:[%s450] sm:$0xff]
      %v452 = vld [vmem:[%s450 + $0x8] sm:$0xff]
      %v453 = vld [vmem:[%s450 + $0x10] sm:$0xff]
      %v454 = vld [vmem:[%s450 + $0x18] sm:$0xff]
      %v455 = vld [vmem:[%s450 + $0x20] sm:$0xff]
      %v456 = vld [vmem:[%s450 + $0x28] sm:$0xff]
      %v457 = vld [vmem:[%s450 + $0x30] sm:$0xff]
      %v458 = vld [vmem:[%s450 + $0x38] sm:$0xff]
      %v469 = vunpack.c.l.b16 %v420
      %v470 = vunpack.c.l.b16 %v421
      %v471 = vunpack.c.l.b16 %v422
      %v472 = vunpack.c.l.b16 %v423
      %v473 = vunpack.c.l.b16 %v424
      %v474 = vunpack.c.l.b16 %v425
      %v475 = vunpack.c.l.b16 %v426
      %v476 = vunpack.c.l.b16 %v427
      %v477 = vunpack.c.l.b16 %v428
      %v478 = vunpack.c.l.b16 %v429
      %v479 = vpack.c.b16 %v470, %v469
      %v480 = vpack.c.b16 %v472, %v471
      %v481 = vpack.c.b16 %v474, %v473
      %v482 = vpack.c.b16 %v476, %v475
      %v483 = vpack.c.b16 %v478, %v477
      %vm484 = vsmask.f32 7424
      %v486 = vshrl.u32 %v479, 16
      %v488 = vshll.u32 %v479, 16
      %v490 = vrot.slane %v488, 1
      %v491 = vor.u32 %v486, %v490
      %v493 = vshll.u32 %v480, 16
      %v495 = vrot.slane %v493, 1
      %v496 = vsel %vm484, %v491, %v495
      %v497 = vshrl.u32 %v480, 16
      %v499 = vor.u32 %v497, %v495
      %v501 = vshll.u32 %v481, 16
      %v503 = vrot.slane %v501, 1
      %v504 = vsel %vm484, %v499, %v503
      %v505 = vshrl.u32 %v481, 16
      %v507 = vor.u32 %v505, %v503
      %v509 = vshll.u32 %v482, 16
      %v511 = vrot.slane %v509, 1
      %v512 = vsel %vm484, %v507, %v511
      %v513 = vshrl.u32 %v482, 16
      %v515 = vor.u32 %v513, %v511
      %v517 = vshll.u32 %v483, 16
      %v519 = vrot.slane %v517, 1
      %v520 = vsel %vm484, %v515, %v519
      %v521 = vshrl.u32 %v483, 16
      %v523 = vor.u32 %v521, %v519
      %v532 = vunpack.c.l.b16 %v451
      %v533 = vunpack.c.h.b16 %v451
      %v534 = vunpack.c.l.b16 %v452
      %v535 = vunpack.c.h.b16 %v452
      %v536 = vunpack.c.l.b16 %v453
      %v537 = vunpack.c.h.b16 %v453
      %v538 = vunpack.c.l.b16 %v454
      %v539 = vunpack.c.h.b16 %v454
      %v540 = vunpack.c.l.b16 %v455
      %v541 = vunpack.c.h.b16 %v455
      %v542 = vunpack.c.l.b16 %v456
      %v543 = vunpack.c.h.b16 %v456
      %v544 = vunpack.c.l.b16 %v457
      %v545 = vunpack.c.h.b16 %v457
      %v546 = vunpack.c.l.b16 %v458
      %v547 = vunpack.c.h.b16 %v458
      %v548 = vpack.c.b16 %v534, %v532
      %v549 = vpack.c.b16 %v535, %v533
      %v550 = vpack.c.b16 %v538, %v536
      %v551 = vpack.c.b16 %v539, %v537
      %v552 = vpack.c.b16 %v542, %v540
      %v553 = vpack.c.b16 %v543, %v541
      %v554 = vpack.c.b16 %v546, %v544
      %v555 = vpack.c.b16 %v547, %v545
      %v565 = vsel %vm173, %v496, 0
      %v568 = vsel %vm173, %v504, 0
      %v571 = vsel %vm173, %v512, 0
      %v574 = vsel %vm173, %v520, 0
      %v577 = vsel %vm173, %v523, 0
      %579 = vmatpush.bf16.msra.mxu0 0
      %580 = vmatpush.bf16.msra.mxu0 0
      %581 = vmatpush.bf16.msra.mxu0 0
      %582 = vmatpush.bf16.msra.mxu0 0
      %583 = vmatpush.bf16.msra.mxu0 %v554
      %584 = vmatpush.bf16.msra.mxu0 %v552
      %585 = vmatpush.bf16.msra.mxu0 %v550
      %586 = vmatpush.bf16.msra.mxu0 %v548
      %587 = vmatmul.bf16.gmra.mxu0 %v565
      %v588 = vpop.f32.mrf.mxu0
      %v589 = vadd.f32 0.0, %v588
      %v590 = vpop.f32.mrf.mxu0
      %v591 = vadd.f32 0.0, %v590
      %592 = vmatmul.bf16.gmra.mxu0 %v568
      %v593 = vpop.f32.mrf.mxu0
      %v594 = vadd.f32 0.0, %v593
      %v595 = vpop.f32.mrf.mxu0
      %v596 = vadd.f32 0.0, %v595
      %597 = vmatmul.bf16.gmra.mxu0 %v571
      %v598 = vpop.f32.mrf.mxu0
      %v599 = vadd.f32 0.0, %v598
      %v600 = vpop.f32.mrf.mxu0
      %v601 = vadd.f32 0.0, %v600
      %602 = vmatmul.bf16.gmra.mxu0 %v574
      %v603 = vpop.f32.mrf.mxu0
      %v604 = vadd.f32 0.0, %v603
      %v605 = vpop.f32.mrf.mxu0
      %v606 = vadd.f32 0.0, %v605
      %607 = vmatmul.bf16.gmra.mxu0 %v577
      %v608 = vpop.f32.mrf.mxu0
      %v609 = vadd.f32 0.0, %v608
      %v610 = vpop.f32.mrf.mxu0
      %v611 = vadd.f32 0.0, %v610
      %612 = vdwg.mxu0
      %613 = vmatpush.bf16.msra.mxu0 0
      %614 = vmatpush.bf16.msra.mxu0 0
      %615 = vmatpush.bf16.msra.mxu0 0
      %616 = vmatpush.bf16.msra.mxu0 0
      %617 = vmatpush.bf16.msra.mxu0 %v555
      %618 = vmatpush.bf16.msra.mxu0 %v553
      %619 = vmatpush.bf16.msra.mxu0 %v551
      %620 = vmatpush.bf16.msra.mxu0 %v549
      %621 = vmatmul.bf16.gmra.mxu0 %v565
      %v622 = vpop.f32.mrf.mxu0
      %v623 = vadd.f32 0.0, %v622
      %v624 = vpop.f32.mrf.mxu0
      %v625 = vadd.f32 0.0, %v624
      %626 = vmatmul.bf16.gmra.mxu0 %v568
      %v627 = vpop.f32.mrf.mxu0
      %v628 = vadd.f32 0.0, %v627
      %v629 = vpop.f32.mrf.mxu0
      %v630 = vadd.f32 0.0, %v629
      %631 = vmatmul.bf16.gmra.mxu0 %v571
      %v632 = vpop.f32.mrf.mxu0
      %v633 = vadd.f32 0.0, %v632
      %v634 = vpop.f32.mrf.mxu0
      %v635 = vadd.f32 0.0, %v634
      %636 = vmatmul.bf16.gmra.mxu0 %v574
      %v637 = vpop.f32.mrf.mxu0
      %v638 = vadd.f32 0.0, %v637
      %v639 = vpop.f32.mrf.mxu0
      %v640 = vadd.f32 0.0, %v639
      %641 = vmatmul.bf16.gmra.mxu0 %v577
      %v642 = vpop.f32.mrf.mxu0
      %v643 = vadd.f32 0.0, %v642
      %v644 = vpop.f32.mrf.mxu0
      %v645 = vadd.f32 0.0, %v644
      %646 = vdwg.mxu0
      %v647 = vadd.f32 %v430, %v589
      %v648 = vadd.f32 %v431, %v623
      %v649 = vadd.f32 %v432, %v591
      %v650 = vadd.f32 %v433, %v625
      %v651 = vadd.f32 %v434, %v594
      %v652 = vadd.f32 %v435, %v628
      %v653 = vadd.f32 %v436, %v596
      %v654 = vadd.f32 %v437, %v630
      %v655 = vadd.f32 %v438, %v599
      %v656 = vadd.f32 %v439, %v633
      %v657 = vadd.f32 %v440, %v601
      %v658 = vadd.f32 %v441, %v635
      %v659 = vadd.f32 %v442, %v604
      %v660 = vadd.f32 %v443, %v638
      %v661 = vadd.f32 %v444, %v606
      %v662 = vadd.f32 %v445, %v640
      %v663 = vadd.f32 %v446, %v609
      %v664 = vadd.f32 %v447, %v643
      %v665 = vadd.f32 %v448, %v611
      %v666 = vadd.f32 %v449, %v645
      %667 = vst [vmem:[#allocation2] sm:$0xff] %v647
      %668 = vst.msk [vmem:[#allocation2 + $0x8] sm:$0xff] %vm173, %v648
      %669 = vst [vmem:[#allocation2 + $0x10] sm:$0xff] %v649
      %670 = vst.msk [vmem:[#allocation2 + $0x18] sm:$0xff] %vm173, %v650
      %671 = vst [vmem:[#allocation2 + $0x20] sm:$0xff] %v651
      %672 = vst.msk [vmem:[#allocation2 + $0x28] sm:$0xff] %vm173, %v652
      %673 = vst [vmem:[#allocation2 + $0x30] sm:$0xff] %v653
      %674 = vst.msk [vmem:[#allocation2 + $0x38] sm:$0xff] %vm173, %v654
      %675 = vst [vmem:[#allocation2 + $0x40] sm:$0xff] %v655
      %676 = vst.msk [vmem:[#allocation2 + $0x48] sm:$0xff] %vm173, %v656
      %677 = vst [vmem:[#allocation2 + $0x50] sm:$0xff] %v657
      %678 = vst.msk [vmem:[#allocation2 + $0x58] sm:$0xff] %vm173, %v658
      %679 = vst [vmem:[#allocation2 + $0x60] sm:$0xff] %v659
      %680 = vst.msk [vmem:[#allocation2 + $0x68] sm:$0xff] %vm173, %v660
      %681 = vst [vmem:[#allocation2 + $0x70] sm:$0xff] %v661
      %682 = vst.msk [vmem:[#allocation2 + $0x78] sm:$0xff] %vm173, %v662
      %683 = vst [vmem:[#allocation2 + $0x80] sm:$0xff] %v663
      %684 = vst.msk [vmem:[#allocation2 + $0x88] sm:$0xff] %vm173, %v664
      %685 = vst [vmem:[#allocation2 + $0x90] sm:$0x1f] %v665
      %686 = vst.msk [vmem:[#allocation2 + $0x98] sm:$0x1f] %vm192, %v666
      %v687 = vld [vmem:[%s165] sm:$0xe]
      %v688 = vld [vmem:[%s165 + $0x4] sm:$0xf]
      %v689 = vld [vmem:[%s165 + $0x8] sm:$0xf]
      %v690 = vld [vmem:[%s165 + $0xc] sm:$0xf]
      %v691 = vld [vmem:[%s165 + $0x10] sm:$0xf]
      %v692 = vld [vmem:[%s165 + $0x14] sm:$0xf]
      %v693 = vld [vmem:[%s165 + $0x18] sm:$0xf]
      %v694 = vld [vmem:[%s165 + $0x1c] sm:$0xf]
      %v695 = vld [vmem:[%s165 + $0x20] sm:$0xf]
      %v696 = vld [vmem:[%s165 + $0x24] sm:$0xf]
      %v697 = vld [vmem:[#allocation2] sm:$0xff]
      %v698 = vld [vmem:[#allocation2 + $0x8] sm:$0xff]
      %v699 = vld [vmem:[#allocation2 + $0x10] sm:$0xff]
      %v700 = vld [vmem:[#allocation2 + $0x18] sm:$0xff]
      %v701 = vld [vmem:[#allocation2 + $0x20] sm:$0xff]
      %v702 = vld [vmem:[#allocation2 + $0x28] sm:$0xff]
      %v703 = vld [vmem:[#allocation2 + $0x30] sm:$0xff]
      %v704 = vld [vmem:[#allocation2 + $0x38] sm:$0xff]
      %v705 = vld [vmem:[#allocation2 + $0x40] sm:$0xff]
      %v706 = vld [vmem:[#allocation2 + $0x48] sm:$0xff]
      %v707 = vld [vmem:[#allocation2 + $0x50] sm:$0xff]
      %v708 = vld [vmem:[#allocation2 + $0x58] sm:$0xff]
      %v709 = vld [vmem:[#allocation2 + $0x60] sm:$0xff]
      %v710 = vld [vmem:[#allocation2 + $0x68] sm:$0xff]
      %v711 = vld [vmem:[#allocation2 + $0x70] sm:$0xff]
      %v712 = vld [vmem:[#allocation2 + $0x78] sm:$0xff]
      %v713 = vld [vmem:[#allocation2 + $0x80] sm:$0xff]
      %v714 = vld [vmem:[#allocation2 + $0x88] sm:$0xff]
      %v715 = vld [vmem:[#allocation2 + $0x90] sm:$0x1f]
      %v716 = vld [vmem:[#allocation2 + $0x98] sm:$0x1f]
      %s717 = scalar_lea.vmem %s1, 128
      %v718 = vld [vmem:[%s717] sm:$0xff]
      %v719 = vld [vmem:[%s717 + $0x8] sm:$0xff]
      %v720 = vld [vmem:[%s717 + $0x10] sm:$0xff]
      %v721 = vld [vmem:[%s717 + $0x18] sm:$0xff]
      %v722 = vld [vmem:[%s717 + $0x20] sm:$0xff]
      %v723 = vld [vmem:[%s717 + $0x28] sm:$0xff]
      %v724 = vld [vmem:[%s717 + $0x30] sm:$0xff]
      %v725 = vld [vmem:[%s717 + $0x38] sm:$0xff]
      %v736 = vunpack.c.l.b16 %v687
      %v737 = vunpack.c.l.b16 %v688
      %v738 = vunpack.c.l.b16 %v689
      %v739 = vunpack.c.l.b16 %v690
      %v740 = vunpack.c.l.b16 %v691
      %v741 = vunpack.c.l.b16 %v692
      %v742 = vunpack.c.l.b16 %v693
      %v743 = vunpack.c.l.b16 %v694
      %v744 = vunpack.c.l.b16 %v695
      %v745 = vunpack.c.l.b16 %v696
      %v746 = vpack.c.b16 %v737, %v736
      %v747 = vpack.c.b16 %v739, %v738
      %v748 = vpack.c.b16 %v741, %v740
      %v749 = vpack.c.b16 %v743, %v742
      %v750 = vpack.c.b16 %v745, %v744
      %vm751 = vcmask 1046528
      %v752 = vrot.slane %v746, 1
      %v753 = vrot.slane %v747, 1
      %v754 = vsel %vm751, %v752, %v753
      %v755 = vrot.slane %v748, 1
      %v756 = vsel %vm751, %v753, %v755
      %v757 = vrot.slane %v749, 1
      %v758 = vsel %vm751, %v755, %v757
      %v759 = vrot.slane %v750, 1
      %v760 = vsel %vm751, %v757, %v759
      %v769 = vunpack.c.l.b16 %v718
      %v770 = vunpack.c.h.b16 %v718
      %v771 = vunpack.c.l.b16 %v719
      %v772 = vunpack.c.h.b16 %v719
      %v773 = vunpack.c.l.b16 %v720
      %v774 = vunpack.c.h.b16 %v720
      %v775 = vunpack.c.l.b16 %v721
      %v776 = vunpack.c.h.b16 %v721
      %v777 = vunpack.c.l.b16 %v722
      %v778 = vunpack.c.h.b16 %v722
      %v779 = vunpack.c.l.b16 %v723
      %v780 = vunpack.c.h.b16 %v723
      %v781 = vunpack.c.l.b16 %v724
      %v782 = vunpack.c.h.b16 %v724
      %v783 = vunpack.c.l.b16 %v725
      %v784 = vunpack.c.h.b16 %v725
      %v785 = vpack.c.b16 %v771, %v769
      %v786 = vpack.c.b16 %v772, %v770
      %v787 = vpack.c.b16 %v775, %v773
      %v788 = vpack.c.b16 %v776, %v774
      %v789 = vpack.c.b16 %v779, %v777
      %v790 = vpack.c.b16 %v780, %v778
      %v791 = vpack.c.b16 %v783, %v781
      %v792 = vpack.c.b16 %v784, %v782
      %v802 = vsel %vm173, %v754, 0
      %v805 = vsel %vm173, %v756, 0
      %v808 = vsel %vm173, %v758, 0
      %v811 = vsel %vm173, %v760, 0
      %v814 = vsel %vm173, %v759, 0
      %816 = vmatpush.bf16.msra.mxu0 0
      %817 = vmatpush.bf16.msra.mxu0 0
      %818 = vmatpush.bf16.msra.mxu0 0
      %819 = vmatpush.bf16.msra.mxu0 0
      %820 = vmatpush.bf16.msra.mxu0 %v791
      %821 = vmatpush.bf16.msra.mxu0 %v789
      %822 = vmatpush.bf16.msra.mxu0 %v787
      %823 = vmatpush.bf16.msra.mxu0 %v785
      %824 = vmatmul.bf16.gmra.mxu0 %v802
      %v825 = vpop.f32.mrf.mxu0
      %v826 = vadd.f32 0.0, %v825
      %v827 = vpop.f32.mrf.mxu0
      %v828 = vadd.f32 0.0, %v827
      %829 = vmatmul.bf16.gmra.mxu0 %v805
      %v830 = vpop.f32.mrf.mxu0
      %v831 = vadd.f32 0.0, %v830
      %v832 = vpop.f32.mrf.mxu0
      %v833 = vadd.f32 0.0, %v832
      %834 = vmatmul.bf16.gmra.mxu0 %v808
      %v835 = vpop.f32.mrf.mxu0
      %v836 = vadd.f32 0.0, %v835
      %v837 = vpop.f32.mrf.mxu0
      %v838 = vadd.f32 0.0, %v837
      %839 = vmatmul.bf16.gmra.mxu0 %v811
      %v840 = vpop.f32.mrf.mxu0
      %v841 = vadd.f32 0.0, %v840
      %v842 = vpop.f32.mrf.mxu0
      %v843 = vadd.f32 0.0, %v842
      %844 = vmatmul.bf16.gmra.mxu0 %v814
      %v845 = vpop.f32.mrf.mxu0
      %v846 = vadd.f32 0.0, %v845
      %v847 = vpop.f32.mrf.mxu0
      %v848 = vadd.f32 0.0, %v847
      %849 = vdwg.mxu0
      %850 = vmatpush.bf16.msra.mxu0 0
      %851 = vmatpush.bf16.msra.mxu0 0
      %852 = vmatpush.bf16.msra.mxu0 0
      %853 = vmatpush.bf16.msra.mxu0 0
      %854 = vmatpush.bf16.msra.mxu0 %v792
      %855 = vmatpush.bf16.msra.mxu0 %v790
      %856 = vmatpush.bf16.msra.mxu0 %v788
      %857 = vmatpush.bf16.msra.mxu0 %v786
      %858 = vmatmul.bf16.gmra.mxu0 %v802
      %v859 = vpop.f32.mrf.mxu0
      %v860 = vadd.f32 0.0, %v859
      %v861 = vpop.f32.mrf.mxu0
      %v862 = vadd.f32 0.0, %v861
      %863 = vmatmul.bf16.gmra.mxu0 %v805
      %v864 = vpop.f32.mrf.mxu0
      %v865 = vadd.f32 0.0, %v864
      %v866 = vpop.f32.mrf.mxu0
      %v867 = vadd.f32 0.0, %v866
      %868 = vmatmul.bf16.gmra.mxu0 %v808
      %v869 = vpop.f32.mrf.mxu0
      %v870 = vadd.f32 0.0, %v869
      %v871 = vpop.f32.mrf.mxu0
      %v872 = vadd.f32 0.0, %v871
      %873 = vmatmul.bf16.gmra.mxu0 %v811
      %v874 = vpop.f32.mrf.mxu0
      %v875 = vadd.f32 0.0, %v874
      %v876 = vpop.f32.mrf.mxu0
      %v877 = vadd.f32 0.0, %v876
      %878 = vmatmul.bf16.gmra.mxu0 %v814
      %v879 = vpop.f32.mrf.mxu0
      %v880 = vadd.f32 0.0, %v879
      %v881 = vpop.f32.mrf.mxu0
      %v882 = vadd.f32 0.0, %v881
      %883 = vdwg.mxu0
      %v884 = vadd.f32 %v697, %v826
      %v885 = vadd.f32 %v698, %v860
      %v886 = vadd.f32 %v699, %v828
      %v887 = vadd.f32 %v700, %v862
      %v888 = vadd.f32 %v701, %v831
      %v889 = vadd.f32 %v702, %v865
      %v890 = vadd.f32 %v703, %v833
      %v891 = vadd.f32 %v704, %v867
      %v892 = vadd.f32 %v705, %v836
      %v893 = vadd.f32 %v706, %v870
      %v894 = vadd.f32 %v707, %v838
      %v895 = vadd.f32 %v708, %v872
      %v896 = vadd.f32 %v709, %v841
      %v897 = vadd.f32 %v710, %v875
      %v898 = vadd.f32 %v711, %v843
      %v899 = vadd.f32 %v712, %v877
      %v900 = vadd.f32 %v713, %v846
      %v901 = vadd.f32 %v714, %v880
      %v902 = vadd.f32 %v715, %v848
      %v903 = vadd.f32 %v716, %v882
      %904 = vst [vmem:[#allocation2] sm:$0xff] %v884
      %905 = vst.msk [vmem:[#allocation2 + $0x8] sm:$0xff] %vm173, %v885
      %906 = vst [vmem:[#allocation2 + $0x10] sm:$0xff] %v886
      %907 = vst.msk [vmem:[#allocation2 + $0x18] sm:$0xff] %vm173, %v887
      %908 = vst [vmem:[#allocation2 + $0x20] sm:$0xff] %v888
      %909 = vst.msk [vmem:[#allocation2 + $0x28] sm:$0xff] %vm173, %v889
      %910 = vst [vmem:[#allocation2 + $0x30] sm:$0xff] %v890
      %911 = vst.msk [vmem:[#allocation2 + $0x38] sm:$0xff] %vm173, %v891
      %912 = vst [vmem:[#allocation2 + $0x40] sm:$0xff] %v892
      %913 = vst.msk [vmem:[#allocation2 + $0x48] sm:$0xff] %vm173, %v893
      %914 = vst [vmem:[#allocation2 + $0x50] sm:$0xff] %v894
      %915 = vst.msk [vmem:[#allocation2 + $0x58] sm:$0xff] %vm173, %v895
      %916 = vst [vmem:[#allocation2 + $0x60] sm:$0xff] %v896
      %917 = vst.msk [vmem:[#allocation2 + $0x68] sm:$0xff] %vm173, %v897
      %918 = vst [vmem:[#allocation2 + $0x70] sm:$0xff] %v898
      %919 = vst.msk [vmem:[#allocation2 + $0x78] sm:$0xff] %vm173, %v899
      %920 = vst [vmem:[#allocation2 + $0x80] sm:$0xff] %v900
      %921 = vst.msk [vmem:[#allocation2 + $0x88] sm:$0xff] %vm173, %v901
      %922 = vst [vmem:[#allocation2 + $0x90] sm:$0x1f] %v902
      %923 = vst.msk [vmem:[#allocation2 + $0x98] sm:$0x1f] %vm192, %v903
      %v924 = vld [vmem:[%s165] sm:$0xe]
      %v925 = vld [vmem:[%s165 + $0x4] sm:$0xf]
      %v926 = vld [vmem:[%s165 + $0x8] sm:$0xf]
      %v927 = vld [vmem:[%s165 + $0xc] sm:$0xf]
      %v928 = vld [vmem:[%s165 + $0x10] sm:$0xf]
      %v929 = vld [vmem:[%s165 + $0x14] sm:$0xf]
      %v930 = vld [vmem:[%s165 + $0x18] sm:$0xf]
      %v931 = vld [vmem:[%s165 + $0x1c] sm:$0xf]
      %v932 = vld [vmem:[%s165 + $0x20] sm:$0xf]
      %v933 = vld [vmem:[%s165 + $0x24] sm:$0xf]
      %v934 = vld [vmem:[#allocation2] sm:$0xff]
      %v935 = vld [vmem:[#allocation2 + $0x8] sm:$0xff]
      %v936 = vld [vmem:[#allocation2 + $0x10] sm:$0xff]
      %v937 = vld [vmem:[#allocation2 + $0x18] sm:$0xff]
      %v938 = vld [vmem:[#allocation2 + $0x20] sm:$0xff]
      %v939 = vld [vmem:[#allocation2 + $0x28] sm:$0xff]
      %v940 = vld [vmem:[#allocation2 + $0x30] sm:$0xff]
      %v941 = vld [vmem:[#allocation2 + $0x38] sm:$0xff]
      %v942 = vld [vmem:[#allocation2 + $0x40] sm:$0xff]
      %v943 = vld [vmem:[#allocation2 + $0x48] sm:$0xff]
      %v944 = vld [vmem:[#allocation2 + $0x50] sm:$0xff]
      %v945 = vld [vmem:[#allocation2 + $0x58] sm:$0xff]
      %v946 = vld [vmem:[#allocation2 + $0x60] sm:$0xff]
      %v947 = vld [vmem:[#allocation2 + $0x68] sm:$0xff]
      %v948 = vld [vmem:[#allocation2 + $0x70] sm:$0xff]
      %v949 = vld [vmem:[#allocation2 + $0x78] sm:$0xff]
      %v950 = vld [vmem:[#allocation2 + $0x80] sm:$0xff]
      %v951 = vld [vmem:[#allocation2 + $0x88] sm:$0xff]
      %v952 = vld [vmem:[#allocation2 + $0x90] sm:$0x1f]
      %v953 = vld [vmem:[#allocation2 + $0x98] sm:$0x1f]
      %s954 = scalar_lea.vmem %s1, 192
      %v955 = vld [vmem:[%s954] sm:$0xff]
      %v956 = vld [vmem:[%s954 + $0x8] sm:$0xff]
      %v957 = vld [vmem:[%s954 + $0x10] sm:$0xff]
      %v958 = vld [vmem:[%s954 + $0x18] sm:$0xff]
      %v959 = vld [vmem:[%s954 + $0x20] sm:$0xff]
      %v960 = vld [vmem:[%s954 + $0x28] sm:$0xff]
      %v961 = vld [vmem:[%s954 + $0x30] sm:$0xff]
      %v962 = vld [vmem:[%s954 + $0x38] sm:$0xff]
      %v973 = vunpack.c.l.b16 %v924
      %v974 = vunpack.c.l.b16 %v925
      %v975 = vunpack.c.l.b16 %v926
      %v976 = vunpack.c.l.b16 %v927
      %v977 = vunpack.c.l.b16 %v928
      %v978 = vunpack.c.l.b16 %v929
      %v979 = vunpack.c.l.b16 %v930
      %v980 = vunpack.c.l.b16 %v931
      %v981 = vunpack.c.l.b16 %v932
      %v982 = vunpack.c.l.b16 %v933
      %v983 = vpack.c.b16 %v974, %v973
      %v984 = vpack.c.b16 %v976, %v975
      %v985 = vpack.c.b16 %v978, %v977
      %v986 = vpack.c.b16 %v980, %v979
      %v987 = vpack.c.b16 %v982, %v981
      %vm988 = vsmask.f32 6400
      %v990 = vshrl.u32 %v983, 16
      %v992 = vrot.slane %v990, 1
      %v993 = vshll.u32 %v983, 16
      %v995 = vrot.slane %v993, 2
      %v996 = vor.u32 %v992, %v995
      %v998 = vshrl.u32 %v984, 16
      %v1000 = vrot.slane %v998, 1
      %v1001 = vshll.u32 %v984, 16
      %v1003 = vrot.slane %v1001, 2
      %v1004 = vor.u32 %v1000, %v1003
      %v1005 = vsel %vm988, %v996, %v1004
      %v1007 = vshrl.u32 %v985, 16
      %v1009 = vrot.slane %v1007, 1
      %v1010 = vshll.u32 %v985, 16
      %v1012 = vrot.slane %v1010, 2
      %v1013 = vor.u32 %v1009, %v1012
      %v1014 = vsel %vm988, %v1004, %v1013
      %v1016 = vshrl.u32 %v986, 16
      %v1018 = vrot.slane %v1016, 1
      %v1019 = vshll.u32 %v986, 16
      %v1021 = vrot.slane %v1019, 2
      %v1022 = vor.u32 %v1018, %v1021
      %v1023 = vsel %vm988, %v1013, %v1022
      %v1025 = vshrl.u32 %v987, 16
      %v1027 = vrot.slane %v1025, 1
      %v1028 = vshll.u32 %v987, 16
      %v1030 = vrot.slane %v1028, 2
      %v1031 = vor.u32 %v1027, %v1030
      %v1032 = vsel %vm988, %v1022, %v1031
      %v1041 = vunpack.c.l.b16 %v955
      %v1042 = vunpack.c.h.b16 %v955
      %v1043 = vunpack.c.l.b16 %v956
      %v1044 = vunpack.c.h.b16 %v956
      %v1045 = vunpack.c.l.b16 %v957
      %v1046 = vunpack.c.h.b16 %v957
      %v1047 = vunpack.c.l.b16 %v958
      %v1048 = vunpack.c.h.b16 %v958
      %v1049 = vunpack.c.l.b16 %v959
      %v1050 = vunpack.c.h.b16 %v959
      %v1051 = vunpack.c.l.b16 %v960
      %v1052 = vunpack.c.h.b16 %v960
      %v1053 = vunpack.c.l.b16 %v961
      %v1054 = vunpack.c.h.b16 %v961
      %v1055 = vunpack.c.l.b16 %v962
      %v1056 = vunpack.c.h.b16 %v962
      %v1057 = vpack.c.b16 %v1043, %v1041
      %v1058 = vpack.c.b16 %v1044, %v1042
      %v1059 = vpack.c.b16 %v1047, %v1045
      %v1060 = vpack.c.b16 %v1048, %v1046
      %v1061 = vpack.c.b16 %v1051, %v1049
      %v1062 = vpack.c.b16 %v1052, %v1050
      %v1063 = vpack.c.b16 %v1055, %v1053
      %v1064 = vpack.c.b16 %v1056, %v1054
      %v1074 = vsel %vm173, %v1005, 0
      %v1077 = vsel %vm173, %v1014, 0
      %v1080 = vsel %vm173, %v1023, 0
      %v1083 = vsel %vm173, %v1032, 0
      %v1086 = vsel %vm173, %v1031, 0
      %1088 = vmatpush.bf16.msra.mxu0 0
      %1089 = vmatpush.bf16.msra.mxu0 0
      %1090 = vmatpush.bf16.msra.mxu0 0
      %1091 = vmatpush.bf16.msra.mxu0 0
      %1092 = vmatpush.bf16.msra.mxu0 %v1063
      %1093 = vmatpush.bf16.msra.mxu0 %v1061
      %1094 = vmatpush.bf16.msra.mxu0 %v1059
      %1095 = vmatpush.bf16.msra.mxu0 %v1057
      %1096 = vmatmul.bf16.gmra.mxu0 %v1074
      %v1097 = vpop.f32.mrf.mxu0
      %v1098 = vadd.f32 0.0, %v1097
      %v1099 = vpop.f32.mrf.mxu0
      %v1100 = vadd.f32 0.0, %v1099
      %1101 = vmatmul.bf16.gmra.mxu0 %v1077
      %v1102 = vpop.f32.mrf.mxu0
      %v1103 = vadd.f32 0.0, %v1102
      %v1104 = vpop.f32.mrf.mxu0
      %v1105 = vadd.f32 0.0, %v1104
      %1106 = vmatmul.bf16.gmra.mxu0 %v1080
      %v1107 = vpop.f32.mrf.mxu0
      %v1108 = vadd.f32 0.0, %v1107
      %v1109 = vpop.f32.mrf.mxu0
      %v1110 = vadd.f32 0.0, %v1109
      %1111 = vmatmul.bf16.gmra.mxu0 %v1083
      %v1112 = vpop.f32.mrf.mxu0
      %v1113 = vadd.f32 0.0, %v1112
      %v1114 = vpop.f32.mrf.mxu0
      %v1115 = vadd.f32 0.0, %v1114
      %1116 = vmatmul.bf16.gmra.mxu0 %v1086
      %v1117 = vpop.f32.mrf.mxu0
      %v1118 = vadd.f32 0.0, %v1117
      %v1119 = vpop.f32.mrf.mxu0
      %v1120 = vadd.f32 0.0, %v1119
      %1121 = vdwg.mxu0
      %1122 = vmatpush.bf16.msra.mxu0 0
      %1123 = vmatpush.bf16.msra.mxu0 0
      %1124 = vmatpush.bf16.msra.mxu0 0
      %1125 = vmatpush.bf16.msra.mxu0 0
      %1126 = vmatpush.bf16.msra.mxu0 %v1064
      %1127 = vmatpush.bf16.msra.mxu0 %v1062
      %1128 = vmatpush.bf16.msra.mxu0 %v1060
      %1129 = vmatpush.bf16.msra.mxu0 %v1058
      %1130 = vmatmul.bf16.gmra.mxu0 %v1074
      %v1131 = vpop.f32.mrf.mxu0
      %v1132 = vadd.f32 0.0, %v1131
      %v1133 = vpop.f32.mrf.mxu0
      %v1134 = vadd.f32 0.0, %v1133
      %1135 = vmatmul.bf16.gmra.mxu0 %v1077
      %v1136 = vpop.f32.mrf.mxu0
      %v1137 = vadd.f32 0.0, %v1136
      %v1138 = vpop.f32.mrf.mxu0
      %v1139 = vadd.f32 0.0, %v1138
      %1140 = vmatmul.bf16.gmra.mxu0 %v1080
      %v1141 = vpop.f32.mrf.mxu0
      %v1142 = vadd.f32 0.0, %v1141
      %v1143 = vpop.f32.mrf.mxu0
      %v1144 = vadd.f32 0.0, %v1143
      %1145 = vmatmul.bf16.gmra.mxu0 %v1083
      %v1146 = vpop.f32.mrf.mxu0
      %v1147 = vadd.f32 0.0, %v1146
      %v1148 = vpop.f32.mrf.mxu0
      %v1149 = vadd.f32 0.0, %v1148
      %1150 = vmatmul.bf16.gmra.mxu0 %v1086
      %v1151 = vpop.f32.mrf.mxu0
      %v1152 = vadd.f32 0.0, %v1151
      %v1153 = vpop.f32.mrf.mxu0
      %v1154 = vadd.f32 0.0, %v1153
      %1155 = vdwg.mxu0
      %v1156 = vadd.f32 %v934, %v1098
      %v1157 = vadd.f32 %v935, %v1132
      %v1158 = vadd.f32 %v936, %v1100
      %v1159 = vadd.f32 %v937, %v1134
      %v1160 = vadd.f32 %v938, %v1103
      %v1161 = vadd.f32 %v939, %v1137
      %v1162 = vadd.f32 %v940, %v1105
      %v1163 = vadd.f32 %v941, %v1139
      %v1164 = vadd.f32 %v942, %v1108
      %v1165 = vadd.f32 %v943, %v1142
      %v1166 = vadd.f32 %v944, %v1110
      %v1167 = vadd.f32 %v945, %v1144
      %v1168 = vadd.f32 %v946, %v1113
      %v1169 = vadd.f32 %v947, %v1147
      %v1170 = vadd.f32 %v948, %v1115
      %v1171 = vadd.f32 %v949, %v1149
      %v1172 = vadd.f32 %v950, %v1118
      %v1173 = vadd.f32 %v951, %v1152
      %v1174 = vadd.f32 %v952, %v1120
      %v1175 = vadd.f32 %v953, %v1154
      %1176 = vst [vmem:[#allocation2] sm:$0xff] %v1156
      %1177 = vst.msk [vmem:[#allocation2 + $0x8] sm:$0xff] %vm173, %v1157
      %1178 = vst [vmem:[#allocation2 + $0x10] sm:$0xff] %v1158
      %1179 = vst.msk [vmem:[#allocation2 + $0x18] sm:$0xff] %vm173, %v1159
      %1180 = vst [vmem:[#allocation2 + $0x20] sm:$0xff] %v1160
      %1181 = vst.msk [vmem:[#allocation2 + $0x28] sm:$0xff] %vm173, %v1161
      %1182 = vst [vmem:[#allocation2 + $0x30] sm:$0xff] %v1162
      %1183 = vst.msk [vmem:[#allocation2 + $0x38] sm:$0xff] %vm173, %v1163
      %1184 = vst [vmem:[#allocation2 + $0x40] sm:$0xff] %v1164
      %1185 = vst.msk [vmem:[#allocation2 + $0x48] sm:$0xff] %vm173, %v1165
      %1186 = vst [vmem:[#allocation2 + $0x50] sm:$0xff] %v1166
      %1187 = vst.msk [vmem:[#allocation2 + $0x58] sm:$0xff] %vm173, %v1167
      %1188 = vst [vmem:[#allocation2 + $0x60] sm:$0xff] %v1168
      %1189 = vst.msk [vmem:[#allocation2 + $0x68] sm:$0xff] %vm173, %v1169
      %1190 = vst [vmem:[#allocation2 + $0x70] sm:$0xff] %v1170
      %1191 = vst.msk [vmem:[#allocation2 + $0x78] sm:$0xff] %vm173, %v1171
      %1192 = vst [vmem:[#allocation2 + $0x80] sm:$0xff] %v1172
      %1193 = vst.msk [vmem:[#allocation2 + $0x88] sm:$0xff] %vm173, %v1173
      %1194 = vst [vmem:[#allocation2 + $0x90] sm:$0x1f] %v1174
      %1195 = vst.msk [vmem:[#allocation2 + $0x98] sm:$0x1f] %vm192, %v1175
      %v1196 = vld [vmem:[%s165] sm:$0xc]
      %v1197 = vld [vmem:[%s165 + $0x4] sm:$0xf]
      %v1198 = vld [vmem:[%s165 + $0x8] sm:$0xf]
      %v1199 = vld [vmem:[%s165 + $0xc] sm:$0xf]
      %v1200 = vld [vmem:[%s165 + $0x10] sm:$0xf]
      %v1201 = vld [vmem:[%s165 + $0x14] sm:$0xf]
      %v1202 = vld [vmem:[%s165 + $0x18] sm:$0xf]
      %v1203 = vld [vmem:[%s165 + $0x1c] sm:$0xf]
      %v1204 = vld [vmem:[%s165 + $0x20] sm:$0xf]
      %v1205 = vld [vmem:[%s165 + $0x24] sm:$0xf]
      %v1206 = vld [vmem:[%s165 + $0x28] sm:$0x1]
      %v1207 = vld [vmem:[#allocation2] sm:$0xff]
      %v1208 = vld [vmem:[#allocation2 + $0x8] sm:$0xff]
      %v1209 = vld [vmem:[#allocation2 + $0x10] sm:$0xff]
      %v1210 = vld [vmem:[#allocation2 + $0x18] sm:$0xff]
      %v1211 = vld [vmem:[#allocation2 + $0x20] sm:$0xff]
      %v1212 = vld [vmem:[#allocation2 + $0x28] sm:$0xff]
      %v1213 = vld [vmem:[#allocation2 + $0x30] sm:$0xff]
      %v1214 = vld [vmem:[#allocation2 + $0x38] sm:$0xff]
      %v1215 = vld [vmem:[#allocation2 + $0x40] sm:$0xff]
      %v1216 = vld [vmem:[#allocation2 + $0x48] sm:$0xff]
      %v1217 = vld [vmem:[#allocation2 + $0x50] sm:$0xff]
      %v1218 = vld [vmem:[#allocation2 + $0x58] sm:$0xff]
      %v1219 = vld [vmem:[#allocation2 + $0x60] sm:$0xff]
      %v1220 = vld [vmem:[#allocation2 + $0x68] sm:$0xff]
      %v1221 = vld [vmem:[#allocation2 + $0x70] sm:$0xff]
      %v1222 = vld [vmem:[#allocation2 + $0x78] sm:$0xff]
      %v1223 = vld [vmem:[#allocation2 + $0x80] sm:$0xff]
      %v1224 = vld [vmem:[#allocation2 + $0x88] sm:$0xff]
      %v1225 = vld [vmem:[#allocation2 + $0x90] sm:$0x1f]
      %v1226 = vld [vmem:[#allocation2 + $0x98] sm:$0x1f]
      %s1227 = scalar_lea.vmem %s1, 256
      %v1228 = vld [vmem:[%s1227] sm:$0xff]
      %v1229 = vld [vmem:[%s1227 + $0x8] sm:$0xff]
      %v1230 = vld [vmem:[%s1227 + $0x10] sm:$0xff]
      %v1231 = vld [vmem:[%s1227 + $0x18] sm:$0xff]
      %v1232 = vld [vmem:[%s1227 + $0x20] sm:$0xff]
      %v1233 = vld [vmem:[%s1227 + $0x28] sm:$0xff]
      %v1234 = vld [vmem:[%s1227 + $0x30] sm:$0xff]
      %v1235 = vld [vmem:[%s1227 + $0x38] sm:$0xff]
      %v1247 = vunpack.c.l.b16 %v1196
      %v1248 = vunpack.c.l.b16 %v1197
      %v1249 = vunpack.c.l.b16 %v1198
      %v1250 = vunpack.c.l.b16 %v1199
      %v1251 = vunpack.c.l.b16 %v1200
      %v1252 = vunpack.c.l.b16 %v1201
      %v1253 = vunpack.c.l.b16 %v1202
      %v1254 = vunpack.c.l.b16 %v1203
      %v1255 = vunpack.c.l.b16 %v1204
      %v1256 = vunpack.c.l.b16 %v1205
      %v1257 = vunpack.c.l.b16 %v1206
      %v1258 = vpack.c.b16 %v1248, %v1247
      %v1259 = vpack.c.b16 %v1250, %v1249
      %v1260 = vpack.c.b16 %v1252, %v1251
      %v1261 = vpack.c.b16 %v1254, %v1253
      %v1262 = vpack.c.b16 %v1256, %v1255
      %v1263 = vpack.c.b16 %v1257, %v1257
      %vm1264 = vcmask 1045504
      %v1265 = vrot.slane %v1258, 2
      %v1266 = vrot.slane %v1259, 2
      %v1267 = vsel %vm1264, %v1265, %v1266
      %v1268 = vrot.slane %v1260, 2
      %v1269 = vsel %vm1264, %v1266, %v1268
      %v1270 = vrot.slane %v1261, 2
      %v1271 = vsel %vm1264, %v1268, %v1270
      %v1272 = vrot.slane %v1262, 2
      %v1273 = vsel %vm1264, %v1270, %v1272
      %v1274 = vrot.slane %v1263, 2
      %v1275 = vsel %vm1264, %v1272, %v1274
      %v1284 = vunpack.c.l.b16 %v1228
      %v1285 = vunpack.c.h.b16 %v1228
      %v1286 = vunpack.c.l.b16 %v1229
      %v1287 = vunpack.c.h.b16 %v1229
      %v1288 = vunpack.c.l.b16 %v1230
      %v1289 = vunpack.c.h.b16 %v1230
      %v1290 = vunpack.c.l.b16 %v1231
      %v1291 = vunpack.c.h.b16 %v1231
      %v1292 = vunpack.c.l.b16 %v1232
      %v1293 = vunpack.c.h.b16 %v1232
      %v1294 = vunpack.c.l.b16 %v1233
      %v1295 = vunpack.c.h.b16 %v1233
      %v1296 = vunpack.c.l.b16 %v1234
      %v1297 = vunpack.c.h.b16 %v1234
      %v1298 = vunpack.c.l.b16 %v1235
      %v1299 = vunpack.c.h.b16 %v1235
      %v1300 = vpack.c.b16 %v1286, %v1284
      %v1301 = vpack.c.b16 %v1287, %v1285
      %v1302 = vpack.c.b16 %v1290, %v1288
      %v1303 = vpack.c.b16 %v1291, %v1289
      %v1304 = vpack.c.b16 %v1294, %v1292
      %v1305 = vpack.c.b16 %v1295, %v1293
      %v1306 = vpack.c.b16 %v1298, %v1296
      %v1307 = vpack.c.b16 %v1299, %v1297
      %v1317 = vsel %vm173, %v1267, 0
      %v1320 = vsel %vm173, %v1269, 0
      %v1323 = vsel %vm173, %v1271, 0
      %v1326 = vsel %vm173, %v1273, 0
      %v1329 = vsel %vm173, %v1275, 0
      %1331 = vmatpush.bf16.msra.mxu0 0
      %1332 = vmatpush.bf16.msra.mxu0 0
      %1333 = vmatpush.bf16.msra.mxu0 0
      %1334 = vmatpush.bf16.msra.mxu0 0
      %1335 = vmatpush.bf16.msra.mxu0 %v1306
      %1336 = vmatpush.bf16.msra.mxu0 %v1304
      %1337 = vmatpush.bf16.msra.mxu0 %v1302
      %1338 = vmatpush.bf16.msra.mxu0 %v1300
      %1339 = vmatmul.bf16.gmra.mxu0 %v1317
      %v1340 = vpop.f32.mrf.mxu0
      %v1341 = vadd.f32 0.0, %v1340
      %v1342 = vpop.f32.mrf.mxu0
      %v1343 = vadd.f32 0.0, %v1342
      %1344 = vmatmul.bf16.gmra.mxu0 %v1320
      %v1345 = vpop.f32.mrf.mxu0
      %v1346 = vadd.f32 0.0, %v1345
      %v1347 = vpop.f32.mrf.mxu0
      %v1348 = vadd.f32 0.0, %v1347
      %1349 = vmatmul.bf16.gmra.mxu0 %v1323
      %v1350 = vpop.f32.mrf.mxu0
      %v1351 = vadd.f32 0.0, %v1350
      %v1352 = vpop.f32.mrf.mxu0
      %v1353 = vadd.f32 0.0, %v1352
      %1354 = vmatmul.bf16.gmra.mxu0 %v1326
      %v1355 = vpop.f32.mrf.mxu0
      %v1356 = vadd.f32 0.0, %v1355
      %v1357 = vpop.f32.mrf.mxu0
      %v1358 = vadd.f32 0.0, %v1357
      %1359 = vmatmul.bf16.gmra.mxu0 %v1329
      %v1360 = vpop.f32.mrf.mxu0
      %v1361 = vadd.f32 0.0, %v1360
      %v1362 = vpop.f32.mrf.mxu0
      %v1363 = vadd.f32 0.0, %v1362
      %1364 = vdwg.mxu0
      %1365 = vmatpush.bf16.msra.mxu0 0
      %1366 = vmatpush.bf16.msra.mxu0 0
      %1367 = vmatpush.bf16.msra.mxu0 0
      %1368 = vmatpush.bf16.msra.mxu0 0
      %1369 = vmatpush.bf16.msra.mxu0 %v1307
      %1370 = vmatpush.bf16.msra.mxu0 %v1305
      %1371 = vmatpush.bf16.msra.mxu0 %v1303
      %1372 = vmatpush.bf16.msra.mxu0 %v1301
      %1373 = vmatmul.bf16.gmra.mxu0 %v1317
      %v1374 = vpop.f32.mrf.mxu0
      %v1375 = vadd.f32 0.0, %v1374
      %v1376 = vpop.f32.mrf.mxu0
      %v1377 = vadd.f32 0.0, %v1376
      %1378 = vmatmul.bf16.gmra.mxu0 %v1320
      %v1379 = vpop.f32.mrf.mxu0
      %v1380 = vadd.f32 0.0, %v1379
      %v1381 = vpop.f32.mrf.mxu0
      %v1382 = vadd.f32 0.0, %v1381
      %1383 = vmatmul.bf16.gmra.mxu0 %v1323
      %v1384 = vpop.f32.mrf.mxu0
      %v1385 = vadd.f32 0.0, %v1384
      %v1386 = vpop.f32.mrf.mxu0
      %v1387 = vadd.f32 0.0, %v1386
      %1388 = vmatmul.bf16.gmra.mxu0 %v1326
      %v1389 = vpop.f32.mrf.mxu0
      %v1390 = vadd.f32 0.0, %v1389
      %v1391 = vpop.f32.mrf.mxu0
      %v1392 = vadd.f32 0.0, %v1391
      %1393 = vmatmul.bf16.gmra.mxu0 %v1329
      %v1394 = vpop.f32.mrf.mxu0
      %v1395 = vadd.f32 0.0, %v1394
      %v1396 = vpop.f32.mrf.mxu0
      %v1397 = vadd.f32 0.0, %v1396
      %1398 = vdwg.mxu0
      %v1399 = vadd.f32 %v1207, %v1341
      %v1400 = vadd.f32 %v1208, %v1375
      %v1401 = vadd.f32 %v1209, %v1343
      %v1402 = vadd.f32 %v1210, %v1377
      %v1403 = vadd.f32 %v1211, %v1346
      %v1404 = vadd.f32 %v1212, %v1380
      %v1405 = vadd.f32 %v1213, %v1348
      %v1406 = vadd.f32 %v1214, %v1382
      %v1407 = vadd.f32 %v1215, %v1351
      %v1408 = vadd.f32 %v1216, %v1385
      %v1409 = vadd.f32 %v1217, %v1353
      %v1410 = vadd.f32 %v1218, %v1387
      %v1411 = vadd.f32 %v1219, %v1356
      %v1412 = vadd.f32 %v1220, %v1390
      %v1413 = vadd.f32 %v1221, %v1358
      %v1414 = vadd.f32 %v1222, %v1392
      %v1415 = vadd.f32 %v1223, %v1361
      %v1416 = vadd.f32 %v1224, %v1395
      %v1417 = vadd.f32 %v1225, %v1363
      %v1418 = vadd.f32 %v1226, %v1397
      %1419 = vst [vmem:[#allocation2] sm:$0xff] %v1399
      %1420 = vst.msk [vmem:[#allocation2 + $0x8] sm:$0xff] %vm173, %v1400
      %1421 = vst [vmem:[#allocation2 + $0x10] sm:$0xff] %v1401
      %1422 = vst.msk [vmem:[#allocation2 + $0x18] sm:$0xff] %vm173, %v1402
      %1423 = vst [vmem:[#allocation2 + $0x20] sm:$0xff] %v1403
      %1424 = vst.msk [vmem:[#allocation2 + $0x28] sm:$0xff] %vm173, %v1404
      %1425 = vst [vmem:[#allocation2 + $0x30] sm:$0xff] %v1405
      %1426 = vst.msk [vmem:[#allocation2 + $0x38] sm:$0xff] %vm173, %v1406
      %1427 = vst [vmem:[#allocation2 + $0x40] sm:$0xff] %v1407
      %1428 = vst.msk [vmem:[#allocation2 + $0x48] sm:$0xff] %vm173, %v1408
      %1429 = vst [vmem:[#allocation2 + $0x50] sm:$0xff] %v1409
      %1430 = vst.msk [vmem:[#allocation2 + $0x58] sm:$0xff] %vm173, %v1410
      %1431 = vst [vmem:[#allocation2 + $0x60] sm:$0xff] %v1411
      %1432 = vst.msk [vmem:[#allocation2 + $0x68] sm:$0xff] %vm173, %v1412
      %1433 = vst [vmem:[#allocation2 + $0x70] sm:$0xff] %v1413
      %1434 = vst.msk [vmem:[#allocation2 + $0x78] sm:$0xff] %vm173, %v1414
      %1435 = vst [vmem:[#allocation2 + $0x80] sm:$0xff] %v1415
      %1436 = vst.msk [vmem:[#allocation2 + $0x88] sm:$0xff] %vm173, %v1416
      %1437 = vst [vmem:[#allocation2 + $0x90] sm:$0x1f] %v1417
      %1438 = vst.msk [vmem:[#allocation2 + $0x98] sm:$0x1f] %vm192, %v1418
      %v1439 = vld [vmem:[%s165 + $0x4] sm:$0xe]
      %v1440 = vld [vmem:[%s165 + $0x8] sm:$0xf]
      %v1441 = vld [vmem:[%s165 + $0xc] sm:$0xf]
      %v1442 = vld [vmem:[%s165 + $0x10] sm:$0xf]
      %v1443 = vld [vmem:[%s165 + $0x14] sm:$0xf]
      %v1444 = vld [vmem:[%s165 + $0x18] sm:$0xf]
      %v1445 = vld [vmem:[%s165 + $0x1c] sm:$0xf]
      %v1446 = vld [vmem:[%s165 + $0x20] sm:$0xf]
      %v1447 = vld [vmem:[%s165 + $0x24] sm:$0xf]
      %v1448 = vld [vmem:[%s165 + $0x28] sm:$0xf]
      %v1449 = vld [vmem:[#allocation2] sm:$0xff]
      %v1450 = vld [vmem:[#allocation2 + $0x8] sm:$0xff]
      %v1451 = vld [vmem:[#allocation2 + $0x10] sm:$0xff]
      %v1452 = vld [vmem:[#allocation2 + $0x18] sm:$0xff]
      %v1453 = vld [vmem:[#allocation2 + $0x20] sm:$0xff]
      %v1454 = vld [vmem:[#allocation2 + $0x28] sm:$0xff]
      %v1455 = vld [vmem:[#allocation2 + $0x30] sm:$0xff]
      %v1456 = vld [vmem:[#allocation2 + $0x38] sm:$0xff]
      %v1457 = vld [vmem:[#allocation2 + $0x40] sm:$0xff]
      %v1458 = vld [vmem:[#allocation2 + $0x48] sm:$0xff]
      %v1459 = vld [vmem:[#allocation2 + $0x50] sm:$0xff]
      %v1460 = vld [vmem:[#allocation2 + $0x58] sm:$0xff]
      %v1461 = vld [vmem:[#allocation2 + $0x60] sm:$0xff]
      %v1462 = vld [vmem:[#allocation2 + $0x68] sm:$0xff]
      %v1463 = vld [vmem:[#allocation2 + $0x70] sm:$0xff]
      %v1464 = vld [vmem:[#allocation2 + $0x78] sm:$0xff]
      %v1465 = vld [vmem:[#allocation2 + $0x80] sm:$0xff]
      %v1466 = vld [vmem:[#allocation2 + $0x88] sm:$0xff]
      %v1467 = vld [vmem:[#allocation2 + $0x90] sm:$0x1f]
      %v1468 = vld [vmem:[#allocation2 + $0x98] sm:$0x1f]
      %s1469 = scalar_lea.vmem %s1, 320
      %v1470 = vld [vmem:[%s1469] sm:$0xff]
      %v1471 = vld [vmem:[%s1469 + $0x8] sm:$0xff]
      %v1472 = vld [vmem:[%s1469 + $0x10] sm:$0xff]
      %v1473 = vld [vmem:[%s1469 + $0x18] sm:$0xff]
      %v1474 = vld [vmem:[%s1469 + $0x20] sm:$0xff]
      %v1475 = vld [vmem:[%s1469 + $0x28] sm:$0xff]
      %v1476 = vld [vmem:[%s1469 + $0x30] sm:$0xff]
      %v1477 = vld [vmem:[%s1469 + $0x38] sm:$0xff]
      %v1488 = vunpack.c.l.b16 %v1439
      %v1489 = vunpack.c.l.b16 %v1440
      %v1490 = vunpack.c.l.b16 %v1441
      %v1491 = vunpack.c.l.b16 %v1442
      %v1492 = vunpack.c.l.b16 %v1443
      %v1493 = vunpack.c.l.b16 %v1444
      %v1494 = vunpack.c.l.b16 %v1445
      %v1495 = vunpack.c.l.b16 %v1446
      %v1496 = vunpack.c.l.b16 %v1447
      %v1497 = vunpack.c.l.b16 %v1448
      %v1498 = vpack.c.b16 %v1489, %v1488
      %v1499 = vpack.c.b16 %v1491, %v1490
      %v1500 = vpack.c.b16 %v1493, %v1492
      %v1501 = vpack.c.b16 %v1495, %v1494
      %v1502 = vpack.c.b16 %v1497, %v1496
      %v1504 = vshrl.u32 %v1498, 16
      %v1506 = vrot.slane %v1504, 1
      %v1507 = vshll.u32 %v1498, 16
      %v1509 = vrot.slane %v1507, 2
      %v1510 = vor.u32 %v1506, %v1509
      %v1512 = vshrl.u32 %v1499, 16
      %v1514 = vrot.slane %v1512, 1
      %v1515 = vshll.u32 %v1499, 16
      %v1517 = vrot.slane %v1515, 2
      %v1518 = vor.u32 %v1514, %v1517
      %v1519 = vsel %vm988, %v1510, %v1518
      %v1521 = vshrl.u32 %v1500, 16
      %v1523 = vrot.slane %v1521, 1
      %v1524 = vshll.u32 %v1500, 16
      %v1526 = vrot.slane %v1524, 2
      %v1527 = vor.u32 %v1523, %v1526
      %v1528 = vsel %vm988, %v1518, %v1527
      %v1530 = vshrl.u32 %v1501, 16
      %v1532 = vrot.slane %v1530, 1
      %v1533 = vshll.u32 %v1501, 16
      %v1535 = vrot.slane %v1533, 2
      %v1536 = vor.u32 %v1532, %v1535
      %v1537 = vsel %vm988, %v1527, %v1536
      %v1539 = vshrl.u32 %v1502, 16
      %v1541 = vrot.slane %v1539, 1
      %v1542 = vshll.u32 %v1502, 16
      %v1544 = vrot.slane %v1542, 2
      %v1545 = vor.u32 %v1541, %v1544
      %v1546 = vsel %vm988, %v1536, %v1545
      %v1555 = vunpack.c.l.b16 %v1470
      %v1556 = vunpack.c.h.b16 %v1470
      %v1557 = vunpack.c.l.b16 %v1471
      %v1558 = vunpack.c.h.b16 %v1471
      %v1559 = vunpack.c.l.b16 %v1472
      %v1560 = vunpack.c.h.b16 %v1472
      %v1561 = vunpack.c.l.b16 %v1473
      %v1562 = vunpack.c.h.b16 %v1473
      %v1563 = vunpack.c.l.b16 %v1474
      %v1564 = vunpack.c.h.b16 %v1474
      %v1565 = vunpack.c.l.b16 %v1475
      %v1566 = vunpack.c.h.b16 %v1475
      %v1567 = vunpack.c.l.b16 %v1476
      %v1568 = vunpack.c.h.b16 %v1476
      %v1569 = vunpack.c.l.b16 %v1477
      %v1570 = vunpack.c.h.b16 %v1477
      %v1571 = vpack.c.b16 %v1557, %v1555
      %v1572 = vpack.c.b16 %v1558, %v1556
      %v1573 = vpack.c.b16 %v1561, %v1559
      %v1574 = vpack.c.b16 %v1562, %v1560
      %v1575 = vpack.c.b16 %v1565, %v1563
      %v1576 = vpack.c.b16 %v1566, %v1564
      %v1577 = vpack.c.b16 %v1569, %v1567
      %v1578 = vpack.c.b16 %v1570, %v1568
      %v1588 = vsel %vm173, %v1519, 0
      %v1591 = vsel %vm173, %v1528, 0
      %v1594 = vsel %vm173, %v1537, 0
      %v1597 = vsel %vm173, %v1546, 0
      %v1600 = vsel %vm173, %v1545, 0
      %1602 = vmatpush.bf16.msra.mxu0 0
      %1603 = vmatpush.bf16.msra.mxu0 0
      %1604 = vmatpush.bf16.msra.mxu0 0
      %1605 = vmatpush.bf16.msra.mxu0 0
      %1606 = vmatpush.bf16.msra.mxu0 %v1577
      %1607 = vmatpush.bf16.msra.mxu0 %v1575
      %1608 = vmatpush.bf16.msra.mxu0 %v1573
      %1609 = vmatpush.bf16.msra.mxu0 %v1571
      %1610 = vmatmul.bf16.gmra.mxu0 %v1588
      %v1611 = vpop.f32.mrf.mxu0
      %v1612 = vadd.f32 0.0, %v1611
      %v1613 = vpop.f32.mrf.mxu0
      %v1614 = vadd.f32 0.0, %v1613
      %1615 = vmatmul.bf16.gmra.mxu0 %v1591
      %v1616 = vpop.f32.mrf.mxu0
      %v1617 = vadd.f32 0.0, %v1616
      %v1618 = vpop.f32.mrf.mxu0
      %v1619 = vadd.f32 0.0, %v1618
      %1620 = vmatmul.bf16.gmra.mxu0 %v1594
      %v1621 = vpop.f32.mrf.mxu0
      %v1622 = vadd.f32 0.0, %v1621
      %v1623 = vpop.f32.mrf.mxu0
      %v1624 = vadd.f32 0.0, %v1623
      %1625 = vmatmul.bf16.gmra.mxu0 %v1597
      %v1626 = vpop.f32.mrf.mxu0
      %v1627 = vadd.f32 0.0, %v1626
      %v1628 = vpop.f32.mrf.mxu0
      %v1629 = vadd.f32 0.0, %v1628
      %1630 = vmatmul.bf16.gmra.mxu0 %v1600
      %v1631 = vpop.f32.mrf.mxu0
      %v1632 = vadd.f32 0.0, %v1631
      %v1633 = vpop.f32.mrf.mxu0
      %v1634 = vadd.f32 0.0, %v1633
      %1635 = vdwg.mxu0
      %1636 = vmatpush.bf16.msra.mxu0 0
      %1637 = vmatpush.bf16.msra.mxu0 0
      %1638 = vmatpush.bf16.msra.mxu0 0
      %1639 = vmatpush.bf16.msra.mxu0 0
      %1640 = vmatpush.bf16.msra.mxu0 %v1578
      %1641 = vmatpush.bf16.msra.mxu0 %v1576
      %1642 = vmatpush.bf16.msra.mxu0 %v1574
      %1643 = vmatpush.bf16.msra.mxu0 %v1572
      %1644 = vmatmul.bf16.gmra.mxu0 %v1588
      %v1645 = vpop.f32.mrf.mxu0
      %v1646 = vadd.f32 0.0, %v1645
      %v1647 = vpop.f32.mrf.mxu0
      %v1648 = vadd.f32 0.0, %v1647
      %1649 = vmatmul.bf16.gmra.mxu0 %v1591
      %v1650 = vpop.f32.mrf.mxu0
      %v1651 = vadd.f32 0.0, %v1650
      %v1652 = vpop.f32.mrf.mxu0
      %v1653 = vadd.f32 0.0, %v1652
      %1654 = vmatmul.bf16.gmra.mxu0 %v1594
      %v1655 = vpop.f32.mrf.mxu0
      %v1656 = vadd.f32 0.0, %v1655
      %v1657 = vpop.f32.mrf.mxu0
      %v1658 = vadd.f32 0.0, %v1657
      %1659 = vmatmul.bf16.gmra.mxu0 %v1597
      %v1660 = vpop.f32.mrf.mxu0
      %v1661 = vadd.f32 0.0, %v1660
      %v1662 = vpop.f32.mrf.mxu0
      %v1663 = vadd.f32 0.0, %v1662
      %1664 = vmatmul.bf16.gmra.mxu0 %v1600
      %v1665 = vpop.f32.mrf.mxu0
      %v1666 = vadd.f32 0.0, %v1665
      %v1667 = vpop.f32.mrf.mxu0
      %v1668 = vadd.f32 0.0, %v1667
      %1669 = vdwg.mxu0
      %v1670 = vadd.f32 %v1449, %v1612
      %v1671 = vadd.f32 %v1450, %v1646
      %v1672 = vadd.f32 %v1451, %v1614
      %v1673 = vadd.f32 %v1452, %v1648
      %v1674 = vadd.f32 %v1453, %v1617
      %v1675 = vadd.f32 %v1454, %v1651
      %v1676 = vadd.f32 %v1455, %v1619
      %v1677 = vadd.f32 %v1456, %v1653
      %v1678 = vadd.f32 %v1457, %v1622
      %v1679 = vadd.f32 %v1458, %v1656
      %v1680 = vadd.f32 %v1459, %v1624
      %v1681 = vadd.f32 %v1460, %v1658
      %v1682 = vadd.f32 %v1461, %v1627
      %v1683 = vadd.f32 %v1462, %v1661
      %v1684 = vadd.f32 %v1463, %v1629
      %v1685 = vadd.f32 %v1464, %v1663
      %v1686 = vadd.f32 %v1465, %v1632
      %v1687 = vadd.f32 %v1466, %v1666
      %v1688 = vadd.f32 %v1467, %v1634
      %v1689 = vadd.f32 %v1468, %v1668
      %1690 = vst [vmem:[#allocation2] sm:$0xff] %v1670
      %1691 = vst.msk [vmem:[#allocation2 + $0x8] sm:$0xff] %vm173, %v1671
      %1692 = vst [vmem:[#allocation2 + $0x10] sm:$0xff] %v1672
      %1693 = vst.msk [vmem:[#allocation2 + $0x18] sm:$0xff] %vm173, %v1673
      %1694 = vst [vmem:[#allocation2 + $0x20] sm:$0xff] %v1674
      %1695 = vst.msk [vmem:[#allocation2 + $0x28] sm:$0xff] %vm173, %v1675
      %1696 = vst [vmem:[#allocation2 + $0x30] sm:$0xff] %v1676
      %1697 = vst.msk [vmem:[#allocation2 + $0x38] sm:$0xff] %vm173, %v1677
      %1698 = vst [vmem:[#allocation2 + $0x40] sm:$0xff] %v1678
      %1699 = vst.msk [vmem:[#allocation2 + $0x48] sm:$0xff] %vm173, %v1679
      %1700 = vst [vmem:[#allocation2 + $0x50] sm:$0xff] %v1680
      %1701 = vst.msk [vmem:[#allocation2 + $0x58] sm:$0xff] %vm173, %v1681
      %1702 = vst [vmem:[#allocation2 + $0x60] sm:$0xff] %v1682
      %1703 = vst.msk [vmem:[#allocation2 + $0x68] sm:$0xff] %vm173, %v1683
      %1704 = vst [vmem:[#allocation2 + $0x70] sm:$0xff] %v1684
      %1705 = vst.msk [vmem:[#allocation2 + $0x78] sm:$0xff] %vm173, %v1685
      %1706 = vst [vmem:[#allocation2 + $0x80] sm:$0xff] %v1686
      %1707 = vst.msk [vmem:[#allocation2 + $0x88] sm:$0xff] %vm173, %v1687
      %1708 = vst [vmem:[#allocation2 + $0x90] sm:$0x1f] %v1688
      %1709 = vst.msk [vmem:[#allocation2 + $0x98] sm:$0x1f] %vm192, %v1689
      %v1710 = vld [vmem:[%s165 + $0x4] sm:$0xc]
      %v1711 = vld [vmem:[%s165 + $0x8] sm:$0xf]
      %v1712 = vld [vmem:[%s165 + $0xc] sm:$0xf]
      %v1713 = vld [vmem:[%s165 + $0x10] sm:$0xf]
      %v1714 = vld [vmem:[%s165 + $0x14] sm:$0xf]
      %v1715 = vld [vmem:[%s165 + $0x18] sm:$0xf]
      %v1716 = vld [vmem:[%s165 + $0x1c] sm:$0xf]
      %v1717 = vld [vmem:[%s165 + $0x20] sm:$0xf]
      %v1718 = vld [vmem:[%s165 + $0x24] sm:$0xf]
      %v1719 = vld [vmem:[%s165 + $0x28] sm:$0xf]
      %v1720 = vld [vmem:[%s165 + $0x2c] sm:$0x1]
      %v1721 = vld [vmem:[#allocation2] sm:$0xff]
      %v1722 = vld [vmem:[#allocation2 + $0x8] sm:$0xff]
      %v1723 = vld [vmem:[#allocation2 + $0x10] sm:$0xff]
      %v1724 = vld [vmem:[#allocation2 + $0x18] sm:$0xff]
      %v1725 = vld [vmem:[#allocation2 + $0x20] sm:$0xff]
      %v1726 = vld [vmem:[#allocation2 + $0x28] sm:$0xff]
      %v1727 = vld [vmem:[#allocation2 + $0x30] sm:$0xff]
      %v1728 = vld [vmem:[#allocation2 + $0x38] sm:$0xff]
      %v1729 = vld [vmem:[#allocation2 + $0x40] sm:$0xff]
      %v1730 = vld [vmem:[#allocation2 + $0x48] sm:$0xff]
      %v1731 = vld [vmem:[#allocation2 + $0x50] sm:$0xff]
      %v1732 = vld [vmem:[#allocation2 + $0x58] sm:$0xff]
      %v1733 = vld [vmem:[#allocation2 + $0x60] sm:$0xff]
      %v1734 = vld [vmem:[#allocation2 + $0x68] sm:$0xff]
      %v1735 = vld [vmem:[#allocation2 + $0x70] sm:$0xff]
      %v1736 = vld [vmem:[#allocation2 + $0x78] sm:$0xff]
      %v1737 = vld [vmem:[#allocation2 + $0x80] sm:$0xff]
      %v1738 = vld [vmem:[#allocation2 + $0x88] sm:$0xff]
      %v1739 = vld [vmem:[#allocation2 + $0x90] sm:$0x1f]
      %v1740 = vld [vmem:[#allocation2 + $0x98] sm:$0x1f]
      %s1741 = scalar_lea.vmem %s1, 384
      %v1742 = vld [vmem:[%s1741] sm:$0xff]
      %v1743 = vld [vmem:[%s1741 + $0x8] sm:$0xff]
      %v1744 = vld [vmem:[%s1741 + $0x10] sm:$0xff]
      %v1745 = vld [vmem:[%s1741 + $0x18] sm:$0xff]
      %v1746 = vld [vmem:[%s1741 + $0x20] sm:$0xff]
      %v1747 = vld [vmem:[%s1741 + $0x28] sm:$0xff]
      %v1748 = vld [vmem:[%s1741 + $0x30] sm:$0xff]
      %v1749 = vld [vmem:[%s1741 + $0x38] sm:$0xff]
      %v1761 = vunpack.c.l.b16 %v1710
      %v1762 = vunpack.c.l.b16 %v1711
      %v1763 = vunpack.c.l.b16 %v1712
      %v1764 = vunpack.c.l.b16 %v1713
      %v1765 = vunpack.c.l.b16 %v1714
      %v1766 = vunpack.c.l.b16 %v1715
      %v1767 = vunpack.c.l.b16 %v1716
      %v1768 = vunpack.c.l.b16 %v1717
      %v1769 = vunpack.c.l.b16 %v1718
      %v1770 = vunpack.c.l.b16 %v1719
      %v1771 = vunpack.c.l.b16 %v1720
      %v1772 = vpack.c.b16 %v1762, %v1761
      %v1773 = vpack.c.b16 %v1764, %v1763
      %v1774 = vpack.c.b16 %v1766, %v1765
      %v1775 = vpack.c.b16 %v1768, %v1767
      %v1776 = vpack.c.b16 %v1770, %v1769
      %v1777 = vpack.c.b16 %v1771, %v1771
      %v1778 = vrot.slane %v1772, 2
      %v1779 = vrot.slane %v1773, 2
      %v1780 = vsel %vm1264, %v1778, %v1779
      %v1781 = vrot.slane %v1774, 2
      %v1782 = vsel %vm1264, %v1779, %v1781
      %v1783 = vrot.slane %v1775, 2
      %v1784 = vsel %vm1264, %v1781, %v1783
      %v1785 = vrot.slane %v1776, 2
      %v1786 = vsel %vm1264, %v1783, %v1785
      %v1787 = vrot.slane %v1777, 2
      %v1788 = vsel %vm1264, %v1785, %v1787
      %v1797 = vunpack.c.l.b16 %v1742
      %v1798 = vunpack.c.h.b16 %v1742
      %v1799 = vunpack.c.l.b16 %v1743
      %v1800 = vunpack.c.h.b16 %v1743
      %v1801 = vunpack.c.l.b16 %v1744
      %v1802 = vunpack.c.h.b16 %v1744
      %v1803 = vunpack.c.l.b16 %v1745
      %v1804 = vunpack.c.h.b16 %v1745
      %v1805 = vunpack.c.l.b16 %v1746
      %v1806 = vunpack.c.h.b16 %v1746
      %v1807 = vunpack.c.l.b16 %v1747
      %v1808 = vunpack.c.h.b16 %v1747
      %v1809 = vunpack.c.l.b16 %v1748
      %v1810 = vunpack.c.h.b16 %v1748
      %v1811 = vunpack.c.l.b16 %v1749
      %v1812 = vunpack.c.h.b16 %v1749
      %v1813 = vpack.c.b16 %v1799, %v1797
      %v1814 = vpack.c.b16 %v1800, %v1798
      %v1815 = vpack.c.b16 %v1803, %v1801
      %v1816 = vpack.c.b16 %v1804, %v1802
      %v1817 = vpack.c.b16 %v1807, %v1805
      %v1818 = vpack.c.b16 %v1808, %v1806
      %v1819 = vpack.c.b16 %v1811, %v1809
      %v1820 = vpack.c.b16 %v1812, %v1810
      %v1830 = vsel %vm173, %v1780, 0
      %v1833 = vsel %vm173, %v1782, 0
      %v1836 = vsel %vm173, %v1784, 0
      %v1839 = vsel %vm173, %v1786, 0
      %v1842 = vsel %vm173, %v1788, 0
      %1844 = vmatpush.bf16.msra.mxu0 0
      %1845 = vmatpush.bf16.msra.mxu0 0
      %1846 = vmatpush.bf16.msra.mxu0 0
      %1847 = vmatpush.bf16.msra.mxu0 0
      %1848 = vmatpush.bf16.msra.mxu0 %v1819
      %1849 = vmatpush.bf16.msra.mxu0 %v1817
      %1850 = vmatpush.bf16.msra.mxu0 %v1815
      %1851 = vmatpush.bf16.msra.mxu0 %v1813
      %1852 = vmatmul.bf16.gmra.mxu0 %v1830
      %v1853 = vpop.f32.mrf.mxu0
      %v1854 = vadd.f32 0.0, %v1853
      %v1855 = vpop.f32.mrf.mxu0
      %v1856 = vadd.f32 0.0, %v1855
      %1857 = vmatmul.bf16.gmra.mxu0 %v1833
      %v1858 = vpop.f32.mrf.mxu0
      %v1859 = vadd.f32 0.0, %v1858
      %v1860 = vpop.f32.mrf.mxu0
      %v1861 = vadd.f32 0.0, %v1860
      %1862 = vmatmul.bf16.gmra.mxu0 %v1836
      %v1863 = vpop.f32.mrf.mxu0
      %v1864 = vadd.f32 0.0, %v1863
      %v1865 = vpop.f32.mrf.mxu0
      %v1866 = vadd.f32 0.0, %v1865
      %1867 = vmatmul.bf16.gmra.mxu0 %v1839
      %v1868 = vpop.f32.mrf.mxu0
      %v1869 = vadd.f32 0.0, %v1868
      %v1870 = vpop.f32.mrf.mxu0
      %v1871 = vadd.f32 0.0, %v1870
      %1872 = vmatmul.bf16.gmra.mxu0 %v1842
      %v1873 = vpop.f32.mrf.mxu0
      %v1874 = vadd.f32 0.0, %v1873
      %v1875 = vpop.f32.mrf.mxu0
      %v1876 = vadd.f32 0.0, %v1875
      %1877 = vdwg.mxu0
      %1878 = vmatpush.bf16.msra.mxu0 0
      %1879 = vmatpush.bf16.msra.mxu0 0
      %1880 = vmatpush.bf16.msra.mxu0 0
      %1881 = vmatpush.bf16.msra.mxu0 0
      %1882 = vmatpush.bf16.msra.mxu0 %v1820
      %1883 = vmatpush.bf16.msra.mxu0 %v1818
      %1884 = vmatpush.bf16.msra.mxu0 %v1816
      %1885 = vmatpush.bf16.msra.mxu0 %v1814
      %1886 = vmatmul.bf16.gmra.mxu0 %v1830
      %v1887 = vpop.f32.mrf.mxu0
      %v1888 = vadd.f32 0.0, %v1887
      %v1889 = vpop.f32.mrf.mxu0
      %v1890 = vadd.f32 0.0, %v1889
      %1891 = vmatmul.bf16.gmra.mxu0 %v1833
      %v1892 = vpop.f32.mrf.mxu0
      %v1893 = vadd.f32 0.0, %v1892
      %v1894 = vpop.f32.mrf.mxu0
      %v1895 = vadd.f32 0.0, %v1894
      %1896 = vmatmul.bf16.gmra.mxu0 %v1836
      %v1897 = vpop.f32.mrf.mxu0
      %v1898 = vadd.f32 0.0, %v1897
      %v1899 = vpop.f32.mrf.mxu0
      %v1900 = vadd.f32 0.0, %v1899
      %1901 = vmatmul.bf16.gmra.mxu0 %v1839
      %v1902 = vpop.f32.mrf.mxu0
      %v1903 = vadd.f32 0.0, %v1902
      %v1904 = vpop.f32.mrf.mxu0
      %v1905 = vadd.f32 0.0, %v1904
      %1906 = vmatmul.bf16.gmra.mxu0 %v1842
      %v1907 = vpop.f32.mrf.mxu0
      %v1908 = vadd.f32 0.0, %v1907
      %v1909 = vpop.f32.mrf.mxu0
      %v1910 = vadd.f32 0.0, %v1909
      %1911 = vdwg.mxu0
      %v1912 = vadd.f32 %v1721, %v1854
      %v1913 = vadd.f32 %v1722, %v1888
      %v1914 = vadd.f32 %v1723, %v1856
      %v1915 = vadd.f32 %v1724, %v1890
      %v1916 = vadd.f32 %v1725, %v1859
      %v1917 = vadd.f32 %v1726, %v1893
      %v1918 = vadd.f32 %v1727, %v1861
      %v1919 = vadd.f32 %v1728, %v1895
      %v1920 = vadd.f32 %v1729, %v1864
      %v1921 = vadd.f32 %v1730, %v1898
      %v1922 = vadd.f32 %v1731, %v1866
      %v1923 = vadd.f32 %v1732, %v1900
      %v1924 = vadd.f32 %v1733, %v1869
      %v1925 = vadd.f32 %v1734, %v1903
      %v1926 = vadd.f32 %v1735, %v1871
      %v1927 = vadd.f32 %v1736, %v1905
      %v1928 = vadd.f32 %v1737, %v1874
      %v1929 = vadd.f32 %v1738, %v1908
      %v1930 = vadd.f32 %v1739, %v1876
      %v1931 = vadd.f32 %v1740, %v1910
      %1932 = vst [vmem:[#allocation2] sm:$0xff] %v1912
      %1933 = vst.msk [vmem:[#allocation2 + $0x8] sm:$0xff] %vm173, %v1913
      %1934 = vst [vmem:[#allocation2 + $0x10] sm:$0xff] %v1914
      %1935 = vst.msk [vmem:[#allocation2 + $0x18] sm:$0xff] %vm173, %v1915
      %1936 = vst [vmem:[#allocation2 + $0x20] sm:$0xff] %v1916
      %1937 = vst.msk [vmem:[#allocation2 + $0x28] sm:$0xff] %vm173, %v1917
      %1938 = vst [vmem:[#allocation2 + $0x30] sm:$0xff] %v1918
      %1939 = vst.msk [vmem:[#allocation2 + $0x38] sm:$0xff] %vm173, %v1919
      %1940 = vst [vmem:[#allocation2 + $0x40] sm:$0xff] %v1920
      %1941 = vst.msk [vmem:[#allocation2 + $0x48] sm:$0xff] %vm173, %v1921
      %1942 = vst [vmem:[#allocation2 + $0x50] sm:$0xff] %v1922
      %1943 = vst.msk [vmem:[#allocation2 + $0x58] sm:$0xff] %vm173, %v1923
      %1944 = vst [vmem:[#allocation2 + $0x60] sm:$0xff] %v1924
      %1945 = vst.msk [vmem:[#allocation2 + $0x68] sm:$0xff] %vm173, %v1925
      %1946 = vst [vmem:[#allocation2 + $0x70] sm:$0xff] %v1926
      %1947 = vst.msk [vmem:[#allocation2 + $0x78] sm:$0xff] %vm173, %v1927
      %1948 = vst [vmem:[#allocation2 + $0x80] sm:$0xff] %v1928
      %1949 = vst.msk [vmem:[#allocation2 + $0x88] sm:$0xff] %vm173, %v1929
      %1950 = vst [vmem:[#allocation2 + $0x90] sm:$0x1f] %v1930
      %1951 = vst.msk [vmem:[#allocation2 + $0x98] sm:$0x1f] %vm192, %v1931
      %v1952 = vld [vmem:[%s165 + $0x4] sm:$0xc]
      %v1953 = vld [vmem:[%s165 + $0x8] sm:$0xf]
      %v1954 = vld [vmem:[%s165 + $0xc] sm:$0xf]
      %v1955 = vld [vmem:[%s165 + $0x10] sm:$0xf]
      %v1956 = vld [vmem:[%s165 + $0x14] sm:$0xf]
      %v1957 = vld [vmem:[%s165 + $0x18] sm:$0xf]
      %v1958 = vld [vmem:[%s165 + $0x1c] sm:$0xf]
      %v1959 = vld [vmem:[%s165 + $0x20] sm:$0xf]
      %v1960 = vld [vmem:[%s165 + $0x24] sm:$0xf]
      %v1961 = vld [vmem:[%s165 + $0x28] sm:$0xf]
      %v1962 = vld [vmem:[%s165 + $0x2c] sm:$0x1]
      %v1963 = vld [vmem:[#allocation2] sm:$0xff]
      %v1964 = vld [vmem:[#allocation2 + $0x8] sm:$0xff]
      %v1965 = vld [vmem:[#allocation2 + $0x10] sm:$0xff]
      %v1966 = vld [vmem:[#allocation2 + $0x18] sm:$0xff]
      %v1967 = vld [vmem:[#allocation2 + $0x20] sm:$0xff]
      %v1968 = vld [vmem:[#allocation2 + $0x28] sm:$0xff]
      %v1969 = vld [vmem:[#allocation2 + $0x30] sm:$0xff]
      %v1970 = vld [vmem:[#allocation2 + $0x38] sm:$0xff]
      %v1971 = vld [vmem:[#allocation2 + $0x40] sm:$0xff]
      %v1972 = vld [vmem:[#allocation2 + $0x48] sm:$0xff]
      %v1973 = vld [vmem:[#allocation2 + $0x50] sm:$0xff]
      %v1974 = vld [vmem:[#allocation2 + $0x58] sm:$0xff]
      %v1975 = vld [vmem:[#allocation2 + $0x60] sm:$0xff]
      %v1976 = vld [vmem:[#allocation2 + $0x68] sm:$0xff]
      %v1977 = vld [vmem:[#allocation2 + $0x70] sm:$0xff]
      %v1978 = vld [vmem:[#allocation2 + $0x78] sm:$0xff]
      %v1979 = vld [vmem:[#allocation2 + $0x80] sm:$0xff]
      %v1980 = vld [vmem:[#allocation2 + $0x88] sm:$0xff]
      %v1981 = vld [vmem:[#allocation2 + $0x90] sm:$0x1f]
      %v1982 = vld [vmem:[#allocation2 + $0x98] sm:$0x1f]
      %s1983 = scalar_lea.vmem %s1, 448
      %v1984 = vld [vmem:[%s1983] sm:$0xff]
      %v1985 = vld [vmem:[%s1983 + $0x8] sm:$0xff]
      %v1986 = vld [vmem:[%s1983 + $0x10] sm:$0xff]
      %v1987 = vld [vmem:[%s1983 + $0x18] sm:$0xff]
      %v1988 = vld [vmem:[%s1983 + $0x20] sm:$0xff]
      %v1989 = vld [vmem:[%s1983 + $0x28] sm:$0xff]
      %v1990 = vld [vmem:[%s1983 + $0x30] sm:$0xff]
      %v1991 = vld [vmem:[%s1983 + $0x38] sm:$0xff]
      %v2003 = vunpack.c.l.b16 %v1952
      %v2004 = vunpack.c.l.b16 %v1953
      %v2005 = vunpack.c.l.b16 %v1954
      %v2006 = vunpack.c.l.b16 %v1955
      %v2007 = vunpack.c.l.b16 %v1956
      %v2008 = vunpack.c.l.b16 %v1957
      %v2009 = vunpack.c.l.b16 %v1958
      %v2010 = vunpack.c.l.b16 %v1959
      %v2011 = vunpack.c.l.b16 %v1960
      %v2012 = vunpack.c.l.b16 %v1961
      %v2013 = vunpack.c.l.b16 %v1962
      %v2014 = vpack.c.b16 %v2004, %v2003
      %v2015 = vpack.c.b16 %v2006, %v2005
      %v2016 = vpack.c.b16 %v2008, %v2007
      %v2017 = vpack.c.b16 %v2010, %v2009
      %v2018 = vpack.c.b16 %v2012, %v2011
      %v2019 = vpack.c.b16 %v2013, %v2013
      %vm2020 = vsmask.f32 5376
      %v2022 = vshrl.u32 %v2014, 16
      %v2024 = vrot.slane %v2022, 2
      %v2025 = vshll.u32 %v2014, 16
      %v2027 = vrot.slane %v2025, 3
      %v2028 = vor.u32 %v2024, %v2027
      %v2030 = vshrl.u32 %v2015, 16
      %v2032 = vrot.slane %v2030, 2
      %v2033 = vshll.u32 %v2015, 16
      %v2035 = vrot.slane %v2033, 3
      %v2036 = vor.u32 %v2032, %v2035
      %v2037 = vsel %vm2020, %v2028, %v2036
      %v2039 = vshrl.u32 %v2016, 16
      %v2041 = vrot.slane %v2039, 2
      %v2042 = vshll.u32 %v2016, 16
      %v2044 = vrot.slane %v2042, 3
      %v2045 = vor.u32 %v2041, %v2044
      %v2046 = vsel %vm2020, %v2036, %v2045
      %v2048 = vshrl.u32 %v2017, 16
      %v2050 = vrot.slane %v2048, 2
      %v2051 = vshll.u32 %v2017, 16
      %v2053 = vrot.slane %v2051, 3
      %v2054 = vor.u32 %v2050, %v2053
      %v2055 = vsel %vm2020, %v2045, %v2054
      %v2057 = vshrl.u32 %v2018, 16
      %v2059 = vrot.slane %v2057, 2
      %v2060 = vshll.u32 %v2018, 16
      %v2062 = vrot.slane %v2060, 3
      %v2063 = vor.u32 %v2059, %v2062
      %v2064 = vsel %vm2020, %v2054, %v2063
      %v2066 = vshrl.u32 %v2019, 16
      %v2068 = vrot.slane %v2066, 2
      %v2069 = vshll.u32 %v2019, 16
      %v2071 = vrot.slane %v2069, 3
      %v2072 = vor.u32 %v2068, %v2071
      %v2073 = vsel %vm2020, %v2063, %v2072
      %v2082 = vunpack.c.l.b16 %v1984
      %v2083 = vunpack.c.h.b16 %v1984
      %v2084 = vunpack.c.l.b16 %v1985
      %v2085 = vunpack.c.h.b16 %v1985
      %v2086 = vunpack.c.l.b16 %v1986
      %v2087 = vunpack.c.h.b16 %v1986
      %v2088 = vunpack.c.l.b16 %v1987
      %v2089 = vunpack.c.h.b16 %v1987
      %v2090 = vunpack.c.l.b16 %v1988
      %v2091 = vunpack.c.h.b16 %v1988
      %v2092 = vunpack.c.l.b16 %v1989
      %v2093 = vunpack.c.h.b16 %v1989
      %v2094 = vunpack.c.l.b16 %v1990
      %v2095 = vunpack.c.h.b16 %v1990
      %v2096 = vunpack.c.l.b16 %v1991
      %v2097 = vunpack.c.h.b16 %v1991
      %v2098 = vpack.c.b16 %v2084, %v2082
      %v2099 = vpack.c.b16 %v2085, %v2083
      %v2100 = vpack.c.b16 %v2088, %v2086
      %v2101 = vpack.c.b16 %v2089, %v2087
      %v2102 = vpack.c.b16 %v2092, %v2090
      %v2103 = vpack.c.b16 %v2093, %v2091
      %v2104 = vpack.c.b16 %v2096, %v2094
      %v2105 = vpack.c.b16 %v2097, %v2095
      %v2115 = vsel %vm173, %v2037, 0
      %v2118 = vsel %vm173, %v2046, 0
      %v2121 = vsel %vm173, %v2055, 0
      %v2124 = vsel %vm173, %v2064, 0
      %v2127 = vsel %vm173, %v2073, 0
      %2129 = vmatpush.bf16.msra.mxu0 0
      %2130 = vmatpush.bf16.msra.mxu0 0
      %2131 = vmatpush.bf16.msra.mxu0 0
      %2132 = vmatpush.bf16.msra.mxu0 0
      %2133 = vmatpush.bf16.msra.mxu0 %v2104
      %2134 = vmatpush.bf16.msra.mxu0 %v2102
      %2135 = vmatpush.bf16.msra.mxu0 %v2100
      %2136 = vmatpush.bf16.msra.mxu0 %v2098
      %2137 = vmatmul.bf16.gmra.mxu0 %v2115
      %v2138 = vpop.f32.mrf.mxu0
      %v2139 = vadd.f32 0.0, %v2138
      %v2140 = vpop.f32.mrf.mxu0
      %v2141 = vadd.f32 0.0, %v2140
      %2142 = vmatmul.bf16.gmra.mxu0 %v2118
      %v2143 = vpop.f32.mrf.mxu0
      %v2144 = vadd.f32 0.0, %v2143
      %v2145 = vpop.f32.mrf.mxu0
      %v2146 = vadd.f32 0.0, %v2145
      %2147 = vmatmul.bf16.gmra.mxu0 %v2121
      %v2148 = vpop.f32.mrf.mxu0
      %v2149 = vadd.f32 0.0, %v2148
      %v2150 = vpop.f32.mrf.mxu0
      %v2151 = vadd.f32 0.0, %v2150
      %2152 = vmatmul.bf16.gmra.mxu0 %v2124
      %v2153 = vpop.f32.mrf.mxu0
      %v2154 = vadd.f32 0.0, %v2153
      %v2155 = vpop.f32.mrf.mxu0
      %v2156 = vadd.f32 0.0, %v2155
      %2157 = vmatmul.bf16.gmra.mxu0 %v2127
      %v2158 = vpop.f32.mrf.mxu0
      %v2159 = vadd.f32 0.0, %v2158
      %v2160 = vpop.f32.mrf.mxu0
      %v2161 = vadd.f32 0.0, %v2160
      %2162 = vdwg.mxu0
      %2163 = vmatpush.bf16.msra.mxu0 0
      %2164 = vmatpush.bf16.msra.mxu0 0
      %2165 = vmatpush.bf16.msra.mxu0 0
      %2166 = vmatpush.bf16.msra.mxu0 0
      %2167 = vmatpush.bf16.msra.mxu0 %v2105
      %2168 = vmatpush.bf16.msra.mxu0 %v2103
      %2169 = vmatpush.bf16.msra.mxu0 %v2101
      %2170 = vmatpush.bf16.msra.mxu0 %v2099
      %2171 = vmatmul.bf16.gmra.mxu0 %v2115
      %v2172 = vpop.f32.mrf.mxu0
      %v2173 = vadd.f32 0.0, %v2172
      %v2174 = vpop.f32.mrf.mxu0
      %v2175 = vadd.f32 0.0, %v2174
      %2176 = vmatmul.bf16.gmra.mxu0 %v2118
      %v2177 = vpop.f32.mrf.mxu0
      %v2178 = vadd.f32 0.0, %v2177
      %v2179 = vpop.f32.mrf.mxu0
      %v2180 = vadd.f32 0.0, %v2179
      %2181 = vmatmul.bf16.gmra.mxu0 %v2121
      %v2182 = vpop.f32.mrf.mxu0
      %v2183 = vadd.f32 0.0, %v2182
      %v2184 = vpop.f32.mrf.mxu0
      %v2185 = vadd.f32 0.0, %v2184
      %2186 = vmatmul.bf16.gmra.mxu0 %v2124
      %v2187 = vpop.f32.mrf.mxu0
      %v2188 = vadd.f32 0.0, %v2187
      %v2189 = vpop.f32.mrf.mxu0
      %v2190 = vadd.f32 0.0, %v2189
      %2191 = vmatmul.bf16.gmra.mxu0 %v2127
      %v2192 = vpop.f32.mrf.mxu0
      %v2193 = vadd.f32 0.0, %v2192
      %v2194 = vpop.f32.mrf.mxu0
      %v2195 = vadd.f32 0.0, %v2194
      %2196 = vdwg.mxu0
      %v2197 = vadd.f32 %v1963, %v2139
      %v2198 = vadd.f32 %v1964, %v2173
      %v2199 = vadd.f32 %v1965, %v2141
      %v2200 = vadd.f32 %v1966, %v2175
      %v2201 = vadd.f32 %v1967, %v2144
      %v2202 = vadd.f32 %v1968, %v2178
      %v2203 = vadd.f32 %v1969, %v2146
      %v2204 = vadd.f32 %v1970, %v2180
      %v2205 = vadd.f32 %v1971, %v2149
      %v2206 = vadd.f32 %v1972, %v2183
      %v2207 = vadd.f32 %v1973, %v2151
      %v2208 = vadd.f32 %v1974, %v2185
      %v2209 = vadd.f32 %v1975, %v2154
      %v2210 = vadd.f32 %v1976, %v2188
      %v2211 = vadd.f32 %v1977, %v2156
      %v2212 = vadd.f32 %v1978, %v2190
      %v2213 = vadd.f32 %v1979, %v2159
      %v2214 = vadd.f32 %v1980, %v2193
      %v2215 = vadd.f32 %v1981, %v2161
      %v2216 = vadd.f32 %v1982, %v2195
      %2217 = vst [vmem:[#allocation2] sm:$0xff] %v2197
      %2218 = vst.msk [vmem:[#allocation2 + $0x8] sm:$0xff] %vm173, %v2198
      %2219 = vst [vmem:[#allocation2 + $0x10] sm:$0xff] %v2199
      %2220 = vst.msk [vmem:[#allocation2 + $0x18] sm:$0xff] %vm173, %v2200
      %2221 = vst [vmem:[#allocation2 + $0x20] sm:$0xff] %v2201
      %2222 = vst.msk [vmem:[#allocation2 + $0x28] sm:$0xff] %vm173, %v2202
      %2223 = vst [vmem:[#allocation2 + $0x30] sm:$0xff] %v2203
      %2224 = vst.msk [vmem:[#allocation2 + $0x38] sm:$0xff] %vm173, %v2204
      %2225 = vst [vmem:[#allocation2 + $0x40] sm:$0xff] %v2205
      %2226 = vst.msk [vmem:[#allocation2 + $0x48] sm:$0xff] %vm173, %v2206
      %2227 = vst [vmem:[#allocation2 + $0x50] sm:$0xff] %v2207
      %2228 = vst.msk [vmem:[#allocation2 + $0x58] sm:$0xff] %vm173, %v2208
      %2229 = vst [vmem:[#allocation2 + $0x60] sm:$0xff] %v2209
      %2230 = vst.msk [vmem:[#allocation2 + $0x68] sm:$0xff] %vm173, %v2210
      %2231 = vst [vmem:[#allocation2 + $0x70] sm:$0xff] %v2211
      %2232 = vst.msk [vmem:[#allocation2 + $0x78] sm:$0xff] %vm173, %v2212
      %2233 = vst [vmem:[#allocation2 + $0x80] sm:$0xff] %v2213
      %2234 = vst.msk [vmem:[#allocation2 + $0x88] sm:$0xff] %vm173, %v2214
      %2235 = vst [vmem:[#allocation2 + $0x90] sm:$0x1f] %v2215
      %2236 = vst.msk [vmem:[#allocation2 + $0x98] sm:$0x1f] %vm192, %v2216
      %v2237 = vld [vmem:[%s165 + $0x4] sm:$0x8]
      %v2238 = vld [vmem:[%s165 + $0x8] sm:$0xf]
      %v2239 = vld [vmem:[%s165 + $0xc] sm:$0xf]
      %v2240 = vld [vmem:[%s165 + $0x10] sm:$0xf]
      %v2241 = vld [vmem:[%s165 + $0x14] sm:$0xf]
      %v2242 = vld [vmem:[%s165 + $0x18] sm:$0xf]
      %v2243 = vld [vmem:[%s165 + $0x1c] sm:$0xf]
      %v2244 = vld [vmem:[%s165 + $0x20] sm:$0xf]
      %v2245 = vld [vmem:[%s165 + $0x24] sm:$0xf]
      %v2246 = vld [vmem:[%s165 + $0x28] sm:$0xf]
      %v2247 = vld [vmem:[%s165 + $0x2c] sm:$0x3]
      %v2248 = vld [vmem:[#allocation2] sm:$0xff]
      %v2249 = vld [vmem:[#allocation2 + $0x8] sm:$0xff]
      %v2250 = vld [vmem:[#allocation2 + $0x10] sm:$0xff]
      %v2251 = vld [vmem:[#allocation2 + $0x18] sm:$0xff]
      %v2252 = vld [vmem:[#allocation2 + $0x20] sm:$0xff]
      %v2253 = vld [vmem:[#allocation2 + $0x28] sm:$0xff]
      %v2254 = vld [vmem:[#allocation2 + $0x30] sm:$0xff]
      %v2255 = vld [vmem:[#allocation2 + $0x38] sm:$0xff]
      %v2256 = vld [vmem:[#allocation2 + $0x40] sm:$0xff]
      %v2257 = vld [vmem:[#allocation2 + $0x48] sm:$0xff]
      %v2258 = vld [vmem:[#allocation2 + $0x50] sm:$0xff]
      %v2259 = vld [vmem:[#allocation2 + $0x58] sm:$0xff]
      %v2260 = vld [vmem:[#allocation2 + $0x60] sm:$0xff]
      %v2261 = vld [vmem:[#allocation2 + $0x68] sm:$0xff]
      %v2262 = vld [vmem:[#allocation2 + $0x70] sm:$0xff]
      %v2263 = vld [vmem:[#allocation2 + $0x78] sm:$0xff]
      %v2264 = vld [vmem:[#allocation2 + $0x80] sm:$0xff]
      %v2265 = vld [vmem:[#allocation2 + $0x88] sm:$0xff]
      %v2266 = vld [vmem:[#allocation2 + $0x90] sm:$0x1f]
      %v2267 = vld [vmem:[#allocation2 + $0x98] sm:$0x1f]
      %s2268 = scalar_lea.vmem %s1, 512
      %v2269 = vld [vmem:[%s2268] sm:$0xff]
      %v2270 = vld [vmem:[%s2268 + $0x8] sm:$0xff]
      %v2271 = vld [vmem:[%s2268 + $0x10] sm:$0xff]
      %v2272 = vld [vmem:[%s2268 + $0x18] sm:$0xff]
      %v2273 = vld [vmem:[%s2268 + $0x20] sm:$0xff]
      %v2274 = vld [vmem:[%s2268 + $0x28] sm:$0xff]
      %v2275 = vld [vmem:[%s2268 + $0x30] sm:$0xff]
      %v2276 = vld [vmem:[%s2268 + $0x38] sm:$0xff]
      %v2288 = vunpack.c.l.b16 %v2237
      %v2289 = vunpack.c.l.b16 %v2238
      %v2290 = vunpack.c.l.b16 %v2239
      %v2291 = vunpack.c.l.b16 %v2240
      %v2292 = vunpack.c.l.b16 %v2241
      %v2293 = vunpack.c.l.b16 %v2242
      %v2294 = vunpack.c.l.b16 %v2243
      %v2295 = vunpack.c.l.b16 %v2244
      %v2296 = vunpack.c.l.b16 %v2245
      %v2297 = vunpack.c.l.b16 %v2246
      %v2298 = vunpack.c.l.b16 %v2247
      %v2299 = vpack.c.b16 %v2289, %v2288
      %v2300 = vpack.c.b16 %v2291, %v2290
      %v2301 = vpack.c.b16 %v2293, %v2292
      %v2302 = vpack.c.b16 %v2295, %v2294
      %v2303 = vpack.c.b16 %v2297, %v2296
      %v2304 = vpack.c.b16 %v2298, %v2298
      %vm2305 = vcmask 1044480
      %v2306 = vrot.slane %v2299, 3
      %v2307 = vrot.slane %v2300, 3
      %v2308 = vsel %vm2305, %v2306, %v2307
      %v2309 = vrot.slane %v2301, 3
      %v2310 = vsel %vm2305, %v2307, %v2309
      %v2311 = vrot.slane %v2302, 3
      %v2312 = vsel %vm2305, %v2309, %v2311
      %v2313 = vrot.slane %v2303, 3
      %v2314 = vsel %vm2305, %v2311, %v2313
      %v2315 = vrot.slane %v2304, 3
      %v2316 = vsel %vm2305, %v2313, %v2315
      %v2325 = vunpack.c.l.b16 %v2269
      %v2326 = vunpack.c.h.b16 %v2269
      %v2327 = vunpack.c.l.b16 %v2270
      %v2328 = vunpack.c.h.b16 %v2270
      %v2329 = vunpack.c.l.b16 %v2271
      %v2330 = vunpack.c.h.b16 %v2271
      %v2331 = vunpack.c.l.b16 %v2272
      %v2332 = vunpack.c.h.b16 %v2272
      %v2333 = vunpack.c.l.b16 %v2273
      %v2334 = vunpack.c.h.b16 %v2273
      %v2335 = vunpack.c.l.b16 %v2274
      %v2336 = vunpack.c.h.b16 %v2274
      %v2337 = vunpack.c.l.b16 %v2275
      %v2338 = vunpack.c.h.b16 %v2275
      %v2339 = vunpack.c.l.b16 %v2276
      %v2340 = vunpack.c.h.b16 %v2276
      %v2341 = vpack.c.b16 %v2327, %v2325
      %v2342 = vpack.c.b16 %v2328, %v2326
      %v2343 = vpack.c.b16 %v2331, %v2329
      %v2344 = vpack.c.b16 %v2332, %v2330
      %v2345 = vpack.c.b16 %v2335, %v2333
      %v2346 = vpack.c.b16 %v2336, %v2334
      %v2347 = vpack.c.b16 %v2339, %v2337
      %v2348 = vpack.c.b16 %v2340, %v2338
      %v2358 = vsel %vm173, %v2308, 0
      %v2361 = vsel %vm173, %v2310, 0
      %v2364 = vsel %vm173, %v2312, 0
      %v2367 = vsel %vm173, %v2314, 0
      %v2370 = vsel %vm173, %v2316, 0
      %2372 = vmatpush.bf16.msra.mxu0 0
      %2373 = vmatpush.bf16.msra.mxu0 0
      %2374 = vmatpush.bf16.msra.mxu0 0
      %2375 = vmatpush.bf16.msra.mxu0 0
      %2376 = vmatpush.bf16.msra.mxu0 %v2347
      %2377 = vmatpush.bf16.msra.mxu0 %v2345
      %2378 = vmatpush.bf16.msra.mxu0 %v2343
      %2379 = vmatpush.bf16.msra.mxu0 %v2341
      %2380 = vmatmul.bf16.gmra.mxu0 %v2358
      %v2381 = vpop.f32.mrf.mxu0
      %v2382 = vadd.f32 0.0, %v2381
      %v2383 = vpop.f32.mrf.mxu0
      %v2384 = vadd.f32 0.0, %v2383
      %2385 = vmatmul.bf16.gmra.mxu0 %v2361
      %v2386 = vpop.f32.mrf.mxu0
      %v2387 = vadd.f32 0.0, %v2386
      %v2388 = vpop.f32.mrf.mxu0
      %v2389 = vadd.f32 0.0, %v2388
      %2390 = vmatmul.bf16.gmra.mxu0 %v2364
      %v2391 = vpop.f32.mrf.mxu0
      %v2392 = vadd.f32 0.0, %v2391
      %v2393 = vpop.f32.mrf.mxu0
      %v2394 = vadd.f32 0.0, %v2393
      %2395 = vmatmul.bf16.gmra.mxu0 %v2367
      %v2396 = vpop.f32.mrf.mxu0
      %v2397 = vadd.f32 0.0, %v2396
      %v2398 = vpop.f32.mrf.mxu0
      %v2399 = vadd.f32 0.0, %v2398
      %2400 = vmatmul.bf16.gmra.mxu0 %v2370
      %v2401 = vpop.f32.mrf.mxu0
      %v2402 = vadd.f32 0.0, %v2401
      %v2403 = vpop.f32.mrf.mxu0
      %v2404 = vadd.f32 0.0, %v2403
      %2405 = vdwg.mxu0
      %2406 = vmatpush.bf16.msra.mxu0 0
      %2407 = vmatpush.bf16.msra.mxu0 0
      %2408 = vmatpush.bf16.msra.mxu0 0
      %2409 = vmatpush.bf16.msra.mxu0 0
      %2410 = vmatpush.bf16.msra.mxu0 %v2348
      %2411 = vmatpush.bf16.msra.mxu0 %v2346
      %2412 = vmatpush.bf16.msra.mxu0 %v2344
      %2413 = vmatpush.bf16.msra.mxu0 %v2342
      %2414 = vmatmul.bf16.gmra.mxu0 %v2358
      %v2415 = vpop.f32.mrf.mxu0
      %v2416 = vadd.f32 0.0, %v2415
      %v2417 = vpop.f32.mrf.mxu0
      %v2418 = vadd.f32 0.0, %v2417
      %2419 = vmatmul.bf16.gmra.mxu0 %v2361
      %v2420 = vpop.f32.mrf.mxu0
      %v2421 = vadd.f32 0.0, %v2420
      %v2422 = vpop.f32.mrf.mxu0
      %v2423 = vadd.f32 0.0, %v2422
      %2424 = vmatmul.bf16.gmra.mxu0 %v2364
      %v2425 = vpop.f32.mrf.mxu0
      %v2426 = vadd.f32 0.0, %v2425
      %v2427 = vpop.f32.mrf.mxu0
      %v2428 = vadd.f32 0.0, %v2427
      %2429 = vmatmul.bf16.gmra.mxu0 %v2367
      %v2430 = vpop.f32.mrf.mxu0
      %v2431 = vadd.f32 0.0, %v2430
      %v2432 = vpop.f32.mrf.mxu0
      %v2433 = vadd.f32 0.0, %v2432
      %2434 = vmatmul.bf16.gmra.mxu0 %v2370
      %v2435 = vpop.f32.mrf.mxu0
      %v2436 = vadd.f32 0.0, %v2435
      %v2437 = vpop.f32.mrf.mxu0
      %v2438 = vadd.f32 0.0, %v2437
      %2439 = vdwg.mxu0
      %v2440 = vadd.f32 %v2248, %v2382
      %v2441 = vadd.f32 %v2249, %v2416
      %v2442 = vadd.f32 %v2250, %v2384
      %v2443 = vadd.f32 %v2251, %v2418
      %v2444 = vadd.f32 %v2252, %v2387
      %v2445 = vadd.f32 %v2253, %v2421
      %v2446 = vadd.f32 %v2254, %v2389
      %v2447 = vadd.f32 %v2255, %v2423
      %v2448 = vadd.f32 %v2256, %v2392
      %v2449 = vadd.f32 %v2257, %v2426
      %v2450 = vadd.f32 %v2258, %v2394
      %v2451 = vadd.f32 %v2259, %v2428
      %v2452 = vadd.f32 %v2260, %v2397
      %v2453 = vadd.f32 %v2261, %v2431
      %v2454 = vadd.f32 %v2262, %v2399
      %v2455 = vadd.f32 %v2263, %v2433
      %v2456 = vadd.f32 %v2264, %v2402
      %v2457 = vadd.f32 %v2265, %v2436
      %v2458 = vadd.f32 %v2266, %v2404
      %v2459 = vadd.f32 %v2267, %v2438
      %2460 = vst [vmem:[#allocation2] sm:$0xff] %v2440
      %2461 = vst.msk [vmem:[#allocation2 + $0x8] sm:$0xff] %vm173, %v2441
      %2462 = vst [vmem:[#allocation2 + $0x10] sm:$0xff] %v2442
      %2463 = vst.msk [vmem:[#allocation2 + $0x18] sm:$0xff] %vm173, %v2443
      %2464 = vst [vmem:[#allocation2 + $0x20] sm:$0xff] %v2444
      %2465 = vst.msk [vmem:[#allocation2 + $0x28] sm:$0xff] %vm173, %v2445
      %2466 = vst [vmem:[#allocation2 + $0x30] sm:$0xff] %v2446
      %2467 = vst.msk [vmem:[#allocation2 + $0x38] sm:$0xff] %vm173, %v2447
      %2468 = vst [vmem:[#allocation2 + $0x40] sm:$0xff] %v2448
      %2469 = vst.msk [vmem:[#allocation2 + $0x48] sm:$0xff] %vm173, %v2449
      %2470 = vst [vmem:[#allocation2 + $0x50] sm:$0xff] %v2450
      %2471 = vst.msk [vmem:[#allocation2 + $0x58] sm:$0xff] %vm173, %v2451
      %2472 = vst [vmem:[#allocation2 + $0x60] sm:$0xff] %v2452
      %2473 = vst.msk [vmem:[#allocation2 + $0x68] sm:$0xff] %vm173, %v2453
      %2474 = vst [vmem:[#allocation2 + $0x70] sm:$0xff] %v2454
      %2475 = vst.msk [vmem:[#allocation2 + $0x78] sm:$0xff] %vm173, %v2455
      %2476 = vst [vmem:[#allocation2 + $0x80] sm:$0xff] %v2456
      %2477 = vst.msk [vmem:[#allocation2 + $0x88] sm:$0xff] %vm173, %v2457
      %2478 = vst [vmem:[#allocation2 + $0x90] sm:$0x1f] %v2458
      %2479 = vst.msk [vmem:[#allocation2 + $0x98] sm:$0x1f] %vm192, %v2459
      %v2480 = vld [vmem:[%s165 + $0x4] sm:$0x8]
      %v2481 = vld [vmem:[%s165 + $0x8] sm:$0xf]
      %v2482 = vld [vmem:[%s165 + $0xc] sm:$0xf]
      %v2483 = vld [vmem:[%s165 + $0x10] sm:$0xf]
      %v2484 = vld [vmem:[%s165 + $0x14] sm:$0xf]
      %v2485 = vld [vmem:[%s165 + $0x18] sm:$0xf]
      %v2486 = vld [vmem:[%s165 + $0x1c] sm:$0xf]
      %v2487 = vld [vmem:[%s165 + $0x20] sm:$0xf]
      %v2488 = vld [vmem:[%s165 + $0x24] sm:$0xf]
      %v2489 = vld [vmem:[%s165 + $0x28] sm:$0xf]
      %v2490 = vld [vmem:[%s165 + $0x2c] sm:$0x3]
      %v2491 = vld [vmem:[#allocation2] sm:$0xff]
      %v2492 = vld [vmem:[#allocation2 + $0x8] sm:$0xff]
      %v2493 = vld [vmem:[#allocation2 + $0x10] sm:$0xff]
      %v2494 = vld [vmem:[#allocation2 + $0x18] sm:$0xff]
      %v2495 = vld [vmem:[#allocation2 + $0x20] sm:$0xff]
      %v2496 = vld [vmem:[#allocation2 + $0x28] sm:$0xff]
      %v2497 = vld [vmem:[#allocation2 + $0x30] sm:$0xff]
      %v2498 = vld [vmem:[#allocation2 + $0x38] sm:$0xff]
      %v2499 = vld [vmem:[#allocation2 + $0x40] sm:$0xff]
      %v2500 = vld [vmem:[#allocation2 + $0x48] sm:$0xff]
      %v2501 = vld [vmem:[#allocation2 + $0x50] sm:$0xff]
      %v2502 = vld [vmem:[#allocation2 + $0x58] sm:$0xff]
      %v2503 = vld [vmem:[#allocation2 + $0x60] sm:$0xff]
      %v2504 = vld [vmem:[#allocation2 + $0x68] sm:$0xff]
      %v2505 = vld [vmem:[#allocation2 + $0x70] sm:$0xff]
      %v2506 = vld [vmem:[#allocation2 + $0x78] sm:$0xff]
      %v2507 = vld [vmem:[#allocation2 + $0x80] sm:$0xff]
      %v2508 = vld [vmem:[#allocation2 + $0x88] sm:$0xff]
      %v2509 = vld [vmem:[#allocation2 + $0x90] sm:$0x1f]
      %v2510 = vld [vmem:[#allocation2 + $0x98] sm:$0x1f]
      %s2511 = scalar_lea.vmem %s1, 576
      %v2512 = vld [vmem:[%s2511] sm:$0xff]
      %v2513 = vld [vmem:[%s2511 + $0x8] sm:$0xff]
      %v2514 = vld [vmem:[%s2511 + $0x10] sm:$0xff]
      %v2515 = vld [vmem:[%s2511 + $0x18] sm:$0xff]
      %v2516 = vld [vmem:[%s2511 + $0x20] sm:$0xff]
      %v2517 = vld [vmem:[%s2511 + $0x28] sm:$0xff]
      %v2518 = vld [vmem:[%s2511 + $0x30] sm:$0xff]
      %v2519 = vld [vmem:[%s2511 + $0x38] sm:$0xff]
      %v2531 = vunpack.c.l.b16 %v2480
      %v2532 = vunpack.c.l.b16 %v2481
      %v2533 = vunpack.c.l.b16 %v2482
      %v2534 = vunpack.c.l.b16 %v2483
      %v2535 = vunpack.c.l.b16 %v2484
      %v2536 = vunpack.c.l.b16 %v2485
      %v2537 = vunpack.c.l.b16 %v2486
      %v2538 = vunpack.c.l.b16 %v2487
      %v2539 = vunpack.c.l.b16 %v2488
      %v2540 = vunpack.c.l.b16 %v2489
      %v2541 = vunpack.c.l.b16 %v2490
      %v2542 = vpack.c.b16 %v2532, %v2531
      %v2543 = vpack.c.b16 %v2534, %v2533
      %v2544 = vpack.c.b16 %v2536, %v2535
      %v2545 = vpack.c.b16 %v2538, %v2537
      %v2546 = vpack.c.b16 %v2540, %v2539
      %v2547 = vpack.c.b16 %v2541, %v2541
      %vm2548 = vsmask.f32 4352
      %v2550 = vshrl.u32 %v2542, 16
      %v2552 = vrot.slane %v2550, 3
      %v2553 = vshll.u32 %v2542, 16
      %v2555 = vrot.slane %v2553, 4
      %v2556 = vor.u32 %v2552, %v2555
      %v2558 = vshrl.u32 %v2543, 16
      %v2560 = vrot.slane %v2558, 3
      %v2561 = vshll.u32 %v2543, 16
      %v2563 = vrot.slane %v2561, 4
      %v2564 = vor.u32 %v2560, %v2563
      %v2565 = vsel %vm2548, %v2556, %v2564
      %v2567 = vshrl.u32 %v2544, 16
      %v2569 = vrot.slane %v2567, 3
      %v2570 = vshll.u32 %v2544, 16
      %v2572 = vrot.slane %v2570, 4
      %v2573 = vor.u32 %v2569, %v2572
      %v2574 = vsel %vm2548, %v2564, %v2573
      %v2576 = vshrl.u32 %v2545, 16
      %v2578 = vrot.slane %v2576, 3
      %v2579 = vshll.u32 %v2545, 16
      %v2581 = vrot.slane %v2579, 4
      %v2582 = vor.u32 %v2578, %v2581
      %v2583 = vsel %vm2548, %v2573, %v2582
      %v2585 = vshrl.u32 %v2546, 16
      %v2587 = vrot.slane %v2585, 3
      %v2588 = vshll.u32 %v2546, 16
      %v2590 = vrot.slane %v2588, 4
      %v2591 = vor.u32 %v2587, %v2590
      %v2592 = vsel %vm2548, %v2582, %v2591
      %v2594 = vshrl.u32 %v2547, 16
      %v2596 = vrot.slane %v2594, 3
      %v2597 = vshll.u32 %v2547, 16
      %v2599 = vrot.slane %v2597, 4
      %v2600 = vor.u32 %v2596, %v2599
      %v2601 = vsel %vm2548, %v2591, %v2600
      %v2610 = vunpack.c.l.b16 %v2512
      %v2611 = vunpack.c.h.b16 %v2512
      %v2612 = vunpack.c.l.b16 %v2513
      %v2613 = vunpack.c.h.b16 %v2513
      %v2614 = vunpack.c.l.b16 %v2514
      %v2615 = vunpack.c.h.b16 %v2514
      %v2616 = vunpack.c.l.b16 %v2515
      %v2617 = vunpack.c.h.b16 %v2515
      %v2618 = vunpack.c.l.b16 %v2516
      %v2619 = vunpack.c.h.b16 %v2516
      %v2620 = vunpack.c.l.b16 %v2517
      %v2621 = vunpack.c.h.b16 %v2517
      %v2622 = vunpack.c.l.b16 %v2518
      %v2623 = vunpack.c.h.b16 %v2518
      %v2624 = vunpack.c.l.b16 %v2519
      %v2625 = vunpack.c.h.b16 %v2519
      %v2626 = vpack.c.b16 %v2612, %v2610
      %v2627 = vpack.c.b16 %v2613, %v2611
      %v2628 = vpack.c.b16 %v2616, %v2614
      %v2629 = vpack.c.b16 %v2617, %v2615
      %v2630 = vpack.c.b16 %v2620, %v2618
      %v2631 = vpack.c.b16 %v2621, %v2619
      %v2632 = vpack.c.b16 %v2624, %v2622
      %v2633 = vpack.c.b16 %v2625, %v2623
      %v2643 = vsel %vm173, %v2565, 0
      %v2646 = vsel %vm173, %v2574, 0
      %v2649 = vsel %vm173, %v2583, 0
      %v2652 = vsel %vm173, %v2592, 0
      %v2655 = vsel %vm173, %v2601, 0
      %2657 = vmatpush.bf16.msra.mxu0 0
      %2658 = vmatpush.bf16.msra.mxu0 0
      %2659 = vmatpush.bf16.msra.mxu0 0
      %2660 = vmatpush.bf16.msra.mxu0 0
      %2661 = vmatpush.bf16.msra.mxu0 %v2632
      %2662 = vmatpush.bf16.msra.mxu0 %v2630
      %2663 = vmatpush.bf16.msra.mxu0 %v2628
      %2664 = vmatpush.bf16.msra.mxu0 %v2626
      %2665 = vmatmul.bf16.gmra.mxu0 %v2643
      %v2666 = vpop.f32.mrf.mxu0
      %v2667 = vadd.f32 0.0, %v2666
      %v2668 = vpop.f32.mrf.mxu0
      %v2669 = vadd.f32 0.0, %v2668
      %2670 = vmatmul.bf16.gmra.mxu0 %v2646
      %v2671 = vpop.f32.mrf.mxu0
      %v2672 = vadd.f32 0.0, %v2671
      %v2673 = vpop.f32.mrf.mxu0
      %v2674 = vadd.f32 0.0, %v2673
      %2675 = vmatmul.bf16.gmra.mxu0 %v2649
      %v2676 = vpop.f32.mrf.mxu0
      %v2677 = vadd.f32 0.0, %v2676
      %v2678 = vpop.f32.mrf.mxu0
      %v2679 = vadd.f32 0.0, %v2678
      %2680 = vmatmul.bf16.gmra.mxu0 %v2652
      %v2681 = vpop.f32.mrf.mxu0
      %v2682 = vadd.f32 0.0, %v2681
      %v2683 = vpop.f32.mrf.mxu0
      %v2684 = vadd.f32 0.0, %v2683
      %2685 = vmatmul.bf16.gmra.mxu0 %v2655
      %v2686 = vpop.f32.mrf.mxu0
      %v2687 = vadd.f32 0.0, %v2686
      %v2688 = vpop.f32.mrf.mxu0
      %v2689 = vadd.f32 0.0, %v2688
      %2690 = vdwg.mxu0
      %2691 = vmatpush.bf16.msra.mxu0 0
      %2692 = vmatpush.bf16.msra.mxu0 0
      %2693 = vmatpush.bf16.msra.mxu0 0
      %2694 = vmatpush.bf16.msra.mxu0 0
      %2695 = vmatpush.bf16.msra.mxu0 %v2633
      %2696 = vmatpush.bf16.msra.mxu0 %v2631
      %2697 = vmatpush.bf16.msra.mxu0 %v2629
      %2698 = vmatpush.bf16.msra.mxu0 %v2627
      %2699 = vmatmul.bf16.gmra.mxu0 %v2643
      %v2700 = vpop.f32.mrf.mxu0
      %v2701 = vadd.f32 0.0, %v2700
      %v2702 = vpop.f32.mrf.mxu0
      %v2703 = vadd.f32 0.0, %v2702
      %2704 = vmatmul.bf16.gmra.mxu0 %v2646
      %v2705 = vpop.f32.mrf.mxu0
      %v2706 = vadd.f32 0.0, %v2705
      %v2707 = vpop.f32.mrf.mxu0
      %v2708 = vadd.f32 0.0, %v2707
      %2709 = vmatmul.bf16.gmra.mxu0 %v2649
      %v2710 = vpop.f32.mrf.mxu0
      %v2711 = vadd.f32 0.0, %v2710
      %v2712 = vpop.f32.mrf.mxu0
      %v2713 = vadd.f32 0.0, %v2712
      %2714 = vmatmul.bf16.gmra.mxu0 %v2652
      %v2715 = vpop.f32.mrf.mxu0
      %v2716 = vadd.f32 0.0, %v2715
      %v2717 = vpop.f32.mrf.mxu0
      %v2718 = vadd.f32 0.0, %v2717
      %2719 = vmatmul.bf16.gmra.mxu0 %v2655
      %v2720 = vpop.f32.mrf.mxu0
      %v2721 = vadd.f32 0.0, %v2720
      %v2722 = vpop.f32.mrf.mxu0
      %v2723 = vadd.f32 0.0, %v2722
      %2724 = vdwg.mxu0
      %v2725 = vadd.f32 %v2491, %v2667
      %v2726 = vadd.f32 %v2492, %v2701
      %v2727 = vadd.f32 %v2493, %v2669
      %v2728 = vadd.f32 %v2494, %v2703
      %v2729 = vadd.f32 %v2495, %v2672
      %v2730 = vadd.f32 %v2496, %v2706
      %v2731 = vadd.f32 %v2497, %v2674
      %v2732 = vadd.f32 %v2498, %v2708
      %v2733 = vadd.f32 %v2499, %v2677
      %v2734 = vadd.f32 %v2500, %v2711
      %v2735 = vadd.f32 %v2501, %v2679
      %v2736 = vadd.f32 %v2502, %v2713
      %v2737 = vadd.f32 %v2503, %v2682
      %v2738 = vadd.f32 %v2504, %v2716
      %v2739 = vadd.f32 %v2505, %v2684
      %v2740 = vadd.f32 %v2506, %v2718
      %v2741 = vadd.f32 %v2507, %v2687
      %v2742 = vadd.f32 %v2508, %v2721
      %v2743 = vadd.f32 %v2509, %v2689
      %v2744 = vadd.f32 %v2510, %v2723
      %2745 = vst [vmem:[#allocation2] sm:$0xff] %v2725
      %2746 = vst.msk [vmem:[#allocation2 + $0x8] sm:$0xff] %vm173, %v2726
      %2747 = vst [vmem:[#allocation2 + $0x10] sm:$0xff] %v2727
      %2748 = vst.msk [vmem:[#allocation2 + $0x18] sm:$0xff] %vm173, %v2728
      %2749 = vst [vmem:[#allocation2 + $0x20] sm:$0xff] %v2729
      %2750 = vst.msk [vmem:[#allocation2 + $0x28] sm:$0xff] %vm173, %v2730
      %2751 = vst [vmem:[#allocation2 + $0x30] sm:$0xff] %v2731
      %2752 = vst.msk [vmem:[#allocation2 + $0x38] sm:$0xff] %vm173, %v2732
      %2753 = vst [vmem:[#allocation2 + $0x40] sm:$0xff] %v2733
      %2754 = vst.msk [vmem:[#allocation2 + $0x48] sm:$0xff] %vm173, %v2734
      %2755 = vst [vmem:[#allocation2 + $0x50] sm:$0xff] %v2735
      %2756 = vst.msk [vmem:[#allocation2 + $0x58] sm:$0xff] %vm173, %v2736
      %2757 = vst [vmem:[#allocation2 + $0x60] sm:$0xff] %v2737
      %2758 = vst.msk [vmem:[#allocation2 + $0x68] sm:$0xff] %vm173, %v2738
      %2759 = vst [vmem:[#allocation2 + $0x70] sm:$0xff] %v2739
      %2760 = vst.msk [vmem:[#allocation2 + $0x78] sm:$0xff] %vm173, %v2740
      %2761 = vst [vmem:[#allocation2 + $0x80] sm:$0xff] %v2741
      %2762 = vst.msk [vmem:[#allocation2 + $0x88] sm:$0xff] %vm173, %v2742
      %2763 = vst [vmem:[#allocation2 + $0x90] sm:$0x1f] %v2743
      %2764 = vst.msk [vmem:[#allocation2 + $0x98] sm:$0x1f] %vm192, %v2744
      %v2765 = vld [vmem:[%s165 + $0x8] sm:$0x8]
      %v2766 = vld [vmem:[%s165 + $0xc] sm:$0xf]
      %v2767 = vld [vmem:[%s165 + $0x10] sm:$0xf]
      %v2768 = vld [vmem:[%s165 + $0x14] sm:$0xf]
      %v2769 = vld [vmem:[%s165 + $0x18] sm:$0xf]
      %v2770 = vld [vmem:[%s165 + $0x1c] sm:$0xf]
      %v2771 = vld [vmem:[%s165 + $0x20] sm:$0xf]
      %v2772 = vld [vmem:[%s165 + $0x24] sm:$0xf]
      %v2773 = vld [vmem:[%s165 + $0x28] sm:$0xf]
      %v2774 = vld [vmem:[%s165 + $0x2c] sm:$0xf]
      %v2775 = vld [vmem:[%s165 + $0x30] sm:$0x3]
      %v2776 = vld [vmem:[#allocation2] sm:$0xff]
      %v2777 = vld [vmem:[#allocation2 + $0x8] sm:$0xff]
      %v2778 = vld [vmem:[#allocation2 + $0x10] sm:$0xff]
      %v2779 = vld [vmem:[#allocation2 + $0x18] sm:$0xff]
      %v2780 = vld [vmem:[#allocation2 + $0x20] sm:$0xff]
      %v2781 = vld [vmem:[#allocation2 + $0x28] sm:$0xff]
      %v2782 = vld [vmem:[#allocation2 + $0x30] sm:$0xff]
      %v2783 = vld [vmem:[#allocation2 + $0x38] sm:$0xff]
      %v2784 = vld [vmem:[#allocation2 + $0x40] sm:$0xff]
      %v2785 = vld [vmem:[#allocation2 + $0x48] sm:$0xff]
      %v2786 = vld [vmem:[#allocation2 + $0x50] sm:$0xff]
      %v2787 = vld [vmem:[#allocation2 + $0x58] sm:$0xff]
      %v2788 = vld [vmem:[#allocation2 + $0x60] sm:$0xff]
      %v2789 = vld [vmem:[#allocation2 + $0x68] sm:$0xff]
      %v2790 = vld [vmem:[#allocation2 + $0x70] sm:$0xff]
      %v2791 = vld [vmem:[#allocation2 + $0x78] sm:$0xff]
      %v2792 = vld [vmem:[#allocation2 + $0x80] sm:$0xff]
      %v2793 = vld [vmem:[#allocation2 + $0x88] sm:$0xff]
      %v2794 = vld [vmem:[#allocation2 + $0x90] sm:$0x1f]
      %v2795 = vld [vmem:[#allocation2 + $0x98] sm:$0x1f]
      %s2796 = scalar_lea.vmem %s1, 640
      %v2797 = vld [vmem:[%s2796] sm:$0xff]
      %v2798 = vld [vmem:[%s2796 + $0x8] sm:$0xff]
      %v2799 = vld [vmem:[%s2796 + $0x10] sm:$0xff]
      %v2800 = vld [vmem:[%s2796 + $0x18] sm:$0xff]
      %v2801 = vld [vmem:[%s2796 + $0x20] sm:$0xff]
      %v2802 = vld [vmem:[%s2796 + $0x28] sm:$0xff]
      %v2803 = vld [vmem:[%s2796 + $0x30] sm:$0xff]
      %v2804 = vld [vmem:[%s2796 + $0x38] sm:$0xff]
      %v2816 = vunpack.c.l.b16 %v2765
      %v2817 = vunpack.c.l.b16 %v2766
      %v2818 = vunpack.c.l.b16 %v2767
      %v2819 = vunpack.c.l.b16 %v2768
      %v2820 = vunpack.c.l.b16 %v2769
      %v2821 = vunpack.c.l.b16 %v2770
      %v2822 = vunpack.c.l.b16 %v2771
      %v2823 = vunpack.c.l.b16 %v2772
      %v2824 = vunpack.c.l.b16 %v2773
      %v2825 = vunpack.c.l.b16 %v2774
      %v2826 = vunpack.c.l.b16 %v2775
      %v2827 = vpack.c.b16 %v2817, %v2816
      %v2828 = vpack.c.b16 %v2819, %v2818
      %v2829 = vpack.c.b16 %v2821, %v2820
      %v2830 = vpack.c.b16 %v2823, %v2822
      %v2831 = vpack.c.b16 %v2825, %v2824
      %v2832 = vpack.c.b16 %v2826, %v2826
      %v2833 = vrot.slane %v2827, 3
      %v2834 = vrot.slane %v2828, 3
      %v2835 = vsel %vm2305, %v2833, %v2834
      %v2836 = vrot.slane %v2829, 3
      %v2837 = vsel %vm2305, %v2834, %v2836
      %v2838 = vrot.slane %v2830, 3
      %v2839 = vsel %vm2305, %v2836, %v2838
      %v2840 = vrot.slane %v2831, 3
      %v2841 = vsel %vm2305, %v2838, %v2840
      %v2842 = vrot.slane %v2832, 3
      %v2843 = vsel %vm2305, %v2840, %v2842
      %v2852 = vunpack.c.l.b16 %v2797
      %v2853 = vunpack.c.h.b16 %v2797
      %v2854 = vunpack.c.l.b16 %v2798
      %v2855 = vunpack.c.h.b16 %v2798
      %v2856 = vunpack.c.l.b16 %v2799
      %v2857 = vunpack.c.h.b16 %v2799
      %v2858 = vunpack.c.l.b16 %v2800
      %v2859 = vunpack.c.h.b16 %v2800
      %v2860 = vunpack.c.l.b16 %v2801
      %v2861 = vunpack.c.h.b16 %v2801
      %v2862 = vunpack.c.l.b16 %v2802
      %v2863 = vunpack.c.h.b16 %v2802
      %v2864 = vunpack.c.l.b16 %v2803
      %v2865 = vunpack.c.h.b16 %v2803
      %v2866 = vunpack.c.l.b16 %v2804
      %v2867 = vunpack.c.h.b16 %v2804
      %v2868 = vpack.c.b16 %v2854, %v2852
      %v2869 = vpack.c.b16 %v2855, %v2853
      %v2870 = vpack.c.b16 %v2858, %v2856
      %v2871 = vpack.c.b16 %v2859, %v2857
      %v2872 = vpack.c.b16 %v2862, %v2860
      %v2873 = vpack.c.b16 %v2863, %v2861
      %v2874 = vpack.c.b16 %v2866, %v2864
      %v2875 = vpack.c.b16 %v2867, %v2865
      %v2885 = vsel %vm173, %v2835, 0
      %v2888 = vsel %vm173, %v2837, 0
      %v2891 = vsel %vm173, %v2839, 0
      %v2894 = vsel %vm173, %v2841, 0
      %v2897 = vsel %vm173, %v2843, 0
      %2899 = vmatpush.bf16.msra.mxu0 0
      %2900 = vmatpush.bf16.msra.mxu0 0
      %2901 = vmatpush.bf16.msra.mxu0 0
      %2902 = vmatpush.bf16.msra.mxu0 0
      %2903 = vmatpush.bf16.msra.mxu0 %v2874
      %2904 = vmatpush.bf16.msra.mxu0 %v2872
      %2905 = vmatpush.bf16.msra.mxu0 %v2870
      %2906 = vmatpush.bf16.msra.mxu0 %v2868
      %2907 = vmatmul.bf16.gmra.mxu0 %v2885
      %v2908 = vpop.f32.mrf.mxu0
      %v2909 = vadd.f32 0.0, %v2908
      %v2910 = vpop.f32.mrf.mxu0
      %v2911 = vadd.f32 0.0, %v2910
      %2912 = vmatmul.bf16.gmra.mxu0 %v2888
      %v2913 = vpop.f32.mrf.mxu0
      %v2914 = vadd.f32 0.0, %v2913
      %v2915 = vpop.f32.mrf.mxu0
      %v2916 = vadd.f32 0.0, %v2915
      %2917 = vmatmul.bf16.gmra.mxu0 %v2891
      %v2918 = vpop.f32.mrf.mxu0
      %v2919 = vadd.f32 0.0, %v2918
      %v2920 = vpop.f32.mrf.mxu0
      %v2921 = vadd.f32 0.0, %v2920
      %2922 = vmatmul.bf16.gmra.mxu0 %v2894
      %v2923 = vpop.f32.mrf.mxu0
      %v2924 = vadd.f32 0.0, %v2923
      %v2925 = vpop.f32.mrf.mxu0
      %v2926 = vadd.f32 0.0, %v2925
      %2927 = vmatmul.bf16.gmra.mxu0 %v2897
      %v2928 = vpop.f32.mrf.mxu0
      %v2929 = vadd.f32 0.0, %v2928
      %v2930 = vpop.f32.mrf.mxu0
      %v2931 = vadd.f32 0.0, %v2930
      %2932 = vdwg.mxu0
      %2933 = vmatpush.bf16.msra.mxu0 0
      %2934 = vmatpush.bf16.msra.mxu0 0
      %2935 = vmatpush.bf16.msra.mxu0 0
      %2936 = vmatpush.bf16.msra.mxu0 0
      %2937 = vmatpush.bf16.msra.mxu0 %v2875
      %2938 = vmatpush.bf16.msra.mxu0 %v2873
      %2939 = vmatpush.bf16.msra.mxu0 %v2871
      %2940 = vmatpush.bf16.msra.mxu0 %v2869
      %2941 = vmatmul.bf16.gmra.mxu0 %v2885
      %v2942 = vpop.f32.mrf.mxu0
      %v2943 = vadd.f32 0.0, %v2942
      %v2944 = vpop.f32.mrf.mxu0
      %v2945 = vadd.f32 0.0, %v2944
      %2946 = vmatmul.bf16.gmra.mxu0 %v2888
      %v2947 = vpop.f32.mrf.mxu0
      %v2948 = vadd.f32 0.0, %v2947
      %v2949 = vpop.f32.mrf.mxu0
      %v2950 = vadd.f32 0.0, %v2949
      %2951 = vmatmul.bf16.gmra.mxu0 %v2891
      %v2952 = vpop.f32.mrf.mxu0
      %v2953 = vadd.f32 0.0, %v2952
      %v2954 = vpop.f32.mrf.mxu0
      %v2955 = vadd.f32 0.0, %v2954
      %2956 = vmatmul.bf16.gmra.mxu0 %v2894
      %v2957 = vpop.f32.mrf.mxu0
      %v2958 = vadd.f32 0.0, %v2957
      %v2959 = vpop.f32.mrf.mxu0
      %v2960 = vadd.f32 0.0, %v2959
      %2961 = vmatmul.bf16.gmra.mxu0 %v2897
      %v2962 = vpop.f32.mrf.mxu0
      %v2963 = vadd.f32 0.0, %v2962
      %v2964 = vpop.f32.mrf.mxu0
      %v2965 = vadd.f32 0.0, %v2964
      %2966 = vdwg.mxu0
      %v2967 = vadd.f32 %v2776, %v2909
      %v2968 = vadd.f32 %v2777, %v2943
      %v2969 = vadd.f32 %v2778, %v2911
      %v2970 = vadd.f32 %v2779, %v2945
      %v2971 = vadd.f32 %v2780, %v2914
      %v2972 = vadd.f32 %v2781, %v2948
      %v2973 = vadd.f32 %v2782, %v2916
      %v2974 = vadd.f32 %v2783, %v2950
      %v2975 = vadd.f32 %v2784, %v2919
      %v2976 = vadd.f32 %v2785, %v2953
      %v2977 = vadd.f32 %v2786, %v2921
      %v2978 = vadd.f32 %v2787, %v2955
      %v2979 = vadd.f32 %v2788, %v2924
      %v2980 = vadd.f32 %v2789, %v2958
      %v2981 = vadd.f32 %v2790, %v2926
      %v2982 = vadd.f32 %v2791, %v2960
      %v2983 = vadd.f32 %v2792, %v2929
      %v2984 = vadd.f32 %v2793, %v2963
      %v2985 = vadd.f32 %v2794, %v2931
      %v2986 = vadd.f32 %v2795, %v2965
      %2987 = vst [vmem:[#allocation2] sm:$0xff] %v2967
      %2988 = vst.msk [vmem:[#allocation2 + $0x8] sm:$0xff] %vm173, %v2968
      %2989 = vst [vmem:[#allocation2 + $0x10] sm:$0xff] %v2969
      %2990 = vst.msk [vmem:[#allocation2 + $0x18] sm:$0xff] %vm173, %v2970
      %2991 = vst [vmem:[#allocation2 + $0x20] sm:$0xff] %v2971
      %2992 = vst.msk [vmem:[#allocation2 + $0x28] sm:$0xff] %vm173, %v2972
      %2993 = vst [vmem:[#allocation2 + $0x30] sm:$0xff] %v2973
      %2994 = vst.msk [vmem:[#allocation2 + $0x38] sm:$0xff] %vm173, %v2974
      %2995 = vst [vmem:[#allocation2 + $0x40] sm:$0xff] %v2975
      %2996 = vst.msk [vmem:[#allocation2 + $0x48] sm:$0xff] %vm173, %v2976
      %2997 = vst [vmem:[#allocation2 + $0x50] sm:$0xff] %v2977
      %2998 = vst.msk [vmem:[#allocation2 + $0x58] sm:$0xff] %vm173, %v2978
      %2999 = vst [vmem:[#allocation2 + $0x60] sm:$0xff] %v2979
      %3000 = vst.msk [vmem:[#allocation2 + $0x68] sm:$0xff] %vm173, %v2980
      %3001 = vst [vmem:[#allocation2 + $0x70] sm:$0xff] %v2981
      %3002 = vst.msk [vmem:[#allocation2 + $0x78] sm:$0xff] %vm173, %v2982
      %3003 = vst [vmem:[#allocation2 + $0x80] sm:$0xff] %v2983
      %3004 = vst.msk [vmem:[#allocation2 + $0x88] sm:$0xff] %vm173, %v2984
      %3005 = vst [vmem:[#allocation2 + $0x90] sm:$0x1f] %v2985
      %3006 = vst.msk [vmem:[#allocation2 + $0x98] sm:$0x1f] %vm192, %v2986
      %v3007 = vld [vmem:[%s165 + $0x8] sm:$0x8]
      %v3008 = vld [vmem:[%s165 + $0xc] sm:$0xf]
      %v3009 = vld [vmem:[%s165 + $0x10] sm:$0xf]
      %v3010 = vld [vmem:[%s165 + $0x14] sm:$0xf]
      %v3011 = vld [vmem:[%s165 + $0x18] sm:$0xf]
      %v3012 = vld [vmem:[%s165 + $0x1c] sm:$0xf]
      %v3013 = vld [vmem:[%s165 + $0x20] sm:$0xf]
      %v3014 = vld [vmem:[%s165 + $0x24] sm:$0xf]
      %v3015 = vld [vmem:[%s165 + $0x28] sm:$0xf]
      %v3016 = vld [vmem:[%s165 + $0x2c] sm:$0xf]
      %v3017 = vld [vmem:[%s165 + $0x30] sm:$0x3]
      %v3018 = vld [vmem:[#allocation2] sm:$0xff]
      %v3019 = vld [vmem:[#allocation2 + $0x8] sm:$0xff]
      %v3020 = vld [vmem:[#allocation2 + $0x10] sm:$0xff]
      %v3021 = vld [vmem:[#allocation2 + $0x18] sm:$0xff]
      %v3022 = vld [vmem:[#allocation2 + $0x20] sm:$0xff]
      %v3023 = vld [vmem:[#allocation2 + $0x28] sm:$0xff]
      %v3024 = vld [vmem:[#allocation2 + $0x30] sm:$0xff]
      %v3025 = vld [vmem:[#allocation2 + $0x38] sm:$0xff]
      %v3026 = vld [vmem:[#allocation2 + $0x40] sm:$0xff]
      %v3027 = vld [vmem:[#allocation2 + $0x48] sm:$0xff]
      %v3028 = vld [vmem:[#allocation2 + $0x50] sm:$0xff]
      %v3029 = vld [vmem:[#allocation2 + $0x58] sm:$0xff]
      %v3030 = vld [vmem:[#allocation2 + $0x60] sm:$0xff]
      %v3031 = vld [vmem:[#allocation2 + $0x68] sm:$0xff]
      %v3032 = vld [vmem:[#allocation2 + $0x70] sm:$0xff]
      %v3033 = vld [vmem:[#allocation2 + $0x78] sm:$0xff]
      %v3034 = vld [vmem:[#allocation2 + $0x80] sm:$0xff]
      %v3035 = vld [vmem:[#allocation2 + $0x88] sm:$0xff]
      %v3036 = vld [vmem:[#allocation2 + $0x90] sm:$0x1f]
      %v3037 = vld [vmem:[#allocation2 + $0x98] sm:$0x1f]
      %s3038 = scalar_lea.vmem %s1, 704
      %v3039 = vld [vmem:[%s3038] sm:$0xff]
      %v3040 = vld [vmem:[%s3038 + $0x8] sm:$0xff]
      %v3041 = vld [vmem:[%s3038 + $0x10] sm:$0xff]
      %v3042 = vld [vmem:[%s3038 + $0x18] sm:$0xff]
      %v3043 = vld [vmem:[%s3038 + $0x20] sm:$0xff]
      %v3044 = vld [vmem:[%s3038 + $0x28] sm:$0xff]
      %v3045 = vld [vmem:[%s3038 + $0x30] sm:$0xff]
      %v3046 = vld [vmem:[%s3038 + $0x38] sm:$0xff]
      %v3058 = vunpack.c.l.b16 %v3007
      %v3059 = vunpack.c.l.b16 %v3008
      %v3060 = vunpack.c.l.b16 %v3009
      %v3061 = vunpack.c.l.b16 %v3010
      %v3062 = vunpack.c.l.b16 %v3011
      %v3063 = vunpack.c.l.b16 %v3012
      %v3064 = vunpack.c.l.b16 %v3013
      %v3065 = vunpack.c.l.b16 %v3014
      %v3066 = vunpack.c.l.b16 %v3015
      %v3067 = vunpack.c.l.b16 %v3016
      %v3068 = vunpack.c.l.b16 %v3017
      %v3069 = vpack.c.b16 %v3059, %v3058
      %v3070 = vpack.c.b16 %v3061, %v3060
      %v3071 = vpack.c.b16 %v3063, %v3062
      %v3072 = vpack.c.b16 %v3065, %v3064
      %v3073 = vpack.c.b16 %v3067, %v3066
      %v3074 = vpack.c.b16 %v3068, %v3068
      %v3076 = vshrl.u32 %v3069, 16
      %v3078 = vrot.slane %v3076, 3
      %v3079 = vshll.u32 %v3069, 16
      %v3081 = vrot.slane %v3079, 4
      %v3082 = vor.u32 %v3078, %v3081
      %v3084 = vshrl.u32 %v3070, 16
      %v3086 = vrot.slane %v3084, 3
      %v3087 = vshll.u32 %v3070, 16
      %v3089 = vrot.slane %v3087, 4
      %v3090 = vor.u32 %v3086, %v3089
      %v3091 = vsel %vm2548, %v3082, %v3090
      %v3093 = vshrl.u32 %v3071, 16
      %v3095 = vrot.slane %v3093, 3
      %v3096 = vshll.u32 %v3071, 16
      %v3098 = vrot.slane %v3096, 4
      %v3099 = vor.u32 %v3095, %v3098
      %v3100 = vsel %vm2548, %v3090, %v3099
      %v3102 = vshrl.u32 %v3072, 16
      %v3104 = vrot.slane %v3102, 3
      %v3105 = vshll.u32 %v3072, 16
      %v3107 = vrot.slane %v3105, 4
      %v3108 = vor.u32 %v3104, %v3107
      %v3109 = vsel %vm2548, %v3099, %v3108
      %v3111 = vshrl.u32 %v3073, 16
      %v3113 = vrot.slane %v3111, 3
      %v3114 = vshll.u32 %v3073, 16
      %v3116 = vrot.slane %v3114, 4
      %v3117 = vor.u32 %v3113, %v3116
      %v3118 = vsel %vm2548, %v3108, %v3117
      %v3120 = vshrl.u32 %v3074, 16
      %v3122 = vrot.slane %v3120, 3
      %v3123 = vshll.u32 %v3074, 16
      %v3125 = vrot.slane %v3123, 4
      %v3126 = vor.u32 %v3122, %v3125
      %v3127 = vsel %vm2548, %v3117, %v3126
      %v3136 = vunpack.c.l.b16 %v3039
      %v3137 = vunpack.c.h.b16 %v3039
      %v3138 = vunpack.c.l.b16 %v3040
      %v3139 = vunpack.c.h.b16 %v3040
      %v3140 = vunpack.c.l.b16 %v3041
      %v3141 = vunpack.c.h.b16 %v3041
      %v3142 = vunpack.c.l.b16 %v3042
      %v3143 = vunpack.c.h.b16 %v3042
      %v3144 = vunpack.c.l.b16 %v3043
      %v3145 = vunpack.c.h.b16 %v3043
      %v3146 = vunpack.c.l.b16 %v3044
      %v3147 = vunpack.c.h.b16 %v3044
      %v3148 = vunpack.c.l.b16 %v3045
      %v3149 = vunpack.c.h.b16 %v3045
      %v3150 = vunpack.c.l.b16 %v3046
      %v3151 = vunpack.c.h.b16 %v3046
      %v3152 = vpack.c.b16 %v3138, %v3136
      %v3153 = vpack.c.b16 %v3139, %v3137
      %v3154 = vpack.c.b16 %v3142, %v3140
      %v3155 = vpack.c.b16 %v3143, %v3141
      %v3156 = vpack.c.b16 %v3146, %v3144
      %v3157 = vpack.c.b16 %v3147, %v3145
      %v3158 = vpack.c.b16 %v3150, %v3148
      %v3159 = vpack.c.b16 %v3151, %v3149
      %v3169 = vsel %vm173, %v3091, 0
      %v3172 = vsel %vm173, %v3100, 0
      %v3175 = vsel %vm173, %v3109, 0
      %v3178 = vsel %vm173, %v3118, 0
      %v3181 = vsel %vm173, %v3127, 0
      %3183 = vmatpush.bf16.msra.mxu0 0
      %3184 = vmatpush.bf16.msra.mxu0 0
      %3185 = vmatpush.bf16.msra.mxu0 0
      %3186 = vmatpush.bf16.msra.mxu0 0
      %3187 = vmatpush.bf16.msra.mxu0 %v3158
      %3188 = vmatpush.bf16.msra.mxu0 %v3156
      %3189 = vmatpush.bf16.msra.mxu0 %v3154
      %3190 = vmatpush.bf16.msra.mxu0 %v3152
      %3191 = vmatmul.bf16.gmra.mxu0 %v3169
      %v3192 = vpop.f32.mrf.mxu0
      %v3193 = vadd.f32 0.0, %v3192
      %v3194 = vpop.f32.mrf.mxu0
      %v3195 = vadd.f32 0.0, %v3194
      %3196 = vmatmul.bf16.gmra.mxu0 %v3172
      %v3197 = vpop.f32.mrf.mxu0
      %v3198 = vadd.f32 0.0, %v3197
      %v3199 = vpop.f32.mrf.mxu0
      %v3200 = vadd.f32 0.0, %v3199
      %3201 = vmatmul.bf16.gmra.mxu0 %v3175
      %v3202 = vpop.f32.mrf.mxu0
      %v3203 = vadd.f32 0.0, %v3202
      %v3204 = vpop.f32.mrf.mxu0
      %v3205 = vadd.f32 0.0, %v3204
      %3206 = vmatmul.bf16.gmra.mxu0 %v3178
      %v3207 = vpop.f32.mrf.mxu0
      %v3208 = vadd.f32 0.0, %v3207
      %v3209 = vpop.f32.mrf.mxu0
      %v3210 = vadd.f32 0.0, %v3209
      %3211 = vmatmul.bf16.gmra.mxu0 %v3181
      %v3212 = vpop.f32.mrf.mxu0
      %v3213 = vadd.f32 0.0, %v3212
      %v3214 = vpop.f32.mrf.mxu0
      %v3215 = vadd.f32 0.0, %v3214
      %3216 = vdwg.mxu0
      %3217 = vmatpush.bf16.msra.mxu0 0
      %3218 = vmatpush.bf16.msra.mxu0 0
      %3219 = vmatpush.bf16.msra.mxu0 0
      %3220 = vmatpush.bf16.msra.mxu0 0
      %3221 = vmatpush.bf16.msra.mxu0 %v3159
      %3222 = vmatpush.bf16.msra.mxu0 %v3157
      %3223 = vmatpush.bf16.msra.mxu0 %v3155
      %3224 = vmatpush.bf16.msra.mxu0 %v3153
      %3225 = vmatmul.bf16.gmra.mxu0 %v3169
      %v3226 = vpop.f32.mrf.mxu0
      %v3227 = vadd.f32 0.0, %v3226
      %v3228 = vpop.f32.mrf.mxu0
      %v3229 = vadd.f32 0.0, %v3228
      %3230 = vmatmul.bf16.gmra.mxu0 %v3172
      %v3231 = vpop.f32.mrf.mxu0
      %v3232 = vadd.f32 0.0, %v3231
      %v3233 = vpop.f32.mrf.mxu0
      %v3234 = vadd.f32 0.0, %v3233
      %3235 = vmatmul.bf16.gmra.mxu0 %v3175
      %v3236 = vpop.f32.mrf.mxu0
      %v3237 = vadd.f32 0.0, %v3236
      %v3238 = vpop.f32.mrf.mxu0
      %v3239 = vadd.f32 0.0, %v3238
      %3240 = vmatmul.bf16.gmra.mxu0 %v3178
      %v3241 = vpop.f32.mrf.mxu0
      %v3242 = vadd.f32 0.0, %v3241
      %v3243 = vpop.f32.mrf.mxu0
      %v3244 = vadd.f32 0.0, %v3243
      %3245 = vmatmul.bf16.gmra.mxu0 %v3181
      %v3246 = vpop.f32.mrf.mxu0
      %v3247 = vadd.f32 0.0, %v3246
      %v3248 = vpop.f32.mrf.mxu0
      %v3249 = vadd.f32 0.0, %v3248
      %3250 = vdwg.mxu0
      %v3251 = vadd.f32 %v3018, %v3193
      %v3252 = vadd.f32 %v3019, %v3227
      %v3253 = vadd.f32 %v3020, %v3195
      %v3254 = vadd.f32 %v3021, %v3229
      %v3255 = vadd.f32 %v3022, %v3198
      %v3256 = vadd.f32 %v3023, %v3232
      %v3257 = vadd.f32 %v3024, %v3200
      %v3258 = vadd.f32 %v3025, %v3234
      %v3259 = vadd.f32 %v3026, %v3203
      %v3260 = vadd.f32 %v3027, %v3237
      %v3261 = vadd.f32 %v3028, %v3205
      %v3262 = vadd.f32 %v3029, %v3239
      %v3263 = vadd.f32 %v3030, %v3208
      %v3264 = vadd.f32 %v3031, %v3242
      %v3265 = vadd.f32 %v3032, %v3210
      %v3266 = vadd.f32 %v3033, %v3244
      %v3267 = vadd.f32 %v3034, %v3213
      %v3268 = vadd.f32 %v3035, %v3247
      %v3269 = vadd.f32 %v3036, %v3215
      %v3270 = vadd.f32 %v3037, %v3249
      %3271 = vst [vmem:[#allocation2] sm:$0xff] %v3251
      %3272 = vst.msk [vmem:[#allocation2 + $0x8] sm:$0xff] %vm173, %v3252
      %3273 = vst [vmem:[#allocation2 + $0x10] sm:$0xff] %v3253
      %3274 = vst.msk [vmem:[#allocation2 + $0x18] sm:$0xff] %vm173, %v3254
      %3275 = vst [vmem:[#allocation2 + $0x20] sm:$0xff] %v3255
      %3276 = vst.msk [vmem:[#allocation2 + $0x28] sm:$0xff] %vm173, %v3256
      %3277 = vst [vmem:[#allocation2 + $0x30] sm:$0xff] %v3257
      %3278 = vst.msk [vmem:[#allocation2 + $0x38] sm:$0xff] %vm173, %v3258
      %3279 = vst [vmem:[#allocation2 + $0x40] sm:$0xff] %v3259
      %3280 = vst.msk [vmem:[#allocation2 + $0x48] sm:$0xff] %vm173, %v3260
      %3281 = vst [vmem:[#allocation2 + $0x50] sm:$0xff] %v3261
      %3282 = vst.msk [vmem:[#allocation2 + $0x58] sm:$0xff] %vm173, %v3262
      %3283 = vst [vmem:[#allocation2 + $0x60] sm:$0xff] %v3263
      %3284 = vst.msk [vmem:[#allocation2 + $0x68] sm:$0xff] %vm173, %v3264
      %3285 = vst [vmem:[#allocation2 + $0x70] sm:$0xff] %v3265
      %3286 = vst.msk [vmem:[#allocation2 + $0x78] sm:$0xff] %vm173, %v3266
      %3287 = vst [vmem:[#allocation2 + $0x80] sm:$0xff] %v3267
      %3288 = vst.msk [vmem:[#allocation2 + $0x88] sm:$0xff] %vm173, %v3268
      %3289 = vst [vmem:[#allocation2 + $0x90] sm:$0x1f] %v3269
      %3290 = vst.msk [vmem:[#allocation2 + $0x98] sm:$0x1f] %vm192, %v3270
      %v3291 = vld [vmem:[%s165 + $0xc] sm:$0xf]
      %v3292 = vld [vmem:[%s165 + $0x10] sm:$0xf]
      %v3293 = vld [vmem:[%s165 + $0x14] sm:$0xf]
      %v3294 = vld [vmem:[%s165 + $0x18] sm:$0xf]
      %v3295 = vld [vmem:[%s165 + $0x1c] sm:$0xf]
      %v3296 = vld [vmem:[%s165 + $0x20] sm:$0xf]
      %v3297 = vld [vmem:[%s165 + $0x24] sm:$0xf]
      %v3298 = vld [vmem:[%s165 + $0x28] sm:$0xf]
      %v3299 = vld [vmem:[%s165 + $0x2c] sm:$0xf]
      %v3300 = vld [vmem:[%s165 + $0x30] sm:$0x7]
      %v3301 = vld [vmem:[#allocation2] sm:$0xff]
      %v3302 = vld [vmem:[#allocation2 + $0x8] sm:$0xff]
      %v3303 = vld [vmem:[#allocation2 + $0x10] sm:$0xff]
      %v3304 = vld [vmem:[#allocation2 + $0x18] sm:$0xff]
      %v3305 = vld [vmem:[#allocation2 + $0x20] sm:$0xff]
      %v3306 = vld [vmem:[#allocation2 + $0x28] sm:$0xff]
      %v3307 = vld [vmem:[#allocation2 + $0x30] sm:$0xff]
      %v3308 = vld [vmem:[#allocation2 + $0x38] sm:$0xff]
      %v3309 = vld [vmem:[#allocation2 + $0x40] sm:$0xff]
      %v3310 = vld [vmem:[#allocation2 + $0x48] sm:$0xff]
      %v3311 = vld [vmem:[#allocation2 + $0x50] sm:$0xff]
      %v3312 = vld [vmem:[#allocation2 + $0x58] sm:$0xff]
      %v3313 = vld [vmem:[#allocation2 + $0x60] sm:$0xff]
      %v3314 = vld [vmem:[#allocation2 + $0x68] sm:$0xff]
      %v3315 = vld [vmem:[#allocation2 + $0x70] sm:$0xff]
      %v3316 = vld [vmem:[#allocation2 + $0x78] sm:$0xff]
      %v3317 = vld [vmem:[#allocation2 + $0x80] sm:$0xff]
      %v3318 = vld [vmem:[#allocation2 + $0x88] sm:$0xff]
      %v3319 = vld [vmem:[#allocation2 + $0x90] sm:$0x1f]
      %v3320 = vld [vmem:[#allocation2 + $0x98] sm:$0x1f]
      %s3321 = scalar_lea.vmem %s1, 768
      %v3322 = vld [vmem:[%s3321] sm:$0xff]
      %v3323 = vld [vmem:[%s3321 + $0x8] sm:$0xff]
      %v3324 = vld [vmem:[%s3321 + $0x10] sm:$0xff]
      %v3325 = vld [vmem:[%s3321 + $0x18] sm:$0xff]
      %v3326 = vld [vmem:[%s3321 + $0x20] sm:$0xff]
      %v3327 = vld [vmem:[%s3321 + $0x28] sm:$0xff]
      %v3328 = vld [vmem:[%s3321 + $0x30] sm:$0xff]
      %v3329 = vld [vmem:[%s3321 + $0x38] sm:$0xff]
      %v3340 = vunpack.c.l.b16 %v3291
      %v3341 = vunpack.c.l.b16 %v3292
      %v3342 = vunpack.c.l.b16 %v3293
      %v3343 = vunpack.c.l.b16 %v3294
      %v3344 = vunpack.c.l.b16 %v3295
      %v3345 = vunpack.c.l.b16 %v3296
      %v3346 = vunpack.c.l.b16 %v3297
      %v3347 = vunpack.c.l.b16 %v3298
      %v3348 = vunpack.c.l.b16 %v3299
      %v3349 = vunpack.c.l.b16 %v3300
      %v3350 = vpack.c.b16 %v3341, %v3340
      %v3351 = vpack.c.b16 %v3343, %v3342
      %v3352 = vpack.c.b16 %v3345, %v3344
      %v3353 = vpack.c.b16 %v3347, %v3346
      %v3354 = vpack.c.b16 %v3349, %v3348
      %v3363 = vunpack.c.l.b16 %v3322
      %v3364 = vunpack.c.h.b16 %v3322
      %v3365 = vunpack.c.l.b16 %v3323
      %v3366 = vunpack.c.h.b16 %v3323
      %v3367 = vunpack.c.l.b16 %v3324
      %v3368 = vunpack.c.h.b16 %v3324
      %v3369 = vunpack.c.l.b16 %v3325
      %v3370 = vunpack.c.h.b16 %v3325
      %v3371 = vunpack.c.l.b16 %v3326
      %v3372 = vunpack.c.h.b16 %v3326
      %v3373 = vunpack.c.l.b16 %v3327
      %v3374 = vunpack.c.h.b16 %v3327
      %v3375 = vunpack.c.l.b16 %v3328
      %v3376 = vunpack.c.h.b16 %v3328
      %v3377 = vunpack.c.l.b16 %v3329
      %v3378 = vunpack.c.h.b16 %v3329
      %v3379 = vpack.c.b16 %v3365, %v3363
      %v3380 = vpack.c.b16 %v3366, %v3364
      %v3381 = vpack.c.b16 %v3369, %v3367
      %v3382 = vpack.c.b16 %v3370, %v3368
      %v3383 = vpack.c.b16 %v3373, %v3371
      %v3384 = vpack.c.b16 %v3374, %v3372
      %v3385 = vpack.c.b16 %v3377, %v3375
      %v3386 = vpack.c.b16 %v3378, %v3376
      %v3396 = vsel %vm173, %v3350, 0
      %v3399 = vsel %vm173, %v3351, 0
      %v3402 = vsel %vm173, %v3352, 0
      %v3405 = vsel %vm173, %v3353, 0
      %v3408 = vsel %vm173, %v3354, 0
      %3410 = vmatpush.bf16.msra.mxu0 0
      %3411 = vmatpush.bf16.msra.mxu0 0
      %3412 = vmatpush.bf16.msra.mxu0 0
      %3413 = vmatpush.bf16.msra.mxu0 0
      %3414 = vmatpush.bf16.msra.mxu0 %v3385
      %3415 = vmatpush.bf16.msra.mxu0 %v3383
      %3416 = vmatpush.bf16.msra.mxu0 %v3381
      %3417 = vmatpush.bf16.msra.mxu0 %v3379
      %3418 = vmatmul.bf16.gmra.mxu0 %v3396
      %v3419 = vpop.f32.mrf.mxu0
      %v3420 = vadd.f32 0.0, %v3419
      %v3421 = vpop.f32.mrf.mxu0
      %v3422 = vadd.f32 0.0, %v3421
      %3423 = vmatmul.bf16.gmra.mxu0 %v3399
      %v3424 = vpop.f32.mrf.mxu0
      %v3425 = vadd.f32 0.0, %v3424
      %v3426 = vpop.f32.mrf.mxu0
      %v3427 = vadd.f32 0.0, %v3426
      %3428 = vmatmul.bf16.gmra.mxu0 %v3402
      %v3429 = vpop.f32.mrf.mxu0
      %v3430 = vadd.f32 0.0, %v3429
      %v3431 = vpop.f32.mrf.mxu0
      %v3432 = vadd.f32 0.0, %v3431
      %3433 = vmatmul.bf16.gmra.mxu0 %v3405
      %v3434 = vpop.f32.mrf.mxu0
      %v3435 = vadd.f32 0.0, %v3434
      %v3436 = vpop.f32.mrf.mxu0
      %v3437 = vadd.f32 0.0, %v3436
      %3438 = vmatmul.bf16.gmra.mxu0 %v3408
      %v3439 = vpop.f32.mrf.mxu0
      %v3440 = vadd.f32 0.0, %v3439
      %v3441 = vpop.f32.mrf.mxu0
      %v3442 = vadd.f32 0.0, %v3441
      %3443 = vdwg.mxu0
      %3444 = vmatpush.bf16.msra.mxu0 0
      %3445 = vmatpush.bf16.msra.mxu0 0
      %3446 = vmatpush.bf16.msra.mxu0 0
      %3447 = vmatpush.bf16.msra.mxu0 0
      %3448 = vmatpush.bf16.msra.mxu0 %v3386
      %3449 = vmatpush.bf16.msra.mxu0 %v3384
      %3450 = vmatpush.bf16.msra.mxu0 %v3382
      %3451 = vmatpush.bf16.msra.mxu0 %v3380
      %3452 = vmatmul.bf16.gmra.mxu0 %v3396
      %v3453 = vpop.f32.mrf.mxu0
      %v3454 = vadd.f32 0.0, %v3453
      %v3455 = vpop.f32.mrf.mxu0
      %v3456 = vadd.f32 0.0, %v3455
      %3457 = vmatmul.bf16.gmra.mxu0 %v3399
      %v3458 = vpop.f32.mrf.mxu0
      %v3459 = vadd.f32 0.0, %v3458
      %v3460 = vpop.f32.mrf.mxu0
      %v3461 = vadd.f32 0.0, %v3460
      %3462 = vmatmul.bf16.gmra.mxu0 %v3402
      %v3463 = vpop.f32.mrf.mxu0
      %v3464 = vadd.f32 0.0, %v3463
      %v3465 = vpop.f32.mrf.mxu0
      %v3466 = vadd.f32 0.0, %v3465
      %3467 = vmatmul.bf16.gmra.mxu0 %v3405
      %v3468 = vpop.f32.mrf.mxu0
      %v3469 = vadd.f32 0.0, %v3468
      %v3470 = vpop.f32.mrf.mxu0
      %v3471 = vadd.f32 0.0, %v3470
      %3472 = vmatmul.bf16.gmra.mxu0 %v3408
      %v3473 = vpop.f32.mrf.mxu0
      %v3474 = vadd.f32 0.0, %v3473
      %v3475 = vpop.f32.mrf.mxu0
      %v3476 = vadd.f32 0.0, %v3475
      %3477 = vdwg.mxu0
      %v3478 = vadd.f32 %v3301, %v3420
      %v3479 = vadd.f32 %v3302, %v3454
      %v3480 = vadd.f32 %v3303, %v3422
      %v3481 = vadd.f32 %v3304, %v3456
      %v3482 = vadd.f32 %v3305, %v3425
      %v3483 = vadd.f32 %v3306, %v3459
      %v3484 = vadd.f32 %v3307, %v3427
      %v3485 = vadd.f32 %v3308, %v3461
      %v3486 = vadd.f32 %v3309, %v3430
      %v3487 = vadd.f32 %v3310, %v3464
      %v3488 = vadd.f32 %v3311, %v3432
      %v3489 = vadd.f32 %v3312, %v3466
      %v3490 = vadd.f32 %v3313, %v3435
      %v3491 = vadd.f32 %v3314, %v3469
      %v3492 = vadd.f32 %v3315, %v3437
      %v3493 = vadd.f32 %v3316, %v3471
      %v3494 = vadd.f32 %v3317, %v3440
      %v3495 = vadd.f32 %v3318, %v3474
      %v3496 = vadd.f32 %v3319, %v3442
      %v3497 = vadd.f32 %v3320, %v3476
      %3498 = vst [vmem:[#allocation2] sm:$0xff] %v3478
      %3499 = vst.msk [vmem:[#allocation2 + $0x8] sm:$0xff] %vm173, %v3479
      %3500 = vst [vmem:[#allocation2 + $0x10] sm:$0xff] %v3480
      %3501 = vst.msk [vmem:[#allocation2 + $0x18] sm:$0xff] %vm173, %v3481
      %3502 = vst [vmem:[#allocation2 + $0x20] sm:$0xff] %v3482
      %3503 = vst.msk [vmem:[#allocation2 + $0x28] sm:$0xff] %vm173, %v3483
      %3504 = vst [vmem:[#allocation2 + $0x30] sm:$0xff] %v3484
      %3505 = vst.msk [vmem:[#allocation2 + $0x38] sm:$0xff] %vm173, %v3485
      %3506 = vst [vmem:[#allocation2 + $0x40] sm:$0xff] %v3486
      %3507 = vst.msk [vmem:[#allocation2 + $0x48] sm:$0xff] %vm173, %v3487
      %3508 = vst [vmem:[#allocation2 + $0x50] sm:$0xff] %v3488
      %3509 = vst.msk [vmem:[#allocation2 + $0x58] sm:$0xff] %vm173, %v3489
      %3510 = vst [vmem:[#allocation2 + $0x60] sm:$0xff] %v3490
      %3511 = vst.msk [vmem:[#allocation2 + $0x68] sm:$0xff] %vm173, %v3491
      %3512 = vst [vmem:[#allocation2 + $0x70] sm:$0xff] %v3492
      %3513 = vst.msk [vmem:[#allocation2 + $0x78] sm:$0xff] %vm173, %v3493
      %3514 = vst [vmem:[#allocation2 + $0x80] sm:$0xff] %v3494
      %3515 = vst.msk [vmem:[#allocation2 + $0x88] sm:$0xff] %vm173, %v3495
      %3516 = vst [vmem:[#allocation2 + $0x90] sm:$0x1f] %v3496
      %3517 = vst.msk [vmem:[#allocation2 + $0x98] sm:$0x1f] %vm192, %v3497
      %v3518 = vld [vmem:[%s165 + $0xc] sm:$0xf]
      %v3519 = vld [vmem:[%s165 + $0x10] sm:$0xf]
      %v3520 = vld [vmem:[%s165 + $0x14] sm:$0xf]
      %v3521 = vld [vmem:[%s165 + $0x18] sm:$0xf]
      %v3522 = vld [vmem:[%s165 + $0x1c] sm:$0xf]
      %v3523 = vld [vmem:[%s165 + $0x20] sm:$0xf]
      %v3524 = vld [vmem:[%s165 + $0x24] sm:$0xf]
      %v3525 = vld [vmem:[%s165 + $0x28] sm:$0xf]
      %v3526 = vld [vmem:[%s165 + $0x2c] sm:$0xf]
      %v3527 = vld [vmem:[%s165 + $0x30] sm:$0x7]
      %v3528 = vld [vmem:[#allocation2] sm:$0xff]
      %v3529 = vld [vmem:[#allocation2 + $0x8] sm:$0xff]
      %v3530 = vld [vmem:[#allocation2 + $0x10] sm:$0xff]
      %v3531 = vld [vmem:[#allocation2 + $0x18] sm:$0xff]
      %v3532 = vld [vmem:[#allocation2 + $0x20] sm:$0xff]
      %v3533 = vld [vmem:[#allocation2 + $0x28] sm:$0xff]
      %v3534 = vld [vmem:[#allocation2 + $0x30] sm:$0xff]
      %v3535 = vld [vmem:[#allocation2 + $0x38] sm:$0xff]
      %v3536 = vld [vmem:[#allocation2 + $0x40] sm:$0xff]
      %v3537 = vld [vmem:[#allocation2 + $0x48] sm:$0xff]
      %v3538 = vld [vmem:[#allocation2 + $0x50] sm:$0xff]
      %v3539 = vld [vmem:[#allocation2 + $0x58] sm:$0xff]
      %v3540 = vld [vmem:[#allocation2 + $0x60] sm:$0xff]
      %v3541 = vld [vmem:[#allocation2 + $0x68] sm:$0xff]
      %v3542 = vld [vmem:[#allocation2 + $0x70] sm:$0xff]
      %v3543 = vld [vmem:[#allocation2 + $0x78] sm:$0xff]
      %v3544 = vld [vmem:[#allocation2 + $0x80] sm:$0xff]
      %v3545 = vld [vmem:[#allocation2 + $0x88] sm:$0xff]
      %v3546 = vld [vmem:[#allocation2 + $0x90] sm:$0x1f]
      %v3547 = vld [vmem:[#allocation2 + $0x98] sm:$0x1f]
      %s3548 = scalar_lea.vmem %s1, 832
      %v3549 = vld [vmem:[%s3548] sm:$0xff]
      %v3550 = vld [vmem:[%s3548 + $0x8] sm:$0xff]
      %v3551 = vld [vmem:[%s3548 + $0x10] sm:$0xff]
      %v3552 = vld [vmem:[%s3548 + $0x18] sm:$0xff]
      %v3553 = vld [vmem:[%s3548 + $0x20] sm:$0xff]
      %v3554 = vld [vmem:[%s3548 + $0x28] sm:$0xff]
      %v3555 = vld [vmem:[%s3548 + $0x30] sm:$0xff]
      %v3556 = vld [vmem:[%s3548 + $0x38] sm:$0xff]
      %v3567 = vunpack.c.l.b16 %v3518
      %v3568 = vunpack.c.l.b16 %v3519
      %v3569 = vunpack.c.l.b16 %v3520
      %v3570 = vunpack.c.l.b16 %v3521
      %v3571 = vunpack.c.l.b16 %v3522
      %v3572 = vunpack.c.l.b16 %v3523
      %v3573 = vunpack.c.l.b16 %v3524
      %v3574 = vunpack.c.l.b16 %v3525
      %v3575 = vunpack.c.l.b16 %v3526
      %v3576 = vunpack.c.l.b16 %v3527
      %v3577 = vpack.c.b16 %v3568, %v3567
      %v3578 = vpack.c.b16 %v3570, %v3569
      %v3579 = vpack.c.b16 %v3572, %v3571
      %v3580 = vpack.c.b16 %v3574, %v3573
      %v3581 = vpack.c.b16 %v3576, %v3575
      %v3583 = vshrl.u32 %v3577, 16
      %v3585 = vshll.u32 %v3577, 16
      %v3587 = vrot.slane %v3585, 1
      %v3588 = vor.u32 %v3583, %v3587
      %v3590 = vshll.u32 %v3578, 16
      %v3592 = vrot.slane %v3590, 1
      %v3593 = vsel %vm484, %v3588, %v3592
      %v3594 = vshrl.u32 %v3578, 16
      %v3596 = vor.u32 %v3594, %v3592
      %v3598 = vshll.u32 %v3579, 16
      %v3600 = vrot.slane %v3598, 1
      %v3601 = vsel %vm484, %v3596, %v3600
      %v3602 = vshrl.u32 %v3579, 16
      %v3604 = vor.u32 %v3602, %v3600
      %v3606 = vshll.u32 %v3580, 16
      %v3608 = vrot.slane %v3606, 1
      %v3609 = vsel %vm484, %v3604, %v3608
      %v3610 = vshrl.u32 %v3580, 16
      %v3612 = vor.u32 %v3610, %v3608
      %v3614 = vshll.u32 %v3581, 16
      %v3616 = vrot.slane %v3614, 1
      %v3617 = vsel %vm484, %v3612, %v3616
      %v3618 = vshrl.u32 %v3581, 16
      %v3620 = vor.u32 %v3618, %v3616
      %v3629 = vunpack.c.l.b16 %v3549
      %v3630 = vunpack.c.h.b16 %v3549
      %v3631 = vunpack.c.l.b16 %v3550
      %v3632 = vunpack.c.h.b16 %v3550
      %v3633 = vunpack.c.l.b16 %v3551
      %v3634 = vunpack.c.h.b16 %v3551
      %v3635 = vunpack.c.l.b16 %v3552
      %v3636 = vunpack.c.h.b16 %v3552
      %v3637 = vunpack.c.l.b16 %v3553
      %v3638 = vunpack.c.h.b16 %v3553
      %v3639 = vunpack.c.l.b16 %v3554
      %v3640 = vunpack.c.h.b16 %v3554
      %v3641 = vunpack.c.l.b16 %v3555
      %v3642 = vunpack.c.h.b16 %v3555
      %v3643 = vunpack.c.l.b16 %v3556
      %v3644 = vunpack.c.h.b16 %v3556
      %v3645 = vpack.c.b16 %v3631, %v3629
      %v3646 = vpack.c.b16 %v3632, %v3630
      %v3647 = vpack.c.b16 %v3635, %v3633
      %v3648 = vpack.c.b16 %v3636, %v3634
      %v3649 = vpack.c.b16 %v3639, %v3637
      %v3650 = vpack.c.b16 %v3640, %v3638
      %v3651 = vpack.c.b16 %v3643, %v3641
      %v3652 = vpack.c.b16 %v3644, %v3642
      %v3662 = vsel %vm173, %v3593, 0
      %v3665 = vsel %vm173, %v3601, 0
      %v3668 = vsel %vm173, %v3609, 0
      %v3671 = vsel %vm173, %v3617, 0
      %v3674 = vsel %vm173, %v3620, 0
      %3676 = vmatpush.bf16.msra.mxu0 0
      %3677 = vmatpush.bf16.msra.mxu0 0
      %3678 = vmatpush.bf16.msra.mxu0 0
      %3679 = vmatpush.bf16.msra.mxu0 0
      %3680 = vmatpush.bf16.msra.mxu0 %v3651
      %3681 = vmatpush.bf16.msra.mxu0 %v3649
      %3682 = vmatpush.bf16.msra.mxu0 %v3647
      %3683 = vmatpush.bf16.msra.mxu0 %v3645
      %3684 = vmatmul.bf16.gmra.mxu0 %v3662
      %v3685 = vpop.f32.mrf.mxu0
      %v3686 = vadd.f32 0.0, %v3685
      %v3687 = vpop.f32.mrf.mxu0
      %v3688 = vadd.f32 0.0, %v3687
      %3689 = vmatmul.bf16.gmra.mxu0 %v3665
      %v3690 = vpop.f32.mrf.mxu0
      %v3691 = vadd.f32 0.0, %v3690
      %v3692 = vpop.f32.mrf.mxu0
      %v3693 = vadd.f32 0.0, %v3692
      %3694 = vmatmul.bf16.gmra.mxu0 %v3668
      %v3695 = vpop.f32.mrf.mxu0
      %v3696 = vadd.f32 0.0, %v3695
      %v3697 = vpop.f32.mrf.mxu0
      %v3698 = vadd.f32 0.0, %v3697
      %3699 = vmatmul.bf16.gmra.mxu0 %v3671
      %v3700 = vpop.f32.mrf.mxu0
      %v3701 = vadd.f32 0.0, %v3700
      %v3702 = vpop.f32.mrf.mxu0
      %v3703 = vadd.f32 0.0, %v3702
      %3704 = vmatmul.bf16.gmra.mxu0 %v3674
      %v3705 = vpop.f32.mrf.mxu0
      %v3706 = vadd.f32 0.0, %v3705
      %v3707 = vpop.f32.mrf.mxu0
      %v3708 = vadd.f32 0.0, %v3707
      %3709 = vdwg.mxu0
      %3710 = vmatpush.bf16.msra.mxu0 0
      %3711 = vmatpush.bf16.msra.mxu0 0
      %3712 = vmatpush.bf16.msra.mxu0 0
      %3713 = vmatpush.bf16.msra.mxu0 0
      %3714 = vmatpush.bf16.msra.mxu0 %v3652
      %3715 = vmatpush.bf16.msra.mxu0 %v3650
      %3716 = vmatpush.bf16.msra.mxu0 %v3648
      %3717 = vmatpush.bf16.msra.mxu0 %v3646
      %3718 = vmatmul.bf16.gmra.mxu0 %v3662
      %v3719 = vpop.f32.mrf.mxu0
      %v3720 = vadd.f32 0.0, %v3719
      %v3721 = vpop.f32.mrf.mxu0
      %v3722 = vadd.f32 0.0, %v3721
      %3723 = vmatmul.bf16.gmra.mxu0 %v3665
      %v3724 = vpop.f32.mrf.mxu0
      %v3725 = vadd.f32 0.0, %v3724
      %v3726 = vpop.f32.mrf.mxu0
      %v3727 = vadd.f32 0.0, %v3726
      %3728 = vmatmul.bf16.gmra.mxu0 %v3668
      %v3729 = vpop.f32.mrf.mxu0
      %v3730 = vadd.f32 0.0, %v3729
      %v3731 = vpop.f32.mrf.mxu0
      %v3732 = vadd.f32 0.0, %v3731
      %3733 = vmatmul.bf16.gmra.mxu0 %v3671
      %v3734 = vpop.f32.mrf.mxu0
      %v3735 = vadd.f32 0.0, %v3734
      %v3736 = vpop.f32.mrf.mxu0
      %v3737 = vadd.f32 0.0, %v3736
      %3738 = vmatmul.bf16.gmra.mxu0 %v3674
      %v3739 = vpop.f32.mrf.mxu0
      %v3740 = vadd.f32 0.0, %v3739
      %v3741 = vpop.f32.mrf.mxu0
      %v3742 = vadd.f32 0.0, %v3741
      %3743 = vdwg.mxu0
      %v3744 = vadd.f32 %v3528, %v3686
      %v3745 = vadd.f32 %v3529, %v3720
      %v3746 = vadd.f32 %v3530, %v3688
      %v3747 = vadd.f32 %v3531, %v3722
      %v3748 = vadd.f32 %v3532, %v3691
      %v3749 = vadd.f32 %v3533, %v3725
      %v3750 = vadd.f32 %v3534, %v3693
      %v3751 = vadd.f32 %v3535, %v3727
      %v3752 = vadd.f32 %v3536, %v3696
      %v3753 = vadd.f32 %v3537, %v3730
      %v3754 = vadd.f32 %v3538, %v3698
      %v3755 = vadd.f32 %v3539, %v3732
      %v3756 = vadd.f32 %v3540, %v3701
      %v3757 = vadd.f32 %v3541, %v3735
      %v3758 = vadd.f32 %v3542, %v3703
      %v3759 = vadd.f32 %v3543, %v3737
      %v3760 = vadd.f32 %v3544, %v3706
      %v3761 = vadd.f32 %v3545, %v3740
      %v3762 = vadd.f32 %v3546, %v3708
      %v3763 = vadd.f32 %v3547, %v3742
      %3764 = vst [vmem:[#allocation2] sm:$0xff] %v3744
      %3765 = vst.msk [vmem:[#allocation2 + $0x8] sm:$0xff] %vm173, %v3745
      %3766 = vst [vmem:[#allocation2 + $0x10] sm:$0xff] %v3746
      %3767 = vst.msk [vmem:[#allocation2 + $0x18] sm:$0xff] %vm173, %v3747
      %3768 = vst [vmem:[#allocation2 + $0x20] sm:$0xff] %v3748
      %3769 = vst.msk [vmem:[#allocation2 + $0x28] sm:$0xff] %vm173, %v3749
      %3770 = vst [vmem:[#allocation2 + $0x30] sm:$0xff] %v3750
      %3771 = vst.msk [vmem:[#allocation2 + $0x38] sm:$0xff] %vm173, %v3751
      %3772 = vst [vmem:[#allocation2 + $0x40] sm:$0xff] %v3752
      %3773 = vst.msk [vmem:[#allocation2 + $0x48] sm:$0xff] %vm173, %v3753
      %3774 = vst [vmem:[#allocation2 + $0x50] sm:$0xff] %v3754
      %3775 = vst.msk [vmem:[#allocation2 + $0x58] sm:$0xff] %vm173, %v3755
      %3776 = vst [vmem:[#allocation2 + $0x60] sm:$0xff] %v3756
      %3777 = vst.msk [vmem:[#allocation2 + $0x68] sm:$0xff] %vm173, %v3757
      %3778 = vst [vmem:[#allocation2 + $0x70] sm:$0xff] %v3758
      %3779 = vst.msk [vmem:[#allocation2 + $0x78] sm:$0xff] %vm173, %v3759
      %3780 = vst [vmem:[#allocation2 + $0x80] sm:$0xff] %v3760
      %3781 = vst.msk [vmem:[#allocation2 + $0x88] sm:$0xff] %vm173, %v3761
      %3782 = vst [vmem:[#allocation2 + $0x90] sm:$0x1f] %v3762
      %3783 = vst.msk [vmem:[#allocation2 + $0x98] sm:$0x1f] %vm192, %v3763
      %v3784 = vld [vmem:[%s165 + $0xc] sm:$0xe]
      %v3785 = vld [vmem:[%s165 + $0x10] sm:$0xf]
      %v3786 = vld [vmem:[%s165 + $0x14] sm:$0xf]
      %v3787 = vld [vmem:[%s165 + $0x18] sm:$0xf]
      %v3788 = vld [vmem:[%s165 + $0x1c] sm:$0xf]
      %v3789 = vld [vmem:[%s165 + $0x20] sm:$0xf]
      %v3790 = vld [vmem:[%s165 + $0x24] sm:$0xf]
      %v3791 = vld [vmem:[%s165 + $0x28] sm:$0xf]
      %v3792 = vld [vmem:[%s165 + $0x2c] sm:$0xf]
      %v3793 = vld [vmem:[%s165 + $0x30] sm:$0xf]
      %v3794 = vld [vmem:[#allocation2] sm:$0xff]
      %v3795 = vld [vmem:[#allocation2 + $0x8] sm:$0xff]
      %v3796 = vld [vmem:[#allocation2 + $0x10] sm:$0xff]
      %v3797 = vld [vmem:[#allocation2 + $0x18] sm:$0xff]
      %v3798 = vld [vmem:[#allocation2 + $0x20] sm:$0xff]
      %v3799 = vld [vmem:[#allocation2 + $0x28] sm:$0xff]
      %v3800 = vld [vmem:[#allocation2 + $0x30] sm:$0xff]
      %v3801 = vld [vmem:[#allocation2 + $0x38] sm:$0xff]
      %v3802 = vld [vmem:[#allocation2 + $0x40] sm:$0xff]
      %v3803 = vld [vmem:[#allocation2 + $0x48] sm:$0xff]
      %v3804 = vld [vmem:[#allocation2 + $0x50] sm:$0xff]
      %v3805 = vld [vmem:[#allocation2 + $0x58] sm:$0xff]
      %v3806 = vld [vmem:[#allocation2 + $0x60] sm:$0xff]
      %v3807 = vld [vmem:[#allocation2 + $0x68] sm:$0xff]
      %v3808 = vld [vmem:[#allocation2 + $0x70] sm:$0xff]
      %v3809 = vld [vmem:[#allocation2 + $0x78] sm:$0xff]
      %v3810 = vld [vmem:[#allocation2 + $0x80] sm:$0xff]
      %v3811 = vld [vmem:[#allocation2 + $0x88] sm:$0xff]
      %v3812 = vld [vmem:[#allocation2 + $0x90] sm:$0x1f]
      %v3813 = vld [vmem:[#allocation2 + $0x98] sm:$0x1f]
      %s3814 = scalar_lea.vmem %s1, 896
      %v3815 = vld [vmem:[%s3814] sm:$0xff]
      %v3816 = vld [vmem:[%s3814 + $0x8] sm:$0xff]
      %v3817 = vld [vmem:[%s3814 + $0x10] sm:$0xff]
      %v3818 = vld [vmem:[%s3814 + $0x18] sm:$0xff]
      %v3819 = vld [vmem:[%s3814 + $0x20] sm:$0xff]
      %v3820 = vld [vmem:[%s3814 + $0x28] sm:$0xff]
      %v3821 = vld [vmem:[%s3814 + $0x30] sm:$0xff]
      %v3822 = vld [vmem:[%s3814 + $0x38] sm:$0xff]
      %v3833 = vunpack.c.l.b16 %v3784
      %v3834 = vunpack.c.l.b16 %v3785
      %v3835 = vunpack.c.l.b16 %v3786
      %v3836 = vunpack.c.l.b16 %v3787
      %v3837 = vunpack.c.l.b16 %v3788
      %v3838 = vunpack.c.l.b16 %v3789
      %v3839 = vunpack.c.l.b16 %v3790
      %v3840 = vunpack.c.l.b16 %v3791
      %v3841 = vunpack.c.l.b16 %v3792
      %v3842 = vunpack.c.l.b16 %v3793
      %v3843 = vpack.c.b16 %v3834, %v3833
      %v3844 = vpack.c.b16 %v3836, %v3835
      %v3845 = vpack.c.b16 %v3838, %v3837
      %v3846 = vpack.c.b16 %v3840, %v3839
      %v3847 = vpack.c.b16 %v3842, %v3841
      %v3848 = vrot.slane %v3843, 1
      %v3849 = vrot.slane %v3844, 1
      %v3850 = vsel %vm751, %v3848, %v3849
      %v3851 = vrot.slane %v3845, 1
      %v3852 = vsel %vm751, %v3849, %v3851
      %v3853 = vrot.slane %v3846, 1
      %v3854 = vsel %vm751, %v3851, %v3853
      %v3855 = vrot.slane %v3847, 1
      %v3856 = vsel %vm751, %v3853, %v3855
      %v3865 = vunpack.c.l.b16 %v3815
      %v3866 = vunpack.c.h.b16 %v3815
      %v3867 = vunpack.c.l.b16 %v3816
      %v3868 = vunpack.c.h.b16 %v3816
      %v3869 = vunpack.c.l.b16 %v3817
      %v3870 = vunpack.c.h.b16 %v3817
      %v3871 = vunpack.c.l.b16 %v3818
      %v3872 = vunpack.c.h.b16 %v3818
      %v3873 = vunpack.c.l.b16 %v3819
      %v3874 = vunpack.c.h.b16 %v3819
      %v3875 = vunpack.c.l.b16 %v3820
      %v3876 = vunpack.c.h.b16 %v3820
      %v3877 = vunpack.c.l.b16 %v3821
      %v3878 = vunpack.c.h.b16 %v3821
      %v3879 = vunpack.c.l.b16 %v3822
      %v3880 = vunpack.c.h.b16 %v3822
      %v3881 = vpack.c.b16 %v3867, %v3865
      %v3882 = vpack.c.b16 %v3868, %v3866
      %v3883 = vpack.c.b16 %v3871, %v3869
      %v3884 = vpack.c.b16 %v3872, %v3870
      %v3885 = vpack.c.b16 %v3875, %v3873
      %v3886 = vpack.c.b16 %v3876, %v3874
      %v3887 = vpack.c.b16 %v3879, %v3877
      %v3888 = vpack.c.b16 %v3880, %v3878
      %v3898 = vsel %vm173, %v3850, 0
      %v3901 = vsel %vm173, %v3852, 0
      %v3904 = vsel %vm173, %v3854, 0
      %v3907 = vsel %vm173, %v3856, 0
      %v3910 = vsel %vm173, %v3855, 0
      %3912 = vmatpush.bf16.msra.mxu0 0
      %3913 = vmatpush.bf16.msra.mxu0 0
      %3914 = vmatpush.bf16.msra.mxu0 0
      %3915 = vmatpush.bf16.msra.mxu0 0
      %3916 = vmatpush.bf16.msra.mxu0 %v3887
      %3917 = vmatpush.bf16.msra.mxu0 %v3885
      %3918 = vmatpush.bf16.msra.mxu0 %v3883
      %3919 = vmatpush.bf16.msra.mxu0 %v3881
      %3920 = vmatmul.bf16.gmra.mxu0 %v3898
      %v3921 = vpop.f32.mrf.mxu0
      %v3922 = vadd.f32 0.0, %v3921
      %v3923 = vpop.f32.mrf.mxu0
      %v3924 = vadd.f32 0.0, %v3923
      %3925 = vmatmul.bf16.gmra.mxu0 %v3901
      %v3926 = vpop.f32.mrf.mxu0
      %v3927 = vadd.f32 0.0, %v3926
      %v3928 = vpop.f32.mrf.mxu0
      %v3929 = vadd.f32 0.0, %v3928
      %3930 = vmatmul.bf16.gmra.mxu0 %v3904
      %v3931 = vpop.f32.mrf.mxu0
      %v3932 = vadd.f32 0.0, %v3931
      %v3933 = vpop.f32.mrf.mxu0
      %v3934 = vadd.f32 0.0, %v3933
      %3935 = vmatmul.bf16.gmra.mxu0 %v3907
      %v3936 = vpop.f32.mrf.mxu0
      %v3937 = vadd.f32 0.0, %v3936
      %v3938 = vpop.f32.mrf.mxu0
      %v3939 = vadd.f32 0.0, %v3938
      %3940 = vmatmul.bf16.gmra.mxu0 %v3910
      %v3941 = vpop.f32.mrf.mxu0
      %v3942 = vadd.f32 0.0, %v3941
      %v3943 = vpop.f32.mrf.mxu0
      %v3944 = vadd.f32 0.0, %v3943
      %3945 = vdwg.mxu0
      %3946 = vmatpush.bf16.msra.mxu0 0
      %3947 = vmatpush.bf16.msra.mxu0 0
      %3948 = vmatpush.bf16.msra.mxu0 0
      %3949 = vmatpush.bf16.msra.mxu0 0
      %3950 = vmatpush.bf16.msra.mxu0 %v3888
      %3951 = vmatpush.bf16.msra.mxu0 %v3886
      %3952 = vmatpush.bf16.msra.mxu0 %v3884
      %3953 = vmatpush.bf16.msra.mxu0 %v3882
      %3954 = vmatmul.bf16.gmra.mxu0 %v3898
      %v3955 = vpop.f32.mrf.mxu0
      %v3956 = vadd.f32 0.0, %v3955
      %v3957 = vpop.f32.mrf.mxu0
      %v3958 = vadd.f32 0.0, %v3957
      %3959 = vmatmul.bf16.gmra.mxu0 %v3901
      %v3960 = vpop.f32.mrf.mxu0
      %v3961 = vadd.f32 0.0, %v3960
      %v3962 = vpop.f32.mrf.mxu0
      %v3963 = vadd.f32 0.0, %v3962
      %3964 = vmatmul.bf16.gmra.mxu0 %v3904
      %v3965 = vpop.f32.mrf.mxu0
      %v3966 = vadd.f32 0.0, %v3965
      %v3967 = vpop.f32.mrf.mxu0
      %v3968 = vadd.f32 0.0, %v3967
      %3969 = vmatmul.bf16.gmra.mxu0 %v3907
      %v3970 = vpop.f32.mrf.mxu0
      %v3971 = vadd.f32 0.0, %v3970
      %v3972 = vpop.f32.mrf.mxu0
      %v3973 = vadd.f32 0.0, %v3972
      %3974 = vmatmul.bf16.gmra.mxu0 %v3910
      %v3975 = vpop.f32.mrf.mxu0
      %v3976 = vadd.f32 0.0, %v3975
      %v3977 = vpop.f32.mrf.mxu0
      %v3978 = vadd.f32 0.0, %v3977
      %3979 = vdwg.mxu0
      %v3980 = vadd.f32 %v3794, %v3922
      %v3981 = vadd.f32 %v3795, %v3956
      %v3982 = vadd.f32 %v3796, %v3924
      %v3983 = vadd.f32 %v3797, %v3958
      %v3984 = vadd.f32 %v3798, %v3927
      %v3985 = vadd.f32 %v3799, %v3961
      %v3986 = vadd.f32 %v3800, %v3929
      %v3987 = vadd.f32 %v3801, %v3963
      %v3988 = vadd.f32 %v3802, %v3932
      %v3989 = vadd.f32 %v3803, %v3966
      %v3990 = vadd.f32 %v3804, %v3934
      %v3991 = vadd.f32 %v3805, %v3968
      %v3992 = vadd.f32 %v3806, %v3937
      %v3993 = vadd.f32 %v3807, %v3971
      %v3994 = vadd.f32 %v3808, %v3939
      %v3995 = vadd.f32 %v3809, %v3973
      %v3996 = vadd.f32 %v3810, %v3942
      %v3997 = vadd.f32 %v3811, %v3976
      %v3998 = vadd.f32 %v3812, %v3944
      %v3999 = vadd.f32 %v3813, %v3978
      %4000 = vst [vmem:[#allocation2] sm:$0xff] %v3980
      %4001 = vst.msk [vmem:[#allocation2 + $0x8] sm:$0xff] %vm173, %v3981
      %4002 = vst [vmem:[#allocation2 + $0x10] sm:$0xff] %v3982
      %4003 = vst.msk [vmem:[#allocation2 + $0x18] sm:$0xff] %vm173, %v3983
      %4004 = vst [vmem:[#allocation2 + $0x20] sm:$0xff] %v3984
      %4005 = vst.msk [vmem:[#allocation2 + $0x28] sm:$0xff] %vm173, %v3985
      %4006 = vst [vmem:[#allocation2 + $0x30] sm:$0xff] %v3986
      %4007 = vst.msk [vmem:[#allocation2 + $0x38] sm:$0xff] %vm173, %v3987
      %4008 = vst [vmem:[#allocation2 + $0x40] sm:$0xff] %v3988
      %4009 = vst.msk [vmem:[#allocation2 + $0x48] sm:$0xff] %vm173, %v3989
      %4010 = vst [vmem:[#allocation2 + $0x50] sm:$0xff] %v3990
      %4011 = vst.msk [vmem:[#allocation2 + $0x58] sm:$0xff] %vm173, %v3991
      %4012 = vst [vmem:[#allocation2 + $0x60] sm:$0xff] %v3992
      %4013 = vst.msk [vmem:[#allocation2 + $0x68] sm:$0xff] %vm173, %v3993
      %4014 = vst [vmem:[#allocation2 + $0x70] sm:$0xff] %v3994
      %4015 = vst.msk [vmem:[#allocation2 + $0x78] sm:$0xff] %vm173, %v3995
      %4016 = vst [vmem:[#allocation2 + $0x80] sm:$0xff] %v3996
      %4017 = vst.msk [vmem:[#allocation2 + $0x88] sm:$0xff] %vm173, %v3997
      %4018 = vst [vmem:[#allocation2 + $0x90] sm:$0x1f] %v3998
      %4019 = vst.msk [vmem:[#allocation2 + $0x98] sm:$0x1f] %vm192, %v3999
      %v4020 = vld [vmem:[%s165 + $0x10] sm:$0xf]
      %v4021 = vld [vmem:[%s165 + $0x14] sm:$0xf]
      %v4022 = vld [vmem:[%s165 + $0x18] sm:$0xf]
      %v4023 = vld [vmem:[%s165 + $0x1c] sm:$0xf]
      %v4024 = vld [vmem:[%s165 + $0x20] sm:$0xf]
      %v4025 = vld [vmem:[%s165 + $0x24] sm:$0xf]
      %v4026 = vld [vmem:[%s165 + $0x28] sm:$0xf]
      %v4027 = vld [vmem:[%s165 + $0x2c] sm:$0xf]
      %v4028 = vld [vmem:[%s165 + $0x30] sm:$0xf]
      %v4029 = vld [vmem:[%s165 + $0x34] sm:$0x7]
      %v4030 = vld [vmem:[#allocation2] sm:$0xff]
      %v4031 = vld [vmem:[#allocation2 + $0x8] sm:$0xff]
      %v4032 = vld [vmem:[#allocation2 + $0x10] sm:$0xff]
      %v4033 = vld [vmem:[#allocation2 + $0x18] sm:$0xff]
      %v4034 = vld [vmem:[#allocation2 + $0x20] sm:$0xff]
      %v4035 = vld [vmem:[#allocation2 + $0x28] sm:$0xff]
      %v4036 = vld [vmem:[#allocation2 + $0x30] sm:$0xff]
      %v4037 = vld [vmem:[#allocation2 + $0x38] sm:$0xff]
      %v4038 = vld [vmem:[#allocation2 + $0x40] sm:$0xff]
      %v4039 = vld [vmem:[#allocation2 + $0x48] sm:$0xff]
      %v4040 = vld [vmem:[#allocation2 + $0x50] sm:$0xff]
      %v4041 = vld [vmem:[#allocation2 + $0x58] sm:$0xff]
      %v4042 = vld [vmem:[#allocation2 + $0x60] sm:$0xff]
      %v4043 = vld [vmem:[#allocation2 + $0x68] sm:$0xff]
      %v4044 = vld [vmem:[#allocation2 + $0x70] sm:$0xff]
      %v4045 = vld [vmem:[#allocation2 + $0x78] sm:$0xff]
      %v4046 = vld [vmem:[#allocation2 + $0x80] sm:$0xff]
      %v4047 = vld [vmem:[#allocation2 + $0x88] sm:$0xff]
      %v4048 = vld [vmem:[#allocation2 + $0x90] sm:$0x1f]
      %v4049 = vld [vmem:[#allocation2 + $0x98] sm:$0x1f]
      %s4050 = scalar_lea.vmem %s1, 960
      %v4051 = vld [vmem:[%s4050] sm:$0xff]
      %v4052 = vld [vmem:[%s4050 + $0x8] sm:$0xff]
      %v4053 = vld [vmem:[%s4050 + $0x10] sm:$0xff]
      %v4054 = vld [vmem:[%s4050 + $0x18] sm:$0xff]
      %v4055 = vld [vmem:[%s4050 + $0x20] sm:$0xff]
      %v4056 = vld [vmem:[%s4050 + $0x28] sm:$0xff]
      %v4057 = vld [vmem:[%s4050 + $0x30] sm:$0xff]
      %v4058 = vld [vmem:[%s4050 + $0x38] sm:$0xff]
      %v4069 = vunpack.c.l.b16 %v4020
      %v4070 = vunpack.c.l.b16 %v4021
      %v4071 = vunpack.c.l.b16 %v4022
      %v4072 = vunpack.c.l.b16 %v4023
      %v4073 = vunpack.c.l.b16 %v4024
      %v4074 = vunpack.c.l.b16 %v4025
      %v4075 = vunpack.c.l.b16 %v4026
      %v4076 = vunpack.c.l.b16 %v4027
      %v4077 = vunpack.c.l.b16 %v4028
      %v4078 = vunpack.c.l.b16 %v4029
      %v4079 = vpack.c.b16 %v4070, %v4069
      %v4080 = vpack.c.b16 %v4072, %v4071
      %v4081 = vpack.c.b16 %v4074, %v4073
      %v4082 = vpack.c.b16 %v4076, %v4075
      %v4083 = vpack.c.b16 %v4078, %v4077
      %v4085 = vshrl.u32 %v4079, 16
      %v4087 = vshll.u32 %v4079, 16
      %v4089 = vrot.slane %v4087, 1
      %v4090 = vor.u32 %v4085, %v4089
      %v4092 = vshll.u32 %v4080, 16
      %v4094 = vrot.slane %v4092, 1
      %v4095 = vsel %vm484, %v4090, %v4094
      %v4096 = vshrl.u32 %v4080, 16
      %v4098 = vor.u32 %v4096, %v4094
      %v4100 = vshll.u32 %v4081, 16
      %v4102 = vrot.slane %v4100, 1
      %v4103 = vsel %vm484, %v4098, %v4102
      %v4104 = vshrl.u32 %v4081, 16
      %v4106 = vor.u32 %v4104, %v4102
      %v4108 = vshll.u32 %v4082, 16
      %v4110 = vrot.slane %v4108, 1
      %v4111 = vsel %vm484, %v4106, %v4110
      %v4112 = vshrl.u32 %v4082, 16
      %v4114 = vor.u32 %v4112, %v4110
      %v4116 = vshll.u32 %v4083, 16
      %v4118 = vrot.slane %v4116, 1
      %v4119 = vsel %vm484, %v4114, %v4118
      %v4120 = vshrl.u32 %v4083, 16
      %v4122 = vor.u32 %v4120, %v4118
      %v4131 = vunpack.c.l.b16 %v4051
      %v4132 = vunpack.c.h.b16 %v4051
      %v4133 = vunpack.c.l.b16 %v4052
      %v4134 = vunpack.c.h.b16 %v4052
      %v4135 = vunpack.c.l.b16 %v4053
      %v4136 = vunpack.c.h.b16 %v4053
      %v4137 = vunpack.c.l.b16 %v4054
      %v4138 = vunpack.c.h.b16 %v4054
      %v4139 = vunpack.c.l.b16 %v4055
      %v4140 = vunpack.c.h.b16 %v4055
      %v4141 = vunpack.c.l.b16 %v4056
      %v4142 = vunpack.c.h.b16 %v4056
      %v4143 = vunpack.c.l.b16 %v4057
      %v4144 = vunpack.c.h.b16 %v4057
      %v4145 = vunpack.c.l.b16 %v4058
      %v4146 = vunpack.c.h.b16 %v4058
      %v4147 = vpack.c.b16 %v4133, %v4131
      %v4148 = vpack.c.b16 %v4134, %v4132
      %v4149 = vpack.c.b16 %v4137, %v4135
      %v4150 = vpack.c.b16 %v4138, %v4136
      %v4151 = vpack.c.b16 %v4141, %v4139
      %v4152 = vpack.c.b16 %v4142, %v4140
      %v4153 = vpack.c.b16 %v4145, %v4143
      %v4154 = vpack.c.b16 %v4146, %v4144
      %v4164 = vsel %vm173, %v4095, 0
      %v4167 = vsel %vm173, %v4103, 0
      %v4170 = vsel %vm173, %v4111, 0
      %v4173 = vsel %vm173, %v4119, 0
      %v4176 = vsel %vm173, %v4122, 0
      %4178 = vmatpush.bf16.msra.mxu0 0
      %4179 = vmatpush.bf16.msra.mxu0 0
      %4180 = vmatpush.bf16.msra.mxu0 0
      %4181 = vmatpush.bf16.msra.mxu0 0
      %4182 = vmatpush.bf16.msra.mxu0 %v4153
      %4183 = vmatpush.bf16.msra.mxu0 %v4151
      %4184 = vmatpush.bf16.msra.mxu0 %v4149
      %4185 = vmatpush.bf16.msra.mxu0 %v4147
      %4186 = vmatmul.bf16.gmra.mxu0 %v4164
      %v4187 = vpop.f32.mrf.mxu0
      %v4188 = vadd.f32 0.0, %v4187
      %v4189 = vpop.f32.mrf.mxu0
      %v4190 = vadd.f32 0.0, %v4189
      %4191 = vmatmul.bf16.gmra.mxu0 %v4167
      %v4192 = vpop.f32.mrf.mxu0
      %v4193 = vadd.f32 0.0, %v4192
      %v4194 = vpop.f32.mrf.mxu0
      %v4195 = vadd.f32 0.0, %v4194
      %4196 = vmatmul.bf16.gmra.mxu0 %v4170
      %v4197 = vpop.f32.mrf.mxu0
      %v4198 = vadd.f32 0.0, %v4197
      %v4199 = vpop.f32.mrf.mxu0
      %v4200 = vadd.f32 0.0, %v4199
      %4201 = vmatmul.bf16.gmra.mxu0 %v4173
      %v4202 = vpop.f32.mrf.mxu0
      %v4203 = vadd.f32 0.0, %v4202
      %v4204 = vpop.f32.mrf.mxu0
      %v4205 = vadd.f32 0.0, %v4204
      %4206 = vmatmul.bf16.gmra.mxu0 %v4176
      %v4207 = vpop.f32.mrf.mxu0
      %v4208 = vadd.f32 0.0, %v4207
      %v4209 = vpop.f32.mrf.mxu0
      %v4210 = vadd.f32 0.0, %v4209
      %4211 = vdwg.mxu0
      %4212 = vmatpush.bf16.msra.mxu0 0
      %4213 = vmatpush.bf16.msra.mxu0 0
      %4214 = vmatpush.bf16.msra.mxu0 0
      %4215 = vmatpush.bf16.msra.mxu0 0
      %4216 = vmatpush.bf16.msra.mxu0 %v4154
      %4217 = vmatpush.bf16.msra.mxu0 %v4152
      %4218 = vmatpush.bf16.msra.mxu0 %v4150
      %4219 = vmatpush.bf16.msra.mxu0 %v4148
      %4220 = vmatmul.bf16.gmra.mxu0 %v4164
      %v4221 = vpop.f32.mrf.mxu0
      %v4222 = vadd.f32 0.0, %v4221
      %v4223 = vpop.f32.mrf.mxu0
      %v4224 = vadd.f32 0.0, %v4223
      %4225 = vmatmul.bf16.gmra.mxu0 %v4167
      %v4226 = vpop.f32.mrf.mxu0
      %v4227 = vadd.f32 0.0, %v4226
      %v4228 = vpop.f32.mrf.mxu0
      %v4229 = vadd.f32 0.0, %v4228
      %4230 = vmatmul.bf16.gmra.mxu0 %v4170
      %v4231 = vpop.f32.mrf.mxu0
      %v4232 = vadd.f32 0.0, %v4231
      %v4233 = vpop.f32.mrf.mxu0
      %v4234 = vadd.f32 0.0, %v4233
      %4235 = vmatmul.bf16.gmra.mxu0 %v4173
      %v4236 = vpop.f32.mrf.mxu0
      %v4237 = vadd.f32 0.0, %v4236
      %v4238 = vpop.f32.mrf.mxu0
      %v4239 = vadd.f32 0.0, %v4238
      %4240 = vmatmul.bf16.gmra.mxu0 %v4176
      %v4241 = vpop.f32.mrf.mxu0
      %v4242 = vadd.f32 0.0, %v4241
      %v4243 = vpop.f32.mrf.mxu0
      %v4244 = vadd.f32 0.0, %v4243
      %4245 = vdwg.mxu0
      %v4246 = vadd.f32 %v4030, %v4188
      %v4247 = vadd.f32 %v4031, %v4222
      %v4248 = vadd.f32 %v4032, %v4190
      %v4249 = vadd.f32 %v4033, %v4224
      %v4250 = vadd.f32 %v4034, %v4193
      %v4251 = vadd.f32 %v4035, %v4227
      %v4252 = vadd.f32 %v4036, %v4195
      %v4253 = vadd.f32 %v4037, %v4229
      %v4254 = vadd.f32 %v4038, %v4198
      %v4255 = vadd.f32 %v4039, %v4232
      %v4256 = vadd.f32 %v4040, %v4200
      %v4257 = vadd.f32 %v4041, %v4234
      %v4258 = vadd.f32 %v4042, %v4203
      %v4259 = vadd.f32 %v4043, %v4237
      %v4260 = vadd.f32 %v4044, %v4205
      %v4261 = vadd.f32 %v4045, %v4239
      %v4262 = vadd.f32 %v4046, %v4208
      %v4263 = vadd.f32 %v4047, %v4242
      %v4264 = vadd.f32 %v4048, %v4210
      %v4265 = vadd.f32 %v4049, %v4244
      %4266 = vst [vmem:[#allocation2] sm:$0xff] %v4246
      %4267 = vst.msk [vmem:[#allocation2 + $0x8] sm:$0xff] %vm173, %v4247
      %4268 = vst [vmem:[#allocation2 + $0x10] sm:$0xff] %v4248
      %4269 = vst.msk [vmem:[#allocation2 + $0x18] sm:$0xff] %vm173, %v4249
      %4270 = vst [vmem:[#allocation2 + $0x20] sm:$0xff] %v4250
      %4271 = vst.msk [vmem:[#allocation2 + $0x28] sm:$0xff] %vm173, %v4251
      %4272 = vst [vmem:[#allocation2 + $0x30] sm:$0xff] %v4252
      %4273 = vst.msk [vmem:[#allocation2 + $0x38] sm:$0xff] %vm173, %v4253
      %4274 = vst [vmem:[#allocation2 + $0x40] sm:$0xff] %v4254
      %4275 = vst.msk [vmem:[#allocation2 + $0x48] sm:$0xff] %vm173, %v4255
      %4276 = vst [vmem:[#allocation2 + $0x50] sm:$0xff] %v4256
      %4277 = vst.msk [vmem:[#allocation2 + $0x58] sm:$0xff] %vm173, %v4257
      %4278 = vst [vmem:[#allocation2 + $0x60] sm:$0xff] %v4258
      %4279 = vst.msk [vmem:[#allocation2 + $0x68] sm:$0xff] %vm173, %v4259
      %4280 = vst [vmem:[#allocation2 + $0x70] sm:$0xff] %v4260
      %4281 = vst.msk [vmem:[#allocation2 + $0x78] sm:$0xff] %vm173, %v4261
      %4282 = vst [vmem:[#allocation2 + $0x80] sm:$0xff] %v4262
      %4283 = vst.msk [vmem:[#allocation2 + $0x88] sm:$0xff] %vm173, %v4263
      %4284 = vst [vmem:[#allocation2 + $0x90] sm:$0x1f] %v4264
      %4285 = vst.msk [vmem:[#allocation2 + $0x98] sm:$0x1f] %vm192, %v4265
      %v4286 = vld [vmem:[%s165 + $0x10] sm:$0xe]
      %v4287 = vld [vmem:[%s165 + $0x14] sm:$0xf]
      %v4288 = vld [vmem:[%s165 + $0x18] sm:$0xf]
      %v4289 = vld [vmem:[%s165 + $0x1c] sm:$0xf]
      %v4290 = vld [vmem:[%s165 + $0x20] sm:$0xf]
      %v4291 = vld [vmem:[%s165 + $0x24] sm:$0xf]
      %v4292 = vld [vmem:[%s165 + $0x28] sm:$0xf]
      %v4293 = vld [vmem:[%s165 + $0x2c] sm:$0xf]
      %v4294 = vld [vmem:[%s165 + $0x30] sm:$0xf]
      %v4295 = vld [vmem:[%s165 + $0x34] sm:$0xf]
      %v4296 = vld [vmem:[#allocation2] sm:$0xff]
      %v4297 = vld [vmem:[#allocation2 + $0x8] sm:$0xff]
      %v4298 = vld [vmem:[#allocation2 + $0x10] sm:$0xff]
      %v4299 = vld [vmem:[#allocation2 + $0x18] sm:$0xff]
      %v4300 = vld [vmem:[#allocation2 + $0x20] sm:$0xff]
      %v4301 = vld [vmem:[#allocation2 + $0x28] sm:$0xff]
      %v4302 = vld [vmem:[#allocation2 + $0x30] sm:$0xff]
      %v4303 = vld [vmem:[#allocation2 + $0x38] sm:$0xff]
      %v4304 = vld [vmem:[#allocation2 + $0x40] sm:$0xff]
      %v4305 = vld [vmem:[#allocation2 + $0x48] sm:$0xff]
      %v4306 = vld [vmem:[#allocation2 + $0x50] sm:$0xff]
      %v4307 = vld [vmem:[#allocation2 + $0x58] sm:$0xff]
      %v4308 = vld [vmem:[#allocation2 + $0x60] sm:$0xff]
      %v4309 = vld [vmem:[#allocation2 + $0x68] sm:$0xff]
      %v4310 = vld [vmem:[#allocation2 + $0x70] sm:$0xff]
      %v4311 = vld [vmem:[#allocation2 + $0x78] sm:$0xff]
      %v4312 = vld [vmem:[#allocation2 + $0x80] sm:$0xff]
      %v4313 = vld [vmem:[#allocation2 + $0x88] sm:$0xff]
      %v4314 = vld [vmem:[#allocation2 + $0x90] sm:$0x1f]
      %v4315 = vld [vmem:[#allocation2 + $0x98] sm:$0x1f]
      %s4316 = scalar_lea.vmem %s1, 1024
      %v4317 = vld [vmem:[%s4316] sm:$0xff]
      %v4318 = vld [vmem:[%s4316 + $0x8] sm:$0xff]
      %v4319 = vld [vmem:[%s4316 + $0x10] sm:$0xff]
      %v4320 = vld [vmem:[%s4316 + $0x18] sm:$0xff]
      %v4321 = vld [vmem:[%s4316 + $0x20] sm:$0xff]
      %v4322 = vld [vmem:[%s4316 + $0x28] sm:$0xff]
      %v4323 = vld [vmem:[%s4316 + $0x30] sm:$0xff]
      %v4324 = vld [vmem:[%s4316 + $0x38] sm:$0xff]
      %v4335 = vunpack.c.l.b16 %v4286
      %v4336 = vunpack.c.l.b16 %v4287
      %v4337 = vunpack.c.l.b16 %v4288
      %v4338 = vunpack.c.l.b16 %v4289
      %v4339 = vunpack.c.l.b16 %v4290
      %v4340 = vunpack.c.l.b16 %v4291
      %v4341 = vunpack.c.l.b16 %v4292
      %v4342 = vunpack.c.l.b16 %v4293
      %v4343 = vunpack.c.l.b16 %v4294
      %v4344 = vunpack.c.l.b16 %v4295
      %v4345 = vpack.c.b16 %v4336, %v4335
      %v4346 = vpack.c.b16 %v4338, %v4337
      %v4347 = vpack.c.b16 %v4340, %v4339
      %v4348 = vpack.c.b16 %v4342, %v4341
      %v4349 = vpack.c.b16 %v4344, %v4343
      %v4350 = vrot.slane %v4345, 1
      %v4351 = vrot.slane %v4346, 1
      %v4352 = vsel %vm751, %v4350, %v4351
      %v4353 = vrot.slane %v4347, 1
      %v4354 = vsel %vm751, %v4351, %v4353
      %v4355 = vrot.slane %v4348, 1
      %v4356 = vsel %vm751, %v4353, %v4355
      %v4357 = vrot.slane %v4349, 1
      %v4358 = vsel %vm751, %v4355, %v4357
      %v4367 = vunpack.c.l.b16 %v4317
      %v4368 = vunpack.c.h.b16 %v4317
      %v4369 = vunpack.c.l.b16 %v4318
      %v4370 = vunpack.c.h.b16 %v4318
      %v4371 = vunpack.c.l.b16 %v4319
      %v4372 = vunpack.c.h.b16 %v4319
      %v4373 = vunpack.c.l.b16 %v4320
      %v4374 = vunpack.c.h.b16 %v4320
      %v4375 = vunpack.c.l.b16 %v4321
      %v4376 = vunpack.c.h.b16 %v4321
      %v4377 = vunpack.c.l.b16 %v4322
      %v4378 = vunpack.c.h.b16 %v4322
      %v4379 = vunpack.c.l.b16 %v4323
      %v4380 = vunpack.c.h.b16 %v4323
      %v4381 = vunpack.c.l.b16 %v4324
      %v4382 = vunpack.c.h.b16 %v4324
      %v4383 = vpack.c.b16 %v4369, %v4367
      %v4384 = vpack.c.b16 %v4370, %v4368
      %v4385 = vpack.c.b16 %v4373, %v4371
      %v4386 = vpack.c.b16 %v4374, %v4372
      %v4387 = vpack.c.b16 %v4377, %v4375
      %v4388 = vpack.c.b16 %v4378, %v4376
      %v4389 = vpack.c.b16 %v4381, %v4379
      %v4390 = vpack.c.b16 %v4382, %v4380
      %v4400 = vsel %vm173, %v4352, 0
      %v4403 = vsel %vm173, %v4354, 0
      %v4406 = vsel %vm173, %v4356, 0
      %v4409 = vsel %vm173, %v4358, 0
      %v4412 = vsel %vm173, %v4357, 0
      %4414 = vmatpush.bf16.msra.mxu0 0
      %4415 = vmatpush.bf16.msra.mxu0 0
      %4416 = vmatpush.bf16.msra.mxu0 0
      %4417 = vmatpush.bf16.msra.mxu0 0
      %4418 = vmatpush.bf16.msra.mxu0 %v4389
      %4419 = vmatpush.bf16.msra.mxu0 %v4387
      %4420 = vmatpush.bf16.msra.mxu0 %v4385
      %4421 = vmatpush.bf16.msra.mxu0 %v4383
      %4422 = vmatmul.bf16.gmra.mxu0 %v4400
      %v4423 = vpop.f32.mrf.mxu0
      %v4424 = vadd.f32 0.0, %v4423
      %v4425 = vpop.f32.mrf.mxu0
      %v4426 = vadd.f32 0.0, %v4425
      %4427 = vmatmul.bf16.gmra.mxu0 %v4403
      %v4428 = vpop.f32.mrf.mxu0
      %v4429 = vadd.f32 0.0, %v4428
      %v4430 = vpop.f32.mrf.mxu0
      %v4431 = vadd.f32 0.0, %v4430
      %4432 = vmatmul.bf16.gmra.mxu0 %v4406
      %v4433 = vpop.f32.mrf.mxu0
      %v4434 = vadd.f32 0.0, %v4433
      %v4435 = vpop.f32.mrf.mxu0
      %v4436 = vadd.f32 0.0, %v4435
      %4437 = vmatmul.bf16.gmra.mxu0 %v4409
      %v4438 = vpop.f32.mrf.mxu0
      %v4439 = vadd.f32 0.0, %v4438
      %v4440 = vpop.f32.mrf.mxu0
      %v4441 = vadd.f32 0.0, %v4440
      %4442 = vmatmul.bf16.gmra.mxu0 %v4412
      %v4443 = vpop.f32.mrf.mxu0
      %v4444 = vadd.f32 0.0, %v4443
      %v4445 = vpop.f32.mrf.mxu0
      %v4446 = vadd.f32 0.0, %v4445
      %4447 = vdwg.mxu0
      %4448 = vmatpush.bf16.msra.mxu0 0
      %4449 = vmatpush.bf16.msra.mxu0 0
      %4450 = vmatpush.bf16.msra.mxu0 0
      %4451 = vmatpush.bf16.msra.mxu0 0
      %4452 = vmatpush.bf16.msra.mxu0 %v4390
      %4453 = vmatpush.bf16.msra.mxu0 %v4388
      %4454 = vmatpush.bf16.msra.mxu0 %v4386
      %4455 = vmatpush.bf16.msra.mxu0 %v4384
      %4456 = vmatmul.bf16.gmra.mxu0 %v4400
      %v4457 = vpop.f32.mrf.mxu0
      %v4458 = vadd.f32 0.0, %v4457
      %v4459 = vpop.f32.mrf.mxu0
      %v4460 = vadd.f32 0.0, %v4459
      %4461 = vmatmul.bf16.gmra.mxu0 %v4403
      %v4462 = vpop.f32.mrf.mxu0
      %v4463 = vadd.f32 0.0, %v4462
      %v4464 = vpop.f32.mrf.mxu0
      %v4465 = vadd.f32 0.0, %v4464
      %4466 = vmatmul.bf16.gmra.mxu0 %v4406
      %v4467 = vpop.f32.mrf.mxu0
      %v4468 = vadd.f32 0.0, %v4467
      %v4469 = vpop.f32.mrf.mxu0
      %v4470 = vadd.f32 0.0, %v4469
      %4471 = vmatmul.bf16.gmra.mxu0 %v4409
      %v4472 = vpop.f32.mrf.mxu0
      %v4473 = vadd.f32 0.0, %v4472
      %v4474 = vpop.f32.mrf.mxu0
      %v4475 = vadd.f32 0.0, %v4474
      %4476 = vmatmul.bf16.gmra.mxu0 %v4412
      %v4477 = vpop.f32.mrf.mxu0
      %v4478 = vadd.f32 0.0, %v4477
      %v4479 = vpop.f32.mrf.mxu0
      %v4480 = vadd.f32 0.0, %v4479
      %4481 = vdwg.mxu0
      %v4482 = vadd.f32 %v4296, %v4424
      %v4483 = vadd.f32 %v4297, %v4458
      %v4484 = vadd.f32 %v4298, %v4426
      %v4485 = vadd.f32 %v4299, %v4460
      %v4486 = vadd.f32 %v4300, %v4429
      %v4487 = vadd.f32 %v4301, %v4463
      %v4488 = vadd.f32 %v4302, %v4431
      %v4489 = vadd.f32 %v4303, %v4465
      %v4490 = vadd.f32 %v4304, %v4434
      %v4491 = vadd.f32 %v4305, %v4468
      %v4492 = vadd.f32 %v4306, %v4436
      %v4493 = vadd.f32 %v4307, %v4470
      %v4494 = vadd.f32 %v4308, %v4439
      %v4495 = vadd.f32 %v4309, %v4473
      %v4496 = vadd.f32 %v4310, %v4441
      %v4497 = vadd.f32 %v4311, %v4475
      %v4498 = vadd.f32 %v4312, %v4444
      %v4499 = vadd.f32 %v4313, %v4478
      %v4500 = vadd.f32 %v4314, %v4446
      %v4501 = vadd.f32 %v4315, %v4480
      %4502 = vst [vmem:[#allocation2] sm:$0xff] %v4482
      %4503 = vst.msk [vmem:[#allocation2 + $0x8] sm:$0xff] %vm173, %v4483
      %4504 = vst [vmem:[#allocation2 + $0x10] sm:$0xff] %v4484
      %4505 = vst.msk [vmem:[#allocation2 + $0x18] sm:$0xff] %vm173, %v4485
      %4506 = vst [vmem:[#allocation2 + $0x20] sm:$0xff] %v4486
      %4507 = vst.msk [vmem:[#allocation2 + $0x28] sm:$0xff] %vm173, %v4487
      %4508 = vst [vmem:[#allocation2 + $0x30] sm:$0xff] %v4488
      %4509 = vst.msk [vmem:[#allocation2 + $0x38] sm:$0xff] %vm173, %v4489
      %4510 = vst [vmem:[#allocation2 + $0x40] sm:$0xff] %v4490
      %4511 = vst.msk [vmem:[#allocation2 + $0x48] sm:$0xff] %vm173, %v4491
      %4512 = vst [vmem:[#allocation2 + $0x50] sm:$0xff] %v4492
      %4513 = vst.msk [vmem:[#allocation2 + $0x58] sm:$0xff] %vm173, %v4493
      %4514 = vst [vmem:[#allocation2 + $0x60] sm:$0xff] %v4494
      %4515 = vst.msk [vmem:[#allocation2 + $0x68] sm:$0xff] %vm173, %v4495
      %4516 = vst [vmem:[#allocation2 + $0x70] sm:$0xff] %v4496
      %4517 = vst.msk [vmem:[#allocation2 + $0x78] sm:$0xff] %vm173, %v4497
      %4518 = vst [vmem:[#allocation2 + $0x80] sm:$0xff] %v4498
      %4519 = vst.msk [vmem:[#allocation2 + $0x88] sm:$0xff] %vm173, %v4499
      %4520 = vst [vmem:[#allocation2 + $0x90] sm:$0x1f] %v4500
      %4521 = vst.msk [vmem:[#allocation2 + $0x98] sm:$0x1f] %vm192, %v4501
      %v4522 = vld [vmem:[%s165 + $0x10] sm:$0xe]
      %v4523 = vld [vmem:[%s165 + $0x14] sm:$0xf]
      %v4524 = vld [vmem:[%s165 + $0x18] sm:$0xf]
      %v4525 = vld [vmem:[%s165 + $0x1c] sm:$0xf]
      %v4526 = vld [vmem:[%s165 + $0x20] sm:$0xf]
      %v4527 = vld [vmem:[%s165 + $0x24] sm:$0xf]
      %v4528 = vld [vmem:[%s165 + $0x28] sm:$0xf]
      %v4529 = vld [vmem:[%s165 + $0x2c] sm:$0xf]
      %v4530 = vld [vmem:[%s165 + $0x30] sm:$0xf]
      %v4531 = vld [vmem:[%s165 + $0x34] sm:$0xf]
      %v4532 = vld [vmem:[#allocation2] sm:$0xff]
      %v4533 = vld [vmem:[#allocation2 + $0x8] sm:$0xff]
      %v4534 = vld [vmem:[#allocation2 + $0x10] sm:$0xff]
      %v4535 = vld [vmem:[#allocation2 + $0x18] sm:$0xff]
      %v4536 = vld [vmem:[#allocation2 + $0x20] sm:$0xff]
      %v4537 = vld [vmem:[#allocation2 + $0x28] sm:$0xff]
      %v4538 = vld [vmem:[#allocation2 + $0x30] sm:$0xff]
      %v4539 = vld [vmem:[#allocation2 + $0x38] sm:$0xff]
      %v4540 = vld [vmem:[#allocation2 + $0x40] sm:$0xff]
      %v4541 = vld [vmem:[#allocation2 + $0x48] sm:$0xff]
      %v4542 = vld [vmem:[#allocation2 + $0x50] sm:$0xff]
      %v4543 = vld [vmem:[#allocation2 + $0x58] sm:$0xff]
      %v4544 = vld [vmem:[#allocation2 + $0x60] sm:$0xff]
      %v4545 = vld [vmem:[#allocation2 + $0x68] sm:$0xff]
      %v4546 = vld [vmem:[#allocation2 + $0x70] sm:$0xff]
      %v4547 = vld [vmem:[#allocation2 + $0x78] sm:$0xff]
      %v4548 = vld [vmem:[#allocation2 + $0x80] sm:$0xff]
      %v4549 = vld [vmem:[#allocation2 + $0x88] sm:$0xff]
      %v4550 = vld [vmem:[#allocation2 + $0x90] sm:$0x1f]
      %v4551 = vld [vmem:[#allocation2 + $0x98] sm:$0x1f]
      %s4552 = scalar_lea.vmem %s1, 1088
      %v4553 = vld [vmem:[%s4552] sm:$0xff]
      %v4554 = vld [vmem:[%s4552 + $0x8] sm:$0xff]
      %v4555 = vld [vmem:[%s4552 + $0x10] sm:$0xff]
      %v4556 = vld [vmem:[%s4552 + $0x18] sm:$0xff]
      %v4557 = vld [vmem:[%s4552 + $0x20] sm:$0xff]
      %v4558 = vld [vmem:[%s4552 + $0x28] sm:$0xff]
      %v4559 = vld [vmem:[%s4552 + $0x30] sm:$0xff]
      %v4560 = vld [vmem:[%s4552 + $0x38] sm:$0xff]
      %v4571 = vunpack.c.l.b16 %v4522
      %v4572 = vunpack.c.l.b16 %v4523
      %v4573 = vunpack.c.l.b16 %v4524
      %v4574 = vunpack.c.l.b16 %v4525
      %v4575 = vunpack.c.l.b16 %v4526
      %v4576 = vunpack.c.l.b16 %v4527
      %v4577 = vunpack.c.l.b16 %v4528
      %v4578 = vunpack.c.l.b16 %v4529
      %v4579 = vunpack.c.l.b16 %v4530
      %v4580 = vunpack.c.l.b16 %v4531
      %v4581 = vpack.c.b16 %v4572, %v4571
      %v4582 = vpack.c.b16 %v4574, %v4573
      %v4583 = vpack.c.b16 %v4576, %v4575
      %v4584 = vpack.c.b16 %v4578, %v4577
      %v4585 = vpack.c.b16 %v4580, %v4579
      %v4587 = vshrl.u32 %v4581, 16
      %v4589 = vrot.slane %v4587, 1
      %v4590 = vshll.u32 %v4581, 16
      %v4592 = vrot.slane %v4590, 2
      %v4593 = vor.u32 %v4589, %v4592
      %v4595 = vshrl.u32 %v4582, 16
      %v4597 = vrot.slane %v4595, 1
      %v4598 = vshll.u32 %v4582, 16
      %v4600 = vrot.slane %v4598, 2
      %v4601 = vor.u32 %v4597, %v4600
      %v4602 = vsel %vm988, %v4593, %v4601
      %v4604 = vshrl.u32 %v4583, 16
      %v4606 = vrot.slane %v4604, 1
      %v4607 = vshll.u32 %v4583, 16
      %v4609 = vrot.slane %v4607, 2
      %v4610 = vor.u32 %v4606, %v4609
      %v4611 = vsel %vm988, %v4601, %v4610
      %v4613 = vshrl.u32 %v4584, 16
      %v4615 = vrot.slane %v4613, 1
      %v4616 = vshll.u32 %v4584, 16
      %v4618 = vrot.slane %v4616, 2
      %v4619 = vor.u32 %v4615, %v4618
      %v4620 = vsel %vm988, %v4610, %v4619
      %v4622 = vshrl.u32 %v4585, 16
      %v4624 = vrot.slane %v4622, 1
      %v4625 = vshll.u32 %v4585, 16
      %v4627 = vrot.slane %v4625, 2
      %v4628 = vor.u32 %v4624, %v4627
      %v4629 = vsel %vm988, %v4619, %v4628
      %v4638 = vunpack.c.l.b16 %v4553
      %v4639 = vunpack.c.h.b16 %v4553
      %v4640 = vunpack.c.l.b16 %v4554
      %v4641 = vunpack.c.h.b16 %v4554
      %v4642 = vunpack.c.l.b16 %v4555
      %v4643 = vunpack.c.h.b16 %v4555
      %v4644 = vunpack.c.l.b16 %v4556
      %v4645 = vunpack.c.h.b16 %v4556
      %v4646 = vunpack.c.l.b16 %v4557
      %v4647 = vunpack.c.h.b16 %v4557
      %v4648 = vunpack.c.l.b16 %v4558
      %v4649 = vunpack.c.h.b16 %v4558
      %v4650 = vunpack.c.l.b16 %v4559
      %v4651 = vunpack.c.h.b16 %v4559
      %v4652 = vunpack.c.l.b16 %v4560
      %v4653 = vunpack.c.h.b16 %v4560
      %v4654 = vpack.c.b16 %v4640, %v4638
      %v4655 = vpack.c.b16 %v4641, %v4639
      %v4656 = vpack.c.b16 %v4644, %v4642
      %v4657 = vpack.c.b16 %v4645, %v4643
      %v4658 = vpack.c.b16 %v4648, %v4646
      %v4659 = vpack.c.b16 %v4649, %v4647
      %v4660 = vpack.c.b16 %v4652, %v4650
      %v4661 = vpack.c.b16 %v4653, %v4651
      %v4671 = vsel %vm173, %v4602, 0
      %v4674 = vsel %vm173, %v4611, 0
      %v4677 = vsel %vm173, %v4620, 0
      %v4680 = vsel %vm173, %v4629, 0
      %v4683 = vsel %vm173, %v4628, 0
      %4685 = vmatpush.bf16.msra.mxu0 0
      %4686 = vmatpush.bf16.msra.mxu0 0
      %4687 = vmatpush.bf16.msra.mxu0 0
      %4688 = vmatpush.bf16.msra.mxu0 0
      %4689 = vmatpush.bf16.msra.mxu0 %v4660
      %4690 = vmatpush.bf16.msra.mxu0 %v4658
      %4691 = vmatpush.bf16.msra.mxu0 %v4656
      %4692 = vmatpush.bf16.msra.mxu0 %v4654
      %4693 = vmatmul.bf16.gmra.mxu0 %v4671
      %v4694 = vpop.f32.mrf.mxu0
      %v4695 = vadd.f32 0.0, %v4694
      %v4696 = vpop.f32.mrf.mxu0
      %v4697 = vadd.f32 0.0, %v4696
      %4698 = vmatmul.bf16.gmra.mxu0 %v4674
      %v4699 = vpop.f32.mrf.mxu0
      %v4700 = vadd.f32 0.0, %v4699
      %v4701 = vpop.f32.mrf.mxu0
      %v4702 = vadd.f32 0.0, %v4701
      %4703 = vmatmul.bf16.gmra.mxu0 %v4677
      %v4704 = vpop.f32.mrf.mxu0
      %v4705 = vadd.f32 0.0, %v4704
      %v4706 = vpop.f32.mrf.mxu0
      %v4707 = vadd.f32 0.0, %v4706
      %4708 = vmatmul.bf16.gmra.mxu0 %v4680
      %v4709 = vpop.f32.mrf.mxu0
      %v4710 = vadd.f32 0.0, %v4709
      %v4711 = vpop.f32.mrf.mxu0
      %v4712 = vadd.f32 0.0, %v4711
      %4713 = vmatmul.bf16.gmra.mxu0 %v4683
      %v4714 = vpop.f32.mrf.mxu0
      %v4715 = vadd.f32 0.0, %v4714
      %v4716 = vpop.f32.mrf.mxu0
      %v4717 = vadd.f32 0.0, %v4716
      %4718 = vdwg.mxu0
      %4719 = vmatpush.bf16.msra.mxu0 0
      %4720 = vmatpush.bf16.msra.mxu0 0
      %4721 = vmatpush.bf16.msra.mxu0 0
      %4722 = vmatpush.bf16.msra.mxu0 0
      %4723 = vmatpush.bf16.msra.mxu0 %v4661
      %4724 = vmatpush.bf16.msra.mxu0 %v4659
      %4725 = vmatpush.bf16.msra.mxu0 %v4657
      %4726 = vmatpush.bf16.msra.mxu0 %v4655
      %4727 = vmatmul.bf16.gmra.mxu0 %v4671
      %v4728 = vpop.f32.mrf.mxu0
      %v4729 = vadd.f32 0.0, %v4728
      %v4730 = vpop.f32.mrf.mxu0
      %v4731 = vadd.f32 0.0, %v4730
      %4732 = vmatmul.bf16.gmra.mxu0 %v4674
      %v4733 = vpop.f32.mrf.mxu0
      %v4734 = vadd.f32 0.0, %v4733
      %v4735 = vpop.f32.mrf.mxu0
      %v4736 = vadd.f32 0.0, %v4735
      %4737 = vmatmul.bf16.gmra.mxu0 %v4677
      %v4738 = vpop.f32.mrf.mxu0
      %v4739 = vadd.f32 0.0, %v4738
      %v4740 = vpop.f32.mrf.mxu0
      %v4741 = vadd.f32 0.0, %v4740
      %4742 = vmatmul.bf16.gmra.mxu0 %v4680
      %v4743 = vpop.f32.mrf.mxu0
      %v4744 = vadd.f32 0.0, %v4743
      %v4745 = vpop.f32.mrf.mxu0
      %v4746 = vadd.f32 0.0, %v4745
      %4747 = vmatmul.bf16.gmra.mxu0 %v4683
      %v4748 = vpop.f32.mrf.mxu0
      %v4749 = vadd.f32 0.0, %v4748
      %v4750 = vpop.f32.mrf.mxu0
      %v4751 = vadd.f32 0.0, %v4750
      %4752 = vdwg.mxu0
      %v4753 = vadd.f32 %v4532, %v4695
      %v4754 = vadd.f32 %v4533, %v4729
      %v4755 = vadd.f32 %v4534, %v4697
      %v4756 = vadd.f32 %v4535, %v4731
      %v4757 = vadd.f32 %v4536, %v4700
      %v4758 = vadd.f32 %v4537, %v4734
      %v4759 = vadd.f32 %v4538, %v4702
      %v4760 = vadd.f32 %v4539, %v4736
      %v4761 = vadd.f32 %v4540, %v4705
      %v4762 = vadd.f32 %v4541, %v4739
      %v4763 = vadd.f32 %v4542, %v4707
      %v4764 = vadd.f32 %v4543, %v4741
      %v4765 = vadd.f32 %v4544, %v4710
      %v4766 = vadd.f32 %v4545, %v4744
      %v4767 = vadd.f32 %v4546, %v4712
      %v4768 = vadd.f32 %v4547, %v4746
      %v4769 = vadd.f32 %v4548, %v4715
      %v4770 = vadd.f32 %v4549, %v4749
      %v4771 = vadd.f32 %v4550, %v4717
      %v4772 = vadd.f32 %v4551, %v4751
      %4773 = vst [vmem:[#allocation2] sm:$0xff] %v4753
      %4774 = vst.msk [vmem:[#allocation2 + $0x8] sm:$0xff] %vm173, %v4754
      %4775 = vst [vmem:[#allocation2 + $0x10] sm:$0xff] %v4755
      %4776 = vst.msk [vmem:[#allocation2 + $0x18] sm:$0xff] %vm173, %v4756
      %4777 = vst [vmem:[#allocation2 + $0x20] sm:$0xff] %v4757
      %4778 = vst.msk [vmem:[#allocation2 + $0x28] sm:$0xff] %vm173, %v4758
      %4779 = vst [vmem:[#allocation2 + $0x30] sm:$0xff] %v4759
      %4780 = vst.msk [vmem:[#allocation2 + $0x38] sm:$0xff] %vm173, %v4760
      %4781 = vst [vmem:[#allocation2 + $0x40] sm:$0xff] %v4761
      %4782 = vst.msk [vmem:[#allocation2 + $0x48] sm:$0xff] %vm173, %v4762
      %4783 = vst [vmem:[#allocation2 + $0x50] sm:$0xff] %v4763
      %4784 = vst.msk [vmem:[#allocation2 + $0x58] sm:$0xff] %vm173, %v4764
      %4785 = vst [vmem:[#allocation2 + $0x60] sm:$0xff] %v4765
      %4786 = vst.msk [vmem:[#allocation2 + $0x68] sm:$0xff] %vm173, %v4766
      %4787 = vst [vmem:[#allocation2 + $0x70] sm:$0xff] %v4767
      %4788 = vst.msk [vmem:[#allocation2 + $0x78] sm:$0xff] %vm173, %v4768
      %4789 = vst [vmem:[#allocation2 + $0x80] sm:$0xff] %v4769
      %4790 = vst.msk [vmem:[#allocation2 + $0x88] sm:$0xff] %vm173, %v4770
      %4791 = vst [vmem:[#allocation2 + $0x90] sm:$0x1f] %v4771
      %4792 = vst.msk [vmem:[#allocation2 + $0x98] sm:$0x1f] %vm192, %v4772
      %v4793 = vld [vmem:[%s165 + $0x10] sm:$0xc]
      %v4794 = vld [vmem:[%s165 + $0x14] sm:$0xf]
      %v4795 = vld [vmem:[%s165 + $0x18] sm:$0xf]
      %v4796 = vld [vmem:[%s165 + $0x1c] sm:$0xf]
      %v4797 = vld [vmem:[%s165 + $0x20] sm:$0xf]
      %v4798 = vld [vmem:[%s165 + $0x24] sm:$0xf]
      %v4799 = vld [vmem:[%s165 + $0x28] sm:$0xf]
      %v4800 = vld [vmem:[%s165 + $0x2c] sm:$0xf]
      %v4801 = vld [vmem:[%s165 + $0x30] sm:$0xf]
      %v4802 = vld [vmem:[%s165 + $0x34] sm:$0xf]
      %v4803 = vld [vmem:[%s165 + $0x38] sm:$0x1]
      %v4804 = vld [vmem:[#allocation2] sm:$0xff]
      %v4805 = vld [vmem:[#allocation2 + $0x8] sm:$0xff]
      %v4806 = vld [vmem:[#allocation2 + $0x10] sm:$0xff]
      %v4807 = vld [vmem:[#allocation2 + $0x18] sm:$0xff]
      %v4808 = vld [vmem:[#allocation2 + $0x20] sm:$0xff]
      %v4809 = vld [vmem:[#allocation2 + $0x28] sm:$0xff]
      %v4810 = vld [vmem:[#allocation2 + $0x30] sm:$0xff]
      %v4811 = vld [vmem:[#allocation2 + $0x38] sm:$0xff]
      %v4812 = vld [vmem:[#allocation2 + $0x40] sm:$0xff]
      %v4813 = vld [vmem:[#allocation2 + $0x48] sm:$0xff]
      %v4814 = vld [vmem:[#allocation2 + $0x50] sm:$0xff]
      %v4815 = vld [vmem:[#allocation2 + $0x58] sm:$0xff]
      %v4816 = vld [vmem:[#allocation2 + $0x60] sm:$0xff]
      %v4817 = vld [vmem:[#allocation2 + $0x68] sm:$0xff]
      %v4818 = vld [vmem:[#allocation2 + $0x70] sm:$0xff]
      %v4819 = vld [vmem:[#allocation2 + $0x78] sm:$0xff]
      %v4820 = vld [vmem:[#allocation2 + $0x80] sm:$0xff]
      %v4821 = vld [vmem:[#allocation2 + $0x88] sm:$0xff]
      %v4822 = vld [vmem:[#allocation2 + $0x90] sm:$0x1f]
      %v4823 = vld [vmem:[#allocation2 + $0x98] sm:$0x1f]
      %s4824 = scalar_lea.vmem %s1, 1152
      %v4825 = vld [vmem:[%s4824] sm:$0xff]
      %v4826 = vld [vmem:[%s4824 + $0x8] sm:$0xff]
      %v4827 = vld [vmem:[%s4824 + $0x10] sm:$0xff]
      %v4828 = vld [vmem:[%s4824 + $0x18] sm:$0xff]
      %v4829 = vld [vmem:[%s4824 + $0x20] sm:$0xff]
      %v4830 = vld [vmem:[%s4824 + $0x28] sm:$0xff]
      %v4831 = vld [vmem:[%s4824 + $0x30] sm:$0xff]
      %v4832 = vld [vmem:[%s4824 + $0x38] sm:$0xff]
      %v4844 = vunpack.c.l.b16 %v4793
      %v4845 = vunpack.c.l.b16 %v4794
      %v4846 = vunpack.c.l.b16 %v4795
      %v4847 = vunpack.c.l.b16 %v4796
      %v4848 = vunpack.c.l.b16 %v4797
      %v4849 = vunpack.c.l.b16 %v4798
      %v4850 = vunpack.c.l.b16 %v4799
      %v4851 = vunpack.c.l.b16 %v4800
      %v4852 = vunpack.c.l.b16 %v4801
      %v4853 = vunpack.c.l.b16 %v4802
      %v4854 = vunpack.c.l.b16 %v4803
      %v4855 = vpack.c.b16 %v4845, %v4844
      %v4856 = vpack.c.b16 %v4847, %v4846
      %v4857 = vpack.c.b16 %v4849, %v4848
      %v4858 = vpack.c.b16 %v4851, %v4850
      %v4859 = vpack.c.b16 %v4853, %v4852
      %v4860 = vpack.c.b16 %v4854, %v4854
      %v4861 = vrot.slane %v4855, 2
      %v4862 = vrot.slane %v4856, 2
      %v4863 = vsel %vm1264, %v4861, %v4862
      %v4864 = vrot.slane %v4857, 2
      %v4865 = vsel %vm1264, %v4862, %v4864
      %v4866 = vrot.slane %v4858, 2
      %v4867 = vsel %vm1264, %v4864, %v4866
      %v4868 = vrot.slane %v4859, 2
      %v4869 = vsel %vm1264, %v4866, %v4868
      %v4870 = vrot.slane %v4860, 2
      %v4871 = vsel %vm1264, %v4868, %v4870
      %v4880 = vunpack.c.l.b16 %v4825
      %v4881 = vunpack.c.h.b16 %v4825
      %v4882 = vunpack.c.l.b16 %v4826
      %v4883 = vunpack.c.h.b16 %v4826
      %v4884 = vunpack.c.l.b16 %v4827
      %v4885 = vunpack.c.h.b16 %v4827
      %v4886 = vunpack.c.l.b16 %v4828
      %v4887 = vunpack.c.h.b16 %v4828
      %v4888 = vunpack.c.l.b16 %v4829
      %v4889 = vunpack.c.h.b16 %v4829
      %v4890 = vunpack.c.l.b16 %v4830
      %v4891 = vunpack.c.h.b16 %v4830
      %v4892 = vunpack.c.l.b16 %v4831
      %v4893 = vunpack.c.h.b16 %v4831
      %v4894 = vunpack.c.l.b16 %v4832
      %v4895 = vunpack.c.h.b16 %v4832
      %v4896 = vpack.c.b16 %v4882, %v4880
      %v4897 = vpack.c.b16 %v4883, %v4881
      %v4898 = vpack.c.b16 %v4886, %v4884
      %v4899 = vpack.c.b16 %v4887, %v4885
      %v4900 = vpack.c.b16 %v4890, %v4888
      %v4901 = vpack.c.b16 %v4891, %v4889
      %v4902 = vpack.c.b16 %v4894, %v4892
      %v4903 = vpack.c.b16 %v4895, %v4893
      %v4913 = vsel %vm173, %v4863, 0
      %v4916 = vsel %vm173, %v4865, 0
      %v4919 = vsel %vm173, %v4867, 0
      %v4922 = vsel %vm173, %v4869, 0
      %v4925 = vsel %vm173, %v4871, 0
      %4927 = vmatpush.bf16.msra.mxu0 0
      %4928 = vmatpush.bf16.msra.mxu0 0
      %4929 = vmatpush.bf16.msra.mxu0 0
      %4930 = vmatpush.bf16.msra.mxu0 0
      %4931 = vmatpush.bf16.msra.mxu0 %v4902
      %4932 = vmatpush.bf16.msra.mxu0 %v4900
      %4933 = vmatpush.bf16.msra.mxu0 %v4898
      %4934 = vmatpush.bf16.msra.mxu0 %v4896
      %4935 = vmatmul.bf16.gmra.mxu0 %v4913
      %v4936 = vpop.f32.mrf.mxu0
      %v4937 = vadd.f32 0.0, %v4936
      %v4938 = vpop.f32.mrf.mxu0
      %v4939 = vadd.f32 0.0, %v4938
      %4940 = vmatmul.bf16.gmra.mxu0 %v4916
      %v4941 = vpop.f32.mrf.mxu0
      %v4942 = vadd.f32 0.0, %v4941
      %v4943 = vpop.f32.mrf.mxu0
      %v4944 = vadd.f32 0.0, %v4943
      %4945 = vmatmul.bf16.gmra.mxu0 %v4919
      %v4946 = vpop.f32.mrf.mxu0
      %v4947 = vadd.f32 0.0, %v4946
      %v4948 = vpop.f32.mrf.mxu0
      %v4949 = vadd.f32 0.0, %v4948
      %4950 = vmatmul.bf16.gmra.mxu0 %v4922
      %v4951 = vpop.f32.mrf.mxu0
      %v4952 = vadd.f32 0.0, %v4951
      %v4953 = vpop.f32.mrf.mxu0
      %v4954 = vadd.f32 0.0, %v4953
      %4955 = vmatmul.bf16.gmra.mxu0 %v4925
      %v4956 = vpop.f32.mrf.mxu0
      %v4957 = vadd.f32 0.0, %v4956
      %v4958 = vpop.f32.mrf.mxu0
      %v4959 = vadd.f32 0.0, %v4958
      %4960 = vdwg.mxu0
      %4961 = vmatpush.bf16.msra.mxu0 0
      %4962 = vmatpush.bf16.msra.mxu0 0
      %4963 = vmatpush.bf16.msra.mxu0 0
      %4964 = vmatpush.bf16.msra.mxu0 0
      %4965 = vmatpush.bf16.msra.mxu0 %v4903
      %4966 = vmatpush.bf16.msra.mxu0 %v4901
      %4967 = vmatpush.bf16.msra.mxu0 %v4899
      %4968 = vmatpush.bf16.msra.mxu0 %v4897
      %4969 = vmatmul.bf16.gmra.mxu0 %v4913
      %v4970 = vpop.f32.mrf.mxu0
      %v4971 = vadd.f32 0.0, %v4970
      %v4972 = vpop.f32.mrf.mxu0
      %v4973 = vadd.f32 0.0, %v4972
      %4974 = vmatmul.bf16.gmra.mxu0 %v4916
      %v4975 = vpop.f32.mrf.mxu0
      %v4976 = vadd.f32 0.0, %v4975
      %v4977 = vpop.f32.mrf.mxu0
      %v4978 = vadd.f32 0.0, %v4977
      %4979 = vmatmul.bf16.gmra.mxu0 %v4919
      %v4980 = vpop.f32.mrf.mxu0
      %v4981 = vadd.f32 0.0, %v4980
      %v4982 = vpop.f32.mrf.mxu0
      %v4983 = vadd.f32 0.0, %v4982
      %4984 = vmatmul.bf16.gmra.mxu0 %v4922
      %v4985 = vpop.f32.mrf.mxu0
      %v4986 = vadd.f32 0.0, %v4985
      %v4987 = vpop.f32.mrf.mxu0
      %v4988 = vadd.f32 0.0, %v4987
      %4989 = vmatmul.bf16.gmra.mxu0 %v4925
      %v4990 = vpop.f32.mrf.mxu0
      %v4991 = vadd.f32 0.0, %v4990
      %v4992 = vpop.f32.mrf.mxu0
      %v4993 = vadd.f32 0.0, %v4992
      %4994 = vdwg.mxu0
      %v4995 = vadd.f32 %v4804, %v4937
      %v4996 = vadd.f32 %v4805, %v4971
      %v4997 = vadd.f32 %v4806, %v4939
      %v4998 = vadd.f32 %v4807, %v4973
      %v4999 = vadd.f32 %v4808, %v4942
      %v5000 = vadd.f32 %v4809, %v4976
      %v5001 = vadd.f32 %v4810, %v4944
      %v5002 = vadd.f32 %v4811, %v4978
      %v5003 = vadd.f32 %v4812, %v4947
      %v5004 = vadd.f32 %v4813, %v4981
      %v5005 = vadd.f32 %v4814, %v4949
      %v5006 = vadd.f32 %v4815, %v4983
      %v5007 = vadd.f32 %v4816, %v4952
      %v5008 = vadd.f32 %v4817, %v4986
      %v5009 = vadd.f32 %v4818, %v4954
      %v5010 = vadd.f32 %v4819, %v4988
      %v5011 = vadd.f32 %v4820, %v4957
      %v5012 = vadd.f32 %v4821, %v4991
      %v5013 = vadd.f32 %v4822, %v4959
      %v5014 = vadd.f32 %v4823, %v4993
      %5015 = vst [vmem:[#allocation2] sm:$0xff] %v4995
      %5016 = vst.msk [vmem:[#allocation2 + $0x8] sm:$0xff] %vm173, %v4996
      %5017 = vst [vmem:[#allocation2 + $0x10] sm:$0xff] %v4997
      %5018 = vst.msk [vmem:[#allocation2 + $0x18] sm:$0xff] %vm173, %v4998
      %5019 = vst [vmem:[#allocation2 + $0x20] sm:$0xff] %v4999
      %5020 = vst.msk [vmem:[#allocation2 + $0x28] sm:$0xff] %vm173, %v5000
      %5021 = vst [vmem:[#allocation2 + $0x30] sm:$0xff] %v5001
      %5022 = vst.msk [vmem:[#allocation2 + $0x38] sm:$0xff] %vm173, %v5002
      %5023 = vst [vmem:[#allocation2 + $0x40] sm:$0xff] %v5003
      %5024 = vst.msk [vmem:[#allocation2 + $0x48] sm:$0xff] %vm173, %v5004
      %5025 = vst [vmem:[#allocation2 + $0x50] sm:$0xff] %v5005
      %5026 = vst.msk [vmem:[#allocation2 + $0x58] sm:$0xff] %vm173, %v5006
      %5027 = vst [vmem:[#allocation2 + $0x60] sm:$0xff] %v5007
      %5028 = vst.msk [vmem:[#allocation2 + $0x68] sm:$0xff] %vm173, %v5008
      %5029 = vst [vmem:[#allocation2 + $0x70] sm:$0xff] %v5009
      %5030 = vst.msk [vmem:[#allocation2 + $0x78] sm:$0xff] %vm173, %v5010
      %5031 = vst [vmem:[#allocation2 + $0x80] sm:$0xff] %v5011
      %5032 = vst.msk [vmem:[#allocation2 + $0x88] sm:$0xff] %vm173, %v5012
      %5033 = vst [vmem:[#allocation2 + $0x90] sm:$0x1f] %v5013
      %5034 = vst.msk [vmem:[#allocation2 + $0x98] sm:$0x1f] %vm192, %v5014
      %v5035 = vld [vmem:[%s165 + $0x10] sm:$0xc]
      %v5036 = vld [vmem:[%s165 + $0x14] sm:$0xf]
      %v5037 = vld [vmem:[%s165 + $0x18] sm:$0xf]
      %v5038 = vld [vmem:[%s165 + $0x1c] sm:$0xf]
      %v5039 = vld [vmem:[%s165 + $0x20] sm:$0xf]
      %v5040 = vld [vmem:[%s165 + $0x24] sm:$0xf]
      %v5041 = vld [vmem:[%s165 + $0x28] sm:$0xf]
      %v5042 = vld [vmem:[%s165 + $0x2c] sm:$0xf]
      %v5043 = vld [vmem:[%s165 + $0x30] sm:$0xf]
      %v5044 = vld [vmem:[%s165 + $0x34] sm:$0xf]
      %v5045 = vld [vmem:[%s165 + $0x38] sm:$0x1]
      %v5046 = vld [vmem:[#allocation2] sm:$0xff]
      %v5047 = vld [vmem:[#allocation2 + $0x8] sm:$0xff]
      %v5048 = vld [vmem:[#allocation2 + $0x10] sm:$0xff]
      %v5049 = vld [vmem:[#allocation2 + $0x18] sm:$0xff]
      %v5050 = vld [vmem:[#allocation2 + $0x20] sm:$0xff]
      %v5051 = vld [vmem:[#allocation2 + $0x28] sm:$0xff]
      %v5052 = vld [vmem:[#allocation2 + $0x30] sm:$0xff]
      %v5053 = vld [vmem:[#allocation2 + $0x38] sm:$0xff]
      %v5054 = vld [vmem:[#allocation2 + $0x40] sm:$0xff]
      %v5055 = vld [vmem:[#allocation2 + $0x48] sm:$0xff]
      %v5056 = vld [vmem:[#allocation2 + $0x50] sm:$0xff]
      %v5057 = vld [vmem:[#allocation2 + $0x58] sm:$0xff]
      %v5058 = vld [vmem:[#allocation2 + $0x60] sm:$0xff]
      %v5059 = vld [vmem:[#allocation2 + $0x68] sm:$0xff]
      %v5060 = vld [vmem:[#allocation2 + $0x70] sm:$0xff]
      %v5061 = vld [vmem:[#allocation2 + $0x78] sm:$0xff]
      %v5062 = vld [vmem:[#allocation2 + $0x80] sm:$0xff]
      %v5063 = vld [vmem:[#allocation2 + $0x88] sm:$0xff]
      %v5064 = vld [vmem:[#allocation2 + $0x90] sm:$0x1f]
      %v5065 = vld [vmem:[#allocation2 + $0x98] sm:$0x1f]
      %s5066 = scalar_lea.vmem %s1, 1216
      %v5067 = vld [vmem:[%s5066] sm:$0xff]
      %v5068 = vld [vmem:[%s5066 + $0x8] sm:$0xff]
      %v5069 = vld [vmem:[%s5066 + $0x10] sm:$0xff]
      %v5070 = vld [vmem:[%s5066 + $0x18] sm:$0xff]
      %v5071 = vld [vmem:[%s5066 + $0x20] sm:$0xff]
      %v5072 = vld [vmem:[%s5066 + $0x28] sm:$0xff]
      %v5073 = vld [vmem:[%s5066 + $0x30] sm:$0xff]
      %v5074 = vld [vmem:[%s5066 + $0x38] sm:$0xff]
      %v5086 = vunpack.c.l.b16 %v5035
      %v5087 = vunpack.c.l.b16 %v5036
      %v5088 = vunpack.c.l.b16 %v5037
      %v5089 = vunpack.c.l.b16 %v5038
      %v5090 = vunpack.c.l.b16 %v5039
      %v5091 = vunpack.c.l.b16 %v5040
      %v5092 = vunpack.c.l.b16 %v5041
      %v5093 = vunpack.c.l.b16 %v5042
      %v5094 = vunpack.c.l.b16 %v5043
      %v5095 = vunpack.c.l.b16 %v5044
      %v5096 = vunpack.c.l.b16 %v5045
      %v5097 = vpack.c.b16 %v5087, %v5086
      %v5098 = vpack.c.b16 %v5089, %v5088
      %v5099 = vpack.c.b16 %v5091, %v5090
      %v5100 = vpack.c.b16 %v5093, %v5092
      %v5101 = vpack.c.b16 %v5095, %v5094
      %v5102 = vpack.c.b16 %v5096, %v5096
      %v5104 = vshrl.u32 %v5097, 16
      %v5106 = vrot.slane %v5104, 2
      %v5107 = vshll.u32 %v5097, 16
      %v5109 = vrot.slane %v5107, 3
      %v5110 = vor.u32 %v5106, %v5109
      %v5112 = vshrl.u32 %v5098, 16
      %v5114 = vrot.slane %v5112, 2
      %v5115 = vshll.u32 %v5098, 16
      %v5117 = vrot.slane %v5115, 3
      %v5118 = vor.u32 %v5114, %v5117
      %v5119 = vsel %vm2020, %v5110, %v5118
      %v5121 = vshrl.u32 %v5099, 16
      %v5123 = vrot.slane %v5121, 2
      %v5124 = vshll.u32 %v5099, 16
      %v5126 = vrot.slane %v5124, 3
      %v5127 = vor.u32 %v5123, %v5126
      %v5128 = vsel %vm2020, %v5118, %v5127
      %v5130 = vshrl.u32 %v5100, 16
      %v5132 = vrot.slane %v5130, 2
      %v5133 = vshll.u32 %v5100, 16
      %v5135 = vrot.slane %v5133, 3
      %v5136 = vor.u32 %v5132, %v5135
      %v5137 = vsel %vm2020, %v5127, %v5136
      %v5139 = vshrl.u32 %v5101, 16
      %v5141 = vrot.slane %v5139, 2
      %v5142 = vshll.u32 %v5101, 16
      %v5144 = vrot.slane %v5142, 3
      %v5145 = vor.u32 %v5141, %v5144
      %v5146 = vsel %vm2020, %v5136, %v5145
      %v5148 = vshrl.u32 %v5102, 16
      %v5150 = vrot.slane %v5148, 2
      %v5151 = vshll.u32 %v5102, 16
      %v5153 = vrot.slane %v5151, 3
      %v5154 = vor.u32 %v5150, %v5153
      %v5155 = vsel %vm2020, %v5145, %v5154
      %v5164 = vunpack.c.l.b16 %v5067
      %v5165 = vunpack.c.h.b16 %v5067
      %v5166 = vunpack.c.l.b16 %v5068
      %v5167 = vunpack.c.h.b16 %v5068
      %v5168 = vunpack.c.l.b16 %v5069
      %v5169 = vunpack.c.h.b16 %v5069
      %v5170 = vunpack.c.l.b16 %v5070
      %v5171 = vunpack.c.h.b16 %v5070
      %v5172 = vunpack.c.l.b16 %v5071
      %v5173 = vunpack.c.h.b16 %v5071
      %v5174 = vunpack.c.l.b16 %v5072
      %v5175 = vunpack.c.h.b16 %v5072
      %v5176 = vunpack.c.l.b16 %v5073
      %v5177 = vunpack.c.h.b16 %v5073
      %v5178 = vunpack.c.l.b16 %v5074
      %v5179 = vunpack.c.h.b16 %v5074
      %v5180 = vpack.c.b16 %v5166, %v5164
      %v5181 = vpack.c.b16 %v5167, %v5165
      %v5182 = vpack.c.b16 %v5170, %v5168
      %v5183 = vpack.c.b16 %v5171, %v5169
      %v5184 = vpack.c.b16 %v5174, %v5172
      %v5185 = vpack.c.b16 %v5175, %v5173
      %v5186 = vpack.c.b16 %v5178, %v5176
      %v5187 = vpack.c.b16 %v5179, %v5177
      %v5197 = vsel %vm173, %v5119, 0
      %v5200 = vsel %vm173, %v5128, 0
      %v5203 = vsel %vm173, %v5137, 0
      %v5206 = vsel %vm173, %v5146, 0
      %v5209 = vsel %vm173, %v5155, 0
      %5211 = vmatpush.bf16.msra.mxu0 0
      %5212 = vmatpush.bf16.msra.mxu0 0
      %5213 = vmatpush.bf16.msra.mxu0 0
      %5214 = vmatpush.bf16.msra.mxu0 0
      %5215 = vmatpush.bf16.msra.mxu0 %v5186
      %5216 = vmatpush.bf16.msra.mxu0 %v5184
      %5217 = vmatpush.bf16.msra.mxu0 %v5182
      %5218 = vmatpush.bf16.msra.mxu0 %v5180
      %5219 = vmatmul.bf16.gmra.mxu0 %v5197
      %v5220 = vpop.f32.mrf.mxu0
      %v5221 = vadd.f32 0.0, %v5220
      %v5222 = vpop.f32.mrf.mxu0
      %v5223 = vadd.f32 0.0, %v5222
      %5224 = vmatmul.bf16.gmra.mxu0 %v5200
      %v5225 = vpop.f32.mrf.mxu0
      %v5226 = vadd.f32 0.0, %v5225
      %v5227 = vpop.f32.mrf.mxu0
      %v5228 = vadd.f32 0.0, %v5227
      %5229 = vmatmul.bf16.gmra.mxu0 %v5203
      %v5230 = vpop.f32.mrf.mxu0
      %v5231 = vadd.f32 0.0, %v5230
      %v5232 = vpop.f32.mrf.mxu0
      %v5233 = vadd.f32 0.0, %v5232
      %5234 = vmatmul.bf16.gmra.mxu0 %v5206
      %v5235 = vpop.f32.mrf.mxu0
      %v5236 = vadd.f32 0.0, %v5235
      %v5237 = vpop.f32.mrf.mxu0
      %v5238 = vadd.f32 0.0, %v5237
      %5239 = vmatmul.bf16.gmra.mxu0 %v5209
      %v5240 = vpop.f32.mrf.mxu0
      %v5241 = vadd.f32 0.0, %v5240
      %v5242 = vpop.f32.mrf.mxu0
      %v5243 = vadd.f32 0.0, %v5242
      %5244 = vdwg.mxu0
      %5245 = vmatpush.bf16.msra.mxu0 0
      %5246 = vmatpush.bf16.msra.mxu0 0
      %5247 = vmatpush.bf16.msra.mxu0 0
      %5248 = vmatpush.bf16.msra.mxu0 0
      %5249 = vmatpush.bf16.msra.mxu0 %v5187
      %5250 = vmatpush.bf16.msra.mxu0 %v5185
      %5251 = vmatpush.bf16.msra.mxu0 %v5183
      %5252 = vmatpush.bf16.msra.mxu0 %v5181
      %5253 = vmatmul.bf16.gmra.mxu0 %v5197
      %v5254 = vpop.f32.mrf.mxu0
      %v5255 = vadd.f32 0.0, %v5254
      %v5256 = vpop.f32.mrf.mxu0
      %v5257 = vadd.f32 0.0, %v5256
      %5258 = vmatmul.bf16.gmra.mxu0 %v5200
      %v5259 = vpop.f32.mrf.mxu0
      %v5260 = vadd.f32 0.0, %v5259
      %v5261 = vpop.f32.mrf.mxu0
      %v5262 = vadd.f32 0.0, %v5261
      %5263 = vmatmul.bf16.gmra.mxu0 %v5203
      %v5264 = vpop.f32.mrf.mxu0
      %v5265 = vadd.f32 0.0, %v5264
      %v5266 = vpop.f32.mrf.mxu0
      %v5267 = vadd.f32 0.0, %v5266
      %5268 = vmatmul.bf16.gmra.mxu0 %v5206
      %v5269 = vpop.f32.mrf.mxu0
      %v5270 = vadd.f32 0.0, %v5269
      %v5271 = vpop.f32.mrf.mxu0
      %v5272 = vadd.f32 0.0, %v5271
      %5273 = vmatmul.bf16.gmra.mxu0 %v5209
      %v5274 = vpop.f32.mrf.mxu0
      %v5275 = vadd.f32 0.0, %v5274
      %v5276 = vpop.f32.mrf.mxu0
      %v5277 = vadd.f32 0.0, %v5276
      %5278 = vdwg.mxu0
      %v5279 = vadd.f32 %v5046, %v5221
      %v5280 = vadd.f32 %v5047, %v5255
      %v5281 = vadd.f32 %v5048, %v5223
      %v5282 = vadd.f32 %v5049, %v5257
      %v5283 = vadd.f32 %v5050, %v5226
      %v5284 = vadd.f32 %v5051, %v5260
      %v5285 = vadd.f32 %v5052, %v5228
      %v5286 = vadd.f32 %v5053, %v5262
      %v5287 = vadd.f32 %v5054, %v5231
      %v5288 = vadd.f32 %v5055, %v5265
      %v5289 = vadd.f32 %v5056, %v5233
      %v5290 = vadd.f32 %v5057, %v5267
      %v5291 = vadd.f32 %v5058, %v5236
      %v5292 = vadd.f32 %v5059, %v5270
      %v5293 = vadd.f32 %v5060, %v5238
      %v5294 = vadd.f32 %v5061, %v5272
      %v5295 = vadd.f32 %v5062, %v5241
      %v5296 = vadd.f32 %v5063, %v5275
      %v5297 = vadd.f32 %v5064, %v5243
      %v5298 = vadd.f32 %v5065, %v5277
      %5299 = vst [vmem:[#allocation2] sm:$0xff] %v5279
      %5300 = vst.msk [vmem:[#allocation2 + $0x8] sm:$0xff] %vm173, %v5280
      %5301 = vst [vmem:[#allocation2 + $0x10] sm:$0xff] %v5281
      %5302 = vst.msk [vmem:[#allocation2 + $0x18] sm:$0xff] %vm173, %v5282
      %5303 = vst [vmem:[#allocation2 + $0x20] sm:$0xff] %v5283
      %5304 = vst.msk [vmem:[#allocation2 + $0x28] sm:$0xff] %vm173, %v5284
      %5305 = vst [vmem:[#allocation2 + $0x30] sm:$0xff] %v5285
      %5306 = vst.msk [vmem:[#allocation2 + $0x38] sm:$0xff] %vm173, %v5286
      %5307 = vst [vmem:[#allocation2 + $0x40] sm:$0xff] %v5287
      %5308 = vst.msk [vmem:[#allocation2 + $0x48] sm:$0xff] %vm173, %v5288
      %5309 = vst [vmem:[#allocation2 + $0x50] sm:$0xff] %v5289
      %5310 = vst.msk [vmem:[#allocation2 + $0x58] sm:$0xff] %vm173, %v5290
      %5311 = vst [vmem:[#allocation2 + $0x60] sm:$0xff] %v5291
      %5312 = vst.msk [vmem:[#allocation2 + $0x68] sm:$0xff] %vm173, %v5292
      %5313 = vst [vmem:[#allocation2 + $0x70] sm:$0xff] %v5293
      %5314 = vst.msk [vmem:[#allocation2 + $0x78] sm:$0xff] %vm173, %v5294
      %5315 = vst [vmem:[#allocation2 + $0x80] sm:$0xff] %v5295
      %5316 = vst.msk [vmem:[#allocation2 + $0x88] sm:$0xff] %vm173, %v5296
      %5317 = vst [vmem:[#allocation2 + $0x90] sm:$0x1f] %v5297
      %5318 = vst.msk [vmem:[#allocation2 + $0x98] sm:$0x1f] %vm192, %v5298
      %v5319 = vld [vmem:[%s165 + $0x14] sm:$0xc]
      %v5320 = vld [vmem:[%s165 + $0x18] sm:$0xf]
      %v5321 = vld [vmem:[%s165 + $0x1c] sm:$0xf]
      %v5322 = vld [vmem:[%s165 + $0x20] sm:$0xf]
      %v5323 = vld [vmem:[%s165 + $0x24] sm:$0xf]
      %v5324 = vld [vmem:[%s165 + $0x28] sm:$0xf]
      %v5325 = vld [vmem:[%s165 + $0x2c] sm:$0xf]
      %v5326 = vld [vmem:[%s165 + $0x30] sm:$0xf]
      %v5327 = vld [vmem:[%s165 + $0x34] sm:$0xf]
      %v5328 = vld [vmem:[%s165 + $0x38] sm:$0xf]
      %v5329 = vld [vmem:[%s165 + $0x3c] sm:$0x1]
      %v5330 = vld [vmem:[#allocation2] sm:$0xff]
      %v5331 = vld [vmem:[#allocation2 + $0x8] sm:$0xff]
      %v5332 = vld [vmem:[#allocation2 + $0x10] sm:$0xff]
      %v5333 = vld [vmem:[#allocation2 + $0x18] sm:$0xff]
      %v5334 = vld [vmem:[#allocation2 + $0x20] sm:$0xff]
      %v5335 = vld [vmem:[#allocation2 + $0x28] sm:$0xff]
      %v5336 = vld [vmem:[#allocation2 + $0x30] sm:$0xff]
      %v5337 = vld [vmem:[#allocation2 + $0x38] sm:$0xff]
      %v5338 = vld [vmem:[#allocation2 + $0x40] sm:$0xff]
      %v5339 = vld [vmem:[#allocation2 + $0x48] sm:$0xff]
      %v5340 = vld [vmem:[#allocation2 + $0x50] sm:$0xff]
      %v5341 = vld [vmem:[#allocation2 + $0x58] sm:$0xff]
      %v5342 = vld [vmem:[#allocation2 + $0x60] sm:$0xff]
      %v5343 = vld [vmem:[#allocation2 + $0x68] sm:$0xff]
      %v5344 = vld [vmem:[#allocation2 + $0x70] sm:$0xff]
      %v5345 = vld [vmem:[#allocation2 + $0x78] sm:$0xff]
      %v5346 = vld [vmem:[#allocation2 + $0x80] sm:$0xff]
      %v5347 = vld [vmem:[#allocation2 + $0x88] sm:$0xff]
      %v5348 = vld [vmem:[#allocation2 + $0x90] sm:$0x1f]
      %v5349 = vld [vmem:[#allocation2 + $0x98] sm:$0x1f]
      %s5350 = scalar_lea.vmem %s1, 1280
      %v5351 = vld [vmem:[%s5350] sm:$0xff]
      %v5352 = vld [vmem:[%s5350 + $0x8] sm:$0xff]
      %v5353 = vld [vmem:[%s5350 + $0x10] sm:$0xff]
      %v5354 = vld [vmem:[%s5350 + $0x18] sm:$0xff]
      %v5355 = vld [vmem:[%s5350 + $0x20] sm:$0xff]
      %v5356 = vld [vmem:[%s5350 + $0x28] sm:$0xff]
      %v5357 = vld [vmem:[%s5350 + $0x30] sm:$0xff]
      %v5358 = vld [vmem:[%s5350 + $0x38] sm:$0xff]
      %v5370 = vunpack.c.l.b16 %v5319
      %v5371 = vunpack.c.l.b16 %v5320
      %v5372 = vunpack.c.l.b16 %v5321
      %v5373 = vunpack.c.l.b16 %v5322
      %v5374 = vunpack.c.l.b16 %v5323
      %v5375 = vunpack.c.l.b16 %v5324
      %v5376 = vunpack.c.l.b16 %v5325
      %v5377 = vunpack.c.l.b16 %v5326
      %v5378 = vunpack.c.l.b16 %v5327
      %v5379 = vunpack.c.l.b16 %v5328
      %v5380 = vunpack.c.l.b16 %v5329
      %v5381 = vpack.c.b16 %v5371, %v5370
      %v5382 = vpack.c.b16 %v5373, %v5372
      %v5383 = vpack.c.b16 %v5375, %v5374
      %v5384 = vpack.c.b16 %v5377, %v5376
      %v5385 = vpack.c.b16 %v5379, %v5378
      %v5386 = vpack.c.b16 %v5380, %v5380
      %v5387 = vrot.slane %v5381, 2
      %v5388 = vrot.slane %v5382, 2
      %v5389 = vsel %vm1264, %v5387, %v5388
      %v5390 = vrot.slane %v5383, 2
      %v5391 = vsel %vm1264, %v5388, %v5390
      %v5392 = vrot.slane %v5384, 2
      %v5393 = vsel %vm1264, %v5390, %v5392
      %v5394 = vrot.slane %v5385, 2
      %v5395 = vsel %vm1264, %v5392, %v5394
      %v5396 = vrot.slane %v5386, 2
      %v5397 = vsel %vm1264, %v5394, %v5396
      %v5406 = vunpack.c.l.b16 %v5351
      %v5407 = vunpack.c.h.b16 %v5351
      %v5408 = vunpack.c.l.b16 %v5352
      %v5409 = vunpack.c.h.b16 %v5352
      %v5410 = vunpack.c.l.b16 %v5353
      %v5411 = vunpack.c.h.b16 %v5353
      %v5412 = vunpack.c.l.b16 %v5354
      %v5413 = vunpack.c.h.b16 %v5354
      %v5414 = vunpack.c.l.b16 %v5355
      %v5415 = vunpack.c.h.b16 %v5355
      %v5416 = vunpack.c.l.b16 %v5356
      %v5417 = vunpack.c.h.b16 %v5356
      %v5418 = vunpack.c.l.b16 %v5357
      %v5419 = vunpack.c.h.b16 %v5357
      %v5420 = vunpack.c.l.b16 %v5358
      %v5421 = vunpack.c.h.b16 %v5358
      %v5422 = vpack.c.b16 %v5408, %v5406
      %v5423 = vpack.c.b16 %v5409, %v5407
      %v5424 = vpack.c.b16 %v5412, %v5410
      %v5425 = vpack.c.b16 %v5413, %v5411
      %v5426 = vpack.c.b16 %v5416, %v5414
      %v5427 = vpack.c.b16 %v5417, %v5415
      %v5428 = vpack.c.b16 %v5420, %v5418
      %v5429 = vpack.c.b16 %v5421, %v5419
      %v5439 = vsel %vm173, %v5389, 0
      %v5442 = vsel %vm173, %v5391, 0
      %v5445 = vsel %vm173, %v5393, 0
      %v5448 = vsel %vm173, %v5395, 0
      %v5451 = vsel %vm173, %v5397, 0
      %5453 = vmatpush.bf16.msra.mxu0 0
      %5454 = vmatpush.bf16.msra.mxu0 0
      %5455 = vmatpush.bf16.msra.mxu0 0
      %5456 = vmatpush.bf16.msra.mxu0 0
      %5457 = vmatpush.bf16.msra.mxu0 %v5428
      %5458 = vmatpush.bf16.msra.mxu0 %v5426
      %5459 = vmatpush.bf16.msra.mxu0 %v5424
      %5460 = vmatpush.bf16.msra.mxu0 %v5422
      %5461 = vmatmul.bf16.gmra.mxu0 %v5439
      %v5462 = vpop.f32.mrf.mxu0
      %v5463 = vadd.f32 0.0, %v5462
      %v5464 = vpop.f32.mrf.mxu0
      %v5465 = vadd.f32 0.0, %v5464
      %5466 = vmatmul.bf16.gmra.mxu0 %v5442
      %v5467 = vpop.f32.mrf.mxu0
      %v5468 = vadd.f32 0.0, %v5467
      %v5469 = vpop.f32.mrf.mxu0
      %v5470 = vadd.f32 0.0, %v5469
      %5471 = vmatmul.bf16.gmra.mxu0 %v5445
      %v5472 = vpop.f32.mrf.mxu0
      %v5473 = vadd.f32 0.0, %v5472
      %v5474 = vpop.f32.mrf.mxu0
      %v5475 = vadd.f32 0.0, %v5474
      %5476 = vmatmul.bf16.gmra.mxu0 %v5448
      %v5477 = vpop.f32.mrf.mxu0
      %v5478 = vadd.f32 0.0, %v5477
      %v5479 = vpop.f32.mrf.mxu0
      %v5480 = vadd.f32 0.0, %v5479
      %5481 = vmatmul.bf16.gmra.mxu0 %v5451
      %v5482 = vpop.f32.mrf.mxu0
      %v5483 = vadd.f32 0.0, %v5482
      %v5484 = vpop.f32.mrf.mxu0
      %v5485 = vadd.f32 0.0, %v5484
      %5486 = vdwg.mxu0
      %5487 = vmatpush.bf16.msra.mxu0 0
      %5488 = vmatpush.bf16.msra.mxu0 0
      %5489 = vmatpush.bf16.msra.mxu0 0
      %5490 = vmatpush.bf16.msra.mxu0 0
      %5491 = vmatpush.bf16.msra.mxu0 %v5429
      %5492 = vmatpush.bf16.msra.mxu0 %v5427
      %5493 = vmatpush.bf16.msra.mxu0 %v5425
      %5494 = vmatpush.bf16.msra.mxu0 %v5423
      %5495 = vmatmul.bf16.gmra.mxu0 %v5439
      %v5496 = vpop.f32.mrf.mxu0
      %v5497 = vadd.f32 0.0, %v5496
      %v5498 = vpop.f32.mrf.mxu0
      %v5499 = vadd.f32 0.0, %v5498
      %5500 = vmatmul.bf16.gmra.mxu0 %v5442
      %v5501 = vpop.f32.mrf.mxu0
      %v5502 = vadd.f32 0.0, %v5501
      %v5503 = vpop.f32.mrf.mxu0
      %v5504 = vadd.f32 0.0, %v5503
      %5505 = vmatmul.bf16.gmra.mxu0 %v5445
      %v5506 = vpop.f32.mrf.mxu0
      %v5507 = vadd.f32 0.0, %v5506
      %v5508 = vpop.f32.mrf.mxu0
      %v5509 = vadd.f32 0.0, %v5508
      %5510 = vmatmul.bf16.gmra.mxu0 %v5448
      %v5511 = vpop.f32.mrf.mxu0
      %v5512 = vadd.f32 0.0, %v5511
      %v5513 = vpop.f32.mrf.mxu0
      %v5514 = vadd.f32 0.0, %v5513
      %5515 = vmatmul.bf16.gmra.mxu0 %v5451
      %v5516 = vpop.f32.mrf.mxu0
      %v5517 = vadd.f32 0.0, %v5516
      %v5518 = vpop.f32.mrf.mxu0
      %v5519 = vadd.f32 0.0, %v5518
      %5520 = vdwg.mxu0
      %v5521 = vadd.f32 %v5330, %v5463
      %v5522 = vadd.f32 %v5331, %v5497
      %v5523 = vadd.f32 %v5332, %v5465
      %v5524 = vadd.f32 %v5333, %v5499
      %v5525 = vadd.f32 %v5334, %v5468
      %v5526 = vadd.f32 %v5335, %v5502
      %v5527 = vadd.f32 %v5336, %v5470
      %v5528 = vadd.f32 %v5337, %v5504
      %v5529 = vadd.f32 %v5338, %v5473
      %v5530 = vadd.f32 %v5339, %v5507
      %v5531 = vadd.f32 %v5340, %v5475
      %v5532 = vadd.f32 %v5341, %v5509
      %v5533 = vadd.f32 %v5342, %v5478
      %v5534 = vadd.f32 %v5343, %v5512
      %v5535 = vadd.f32 %v5344, %v5480
      %v5536 = vadd.f32 %v5345, %v5514
      %v5537 = vadd.f32 %v5346, %v5483
      %v5538 = vadd.f32 %v5347, %v5517
      %v5539 = vadd.f32 %v5348, %v5485
      %v5540 = vadd.f32 %v5349, %v5519
      %5541 = vst [vmem:[#allocation2] sm:$0xff] %v5521
      %5542 = vst.msk [vmem:[#allocation2 + $0x8] sm:$0xff] %vm173, %v5522
      %5543 = vst [vmem:[#allocation2 + $0x10] sm:$0xff] %v5523
      %5544 = vst.msk [vmem:[#allocation2 + $0x18] sm:$0xff] %vm173, %v5524
      %5545 = vst [vmem:[#allocation2 + $0x20] sm:$0xff] %v5525
      %5546 = vst.msk [vmem:[#allocation2 + $0x28] sm:$0xff] %vm173, %v5526
      %5547 = vst [vmem:[#allocation2 + $0x30] sm:$0xff] %v5527
      %5548 = vst.msk [vmem:[#allocation2 + $0x38] sm:$0xff] %vm173, %v5528
      %5549 = vst [vmem:[#allocation2 + $0x40] sm:$0xff] %v5529
      %5550 = vst.msk [vmem:[#allocation2 + $0x48] sm:$0xff] %vm173, %v5530
      %5551 = vst [vmem:[#allocation2 + $0x50] sm:$0xff] %v5531
      %5552 = vst.msk [vmem:[#allocation2 + $0x58] sm:$0xff] %vm173, %v5532
      %5553 = vst [vmem:[#allocation2 + $0x60] sm:$0xff] %v5533
      %5554 = vst.msk [vmem:[#allocation2 + $0x68] sm:$0xff] %vm173, %v5534
      %5555 = vst [vmem:[#allocation2 + $0x70] sm:$0xff] %v5535
      %5556 = vst.msk [vmem:[#allocation2 + $0x78] sm:$0xff] %vm173, %v5536
      %5557 = vst [vmem:[#allocation2 + $0x80] sm:$0xff] %v5537
      %5558 = vst.msk [vmem:[#allocation2 + $0x88] sm:$0xff] %vm173, %v5538
      %5559 = vst [vmem:[#allocation2 + $0x90] sm:$0x1f] %v5539
      %5560 = vst.msk [vmem:[#allocation2 + $0x98] sm:$0x1f] %vm192, %v5540
      %v5561 = vld [vmem:[%s165 + $0x14] sm:$0xc]
      %v5562 = vld [vmem:[%s165 + $0x18] sm:$0xf]
      %v5563 = vld [vmem:[%s165 + $0x1c] sm:$0xf]
      %v5564 = vld [vmem:[%s165 + $0x20] sm:$0xf]
      %v5565 = vld [vmem:[%s165 + $0x24] sm:$0xf]
      %v5566 = vld [vmem:[%s165 + $0x28] sm:$0xf]
      %v5567 = vld [vmem:[%s165 + $0x2c] sm:$0xf]
      %v5568 = vld [vmem:[%s165 + $0x30] sm:$0xf]
      %v5569 = vld [vmem:[%s165 + $0x34] sm:$0xf]
      %v5570 = vld [vmem:[%s165 + $0x38] sm:$0xf]
      %v5571 = vld [vmem:[%s165 + $0x3c] sm:$0x1]
      %v5572 = vld [vmem:[#allocation2] sm:$0xff]
      %v5573 = vld [vmem:[#allocation2 + $0x8] sm:$0xff]
      %v5574 = vld [vmem:[#allocation2 + $0x10] sm:$0xff]
      %v5575 = vld [vmem:[#allocation2 + $0x18] sm:$0xff]
      %v5576 = vld [vmem:[#allocation2 + $0x20] sm:$0xff]
      %v5577 = vld [vmem:[#allocation2 + $0x28] sm:$0xff]
      %v5578 = vld [vmem:[#allocation2 + $0x30] sm:$0xff]
      %v5579 = vld [vmem:[#allocation2 + $0x38] sm:$0xff]
      %v5580 = vld [vmem:[#allocation2 + $0x40] sm:$0xff]
      %v5581 = vld [vmem:[#allocation2 + $0x48] sm:$0xff]
      %v5582 = vld [vmem:[#allocation2 + $0x50] sm:$0xff]
      %v5583 = vld [vmem:[#allocation2 + $0x58] sm:$0xff]
      %v5584 = vld [vmem:[#allocation2 + $0x60] sm:$0xff]
      %v5585 = vld [vmem:[#allocation2 + $0x68] sm:$0xff]
      %v5586 = vld [vmem:[#allocation2 + $0x70] sm:$0xff]
      %v5587 = vld [vmem:[#allocation2 + $0x78] sm:$0xff]
      %v5588 = vld [vmem:[#allocation2 + $0x80] sm:$0xff]
      %v5589 = vld [vmem:[#allocation2 + $0x88] sm:$0xff]
      %v5590 = vld [vmem:[#allocation2 + $0x90] sm:$0x1f]
      %v5591 = vld [vmem:[#allocation2 + $0x98] sm:$0x1f]
      %s5592 = scalar_lea.vmem %s1, 1344
      %v5593 = vld [vmem:[%s5592] sm:$0xff]
      %v5594 = vld [vmem:[%s5592 + $0x8] sm:$0xff]
      %v5595 = vld [vmem:[%s5592 + $0x10] sm:$0xff]
      %v5596 = vld [vmem:[%s5592 + $0x18] sm:$0xff]
      %v5597 = vld [vmem:[%s5592 + $0x20] sm:$0xff]
      %v5598 = vld [vmem:[%s5592 + $0x28] sm:$0xff]
      %v5599 = vld [vmem:[%s5592 + $0x30] sm:$0xff]
      %v5600 = vld [vmem:[%s5592 + $0x38] sm:$0xff]
      %v5612 = vunpack.c.l.b16 %v5561
      %v5613 = vunpack.c.l.b16 %v5562
      %v5614 = vunpack.c.l.b16 %v5563
      %v5615 = vunpack.c.l.b16 %v5564
      %v5616 = vunpack.c.l.b16 %v5565
      %v5617 = vunpack.c.l.b16 %v5566
      %v5618 = vunpack.c.l.b16 %v5567
      %v5619 = vunpack.c.l.b16 %v5568
      %v5620 = vunpack.c.l.b16 %v5569
      %v5621 = vunpack.c.l.b16 %v5570
      %v5622 = vunpack.c.l.b16 %v5571
      %v5623 = vpack.c.b16 %v5613, %v5612
      %v5624 = vpack.c.b16 %v5615, %v5614
      %v5625 = vpack.c.b16 %v5617, %v5616
      %v5626 = vpack.c.b16 %v5619, %v5618
      %v5627 = vpack.c.b16 %v5621, %v5620
      %v5628 = vpack.c.b16 %v5622, %v5622
      %v5630 = vshrl.u32 %v5623, 16
      %v5632 = vrot.slane %v5630, 2
      %v5633 = vshll.u32 %v5623, 16
      %v5635 = vrot.slane %v5633, 3
      %v5636 = vor.u32 %v5632, %v5635
      %v5638 = vshrl.u32 %v5624, 16
      %v5640 = vrot.slane %v5638, 2
      %v5641 = vshll.u32 %v5624, 16
      %v5643 = vrot.slane %v5641, 3
      %v5644 = vor.u32 %v5640, %v5643
      %v5645 = vsel %vm2020, %v5636, %v5644
      %v5647 = vshrl.u32 %v5625, 16
      %v5649 = vrot.slane %v5647, 2
      %v5650 = vshll.u32 %v5625, 16
      %v5652 = vrot.slane %v5650, 3
      %v5653 = vor.u32 %v5649, %v5652
      %v5654 = vsel %vm2020, %v5644, %v5653
      %v5656 = vshrl.u32 %v5626, 16
      %v5658 = vrot.slane %v5656, 2
      %v5659 = vshll.u32 %v5626, 16
      %v5661 = vrot.slane %v5659, 3
      %v5662 = vor.u32 %v5658, %v5661
      %v5663 = vsel %vm2020, %v5653, %v5662
      %v5665 = vshrl.u32 %v5627, 16
      %v5667 = vrot.slane %v5665, 2
      %v5668 = vshll.u32 %v5627, 16
      %v5670 = vrot.slane %v5668, 3
      %v5671 = vor.u32 %v5667, %v5670
      %v5672 = vsel %vm2020, %v5662, %v5671
      %v5674 = vshrl.u32 %v5628, 16
      %v5676 = vrot.slane %v5674, 2
      %v5677 = vshll.u32 %v5628, 16
      %v5679 = vrot.slane %v5677, 3
      %v5680 = vor.u32 %v5676, %v5679
      %v5681 = vsel %vm2020, %v5671, %v5680
      %v5690 = vunpack.c.l.b16 %v5593
      %v5691 = vunpack.c.h.b16 %v5593
      %v5692 = vunpack.c.l.b16 %v5594
      %v5693 = vunpack.c.h.b16 %v5594
      %v5694 = vunpack.c.l.b16 %v5595
      %v5695 = vunpack.c.h.b16 %v5595
      %v5696 = vunpack.c.l.b16 %v5596
      %v5697 = vunpack.c.h.b16 %v5596
      %v5698 = vunpack.c.l.b16 %v5597
      %v5699 = vunpack.c.h.b16 %v5597
      %v5700 = vunpack.c.l.b16 %v5598
      %v5701 = vunpack.c.h.b16 %v5598
      %v5702 = vunpack.c.l.b16 %v5599
      %v5703 = vunpack.c.h.b16 %v5599
      %v5704 = vunpack.c.l.b16 %v5600
      %v5705 = vunpack.c.h.b16 %v5600
      %v5706 = vpack.c.b16 %v5692, %v5690
      %v5707 = vpack.c.b16 %v5693, %v5691
      %v5708 = vpack.c.b16 %v5696, %v5694
      %v5709 = vpack.c.b16 %v5697, %v5695
      %v5710 = vpack.c.b16 %v5700, %v5698
      %v5711 = vpack.c.b16 %v5701, %v5699
      %v5712 = vpack.c.b16 %v5704, %v5702
      %v5713 = vpack.c.b16 %v5705, %v5703
      %v5723 = vsel %vm173, %v5645, 0
      %v5726 = vsel %vm173, %v5654, 0
      %v5729 = vsel %vm173, %v5663, 0
      %v5732 = vsel %vm173, %v5672, 0
      %v5735 = vsel %vm173, %v5681, 0
      %5737 = vmatpush.bf16.msra.mxu0 0
      %5738 = vmatpush.bf16.msra.mxu0 0
      %5739 = vmatpush.bf16.msra.mxu0 0
      %5740 = vmatpush.bf16.msra.mxu0 0
      %5741 = vmatpush.bf16.msra.mxu0 %v5712
      %5742 = vmatpush.bf16.msra.mxu0 %v5710
      %5743 = vmatpush.bf16.msra.mxu0 %v5708
      %5744 = vmatpush.bf16.msra.mxu0 %v5706
      %5745 = vmatmul.bf16.gmra.mxu0 %v5723
      %v5746 = vpop.f32.mrf.mxu0
      %v5747 = vadd.f32 0.0, %v5746
      %v5748 = vpop.f32.mrf.mxu0
      %v5749 = vadd.f32 0.0, %v5748
      %5750 = vmatmul.bf16.gmra.mxu0 %v5726
      %v5751 = vpop.f32.mrf.mxu0
      %v5752 = vadd.f32 0.0, %v5751
      %v5753 = vpop.f32.mrf.mxu0
      %v5754 = vadd.f32 0.0, %v5753
      %5755 = vmatmul.bf16.gmra.mxu0 %v5729
      %v5756 = vpop.f32.mrf.mxu0
      %v5757 = vadd.f32 0.0, %v5756
      %v5758 = vpop.f32.mrf.mxu0
      %v5759 = vadd.f32 0.0, %v5758
      %5760 = vmatmul.bf16.gmra.mxu0 %v5732
      %v5761 = vpop.f32.mrf.mxu0
      %v5762 = vadd.f32 0.0, %v5761
      %v5763 = vpop.f32.mrf.mxu0
      %v5764 = vadd.f32 0.0, %v5763
      %5765 = vmatmul.bf16.gmra.mxu0 %v5735
      %v5766 = vpop.f32.mrf.mxu0
      %v5767 = vadd.f32 0.0, %v5766
      %v5768 = vpop.f32.mrf.mxu0
      %v5769 = vadd.f32 0.0, %v5768
      %5770 = vdwg.mxu0
      %5771 = vmatpush.bf16.msra.mxu0 0
      %5772 = vmatpush.bf16.msra.mxu0 0
      %5773 = vmatpush.bf16.msra.mxu0 0
      %5774 = vmatpush.bf16.msra.mxu0 0
      %5775 = vmatpush.bf16.msra.mxu0 %v5713
      %5776 = vmatpush.bf16.msra.mxu0 %v5711
      %5777 = vmatpush.bf16.msra.mxu0 %v5709
      %5778 = vmatpush.bf16.msra.mxu0 %v5707
      %5779 = vmatmul.bf16.gmra.mxu0 %v5723
      %v5780 = vpop.f32.mrf.mxu0
      %v5781 = vadd.f32 0.0, %v5780
      %v5782 = vpop.f32.mrf.mxu0
      %v5783 = vadd.f32 0.0, %v5782
      %5784 = vmatmul.bf16.gmra.mxu0 %v5726
      %v5785 = vpop.f32.mrf.mxu0
      %v5786 = vadd.f32 0.0, %v5785
      %v5787 = vpop.f32.mrf.mxu0
      %v5788 = vadd.f32 0.0, %v5787
      %5789 = vmatmul.bf16.gmra.mxu0 %v5729
      %v5790 = vpop.f32.mrf.mxu0
      %v5791 = vadd.f32 0.0, %v5790
      %v5792 = vpop.f32.mrf.mxu0
      %v5793 = vadd.f32 0.0, %v5792
      %5794 = vmatmul.bf16.gmra.mxu0 %v5732
      %v5795 = vpop.f32.mrf.mxu0
      %v5796 = vadd.f32 0.0, %v5795
      %v5797 = vpop.f32.mrf.mxu0
      %v5798 = vadd.f32 0.0, %v5797
      %5799 = vmatmul.bf16.gmra.mxu0 %v5735
      %v5800 = vpop.f32.mrf.mxu0
      %v5801 = vadd.f32 0.0, %v5800
      %v5802 = vpop.f32.mrf.mxu0
      %v5803 = vadd.f32 0.0, %v5802
      %5804 = vdwg.mxu0
      %v5805 = vadd.f32 %v5572, %v5747
      %v5806 = vadd.f32 %v5573, %v5781
      %v5807 = vadd.f32 %v5574, %v5749
      %v5808 = vadd.f32 %v5575, %v5783
      %v5809 = vadd.f32 %v5576, %v5752
      %v5810 = vadd.f32 %v5577, %v5786
      %v5811 = vadd.f32 %v5578, %v5754
      %v5812 = vadd.f32 %v5579, %v5788
      %v5813 = vadd.f32 %v5580, %v5757
      %v5814 = vadd.f32 %v5581, %v5791
      %v5815 = vadd.f32 %v5582, %v5759
      %v5816 = vadd.f32 %v5583, %v5793
      %v5817 = vadd.f32 %v5584, %v5762
      %v5818 = vadd.f32 %v5585, %v5796
      %v5819 = vadd.f32 %v5586, %v5764
      %v5820 = vadd.f32 %v5587, %v5798
      %v5821 = vadd.f32 %v5588, %v5767
      %v5822 = vadd.f32 %v5589, %v5801
      %v5823 = vadd.f32 %v5590, %v5769
      %v5824 = vadd.f32 %v5591, %v5803
      %5825 = vst [vmem:[#allocation2] sm:$0xff] %v5805
      %5826 = vst.msk [vmem:[#allocation2 + $0x8] sm:$0xff] %vm173, %v5806
      %5827 = vst [vmem:[#allocation2 + $0x10] sm:$0xff] %v5807
      %5828 = vst.msk [vmem:[#allocation2 + $0x18] sm:$0xff] %vm173, %v5808
      %5829 = vst [vmem:[#allocation2 + $0x20] sm:$0xff] %v5809
      %5830 = vst.msk [vmem:[#allocation2 + $0x28] sm:$0xff] %vm173, %v5810
      %5831 = vst [vmem:[#allocation2 + $0x30] sm:$0xff] %v5811
      %5832 = vst.msk [vmem:[#allocation2 + $0x38] sm:$0xff] %vm173, %v5812
      %5833 = vst [vmem:[#allocation2 + $0x40] sm:$0xff] %v5813
      %5834 = vst.msk [vmem:[#allocation2 + $0x48] sm:$0xff] %vm173, %v5814
      %5835 = vst [vmem:[#allocation2 + $0x50] sm:$0xff] %v5815
      %5836 = vst.msk [vmem:[#allocation2 + $0x58] sm:$0xff] %vm173, %v5816
      %5837 = vst [vmem:[#allocation2 + $0x60] sm:$0xff] %v5817
      %5838 = vst.msk [vmem:[#allocation2 + $0x68] sm:$0xff] %vm173, %v5818
      %5839 = vst [vmem:[#allocation2 + $0x70] sm:$0xff] %v5819
      %5840 = vst.msk [vmem:[#allocation2 + $0x78] sm:$0xff] %vm173, %v5820
      %5841 = vst [vmem:[#allocation2 + $0x80] sm:$0xff] %v5821
      %5842 = vst.msk [vmem:[#allocation2 + $0x88] sm:$0xff] %vm173, %v5822
      %5843 = vst [vmem:[#allocation2 + $0x90] sm:$0x1f] %v5823
      %5844 = vst.msk [vmem:[#allocation2 + $0x98] sm:$0x1f] %vm192, %v5824
      %v5845 = vld [vmem:[%s165 + $0x14] sm:$0x8]
      %v5846 = vld [vmem:[%s165 + $0x18] sm:$0xf]
      %v5847 = vld [vmem:[%s165 + $0x1c] sm:$0xf]
      %v5848 = vld [vmem:[%s165 + $0x20] sm:$0xf]
      %v5849 = vld [vmem:[%s165 + $0x24] sm:$0xf]
      %v5850 = vld [vmem:[%s165 + $0x28] sm:$0xf]
      %v5851 = vld [vmem:[%s165 + $0x2c] sm:$0xf]
      %v5852 = vld [vmem:[%s165 + $0x30] sm:$0xf]
      %v5853 = vld [vmem:[%s165 + $0x34] sm:$0xf]
      %v5854 = vld [vmem:[%s165 + $0x38] sm:$0xf]
      %v5855 = vld [vmem:[%s165 + $0x3c] sm:$0x3]
      %v5856 = vld [vmem:[#allocation2] sm:$0xff]
      %v5857 = vld [vmem:[#allocation2 + $0x8] sm:$0xff]
      %v5858 = vld [vmem:[#allocation2 + $0x10] sm:$0xff]
      %v5859 = vld [vmem:[#allocation2 + $0x18] sm:$0xff]
      %v5860 = vld [vmem:[#allocation2 + $0x20] sm:$0xff]
      %v5861 = vld [vmem:[#allocation2 + $0x28] sm:$0xff]
      %v5862 = vld [vmem:[#allocation2 + $0x30] sm:$0xff]
      %v5863 = vld [vmem:[#allocation2 + $0x38] sm:$0xff]
      %v5864 = vld [vmem:[#allocation2 + $0x40] sm:$0xff]
      %v5865 = vld [vmem:[#allocation2 + $0x48] sm:$0xff]
      %v5866 = vld [vmem:[#allocation2 + $0x50] sm:$0xff]
      %v5867 = vld [vmem:[#allocation2 + $0x58] sm:$0xff]
      %v5868 = vld [vmem:[#allocation2 + $0x60] sm:$0xff]
      %v5869 = vld [vmem:[#allocation2 + $0x68] sm:$0xff]
      %v5870 = vld [vmem:[#allocation2 + $0x70] sm:$0xff]
      %v5871 = vld [vmem:[#allocation2 + $0x78] sm:$0xff]
      %v5872 = vld [vmem:[#allocation2 + $0x80] sm:$0xff]
      %v5873 = vld [vmem:[#allocation2 + $0x88] sm:$0xff]
      %v5874 = vld [vmem:[#allocation2 + $0x90] sm:$0x1f]
      %v5875 = vld [vmem:[#allocation2 + $0x98] sm:$0x1f]
      %s5876 = scalar_lea.vmem %s1, 1408
      %v5877 = vld [vmem:[%s5876] sm:$0xff]
      %v5878 = vld [vmem:[%s5876 + $0x8] sm:$0xff]
      %v5879 = vld [vmem:[%s5876 + $0x10] sm:$0xff]
      %v5880 = vld [vmem:[%s5876 + $0x18] sm:$0xff]
      %v5881 = vld [vmem:[%s5876 + $0x20] sm:$0xff]
      %v5882 = vld [vmem:[%s5876 + $0x28] sm:$0xff]
      %v5883 = vld [vmem:[%s5876 + $0x30] sm:$0xff]
      %v5884 = vld [vmem:[%s5876 + $0x38] sm:$0xff]
      %v5896 = vunpack.c.l.b16 %v5845
      %v5897 = vunpack.c.l.b16 %v5846
      %v5898 = vunpack.c.l.b16 %v5847
      %v5899 = vunpack.c.l.b16 %v5848
      %v5900 = vunpack.c.l.b16 %v5849
      %v5901 = vunpack.c.l.b16 %v5850
      %v5902 = vunpack.c.l.b16 %v5851
      %v5903 = vunpack.c.l.b16 %v5852
      %v5904 = vunpack.c.l.b16 %v5853
      %v5905 = vunpack.c.l.b16 %v5854
      %v5906 = vunpack.c.l.b16 %v5855
      %v5907 = vpack.c.b16 %v5897, %v5896
      %v5908 = vpack.c.b16 %v5899, %v5898
      %v5909 = vpack.c.b16 %v5901, %v5900
      %v5910 = vpack.c.b16 %v5903, %v5902
      %v5911 = vpack.c.b16 %v5905, %v5904
      %v5912 = vpack.c.b16 %v5906, %v5906
      %v5913 = vrot.slane %v5907, 3
      %v5914 = vrot.slane %v5908, 3
      %v5915 = vsel %vm2305, %v5913, %v5914
      %v5916 = vrot.slane %v5909, 3
      %v5917 = vsel %vm2305, %v5914, %v5916
      %v5918 = vrot.slane %v5910, 3
      %v5919 = vsel %vm2305, %v5916, %v5918
      %v5920 = vrot.slane %v5911, 3
      %v5921 = vsel %vm2305, %v5918, %v5920
      %v5922 = vrot.slane %v5912, 3
      %v5923 = vsel %vm2305, %v5920, %v5922
      %v5932 = vunpack.c.l.b16 %v5877
      %v5933 = vunpack.c.h.b16 %v5877
      %v5934 = vunpack.c.l.b16 %v5878
      %v5935 = vunpack.c.h.b16 %v5878
      %v5936 = vunpack.c.l.b16 %v5879
      %v5937 = vunpack.c.h.b16 %v5879
      %v5938 = vunpack.c.l.b16 %v5880
      %v5939 = vunpack.c.h.b16 %v5880
      %v5940 = vunpack.c.l.b16 %v5881
      %v5941 = vunpack.c.h.b16 %v5881
      %v5942 = vunpack.c.l.b16 %v5882
      %v5943 = vunpack.c.h.b16 %v5882
      %v5944 = vunpack.c.l.b16 %v5883
      %v5945 = vunpack.c.h.b16 %v5883
      %v5946 = vunpack.c.l.b16 %v5884
      %v5947 = vunpack.c.h.b16 %v5884
      %v5948 = vpack.c.b16 %v5934, %v5932
      %v5949 = vpack.c.b16 %v5935, %v5933
      %v5950 = vpack.c.b16 %v5938, %v5936
      %v5951 = vpack.c.b16 %v5939, %v5937
      %v5952 = vpack.c.b16 %v5942, %v5940
      %v5953 = vpack.c.b16 %v5943, %v5941
      %v5954 = vpack.c.b16 %v5946, %v5944
      %v5955 = vpack.c.b16 %v5947, %v5945
      %v5965 = vsel %vm173, %v5915, 0
      %v5968 = vsel %vm173, %v5917, 0
      %v5971 = vsel %vm173, %v5919, 0
      %v5974 = vsel %vm173, %v5921, 0
      %v5977 = vsel %vm173, %v5923, 0
      %5979 = vmatpush.bf16.msra.mxu0 0
      %5980 = vmatpush.bf16.msra.mxu0 0
      %5981 = vmatpush.bf16.msra.mxu0 0
      %5982 = vmatpush.bf16.msra.mxu0 0
      %5983 = vmatpush.bf16.msra.mxu0 %v5954
      %5984 = vmatpush.bf16.msra.mxu0 %v5952
      %5985 = vmatpush.bf16.msra.mxu0 %v5950
      %5986 = vmatpush.bf16.msra.mxu0 %v5948
      %5987 = vmatmul.bf16.gmra.mxu0 %v5965
      %v5988 = vpop.f32.mrf.mxu0
      %v5989 = vadd.f32 0.0, %v5988
      %v5990 = vpop.f32.mrf.mxu0
      %v5991 = vadd.f32 0.0, %v5990
      %5992 = vmatmul.bf16.gmra.mxu0 %v5968
      %v5993 = vpop.f32.mrf.mxu0
      %v5994 = vadd.f32 0.0, %v5993
      %v5995 = vpop.f32.mrf.mxu0
      %v5996 = vadd.f32 0.0, %v5995
      %5997 = vmatmul.bf16.gmra.mxu0 %v5971
      %v5998 = vpop.f32.mrf.mxu0
      %v5999 = vadd.f32 0.0, %v5998
      %v6000 = vpop.f32.mrf.mxu0
      %v6001 = vadd.f32 0.0, %v6000
      %6002 = vmatmul.bf16.gmra.mxu0 %v5974
      %v6003 = vpop.f32.mrf.mxu0
      %v6004 = vadd.f32 0.0, %v6003
      %v6005 = vpop.f32.mrf.mxu0
      %v6006 = vadd.f32 0.0, %v6005
      %6007 = vmatmul.bf16.gmra.mxu0 %v5977
      %v6008 = vpop.f32.mrf.mxu0
      %v6009 = vadd.f32 0.0, %v6008
      %v6010 = vpop.f32.mrf.mxu0
      %v6011 = vadd.f32 0.0, %v6010
      %6012 = vdwg.mxu0
      %6013 = vmatpush.bf16.msra.mxu0 0
      %6014 = vmatpush.bf16.msra.mxu0 0
      %6015 = vmatpush.bf16.msra.mxu0 0
      %6016 = vmatpush.bf16.msra.mxu0 0
      %6017 = vmatpush.bf16.msra.mxu0 %v5955
      %6018 = vmatpush.bf16.msra.mxu0 %v5953
      %6019 = vmatpush.bf16.msra.mxu0 %v5951
      %6020 = vmatpush.bf16.msra.mxu0 %v5949
      %6021 = vmatmul.bf16.gmra.mxu0 %v5965
      %v6022 = vpop.f32.mrf.mxu0
      %v6023 = vadd.f32 0.0, %v6022
      %v6024 = vpop.f32.mrf.mxu0
      %v6025 = vadd.f32 0.0, %v6024
      %6026 = vmatmul.bf16.gmra.mxu0 %v5968
      %v6027 = vpop.f32.mrf.mxu0
      %v6028 = vadd.f32 0.0, %v6027
      %v6029 = vpop.f32.mrf.mxu0
      %v6030 = vadd.f32 0.0, %v6029
      %6031 = vmatmul.bf16.gmra.mxu0 %v5971
      %v6032 = vpop.f32.mrf.mxu0
      %v6033 = vadd.f32 0.0, %v6032
      %v6034 = vpop.f32.mrf.mxu0
      %v6035 = vadd.f32 0.0, %v6034
      %6036 = vmatmul.bf16.gmra.mxu0 %v5974
      %v6037 = vpop.f32.mrf.mxu0
      %v6038 = vadd.f32 0.0, %v6037
      %v6039 = vpop.f32.mrf.mxu0
      %v6040 = vadd.f32 0.0, %v6039
      %6041 = vmatmul.bf16.gmra.mxu0 %v5977
      %v6042 = vpop.f32.mrf.mxu0
      %v6043 = vadd.f32 0.0, %v6042
      %v6044 = vpop.f32.mrf.mxu0
      %v6045 = vadd.f32 0.0, %v6044
      %6046 = vdwg.mxu0
      %v6047 = vadd.f32 %v5856, %v5989
      %v6048 = vadd.f32 %v5857, %v6023
      %v6049 = vadd.f32 %v5858, %v5991
      %v6050 = vadd.f32 %v5859, %v6025
      %v6051 = vadd.f32 %v5860, %v5994
      %v6052 = vadd.f32 %v5861, %v6028
      %v6053 = vadd.f32 %v5862, %v5996
      %v6054 = vadd.f32 %v5863, %v6030
      %v6055 = vadd.f32 %v5864, %v5999
      %v6056 = vadd.f32 %v5865, %v6033
      %v6057 = vadd.f32 %v5866, %v6001
      %v6058 = vadd.f32 %v5867, %v6035
      %v6059 = vadd.f32 %v5868, %v6004
      %v6060 = vadd.f32 %v5869, %v6038
      %v6061 = vadd.f32 %v5870, %v6006
      %v6062 = vadd.f32 %v5871, %v6040
      %v6063 = vadd.f32 %v5872, %v6009
      %v6064 = vadd.f32 %v5873, %v6043
      %v6065 = vadd.f32 %v5874, %v6011
      %v6066 = vadd.f32 %v5875, %v6045
      %6067 = vst [vmem:[#allocation2] sm:$0xff] %v6047
      %6068 = vst.msk [vmem:[#allocation2 + $0x8] sm:$0xff] %vm173, %v6048
      %6069 = vst [vmem:[#allocation2 + $0x10] sm:$0xff] %v6049
      %6070 = vst.msk [vmem:[#allocation2 + $0x18] sm:$0xff] %vm173, %v6050
      %6071 = vst [vmem:[#allocation2 + $0x20] sm:$0xff] %v6051
      %6072 = vst.msk [vmem:[#allocation2 + $0x28] sm:$0xff] %vm173, %v6052
      %6073 = vst [vmem:[#allocation2 + $0x30] sm:$0xff] %v6053
      %6074 = vst.msk [vmem:[#allocation2 + $0x38] sm:$0xff] %vm173, %v6054
      %6075 = vst [vmem:[#allocation2 + $0x40] sm:$0xff] %v6055
      %6076 = vst.msk [vmem:[#allocation2 + $0x48] sm:$0xff] %vm173, %v6056
      %6077 = vst [vmem:[#allocation2 + $0x50] sm:$0xff] %v6057
      %6078 = vst.msk [vmem:[#allocation2 + $0x58] sm:$0xff] %vm173, %v6058
      %6079 = vst [vmem:[#allocation2 + $0x60] sm:$0xff] %v6059
      %6080 = vst.msk [vmem:[#allocation2 + $0x68] sm:$0xff] %vm173, %v6060
      %6081 = vst [vmem:[#allocation2 + $0x70] sm:$0xff] %v6061
      %6082 = vst.msk [vmem:[#allocation2 + $0x78] sm:$0xff] %vm173, %v6062
      %6083 = vst [vmem:[#allocation2 + $0x80] sm:$0xff] %v6063
      %6084 = vst.msk [vmem:[#allocation2 + $0x88] sm:$0xff] %vm173, %v6064
      %6085 = vst [vmem:[#allocation2 + $0x90] sm:$0x1f] %v6065
      %6086 = vst.msk [vmem:[#allocation2 + $0x98] sm:$0x1f] %vm192, %v6066
      %v6087 = vld [vmem:[%s165 + $0x14] sm:$0x8]
      %v6088 = vld [vmem:[%s165 + $0x18] sm:$0xf]
      %v6089 = vld [vmem:[%s165 + $0x1c] sm:$0xf]
      %v6090 = vld [vmem:[%s165 + $0x20] sm:$0xf]
      %v6091 = vld [vmem:[%s165 + $0x24] sm:$0xf]
      %v6092 = vld [vmem:[%s165 + $0x28] sm:$0xf]
      %v6093 = vld [vmem:[%s165 + $0x2c] sm:$0xf]
      %v6094 = vld [vmem:[%s165 + $0x30] sm:$0xf]
      %v6095 = vld [vmem:[%s165 + $0x34] sm:$0xf]
      %v6096 = vld [vmem:[%s165 + $0x38] sm:$0xf]
      %v6097 = vld [vmem:[%s165 + $0x3c] sm:$0x3]
      %v6098 = vld [vmem:[#allocation2] sm:$0xff]
      %v6099 = vld [vmem:[#allocation2 + $0x8] sm:$0xff]
      %v6100 = vld [vmem:[#allocation2 + $0x10] sm:$0xff]
      %v6101 = vld [vmem:[#allocation2 + $0x18] sm:$0xff]
      %v6102 = vld [vmem:[#allocation2 + $0x20] sm:$0xff]
      %v6103 = vld [vmem:[#allocation2 + $0x28] sm:$0xff]
      %v6104 = vld [vmem:[#allocation2 + $0x30] sm:$0xff]
      %v6105 = vld [vmem:[#allocation2 + $0x38] sm:$0xff]
      %v6106 = vld [vmem:[#allocation2 + $0x40] sm:$0xff]
      %v6107 = vld [vmem:[#allocation2 + $0x48] sm:$0xff]
      %v6108 = vld [vmem:[#allocation2 + $0x50] sm:$0xff]
      %v6109 = vld [vmem:[#allocation2 + $0x58] sm:$0xff]
      %v6110 = vld [vmem:[#allocation2 + $0x60] sm:$0xff]
      %v6111 = vld [vmem:[#allocation2 + $0x68] sm:$0xff]
      %v6112 = vld [vmem:[#allocation2 + $0x70] sm:$0xff]
      %v6113 = vld [vmem:[#allocation2 + $0x78] sm:$0xff]
      %v6114 = vld [vmem:[#allocation2 + $0x80] sm:$0xff]
      %v6115 = vld [vmem:[#allocation2 + $0x88] sm:$0xff]
      %v6116 = vld [vmem:[#allocation2 + $0x90] sm:$0x1f]
      %v6117 = vld [vmem:[#allocation2 + $0x98] sm:$0x1f]
      %s6118 = scalar_lea.vmem %s1, 1472
      %v6119 = vld [vmem:[%s6118] sm:$0xff]
      %v6120 = vld [vmem:[%s6118 + $0x8] sm:$0xff]
      %v6121 = vld [vmem:[%s6118 + $0x10] sm:$0xff]
      %v6122 = vld [vmem:[%s6118 + $0x18] sm:$0xff]
      %v6123 = vld [vmem:[%s6118 + $0x20] sm:$0xff]
      %v6124 = vld [vmem:[%s6118 + $0x28] sm:$0xff]
      %v6125 = vld [vmem:[%s6118 + $0x30] sm:$0xff]
      %v6126 = vld [vmem:[%s6118 + $0x38] sm:$0xff]
      %v6138 = vunpack.c.l.b16 %v6087
      %v6139 = vunpack.c.l.b16 %v6088
      %v6140 = vunpack.c.l.b16 %v6089
      %v6141 = vunpack.c.l.b16 %v6090
      %v6142 = vunpack.c.l.b16 %v6091
      %v6143 = vunpack.c.l.b16 %v6092
      %v6144 = vunpack.c.l.b16 %v6093
      %v6145 = vunpack.c.l.b16 %v6094
      %v6146 = vunpack.c.l.b16 %v6095
      %v6147 = vunpack.c.l.b16 %v6096
      %v6148 = vunpack.c.l.b16 %v6097
      %v6149 = vpack.c.b16 %v6139, %v6138
      %v6150 = vpack.c.b16 %v6141, %v6140
      %v6151 = vpack.c.b16 %v6143, %v6142
      %v6152 = vpack.c.b16 %v6145, %v6144
      %v6153 = vpack.c.b16 %v6147, %v6146
      %v6154 = vpack.c.b16 %v6148, %v6148
      %v6156 = vshrl.u32 %v6149, 16
      %v6158 = vrot.slane %v6156, 3
      %v6159 = vshll.u32 %v6149, 16
      %v6161 = vrot.slane %v6159, 4
      %v6162 = vor.u32 %v6158, %v6161
      %v6164 = vshrl.u32 %v6150, 16
      %v6166 = vrot.slane %v6164, 3
      %v6167 = vshll.u32 %v6150, 16
      %v6169 = vrot.slane %v6167, 4
      %v6170 = vor.u32 %v6166, %v6169
      %v6171 = vsel %vm2548, %v6162, %v6170
      %v6173 = vshrl.u32 %v6151, 16
      %v6175 = vrot.slane %v6173, 3
      %v6176 = vshll.u32 %v6151, 16
      %v6178 = vrot.slane %v6176, 4
      %v6179 = vor.u32 %v6175, %v6178
      %v6180 = vsel %vm2548, %v6170, %v6179
      %v6182 = vshrl.u32 %v6152, 16
      %v6184 = vrot.slane %v6182, 3
      %v6185 = vshll.u32 %v6152, 16
      %v6187 = vrot.slane %v6185, 4
      %v6188 = vor.u32 %v6184, %v6187
      %v6189 = vsel %vm2548, %v6179, %v6188
      %v6191 = vshrl.u32 %v6153, 16
      %v6193 = vrot.slane %v6191, 3
      %v6194 = vshll.u32 %v6153, 16
      %v6196 = vrot.slane %v6194, 4
      %v6197 = vor.u32 %v6193, %v6196
      %v6198 = vsel %vm2548, %v6188, %v6197
      %v6200 = vshrl.u32 %v6154, 16
      %v6202 = vrot.slane %v6200, 3
      %v6203 = vshll.u32 %v6154, 16
      %v6205 = vrot.slane %v6203, 4
      %v6206 = vor.u32 %v6202, %v6205
      %v6207 = vsel %vm2548, %v6197, %v6206
      %v6216 = vunpack.c.l.b16 %v6119
      %v6217 = vunpack.c.h.b16 %v6119
      %v6218 = vunpack.c.l.b16 %v6120
      %v6219 = vunpack.c.h.b16 %v6120
      %v6220 = vunpack.c.l.b16 %v6121
      %v6221 = vunpack.c.h.b16 %v6121
      %v6222 = vunpack.c.l.b16 %v6122
      %v6223 = vunpack.c.h.b16 %v6122
      %v6224 = vunpack.c.l.b16 %v6123
      %v6225 = vunpack.c.h.b16 %v6123
      %v6226 = vunpack.c.l.b16 %v6124
      %v6227 = vunpack.c.h.b16 %v6124
      %v6228 = vunpack.c.l.b16 %v6125
      %v6229 = vunpack.c.h.b16 %v6125
      %v6230 = vunpack.c.l.b16 %v6126
      %v6231 = vunpack.c.h.b16 %v6126
      %v6232 = vpack.c.b16 %v6218, %v6216
      %v6233 = vpack.c.b16 %v6219, %v6217
      %v6234 = vpack.c.b16 %v6222, %v6220
      %v6235 = vpack.c.b16 %v6223, %v6221
      %v6236 = vpack.c.b16 %v6226, %v6224
      %v6237 = vpack.c.b16 %v6227, %v6225
      %v6238 = vpack.c.b16 %v6230, %v6228
      %v6239 = vpack.c.b16 %v6231, %v6229
      %v6249 = vsel %vm173, %v6171, 0
      %v6252 = vsel %vm173, %v6180, 0
      %v6255 = vsel %vm173, %v6189, 0
      %v6258 = vsel %vm173, %v6198, 0
      %v6261 = vsel %vm173, %v6207, 0
      %6263 = vmatpush.bf16.msra.mxu0 0
      %6264 = vmatpush.bf16.msra.mxu0 0
      %6265 = vmatpush.bf16.msra.mxu0 0
      %6266 = vmatpush.bf16.msra.mxu0 0
      %6267 = vmatpush.bf16.msra.mxu0 %v6238
      %6268 = vmatpush.bf16.msra.mxu0 %v6236
      %6269 = vmatpush.bf16.msra.mxu0 %v6234
      %6270 = vmatpush.bf16.msra.mxu0 %v6232
      %6271 = vmatmul.bf16.gmra.mxu0 %v6249
      %v6272 = vpop.f32.mrf.mxu0
      %v6273 = vadd.f32 0.0, %v6272
      %v6274 = vpop.f32.mrf.mxu0
      %v6275 = vadd.f32 0.0, %v6274
      %6276 = vmatmul.bf16.gmra.mxu0 %v6252
      %v6277 = vpop.f32.mrf.mxu0
      %v6278 = vadd.f32 0.0, %v6277
      %v6279 = vpop.f32.mrf.mxu0
      %v6280 = vadd.f32 0.0, %v6279
      %6281 = vmatmul.bf16.gmra.mxu0 %v6255
      %v6282 = vpop.f32.mrf.mxu0
      %v6283 = vadd.f32 0.0, %v6282
      %v6284 = vpop.f32.mrf.mxu0
      %v6285 = vadd.f32 0.0, %v6284
      %6286 = vmatmul.bf16.gmra.mxu0 %v6258
      %v6287 = vpop.f32.mrf.mxu0
      %v6288 = vadd.f32 0.0, %v6287
      %v6289 = vpop.f32.mrf.mxu0
      %v6290 = vadd.f32 0.0, %v6289
      %6291 = vmatmul.bf16.gmra.mxu0 %v6261
      %v6292 = vpop.f32.mrf.mxu0
      %v6293 = vadd.f32 0.0, %v6292
      %v6294 = vpop.f32.mrf.mxu0
      %v6295 = vadd.f32 0.0, %v6294
      %6296 = vdwg.mxu0
      %6297 = vmatpush.bf16.msra.mxu0 0
      %6298 = vmatpush.bf16.msra.mxu0 0
      %6299 = vmatpush.bf16.msra.mxu0 0
      %6300 = vmatpush.bf16.msra.mxu0 0
      %6301 = vmatpush.bf16.msra.mxu0 %v6239
      %6302 = vmatpush.bf16.msra.mxu0 %v6237
      %6303 = vmatpush.bf16.msra.mxu0 %v6235
      %6304 = vmatpush.bf16.msra.mxu0 %v6233
      %6305 = vmatmul.bf16.gmra.mxu0 %v6249
      %v6306 = vpop.f32.mrf.mxu0
      %v6307 = vadd.f32 0.0, %v6306
      %v6308 = vpop.f32.mrf.mxu0
      %v6309 = vadd.f32 0.0, %v6308
      %6310 = vmatmul.bf16.gmra.mxu0 %v6252
      %v6311 = vpop.f32.mrf.mxu0
      %v6312 = vadd.f32 0.0, %v6311
      %v6313 = vpop.f32.mrf.mxu0
      %v6314 = vadd.f32 0.0, %v6313
      %6315 = vmatmul.bf16.gmra.mxu0 %v6255
      %v6316 = vpop.f32.mrf.mxu0
      %v6317 = vadd.f32 0.0, %v6316
      %v6318 = vpop.f32.mrf.mxu0
      %v6319 = vadd.f32 0.0, %v6318
      %6320 = vmatmul.bf16.gmra.mxu0 %v6258
      %v6321 = vpop.f32.mrf.mxu0
      %v6322 = vadd.f32 0.0, %v6321
      %v6323 = vpop.f32.mrf.mxu0
      %v6324 = vadd.f32 0.0, %v6323
      %6325 = vmatmul.bf16.gmra.mxu0 %v6261
      %v6326 = vpop.f32.mrf.mxu0
      %v6327 = vadd.f32 0.0, %v6326
      %v6328 = vpop.f32.mrf.mxu0
      %v6329 = vadd.f32 0.0, %v6328
      %6330 = vdwg.mxu0
      %v6331 = vadd.f32 %v6098, %v6273
      %v6332 = vadd.f32 %v6099, %v6307
      %v6333 = vadd.f32 %v6100, %v6275
      %v6334 = vadd.f32 %v6101, %v6309
      %v6335 = vadd.f32 %v6102, %v6278
      %v6336 = vadd.f32 %v6103, %v6312
      %v6337 = vadd.f32 %v6104, %v6280
      %v6338 = vadd.f32 %v6105, %v6314
      %v6339 = vadd.f32 %v6106, %v6283
      %v6340 = vadd.f32 %v6107, %v6317
      %v6341 = vadd.f32 %v6108, %v6285
      %v6342 = vadd.f32 %v6109, %v6319
      %v6343 = vadd.f32 %v6110, %v6288
      %v6344 = vadd.f32 %v6111, %v6322
      %v6345 = vadd.f32 %v6112, %v6290
      %v6346 = vadd.f32 %v6113, %v6324
      %v6347 = vadd.f32 %v6114, %v6293
      %v6348 = vadd.f32 %v6115, %v6327
      %v6349 = vadd.f32 %v6116, %v6295
      %v6350 = vadd.f32 %v6117, %v6329
      %6351 = vst [vmem:[#allocation2] sm:$0xff] %v6331
      %6352 = vst.msk [vmem:[#allocation2 + $0x8] sm:$0xff] %vm173, %v6332
      %6353 = vst [vmem:[#allocation2 + $0x10] sm:$0xff] %v6333
      %6354 = vst.msk [vmem:[#allocation2 + $0x18] sm:$0xff] %vm173, %v6334
      %6355 = vst [vmem:[#allocation2 + $0x20] sm:$0xff] %v6335
      %6356 = vst.msk [vmem:[#allocation2 + $0x28] sm:$0xff] %vm173, %v6336
      %6357 = vst [vmem:[#allocation2 + $0x30] sm:$0xff] %v6337
      %6358 = vst.msk [vmem:[#allocation2 + $0x38] sm:$0xff] %vm173, %v6338
      %6359 = vst [vmem:[#allocation2 + $0x40] sm:$0xff] %v6339
      %6360 = vst.msk [vmem:[#allocation2 + $0x48] sm:$0xff] %vm173, %v6340
      %6361 = vst [vmem:[#allocation2 + $0x50] sm:$0xff] %v6341
      %6362 = vst.msk [vmem:[#allocation2 + $0x58] sm:$0xff] %vm173, %v6342
      %6363 = vst [vmem:[#allocation2 + $0x60] sm:$0xff] %v6343
      %6364 = vst.msk [vmem:[#allocation2 + $0x68] sm:$0xff] %vm173, %v6344
      %6365 = vst [vmem:[#allocation2 + $0x70] sm:$0xff] %v6345
      %6366 = vst.msk [vmem:[#allocation2 + $0x78] sm:$0xff] %vm173, %v6346
      %6367 = vst [vmem:[#allocation2 + $0x80] sm:$0xff] %v6347
      %6368 = vst.msk [vmem:[#allocation2 + $0x88] sm:$0xff] %vm173, %v6348
      %6369 = vst [vmem:[#allocation2 + $0x90] sm:$0x1f] %v6349
      %6370 = vst.msk [vmem:[#allocation2 + $0x98] sm:$0x1f] %vm192, %v6350
      %v6371 = vld [vmem:[%s165 + $0x18] sm:$0xf]
      %v6372 = vld [vmem:[%s165 + $0x1c] sm:$0xf]
      %v6373 = vld [vmem:[%s165 + $0x20] sm:$0xf]
      %v6374 = vld [vmem:[%s165 + $0x24] sm:$0xf]
      %v6375 = vld [vmem:[%s165 + $0x28] sm:$0xf]
      %v6376 = vld [vmem:[%s165 + $0x2c] sm:$0xf]
      %v6377 = vld [vmem:[%s165 + $0x30] sm:$0xf]
      %v6378 = vld [vmem:[%s165 + $0x34] sm:$0xf]
      %v6379 = vld [vmem:[%s165 + $0x38] sm:$0xf]
      %v6380 = vld [vmem:[%s165 + $0x3c] sm:$0x7]
      %v6381 = vld [vmem:[#allocation2] sm:$0xff]
      %v6382 = vld [vmem:[#allocation2 + $0x8] sm:$0xff]
      %v6383 = vld [vmem:[#allocation2 + $0x10] sm:$0xff]
      %v6384 = vld [vmem:[#allocation2 + $0x18] sm:$0xff]
      %v6385 = vld [vmem:[#allocation2 + $0x20] sm:$0xff]
      %v6386 = vld [vmem:[#allocation2 + $0x28] sm:$0xff]
      %v6387 = vld [vmem:[#allocation2 + $0x30] sm:$0xff]
      %v6388 = vld [vmem:[#allocation2 + $0x38] sm:$0xff]
      %v6389 = vld [vmem:[#allocation2 + $0x40] sm:$0xff]
      %v6390 = vld [vmem:[#allocation2 + $0x48] sm:$0xff]
      %v6391 = vld [vmem:[#allocation2 + $0x50] sm:$0xff]
      %v6392 = vld [vmem:[#allocation2 + $0x58] sm:$0xff]
      %v6393 = vld [vmem:[#allocation2 + $0x60] sm:$0xff]
      %v6394 = vld [vmem:[#allocation2 + $0x68] sm:$0xff]
      %v6395 = vld [vmem:[#allocation2 + $0x70] sm:$0xff]
      %v6396 = vld [vmem:[#allocation2 + $0x78] sm:$0xff]
      %v6397 = vld [vmem:[#allocation2 + $0x80] sm:$0xff]
      %v6398 = vld [vmem:[#allocation2 + $0x88] sm:$0xff]
      %v6399 = vld [vmem:[#allocation2 + $0x90] sm:$0x1f]
      %v6400 = vld [vmem:[#allocation2 + $0x98] sm:$0x1f]
      %s6401 = scalar_lea.vmem %s1, 1536
      %v6402 = vld [vmem:[%s6401] sm:$0xff]
      %v6403 = vld [vmem:[%s6401 + $0x8] sm:$0xff]
      %v6404 = vld [vmem:[%s6401 + $0x10] sm:$0xff]
      %v6405 = vld [vmem:[%s6401 + $0x18] sm:$0xff]
      %v6406 = vld [vmem:[%s6401 + $0x20] sm:$0xff]
      %v6407 = vld [vmem:[%s6401 + $0x28] sm:$0xff]
      %v6408 = vld [vmem:[%s6401 + $0x30] sm:$0xff]
      %v6409 = vld [vmem:[%s6401 + $0x38] sm:$0xff]
      %v6420 = vunpack.c.l.b16 %v6371
      %v6421 = vunpack.c.l.b16 %v6372
      %v6422 = vunpack.c.l.b16 %v6373
      %v6423 = vunpack.c.l.b16 %v6374
      %v6424 = vunpack.c.l.b16 %v6375
      %v6425 = vunpack.c.l.b16 %v6376
      %v6426 = vunpack.c.l.b16 %v6377
      %v6427 = vunpack.c.l.b16 %v6378
      %v6428 = vunpack.c.l.b16 %v6379
      %v6429 = vunpack.c.l.b16 %v6380
      %v6430 = vpack.c.b16 %v6421, %v6420
      %v6431 = vpack.c.b16 %v6423, %v6422
      %v6432 = vpack.c.b16 %v6425, %v6424
      %v6433 = vpack.c.b16 %v6427, %v6426
      %v6434 = vpack.c.b16 %v6429, %v6428
      %v6443 = vunpack.c.l.b16 %v6402
      %v6444 = vunpack.c.h.b16 %v6402
      %v6445 = vunpack.c.l.b16 %v6403
      %v6446 = vunpack.c.h.b16 %v6403
      %v6447 = vunpack.c.l.b16 %v6404
      %v6448 = vunpack.c.h.b16 %v6404
      %v6449 = vunpack.c.l.b16 %v6405
      %v6450 = vunpack.c.h.b16 %v6405
      %v6451 = vunpack.c.l.b16 %v6406
      %v6452 = vunpack.c.h.b16 %v6406
      %v6453 = vunpack.c.l.b16 %v6407
      %v6454 = vunpack.c.h.b16 %v6407
      %v6455 = vunpack.c.l.b16 %v6408
      %v6456 = vunpack.c.h.b16 %v6408
      %v6457 = vunpack.c.l.b16 %v6409
      %v6458 = vunpack.c.h.b16 %v6409
      %v6459 = vpack.c.b16 %v6445, %v6443
      %v6460 = vpack.c.b16 %v6446, %v6444
      %v6461 = vpack.c.b16 %v6449, %v6447
      %v6462 = vpack.c.b16 %v6450, %v6448
      %v6463 = vpack.c.b16 %v6453, %v6451
      %v6464 = vpack.c.b16 %v6454, %v6452
      %v6465 = vpack.c.b16 %v6457, %v6455
      %v6466 = vpack.c.b16 %v6458, %v6456
      %v6476 = vsel %vm173, %v6430, 0
      %v6479 = vsel %vm173, %v6431, 0
      %v6482 = vsel %vm173, %v6432, 0
      %v6485 = vsel %vm173, %v6433, 0
      %v6488 = vsel %vm173, %v6434, 0
      %6490 = vmatpush.bf16.msra.mxu0 0
      %6491 = vmatpush.bf16.msra.mxu0 0
      %6492 = vmatpush.bf16.msra.mxu0 0
      %6493 = vmatpush.bf16.msra.mxu0 0
      %6494 = vmatpush.bf16.msra.mxu0 %v6465
      %6495 = vmatpush.bf16.msra.mxu0 %v6463
      %6496 = vmatpush.bf16.msra.mxu0 %v6461
      %6497 = vmatpush.bf16.msra.mxu0 %v6459
      %6498 = vmatmul.bf16.gmra.mxu0 %v6476
      %v6499 = vpop.f32.mrf.mxu0
      %v6500 = vadd.f32 0.0, %v6499
      %v6501 = vpop.f32.mrf.mxu0
      %v6502 = vadd.f32 0.0, %v6501
      %6503 = vmatmul.bf16.gmra.mxu0 %v6479
      %v6504 = vpop.f32.mrf.mxu0
      %v6505 = vadd.f32 0.0, %v6504
      %v6506 = vpop.f32.mrf.mxu0
      %v6507 = vadd.f32 0.0, %v6506
      %6508 = vmatmul.bf16.gmra.mxu0 %v6482
      %v6509 = vpop.f32.mrf.mxu0
      %v6510 = vadd.f32 0.0, %v6509
      %v6511 = vpop.f32.mrf.mxu0
      %v6512 = vadd.f32 0.0, %v6511
      %6513 = vmatmul.bf16.gmra.mxu0 %v6485
      %v6514 = vpop.f32.mrf.mxu0
      %v6515 = vadd.f32 0.0, %v6514
      %v6516 = vpop.f32.mrf.mxu0
      %v6517 = vadd.f32 0.0, %v6516
      %6518 = vmatmul.bf16.gmra.mxu0 %v6488
      %v6519 = vpop.f32.mrf.mxu0
      %v6520 = vadd.f32 0.0, %v6519
      %v6521 = vpop.f32.mrf.mxu0
      %v6522 = vadd.f32 0.0, %v6521
      %6523 = vdwg.mxu0
      %6524 = vmatpush.bf16.msra.mxu0 0
      %6525 = vmatpush.bf16.msra.mxu0 0
      %6526 = vmatpush.bf16.msra.mxu0 0
      %6527 = vmatpush.bf16.msra.mxu0 0
      %6528 = vmatpush.bf16.msra.mxu0 %v6466
      %6529 = vmatpush.bf16.msra.mxu0 %v6464
      %6530 = vmatpush.bf16.msra.mxu0 %v6462
      %6531 = vmatpush.bf16.msra.mxu0 %v6460
      %6532 = vmatmul.bf16.gmra.mxu0 %v6476
      %v6533 = vpop.f32.mrf.mxu0
      %v6534 = vadd.f32 0.0, %v6533
      %v6535 = vpop.f32.mrf.mxu0
      %v6536 = vadd.f32 0.0, %v6535
      %6537 = vmatmul.bf16.gmra.mxu0 %v6479
      %v6538 = vpop.f32.mrf.mxu0
      %v6539 = vadd.f32 0.0, %v6538
      %v6540 = vpop.f32.mrf.mxu0
      %v6541 = vadd.f32 0.0, %v6540
      %6542 = vmatmul.bf16.gmra.mxu0 %v6482
      %v6543 = vpop.f32.mrf.mxu0
      %v6544 = vadd.f32 0.0, %v6543
      %v6545 = vpop.f32.mrf.mxu0
      %v6546 = vadd.f32 0.0, %v6545
      %6547 = vmatmul.bf16.gmra.mxu0 %v6485
      %v6548 = vpop.f32.mrf.mxu0
      %v6549 = vadd.f32 0.0, %v6548
      %v6550 = vpop.f32.mrf.mxu0
      %v6551 = vadd.f32 0.0, %v6550
      %6552 = vmatmul.bf16.gmra.mxu0 %v6488
      %v6553 = vpop.f32.mrf.mxu0
      %v6554 = vadd.f32 0.0, %v6553
      %v6555 = vpop.f32.mrf.mxu0
      %v6556 = vadd.f32 0.0, %v6555
      %6557 = vdwg.mxu0
      %v6558 = vadd.f32 %v6381, %v6500
      %v6559 = vadd.f32 %v6382, %v6534
      %v6560 = vadd.f32 %v6383, %v6502
      %v6561 = vadd.f32 %v6384, %v6536
      %v6562 = vadd.f32 %v6385, %v6505
      %v6563 = vadd.f32 %v6386, %v6539
      %v6564 = vadd.f32 %v6387, %v6507
      %v6565 = vadd.f32 %v6388, %v6541
      %v6566 = vadd.f32 %v6389, %v6510
      %v6567 = vadd.f32 %v6390, %v6544
      %v6568 = vadd.f32 %v6391, %v6512
      %v6569 = vadd.f32 %v6392, %v6546
      %v6570 = vadd.f32 %v6393, %v6515
      %v6571 = vadd.f32 %v6394, %v6549
      %v6572 = vadd.f32 %v6395, %v6517
      %v6573 = vadd.f32 %v6396, %v6551
      %v6574 = vadd.f32 %v6397, %v6520
      %v6575 = vadd.f32 %v6398, %v6554
      %v6576 = vadd.f32 %v6399, %v6522
      %v6577 = vadd.f32 %v6400, %v6556
      %6578 = vst [vmem:[#allocation2] sm:$0xff] %v6558
      %6579 = vst.msk [vmem:[#allocation2 + $0x8] sm:$0xff] %vm173, %v6559
      %6580 = vst [vmem:[#allocation2 + $0x10] sm:$0xff] %v6560
      %6581 = vst.msk [vmem:[#allocation2 + $0x18] sm:$0xff] %vm173, %v6561
      %6582 = vst [vmem:[#allocation2 + $0x20] sm:$0xff] %v6562
      %6583 = vst.msk [vmem:[#allocation2 + $0x28] sm:$0xff] %vm173, %v6563
      %6584 = vst [vmem:[#allocation2 + $0x30] sm:$0xff] %v6564
      %6585 = vst.msk [vmem:[#allocation2 + $0x38] sm:$0xff] %vm173, %v6565
      %6586 = vst [vmem:[#allocation2 + $0x40] sm:$0xff] %v6566
      %6587 = vst.msk [vmem:[#allocation2 + $0x48] sm:$0xff] %vm173, %v6567
      %6588 = vst [vmem:[#allocation2 + $0x50] sm:$0xff] %v6568
      %6589 = vst.msk [vmem:[#allocation2 + $0x58] sm:$0xff] %vm173, %v6569
      %6590 = vst [vmem:[#allocation2 + $0x60] sm:$0xff] %v6570
      %6591 = vst.msk [vmem:[#allocation2 + $0x68] sm:$0xff] %vm173, %v6571
      %6592 = vst [vmem:[#allocation2 + $0x70] sm:$0xff] %v6572
      %6593 = vst.msk [vmem:[#allocation2 + $0x78] sm:$0xff] %vm173, %v6573
      %6594 = vst [vmem:[#allocation2 + $0x80] sm:$0xff] %v6574
      %6595 = vst.msk [vmem:[#allocation2 + $0x88] sm:$0xff] %vm173, %v6575
      %6596 = vst [vmem:[#allocation2 + $0x90] sm:$0x1f] %v6576
      %6597 = vst.msk [vmem:[#allocation2 + $0x98] sm:$0x1f] %vm192, %v6577
      %v6598 = vld [vmem:[#allocation2] sm:$0xff]
      %v6599 = vld [vmem:[#allocation2 + $0x8] sm:$0xff]
      %v6600 = vld [vmem:[#allocation2 + $0x10] sm:$0xff]
      %v6601 = vld [vmem:[#allocation2 + $0x18] sm:$0xff]
      %v6602 = vld [vmem:[#allocation2 + $0x20] sm:$0xff]
      %v6603 = vld [vmem:[#allocation2 + $0x28] sm:$0xff]
      %v6604 = vld [vmem:[#allocation2 + $0x30] sm:$0xff]
      %v6605 = vld [vmem:[#allocation2 + $0x38] sm:$0xff]
      %v6606 = vld [vmem:[#allocation2 + $0x40] sm:$0xff]
      %v6607 = vld [vmem:[#allocation2 + $0x48] sm:$0xff]
      %v6608 = vld [vmem:[#allocation2 + $0x50] sm:$0xff]
      %v6609 = vld [vmem:[#allocation2 + $0x58] sm:$0xff]
      %v6610 = vld [vmem:[#allocation2 + $0x60] sm:$0xff]
      %v6611 = vld [vmem:[#allocation2 + $0x68] sm:$0xff]
      %v6612 = vld [vmem:[#allocation2 + $0x70] sm:$0xff]
      %v6613 = vld [vmem:[#allocation2 + $0x78] sm:$0xff]
      %v6614 = vld [vmem:[#allocation2 + $0x80] sm:$0xff]
      %v6615 = vld [vmem:[#allocation2 + $0x88] sm:$0xff]
      %v6616 = vld [vmem:[#allocation2 + $0x90] sm:$0x1f]
      %v6617 = vld [vmem:[#allocation2 + $0x98] sm:$0x1f]
      %v6618 = vld [vmem:[%s2] sm:$0x3]
      %v6620 = vperm.slane %v6618, 0
      %v6621 = vperm.slane %v6618, 1
      %v6624 = vadd.f32 %v6598, %v6620
      %v6625 = vadd.f32 %v6599, %v6621
      %v6626 = vadd.f32 %v6600, %v6620
      %v6627 = vadd.f32 %v6601, %v6621
      %v6628 = vadd.f32 %v6602, %v6620
      %v6629 = vadd.f32 %v6603, %v6621
      %v6630 = vadd.f32 %v6604, %v6620
      %v6631 = vadd.f32 %v6605, %v6621
      %v6632 = vadd.f32 %v6606, %v6620
      %v6633 = vadd.f32 %v6607, %v6621
      %v6634 = vadd.f32 %v6608, %v6620
      %v6635 = vadd.f32 %v6609, %v6621
      %v6636 = vadd.f32 %v6610, %v6620
      %v6637 = vadd.f32 %v6611, %v6621
      %v6638 = vadd.f32 %v6612, %v6620
      %v6639 = vadd.f32 %v6613, %v6621
      %v6640 = vadd.f32 %v6614, %v6620
      %v6641 = vadd.f32 %v6615, %v6621
      %v6642 = vadd.f32 %v6616, %v6620
      %v6643 = vadd.f32 %v6617, %v6621
      %6644 = vst [vmem:[%s170] sm:$0xff] %v6624
      %6645 = vst.msk [vmem:[%s170 + $0x8] sm:$0xff] %vm173, %v6625
      %6646 = vst [vmem:[%s170 + $0x10] sm:$0xff] %v6626
      %6647 = vst.msk [vmem:[%s170 + $0x18] sm:$0xff] %vm173, %v6627
      %6648 = vst [vmem:[%s170 + $0x20] sm:$0xff] %v6628
      %6649 = vst.msk [vmem:[%s170 + $0x28] sm:$0xff] %vm173, %v6629
      %6650 = vst [vmem:[%s170 + $0x30] sm:$0xff] %v6630
      %6651 = vst.msk [vmem:[%s170 + $0x38] sm:$0xff] %vm173, %v6631
      %6652 = vst [vmem:[%s170 + $0x40] sm:$0xff] %v6632
      %6653 = vst.msk [vmem:[%s170 + $0x48] sm:$0xff] %vm173, %v6633
      %6654 = vst [vmem:[%s170 + $0x50] sm:$0xff] %v6634
      %6655 = vst.msk [vmem:[%s170 + $0x58] sm:$0xff] %vm173, %v6635
      %6656 = vst [vmem:[%s170 + $0x60] sm:$0xff] %v6636
      %6657 = vst.msk [vmem:[%s170 + $0x68] sm:$0xff] %vm173, %v6637
      %6658 = vst [vmem:[%s170 + $0x70] sm:$0xff] %v6638
      %6659 = vst.msk [vmem:[%s170 + $0x78] sm:$0xff] %vm173, %v6639
      %6660 = vst [vmem:[%s170 + $0x80] sm:$0xff] %v6640
      %6661 = vst.msk [vmem:[%s170 + $0x88] sm:$0xff] %vm173, %v6641
      %6662 = vst [vmem:[%s170 + $0x90] sm:$0x1f] %v6642
      %6663 = vst.msk [vmem:[%s170 + $0x98] sm:$0x1f] %vm192, %v6643
      %p6664 = scmp.lt.s32.totalorder %s14, 1
      %s6665 = scalar_select %p6664, %s14, 1
      %s6666 = smul.addr %s6665, 20
      %s6667 = smul.addr %s6666, 8
      %s6668 = scalar_lea.vmem %s3, %s6667
      // Predicated region
      $region33: #{untrained_model_forward.5} parent=31 // pred_check
        %p6669 = pneg %p100
      $region34: #{untrained_model_forward.5} parent=31 // pred_check_branch
        %6671 = sbr.rel (%p6669) target = $region36
      $region35: #{untrained_model_forward.5} parent=31 // pred_region
        _
      $region36: #{untrained_model_forward.5} parent=31 // pred_fallthru
        _
    $region32: #{untrained_model_forward.5} parent=5 // pred_fallthru
      _
    %p6672 = scmp.le.s32.totalorder 2, %s9
    // Predicated region
    $region37: #{untrained_model_forward.5} parent=5 // pred_check
      %p6673 = pneg %p6672
    $region38: #{untrained_model_forward.5} parent=5 // pred_check_branch
      %6675 = sbr.rel (%p6673) target = $region40
    $region39: #{untrained_model_forward.5} parent=5 // pred_region
      %s6676 = ssub.s32 %s9, 2
      // Predicated region
      $region41: #{untrained_model_forward.5} parent=39 // pred_check
        %p6677 = pneg %p106
      $region42: #{untrained_model_forward.5} parent=39 // pred_check_branch
        %6679 = sbr.rel (%p6677) target = $region44
      $region43: #{untrained_model_forward.5} parent=39 // pred_region
        %p6680 = scmp.lt.s32.totalorder %s15, 1
        %s6681 = scalar_select %p6680, %s15, 1
        %s6682 = smul.addr %s6681, 20
        %s6683 = smul.addr %s6682, 8
        %s6684 = scalar_lea.vmem %s3, %s6683
      $region44: #{untrained_model_forward.5} parent=39 // pred_fallthru
        _
    $region40: #{untrained_model_forward.5} parent=5 // pred_fallthru
      _
  $region6: #{untrained_model_forward.5} parent=0 // loop_footer
    %s13 = sadd.s32 1, %s9
  $region7: #{untrained_model_forward.5} parent=0 // loop_footer_branch
    %8 = sbr.rel target = $region3
  $region8: #{untrained_model_forward.5} parent=0 // loop_exit
    _

</llo_original>
